<compile_context>
chip_gen: v5e
topology: v5e:2x2
jax: 0.10.0
libtpu: 0.0.40
codegen_flags: <defaults>
</compile_context>

<pallas_src>
import functools

import jax
import jax.numpy as jnp
from jax.experimental import pallas as pl
from jax.experimental.pallas import tpu as pltpu

EPS = 1e-5                     # nn.BatchNorm2d default
LANES = 128
COMPUTE_DTYPE = jnp.bfloat16   # HBM activation/weight storage + MXU operand dtype
VMEM_LIMIT = 48 * 1024 * 1024  # safe on v7x (64 MiB), above v5e/v6e scoped defaults
_ITEMSIZE = 2 if COMPUTE_DTYPE == jnp.bfloat16 else 4


def _round_up(x, m):
    return (x + m - 1) // m * m


def _pick_rows_per_tile(H, W, target_rows):
    """Largest divisor r of H with r*W <= target_rows (>=1)."""
    best = 1
    for r in range(1, H + 1):
        if H % r == 0 and r * W <= target_rows:
            best = r
    return best


def _pick_final_tile(HW, target_rows):
    """Largest multiple of 128 dividing HW, capped by target; fallback HW."""
    best = None
    t = 128
    while t <= min(HW, target_rows):
        if HW % t == 0:
            best = t
        t += 128
    return best if best is not None else HW


# ----------------------------- Pallas kernels ------------------------------ #

def conv_bn_stats_kernel(top_ref, mid_ref, bot_ref, scale_ref, shift_ref,
                         w_ref, b_ref, y_ref, psum_ref, pssq_ref,
                         *, W, TM, HW, input_relu, mm_dtype):
    """One (image, HW-tile) step of: [optional prev-stage BN-apply+ReLU] ->
    3x3 conv (+bias) -> per-channel partial sum / sum-of-squares.

    top/mid/bot : (W, C), (TM, C), (W, C)  activation rows [tile start - W,
                  tile end + W) of the *unpadded* (H*W, C) activation; the
                  halo chunks are clamped at the image edges and masked here.
    scale/shift : (1, C)   previous-stage BN scale/shift (identity for stage 1)
    w_ref       : (9, C, Cpad)  one (C, Cpad) matrix per (ky, kx) tap
    b_ref       : (1, Cpad)
    y_ref       : (TM, Cpad)    conv + bias output (pre-BN), lane-dense
    psum/pssq   : (1, Cpad)     per-tile partial batch statistics
    """
    t = pl.program_id(1)
    xt = jnp.concatenate([top_ref[...], mid_ref[...], bot_ref[...]], axis=0)

    # Previous stage's BN-apply (+ ReLU), folded in.  Identity for stage 1.
    a = xt.astype(jnp.float32) * scale_ref[...] + shift_ref[...]
    if input_relu:
        a = jnp.maximum(a, 0.0)

    # Zero the rows that fall in the conv's zero padding (above / below image).
    rows = jax.lax.broadcasted_iota(jnp.int32, a.shape, 0)
    g = rows + (t * TM - W)                      # global image row index
    a = jnp.where((g >= 0) & (g < HW), a, 0.0)

    # dx = -1 / +1 slabs: row shift by one + column-boundary mask.  The dummy
    # first/last rows land only on masked (w==0 / w==W-1) positions.
    col = rows % W
    aL = jnp.where(col != 0, jnp.concatenate([a[:1], a[:-1]], axis=0), 0.0)
    aR = jnp.where(col != W - 1, jnp.concatenate([a[1:], a[-1:]], axis=0), 0.0)

    aC = a.astype(mm_dtype)
    aL = aL.astype(mm_dtype)
    aR = aR.astype(mm_dtype)

    # Nine adjacent accumulating MXU matmuls (f32 accumulation).
    acc = jnp.zeros(y_ref.shape, jnp.float32)
    for dy in range(3):
        r0 = dy * W
        for dxi, slab in enumerate((aL, aC, aR)):
            acc = acc + jnp.dot(slab[r0:r0 + TM], w_ref[dy * 3 + dxi],
                                preferred_element_type=jnp.float32)
    acc = acc + b_ref[...]

    y_ref[...] = acc.astype(y_ref.dtype)
    # Stats ride the XLU/VPU while the MXU is busy; per-tile partials keep the
    # grid axes "parallel" (no serial accumulator).
    psum_ref[...] = jnp.sum(acc, axis=0, keepdims=True)
    pssq_ref[...] = jnp.sum(acc * acc, axis=0, keepdims=True)


def bn_relu_nchw_kernel(y_ref, scale_ref, shift_ref, o_ref, *, Cout):
    """Final BN-apply + ReLU; writes the output already in (Cout, HW-tile)
    (i.e. NCHW) order and unpadded channels, so no extra XLA slice/transpose
    pass over the result."""
    a = jnp.maximum(
        y_ref[...].astype(jnp.float32) * scale_ref[...] + shift_ref[...], 0.0)
    o_ref[...] = jnp.transpose(a)[:Cout, :]


# ------------------------------- wrappers ---------------------------------- #

def _prep_weights(w_oihw, b, Cpad, Cin_pad=None):
    """(Cout,Cin,3,3) -> (9, Cin_pad, Cpad) tap matrices (k = ky*3+kx)."""
    Cout, Cin = w_oihw.shape[:2]
    if Cin_pad is None:
        Cin_pad = Cin
    wk = jnp.transpose(w_oihw, (2, 3, 1, 0))                  # (3,3,Cin,Cout)
    wk = jnp.pad(wk, ((0, 0), (0, 0), (0, Cin_pad - Cin), (0, Cpad - Cout)))
    wk = wk.reshape(9, Cin_pad, Cpad).astype(COMPUTE_DTYPE)
    bp = jnp.pad(b, (0, Cpad - Cout)).astype(jnp.float32).reshape(1, Cpad)
    return wk, bp


def _conv_stage(act, scale_in, shift_in, w_p, b_p, *, H, W, rpt, Cpad, input_relu):
    """Pallas conv (+ folded previous-stage BN+ReLU) + bias + stat partials.

    act: (N, H*W, C).  Returns y: (N, H*W, Cpad) [COMPUTE_DTYPE],
    psum/pssq: (N*n_tiles, 1, Cpad) [f32]."""
    N, HW, C = act.shape
    TM = rpt * W
    n_tiles = H // rpt

    kernel = functools.partial(conv_bn_stats_kernel, W=W, TM=TM, HW=HW,
                               input_relu=input_relu, mm_dtype=COMPUTE_DTYPE)

    flops = int(2 * N * HW * 9 * C * Cpad)
    bytes_accessed = int(act.size * _ITEMSIZE * (1.0 + 2.0 * W / TM)
                         + w_p.size * _ITEMSIZE + b_p.size * 4
                         + N * HW * Cpad * _ITEMSIZE
                         + 2 * N * n_tiles * Cpad * 4)

    return pl.pallas_call(
        kernel,
        out_shape=(
            jax.ShapeDtypeStruct((N, HW, Cpad), COMPUTE_DTYPE),
            jax.ShapeDtypeStruct((N * n_tiles, 1, Cpad), jnp.float32),
            jax.ShapeDtypeStruct((N * n_tiles, 1, Cpad), jnp.float32),
        ),
        grid_spec=pltpu.PrefetchScalarGridSpec(
            num_scalar_prefetch=0,
            grid=(N, n_tiles),
            in_specs=[
                # halo row above the tile (clamped at the image top; masked)
                pl.BlockSpec((None, W, C),
                             lambda n, t: (n, jnp.maximum(t * rpt - 1, 0), 0)),
                # tile body
                pl.BlockSpec((None, TM, C), lambda n, t: (n, t, 0)),
                # halo row below the tile (clamped at the image bottom; masked)
                pl.BlockSpec((None, W, C),
                             lambda n, t: (n, jnp.minimum((t + 1) * rpt, H - 1), 0)),
                pl.BlockSpec((1, C), lambda n, t: (0, 0)),            # scale (resident)
                pl.BlockSpec((1, C), lambda n, t: (0, 0)),            # shift (resident)
                pl.BlockSpec((9, C, Cpad), lambda n, t: (0, 0, 0)),   # weights (resident)
                pl.BlockSpec((1, Cpad), lambda n, t: (0, 0)),         # bias (resident)
            ],
            out_specs=[
                pl.BlockSpec((None, TM, Cpad), lambda n, t: (n, t, 0)),
                pl.BlockSpec((None, 1, Cpad), lambda n, t: (n * n_tiles + t, 0, 0)),
                pl.BlockSpec((None, 1, Cpad), lambda n, t: (n * n_tiles + t, 0, 0)),
            ],
        ),
        compiler_params=pltpu.CompilerParams(
            dimension_semantics=("parallel", "parallel"),
            vmem_limit_bytes=VMEM_LIMIT,
        ),
        cost_estimate=pl.CostEstimate(flops=flops, transcendentals=0,
                                      bytes_accessed=bytes_accessed),
    )(act, act, act, scale_in, shift_in, w_p, b_p)


def _bn_scale_shift(psum, pssq, gamma, beta, cnt, Cout):
    """Training-mode BatchNorm: biased batch stats over (N, H, W)."""
    s = jnp.sum(psum[:, 0, :Cout], axis=0)
    ss = jnp.sum(pssq[:, 0, :Cout], axis=0)
    mean = s / cnt
    var = ss / cnt - mean * mean
    scale = gamma / jnp.sqrt(var + EPS)
    shift = beta - mean * scale
    return scale, shift


def _bn_relu_nchw(y2, scale2, shift2, *, N, H, W, Cout, Cpad, tile_rows):
    """Final BN-apply + ReLU; emits the (N, Cout, H*W) NCHW output directly."""
    HW = H * W
    TMF = _pick_final_tile(HW, tile_rows)
    scale_p = jnp.pad(scale2, (0, Cpad - Cout)).reshape(1, Cpad)
    shift_p = jnp.pad(shift2, (0, Cpad - Cout)).reshape(1, Cpad)
    kernel = functools.partial(bn_relu_nchw_kernel, Cout=Cout)
    out = pl.pallas_call(
        kernel,
        out_shape=jax.ShapeDtypeStruct((N, Cout, HW), jnp.float32),
        grid_spec=pltpu.PrefetchScalarGridSpec(
            num_scalar_prefetch=0,
            grid=(N, HW // TMF),
            in_specs=[
                pl.BlockSpec((None, TMF, Cpad), lambda n, t: (n, t, 0)),
                pl.BlockSpec((1, Cpad), lambda n, t: (0, 0)),
                pl.BlockSpec((1, Cpad), lambda n, t: (0, 0)),
            ],
            out_specs=pl.BlockSpec((None, Cout, TMF), lambda n, t: (n, 0, t)),
        ),
        compiler_params=pltpu.CompilerParams(
            dimension_semantics=("parallel", "parallel"),
            vmem_limit_bytes=VMEM_LIMIT,
        ),
        cost_estimate=pl.CostEstimate(
            flops=int(3 * N * HW * Cpad), transcendentals=0,
            bytes_accessed=int(N * HW * (Cpad * _ITEMSIZE + Cout * 4))),
    )(y2, scale_p, shift_p)
    return out.reshape(N, Cout, H, W)


def conv_block_forward(x_nchw, params, *, conv_tile_rows=1024, final_tile_rows=1024):
    """Pallas implementation of conv_block.forward; NCHW in -> NCHW out."""
    N, Cin, H, W = x_nchw.shape
    assert W % 8 == 0, "W must be a multiple of 8 (pad W otherwise)"
    Cout = params["w1"].shape[0]
    Cpad = _round_up(Cout, LANES)
    HW = H * W
    cnt = jnp.float32(N * HW)
    rpt = _pick_rows_per_tile(H, W, conv_tile_rows)

    # Activations live as (N, H*W, C) channels-last slabs (lane dim = C).
    x = jnp.transpose(x_nchw, (0, 2, 3, 1)).reshape(N, HW, Cin).astype(COMPUTE_DTYPE)

    # ---- stage 1: conv + bias + batch-stat partials (Pallas) ----
    w1p, b1p = _prep_weights(params["w1"], params["b1"], Cpad)
    one1 = jnp.ones((1, Cin), jnp.float32)
    zero1 = jnp.zeros((1, Cin), jnp.float32)
    y1, ps1, pq1 = _conv_stage(x, one1, zero1, w1p, b1p,
                               H=H, W=W, rpt=rpt, Cpad=Cpad, input_relu=False)
    scale1, shift1 = _bn_scale_shift(ps1, pq1, params["gamma1"],
                                     params["beta1"], cnt, Cout)
    scale1p = jnp.pad(scale1, (0, Cpad - Cout)).reshape(1, Cpad)
    shift1p = jnp.pad(shift1, (0, Cpad - Cout)).reshape(1, Cpad)

    # ---- stage 2: stage-1 BN+ReLU folded into the conv kernel (Pallas) ----
    w2p, b2p = _prep_weights(params["w2"], params["b2"], Cpad, Cin_pad=Cpad)
    y2, ps2, pq2 = _conv_stage(y1, scale1p, shift1p, w2p, b2p,
                               H=H, W=W, rpt=rpt, Cpad=Cpad, input_relu=True)
    scale2, shift2 = _bn_scale_shift(ps2, pq2, params["gamma2"],
                                     params["beta2"], cnt, Cout)

    # ---- final BN-apply + ReLU, emitted directly in NCHW, unpadded (Pallas) ----
    return _bn_relu_nchw(y2, scale2, shift2, N=N, H=H, W=W, Cout=Cout,
                         Cpad=Cpad, tile_rows=final_tile_rows)


# ------------------------------ reference ---------------------------------- #

def conv_block_reference(x_nchw, params):
    """Pure-JAX (XLA, f32) reference with identical semantics, for validation."""
    def stage(x, w, b, gamma, beta):
        y = jax.lax.conv_general_dilated(
            x, w, window_strides=(1, 1), padding=((1, 1), (1, 1)),
            dimension_numbers=("NCHW", "OIHW", "NCHW"))
        y = y + b[None, :, None, None]
        mean = y.mean(axis=(0, 2, 3), keepdims=True)
        var = y.var(axis=(0, 2, 3), keepdims=True)               # biased, like BN
        yn = (y - mean) / jnp.sqrt(var + EPS)
        yn = yn * gamma[None, :, None, None] + beta[None, :, None, None]
        return jnp.maximum(yn, 0.0)

    x = stage(x_nchw, params["w1"], params["b1"], params["gamma1"], params["beta1"])
    x = stage(x, params["w2"], params["b2"], params["gamma2"], params["beta2"])
    return x


# --------------------------------- main ------------------------------------ #

if __name__ == "__main__":
    N, C_IN, C_OUT, H, W = 2, 4, 8, 16, 16

    key = jax.random.PRNGKey(0)
    k = jax.random.split(key, 9)
    params = {
        "w1": 0.1 * jax.random.normal(k[0], (C_OUT, C_IN, 3, 3), jnp.float32),
        "b1": 0.05 * jax.random.normal(k[1], (C_OUT,), jnp.float32),
        "gamma1": 1.0 + 0.1 * jax.random.normal(k[2], (C_OUT,), jnp.float32),
        "beta1": 0.1 * jax.random.normal(k[3], (C_OUT,), jnp.float32),
        "w2": 0.1 * jax.random.normal(k[4], (C_OUT, C_OUT, 3, 3), jnp.float32),
        "b2": 0.05 * jax.random.normal(k[5], (C_OUT,), jnp.float32),
        "gamma2": 1.0 + 0.1 * jax.random.normal(k[6], (C_OUT,), jnp.float32),
        "beta2": 0.1 * jax.random.normal(k[7], (C_OUT,), jnp.float32),
    }
    x = jax.random.normal(k[8], (N, C_IN, H, W), jnp.float32)    # NCHW, like PyTorch

    ref = jax.block_until_ready(conv_block_reference(x, params))
    # dtype-aware tolerance: bf16 operands/storage through two conv+BN stages
    tol = 1e-4 if COMPUTE_DTYPE == jnp.float32 else 5e-2

    # default config (large tiles; one HW tile per image at this small shape)
    out = jax.block_until_ready(jax.jit(conv_block_forward)(x, params))
    assert out.shape == (N, C_OUT, H, W), out.shape
    assert jnp.allclose(out, ref, rtol=tol, atol=tol), \
        float(jnp.max(jnp.abs(out - ref)))

    # small-tile config: exercises the multi-tile halo / clamp / mask path
    fwd_small = jax.jit(functools.partial(conv_block_forward,
                                          conv_tile_rows=128, final_tile_rows=128))
    out2 = jax.block_until_ready(fwd_small(x, params))
    assert jnp.allclose(out2, ref, rtol=tol, atol=tol), \
        float(jnp.max(jnp.abs(out2 - ref)))

    print("KERNEL_OK")
</pallas_src>

<mosaic_0001>
module attributes {stable_mosaic.version = 11 : i64} {
  func.func @conv_bn_stats_kernel(%arg0: i32, %arg1: i32, %arg2: memref<1x16x4xbf16, #tpu.memory_space<vmem>>, %arg3: memref<1x256x4xbf16, #tpu.memory_space<vmem>>, %arg4: memref<1x16x4xbf16, #tpu.memory_space<vmem>>, %arg5: memref<1x4xf32, #tpu.memory_space<vmem>>, %arg6: memref<1x4xf32, #tpu.memory_space<vmem>>, %arg7: memref<9x4x128xbf16, #tpu.memory_space<vmem>>, %arg8: memref<1x128xf32, #tpu.memory_space<vmem>>, %arg9: memref<1x256x128xbf16, #tpu.memory_space<vmem>>, %arg10: memref<1x1x128xf32, #tpu.memory_space<vmem>>, %arg11: memref<1x1x128xf32, #tpu.memory_space<vmem>>) attributes {dimension_semantics = [#tpu.dimension_semantics<parallel>, #tpu.dimension_semantics<parallel>], iteration_bounds = array<i64: 2, 1>, scalar_prefetch = 0 : i64, scratch_operands = 0 : i64, tpu.core_type = #tpu.core_type<tc>, window_params = [{transform_indices = @transform_0, window_bounds = array<i64: 1, 16, 4>}, {transform_indices = @transform_1, window_bounds = array<i64: 1, 256, 4>}, {transform_indices = @transform_2, window_bounds = array<i64: 1, 16, 4>}, {pipeline_mode = #tpu.pipeline_mode<synchronous>, transform_indices = @transform_3, window_bounds = array<i64: 1, 4>}, {pipeline_mode = #tpu.pipeline_mode<synchronous>, transform_indices = @transform_4, window_bounds = array<i64: 1, 4>}, {pipeline_mode = #tpu.pipeline_mode<synchronous>, transform_indices = @transform_5, window_bounds = array<i64: 9, 4, 128>}, {pipeline_mode = #tpu.pipeline_mode<synchronous>, transform_indices = @transform_6, window_bounds = array<i64: 1, 128>}, {transform_indices = @transform_7, window_bounds = array<i64: 1, 256, 128>}, {transform_indices = @transform_8, window_bounds = array<i64: 1, 1, 128>}, {transform_indices = @transform_9, window_bounds = array<i64: 1, 1, 128>}]} {
    %c0 = arith.constant 0 : index
    %c0_0 = arith.constant 0 : index
    %c0_1 = arith.constant 0 : index
    %0 = vector.load %arg2[%c0, %c0_0, %c0_1] : memref<1x16x4xbf16, #tpu.memory_space<vmem>>, vector<1x16x4xbf16>
    %1 = vector.shape_cast %0 : vector<1x16x4xbf16> to vector<16x4xbf16>
    %c0_2 = arith.constant 0 : index
    %c0_3 = arith.constant 0 : index
    %c0_4 = arith.constant 0 : index
    %2 = vector.load %arg3[%c0_2, %c0_3, %c0_4] : memref<1x256x4xbf16, #tpu.memory_space<vmem>>, vector<1x256x4xbf16>
    %3 = vector.shape_cast %2 : vector<1x256x4xbf16> to vector<256x4xbf16>
    %c0_5 = arith.constant 0 : index
    %c0_6 = arith.constant 0 : index
    %c0_7 = arith.constant 0 : index
    %4 = vector.load %arg4[%c0_5, %c0_6, %c0_7] : memref<1x16x4xbf16, #tpu.memory_space<vmem>>, vector<1x16x4xbf16>
    %5 = vector.shape_cast %4 : vector<1x16x4xbf16> to vector<16x4xbf16>
    %6 = tpu.concatenate %1, %3, %5 in 0 : vector<16x4xbf16>, vector<256x4xbf16>, vector<16x4xbf16> -> vector<288x4xbf16>
    %7 = arith.extf %6 : vector<288x4xbf16> to vector<288x4xf32>
    %c0_8 = arith.constant 0 : index
    %c0_9 = arith.constant 0 : index
    %8 = vector.load %arg5[%c0_8, %c0_9] : memref<1x4xf32, #tpu.memory_space<vmem>>, vector<1x4xf32>
    %9 = vector.broadcast %8 : vector<1x4xf32> to vector<288x4xf32>
    %10 = arith.mulf %7, %9 : vector<288x4xf32>
    %c0_10 = arith.constant 0 : index
    %c0_11 = arith.constant 0 : index
    %11 = vector.load %arg6[%c0_10, %c0_11] : memref<1x4xf32, #tpu.memory_space<vmem>>, vector<1x4xf32>
    %12 = vector.broadcast %11 : vector<1x4xf32> to vector<288x4xf32>
    %13 = arith.addf %10, %12 : vector<288x4xf32>
    %14 = tpu.iota {dimensions = array<i32: 0>} : vector<288x4xi32>
    %c256_i32 = arith.constant 256 : i32
    %15 = arith.muli %arg1, %c256_i32 : i32
    %c16_i32 = arith.constant 16 : i32
    %16 = arith.subi %15, %c16_i32 : i32
    %17 = vector.broadcast %16 : i32 to vector<288x4xi32>
    %18 = arith.addi %14, %17 : vector<288x4xi32>
    %c0_i32 = arith.constant 0 : i32
    %19 = vector.broadcast %c0_i32 : i32 to vector<288x4xi32>
    %20 = arith.cmpi sge, %18, %19 : vector<288x4xi32>
    %c256_i32_12 = arith.constant 256 : i32
    %21 = vector.broadcast %c256_i32_12 : i32 to vector<288x4xi32>
    %22 = arith.cmpi slt, %18, %21 : vector<288x4xi32>
    %23 = arith.andi %20, %22 : vector<288x4xi1>
    %cst = arith.constant 0.000000e+00 : f32
    %24 = vector.broadcast %cst : f32 to vector<288x4xf32>
    %25 = arith.select %23, %13, %24 : vector<288x4xi1>, vector<288x4xf32>
    %c16_i32_13 = arith.constant 16 : i32
    %c0_i32_14 = arith.constant 0 : i32
    %26 = arith.cmpi eq, %c16_i32_13, %c0_i32_14 : i32
    %c1_i32 = arith.constant 1 : i32
    %27 = arith.select %26, %c1_i32, %c16_i32_13 : i32
    %28 = vector.broadcast %27 : i32 to vector<288x4xi32>
    %29 = arith.remsi %14, %28 : vector<288x4xi32>
    %c0_i32_15 = arith.constant 0 : i32
    %30 = vector.broadcast %c0_i32_15 : i32 to vector<288x4xi32>
    %31 = arith.cmpi ne, %29, %30 : vector<288x4xi32>
    %c0_i32_16 = arith.constant 0 : i32
    %32 = vector.broadcast %c0_i32_16 : i32 to vector<288x4xi32>
    %33 = arith.cmpi slt, %29, %32 : vector<288x4xi32>
    %c0_i32_17 = arith.constant 0 : i32
    %34 = arith.cmpi slt, %27, %c0_i32_17 : i32
    %35 = vector.broadcast %34 : i1 to vector<288x4xi1>
    %36 = vector.broadcast %35 : vector<288x4xi1> to vector<288x4xi1>
    %37 = arith.xori %33, %36 : vector<288x4xi1>
    %38 = arith.andi %37, %31 : vector<288x4xi1>
    %39 = vector.broadcast %27 : i32 to vector<288x4xi32>
    %40 = arith.addi %29, %39 : vector<288x4xi32>
    %41 = arith.select %38, %40, %29 : vector<288x4xi1>, vector<288x4xi32>
    %c0_i32_18 = arith.constant 0 : i32
    %42 = vector.broadcast %c0_i32_18 : i32 to vector<288x4xi32>
    %43 = arith.cmpi ne, %41, %42 : vector<288x4xi32>
    %44 = vector.extract_strided_slice %25 {offsets = [0, 0], sizes = [1, 4], strides = [1, 1]} : vector<288x4xf32> to vector<1x4xf32>
    %45 = vector.extract_strided_slice %25 {offsets = [0, 0], sizes = [287, 4], strides = [1, 1]} : vector<288x4xf32> to vector<287x4xf32>
    %46 = tpu.concatenate %44, %45 in 0 : vector<1x4xf32>, vector<287x4xf32> -> vector<288x4xf32>
    %cst_19 = arith.constant 0.000000e+00 : f32
    %47 = vector.broadcast %cst_19 : f32 to vector<288x4xf32>
    %48 = arith.select %43, %46, %47 : vector<288x4xi1>, vector<288x4xf32>
    %c15_i32 = arith.constant 15 : i32
    %49 = vector.broadcast %c15_i32 : i32 to vector<288x4xi32>
    %50 = arith.cmpi ne, %41, %49 : vector<288x4xi32>
    %51 = vector.extract_strided_slice %25 {offsets = [1, 0], sizes = [287, 4], strides = [1, 1]} : vector<288x4xf32> to vector<287x4xf32>
    %52 = vector.extract_strided_slice %25 {offsets = [287, 0], sizes = [1, 4], strides = [1, 1]} : vector<288x4xf32> to vector<1x4xf32>
    %53 = tpu.concatenate %51, %52 in 0 : vector<287x4xf32>, vector<1x4xf32> -> vector<288x4xf32>
    %cst_20 = arith.constant 0.000000e+00 : f32
    %54 = vector.broadcast %cst_20 : f32 to vector<288x4xf32>
    %55 = arith.select %50, %53, %54 : vector<288x4xi1>, vector<288x4xf32>
    %56 = arith.truncf %25 : vector<288x4xf32> to vector<288x4xbf16>
    %57 = arith.truncf %48 : vector<288x4xf32> to vector<288x4xbf16>
    %58 = arith.truncf %55 : vector<288x4xf32> to vector<288x4xbf16>
    %cst_21 = arith.constant 0.000000e+00 : f32
    %59 = vector.broadcast %cst_21 : f32 to vector<256x128xf32>
    %60 = vector.extract_strided_slice %57 {offsets = [0, 0], sizes = [256, 4], strides = [1, 1]} : vector<288x4xbf16> to vector<256x4xbf16>
    %c0_22 = arith.constant 0 : index
    %c0_23 = arith.constant 0 : index
    %c0_24 = arith.constant 0 : index
    %61 = vector.load %arg7[%c0_22, %c0_23, %c0_24] : memref<9x4x128xbf16, #tpu.memory_space<vmem>>, vector<1x4x128xbf16>
    %62 = vector.shape_cast %61 : vector<1x4x128xbf16> to vector<4x128xbf16>
    %cst_25 = arith.constant dense<0.000000e+00> : vector<256x128xf32>
    %63 = tpu.matmul %60, %62, %cst_25 {dimension_numbers = #tpu.dot_dimension_numbers<[1], [0], [0], [1], [0, 0, 1, 1], [], []>} : vector<256x4xbf16>, vector<4x128xbf16>, vector<256x128xf32> -> vector<256x128xf32>
    %64 = arith.addf %59, %63 : vector<256x128xf32>
    %65 = vector.extract_strided_slice %56 {offsets = [0, 0], sizes = [256, 4], strides = [1, 1]} : vector<288x4xbf16> to vector<256x4xbf16>
    %c1 = arith.constant 1 : index
    %c0_26 = arith.constant 0 : index
    %c0_27 = arith.constant 0 : index
    %66 = vector.load %arg7[%c1, %c0_26, %c0_27] : memref<9x4x128xbf16, #tpu.memory_space<vmem>>, vector<1x4x128xbf16>
    %67 = vector.shape_cast %66 : vector<1x4x128xbf16> to vector<4x128xbf16>
    %cst_28 = arith.constant dense<0.000000e+00> : vector<256x128xf32>
    %68 = tpu.matmul %65, %67, %cst_28 {dimension_numbers = #tpu.dot_dimension_numbers<[1], [0], [0], [1], [0, 0, 1, 1], [], []>} : vector<256x4xbf16>, vector<4x128xbf16>, vector<256x128xf32> -> vector<256x128xf32>
    %69 = arith.addf %64, %68 : vector<256x128xf32>
    %70 = vector.extract_strided_slice %58 {offsets = [0, 0], sizes = [256, 4], strides = [1, 1]} : vector<288x4xbf16> to vector<256x4xbf16>
    %c2 = arith.constant 2 : index
    %c0_29 = arith.constant 0 : index
    %c0_30 = arith.constant 0 : index
    %71 = vector.load %arg7[%c2, %c0_29, %c0_30] : memref<9x4x128xbf16, #tpu.memory_space<vmem>>, vector<1x4x128xbf16>
    %72 = vector.shape_cast %71 : vector<1x4x128xbf16> to vector<4x128xbf16>
    %cst_31 = arith.constant dense<0.000000e+00> : vector<256x128xf32>
    %73 = tpu.matmul %70, %72, %cst_31 {dimension_numbers = #tpu.dot_dimension_numbers<[1], [0], [0], [1], [0, 0, 1, 1], [], []>} : vector<256x4xbf16>, vector<4x128xbf16>, vector<256x128xf32> -> vector<256x128xf32>
    %74 = arith.addf %69, %73 : vector<256x128xf32>
    %75 = vector.extract_strided_slice %57 {offsets = [16, 0], sizes = [256, 4], strides = [1, 1]} : vector<288x4xbf16> to vector<256x4xbf16>
    %c3 = arith.constant 3 : index
    %c0_32 = arith.constant 0 : index
    %c0_33 = arith.constant 0 : index
    %76 = vector.load %arg7[%c3, %c0_32, %c0_33] : memref<9x4x128xbf16, #tpu.memory_space<vmem>>, vector<1x4x128xbf16>
    %77 = vector.shape_cast %76 : vector<1x4x128xbf16> to vector<4x128xbf16>
    %cst_34 = arith.constant dense<0.000000e+00> : vector<256x128xf32>
    %78 = tpu.matmul %75, %77, %cst_34 {dimension_numbers = #tpu.dot_dimension_numbers<[1], [0], [0], [1], [0, 0, 1, 1], [], []>} : vector<256x4xbf16>, vector<4x128xbf16>, vector<256x128xf32> -> vector<256x128xf32>
    %79 = arith.addf %74, %78 : vector<256x128xf32>
    %80 = vector.extract_strided_slice %56 {offsets = [16, 0], sizes = [256, 4], strides = [1, 1]} : vector<288x4xbf16> to vector<256x4xbf16>
    %c4 = arith.constant 4 : index
    %c0_35 = arith.constant 0 : index
    %c0_36 = arith.constant 0 : index
    %81 = vector.load %arg7[%c4, %c0_35, %c0_36] : memref<9x4x128xbf16, #tpu.memory_space<vmem>>, vector<1x4x128xbf16>
    %82 = vector.shape_cast %81 : vector<1x4x128xbf16> to vector<4x128xbf16>
    %cst_37 = arith.constant dense<0.000000e+00> : vector<256x128xf32>
    %83 = tpu.matmul %80, %82, %cst_37 {dimension_numbers = #tpu.dot_dimension_numbers<[1], [0], [0], [1], [0, 0, 1, 1], [], []>} : vector<256x4xbf16>, vector<4x128xbf16>, vector<256x128xf32> -> vector<256x128xf32>
    %84 = arith.addf %79, %83 : vector<256x128xf32>
    %85 = vector.extract_strided_slice %58 {offsets = [16, 0], sizes = [256, 4], strides = [1, 1]} : vector<288x4xbf16> to vector<256x4xbf16>
    %c5 = arith.constant 5 : index
    %c0_38 = arith.constant 0 : index
    %c0_39 = arith.constant 0 : index
    %86 = vector.load %arg7[%c5, %c0_38, %c0_39] : memref<9x4x128xbf16, #tpu.memory_space<vmem>>, vector<1x4x128xbf16>
    %87 = vector.shape_cast %86 : vector<1x4x128xbf16> to vector<4x128xbf16>
    %cst_40 = arith.constant dense<0.000000e+00> : vector<256x128xf32>
    %88 = tpu.matmul %85, %87, %cst_40 {dimension_numbers = #tpu.dot_dimension_numbers<[1], [0], [0], [1], [0, 0, 1, 1], [], []>} : vector<256x4xbf16>, vector<4x128xbf16>, vector<256x128xf32> -> vector<256x128xf32>
    %89 = arith.addf %84, %88 : vector<256x128xf32>
    %90 = vector.extract_strided_slice %57 {offsets = [32, 0], sizes = [256, 4], strides = [1, 1]} : vector<288x4xbf16> to vector<256x4xbf16>
    %c6 = arith.constant 6 : index
    %c0_41 = arith.constant 0 : index
    %c0_42 = arith.constant 0 : index
    %91 = vector.load %arg7[%c6, %c0_41, %c0_42] : memref<9x4x128xbf16, #tpu.memory_space<vmem>>, vector<1x4x128xbf16>
    %92 = vector.shape_cast %91 : vector<1x4x128xbf16> to vector<4x128xbf16>
    %cst_43 = arith.constant dense<0.000000e+00> : vector<256x128xf32>
    %93 = tpu.matmul %90, %92, %cst_43 {dimension_numbers = #tpu.dot_dimension_numbers<[1], [0], [0], [1], [0, 0, 1, 1], [], []>} : vector<256x4xbf16>, vector<4x128xbf16>, vector<256x128xf32> -> vector<256x128xf32>
    %94 = arith.addf %89, %93 : vector<256x128xf32>
    %95 = vector.extract_strided_slice %56 {offsets = [32, 0], sizes = [256, 4], strides = [1, 1]} : vector<288x4xbf16> to vector<256x4xbf16>
    %c7 = arith.constant 7 : index
    %c0_44 = arith.constant 0 : index
    %c0_45 = arith.constant 0 : index
    %96 = vector.load %arg7[%c7, %c0_44, %c0_45] : memref<9x4x128xbf16, #tpu.memory_space<vmem>>, vector<1x4x128xbf16>
    %97 = vector.shape_cast %96 : vector<1x4x128xbf16> to vector<4x128xbf16>
    %cst_46 = arith.constant dense<0.000000e+00> : vector<256x128xf32>
    %98 = tpu.matmul %95, %97, %cst_46 {dimension_numbers = #tpu.dot_dimension_numbers<[1], [0], [0], [1], [0, 0, 1, 1], [], []>} : vector<256x4xbf16>, vector<4x128xbf16>, vector<256x128xf32> -> vector<256x128xf32>
    %99 = arith.addf %94, %98 : vector<256x128xf32>
    %100 = vector.extract_strided_slice %58 {offsets = [32, 0], sizes = [256, 4], strides = [1, 1]} : vector<288x4xbf16> to vector<256x4xbf16>
    %c8 = arith.constant 8 : index
    %c0_47 = arith.constant 0 : index
    %c0_48 = arith.constant 0 : index
    %101 = vector.load %arg7[%c8, %c0_47, %c0_48] : memref<9x4x128xbf16, #tpu.memory_space<vmem>>, vector<1x4x128xbf16>
    %102 = vector.shape_cast %101 : vector<1x4x128xbf16> to vector<4x128xbf16>
    %cst_49 = arith.constant dense<0.000000e+00> : vector<256x128xf32>
    %103 = tpu.matmul %100, %102, %cst_49 {dimension_numbers = #tpu.dot_dimension_numbers<[1], [0], [0], [1], [0, 0, 1, 1], [], []>} : vector<256x4xbf16>, vector<4x128xbf16>, vector<256x128xf32> -> vector<256x128xf32>
    %104 = arith.addf %99, %103 : vector<256x128xf32>
    %c0_50 = arith.constant 0 : index
    %c0_51 = arith.constant 0 : index
    %105 = vector.load %arg8[%c0_50, %c0_51] : memref<1x128xf32, #tpu.memory_space<vmem>>, vector<1x128xf32>
    %106 = vector.broadcast %105 : vector<1x128xf32> to vector<256x128xf32>
    %107 = arith.addf %104, %106 : vector<256x128xf32>
    %108 = arith.truncf %107 : vector<256x128xf32> to vector<256x128xbf16>
    %c0_52 = arith.constant 0 : index
    %c0_53 = arith.constant 0 : index
    %c0_54 = arith.constant 0 : index
    %109 = vector.load %arg9[%c0_52, %c0_53, %c0_54] : memref<1x256x128xbf16, #tpu.memory_space<vmem>>, vector<1x256x128xbf16>
    %110 = vector.shape_cast %109 : vector<1x256x128xbf16> to vector<256x128xbf16>
    %111 = vector.shape_cast %108 : vector<256x128xbf16> to vector<1x256x128xbf16>
    tpu.vector_store %arg9[%c0_52, %c0_53, %c0_54], %111 {strides = array<i32>} : memref<1x256x128xbf16, #tpu.memory_space<vmem>>, vector<1x256x128xbf16>,
    %cst_55 = arith.constant dense<0.000000e+00> : vector<128xf32>
    %112 = vector.multi_reduction <add>, %107, %cst_55 [0] : vector<256x128xf32> to vector<128xf32>
    %113 = vector.shape_cast %112 : vector<128xf32> to vector<1x128xf32>
    %c0_56 = arith.constant 0 : index
    %c0_57 = arith.constant 0 : index
    %c0_58 = arith.constant 0 : index
    %114 = vector.load %arg10[%c0_56, %c0_57, %c0_58] : memref<1x1x128xf32, #tpu.memory_space<vmem>>, vector<1x1x128xf32>
    %115 = vector.shape_cast %114 : vector<1x1x128xf32> to vector<1x128xf32>
    %116 = vector.shape_cast %113 : vector<1x128xf32> to vector<1x1x128xf32>
    tpu.vector_store %arg10[%c0_56, %c0_57, %c0_58], %116 {strides = array<i32>} : memref<1x1x128xf32, #tpu.memory_space<vmem>>, vector<1x1x128xf32>,
    %117 = arith.mulf %107, %107 : vector<256x128xf32>
    %cst_59 = arith.constant dense<0.000000e+00> : vector<128xf32>
    %118 = vector.multi_reduction <add>, %117, %cst_59 [0] : vector<256x128xf32> to vector<128xf32>
    %119 = vector.shape_cast %118 : vector<128xf32> to vector<1x128xf32>
    %c0_60 = arith.constant 0 : index
    %c0_61 = arith.constant 0 : index
    %c0_62 = arith.constant 0 : index
    %120 = vector.load %arg11[%c0_60, %c0_61, %c0_62] : memref<1x1x128xf32, #tpu.memory_space<vmem>>, vector<1x1x128xf32>
    %121 = vector.shape_cast %120 : vector<1x1x128xf32> to vector<1x128xf32>
    %122 = vector.shape_cast %119 : vector<1x128xf32> to vector<1x1x128xf32>
    tpu.vector_store %arg11[%c0_60, %c0_61, %c0_62], %122 {strides = array<i32>} : memref<1x1x128xf32, #tpu.memory_space<vmem>>, vector<1x1x128xf32>,
    return
  }
  func.func @transform_0(%arg0: i32, %arg1: i32) -> (i32, i32, i32) {
    %c16_i32 = arith.constant 16 : i32
    %0 = arith.muli %arg1, %c16_i32 : i32
    %c1_i32 = arith.constant 1 : i32
    %1 = arith.subi %0, %c1_i32 : i32
    %c0_i32 = arith.constant 0 : i32
    %2 = arith.maxsi %1, %c0_i32 : i32
    %c0_i32_0 = arith.constant 0 : i32
    %c0_i32_1 = arith.constant 0 : i32
    return %arg0, %2, %c0_i32_0 : i32, i32, i32
  }
  func.func @transform_1(%arg0: i32, %arg1: i32) -> (i32, i32, i32) {
    %c0_i32 = arith.constant 0 : i32
    %c0_i32_0 = arith.constant 0 : i32
    return %arg0, %arg1, %c0_i32 : i32, i32, i32
  }
  func.func @transform_2(%arg0: i32, %arg1: i32) -> (i32, i32, i32) {
    %c1_i32 = arith.constant 1 : i32
    %0 = arith.addi %arg1, %c1_i32 : i32
    %c16_i32 = arith.constant 16 : i32
    %1 = arith.muli %0, %c16_i32 : i32
    %c15_i32 = arith.constant 15 : i32
    %2 = arith.minsi %1, %c15_i32 : i32
    %c0_i32 = arith.constant 0 : i32
    %c0_i32_0 = arith.constant 0 : i32
    return %arg0, %2, %c0_i32 : i32, i32, i32
  }
  func.func @transform_3(%arg0: i32, %arg1: i32) -> (i32, i32) {
    %c0_i32 = arith.constant 0 : i32
    %c0_i32_0 = arith.constant 0 : i32
    %c0_i32_1 = arith.constant 0 : i32
    return %c0_i32, %c0_i32_0 : i32, i32
  }
  func.func @transform_4(%arg0: i32, %arg1: i32) -> (i32, i32) {
    %c0_i32 = arith.constant 0 : i32
    %c0_i32_0 = arith.constant 0 : i32
    %c0_i32_1 = arith.constant 0 : i32
    return %c0_i32, %c0_i32_0 : i32, i32
  }
  func.func @transform_5(%arg0: i32, %arg1: i32) -> (i32, i32, i32) {
    %c0_i32 = arith.constant 0 : i32
    %c0_i32_0 = arith.constant 0 : i32
    %c0_i32_1 = arith.constant 0 : i32
    %c0_i32_2 = arith.constant 0 : i32
    return %c0_i32, %c0_i32_0, %c0_i32_1 : i32, i32, i32
  }
  func.func @transform_6(%arg0: i32, %arg1: i32) -> (i32, i32) {
    %c0_i32 = arith.constant 0 : i32
    %c0_i32_0 = arith.constant 0 : i32
    %c0_i32_1 = arith.constant 0 : i32
    return %c0_i32, %c0_i32_0 : i32, i32
  }
  func.func @transform_7(%arg0: i32, %arg1: i32) -> (i32, i32, i32) {
    %c0_i32 = arith.constant 0 : i32
    %c0_i32_0 = arith.constant 0 : i32
    return %arg0, %arg1, %c0_i32 : i32, i32, i32
  }
  func.func @transform_8(%arg0: i32, %arg1: i32) -> (i32, i32, i32) {
    %c1_i32 = arith.constant 1 : i32
    %0 = arith.muli %arg0, %c1_i32 : i32
    %1 = arith.addi %0, %arg1 : i32
    %c0_i32 = arith.constant 0 : i32
    %c0_i32_0 = arith.constant 0 : i32
    %c0_i32_1 = arith.constant 0 : i32
    return %1, %c0_i32, %c0_i32_0 : i32, i32, i32
  }
  func.func @transform_9(%arg0: i32, %arg1: i32) -> (i32, i32, i32) {
    %c1_i32 = arith.constant 1 : i32
    %0 = arith.muli %arg0, %c1_i32 : i32
    %1 = arith.addi %0, %arg1 : i32
    %c0_i32 = arith.constant 0 : i32
    %c0_i32_0 = arith.constant 0 : i32
    %c0_i32_1 = arith.constant 0 : i32
    return %1, %c0_i32, %c0_i32_0 : i32, i32, i32
  }
}

module attributes {stable_mosaic.version = 11 : i64} {
  func.func @conv_bn_stats_kernel(%arg0: i32, %arg1: i32, %arg2: memref<1x16x128xbf16, #tpu.memory_space<vmem>>, %arg3: memref<1x256x128xbf16, #tpu.memory_space<vmem>>, %arg4: memref<1x16x128xbf16, #tpu.memory_space<vmem>>, %arg5: memref<1x128xf32, #tpu.memory_space<vmem>>, %arg6: memref<1x128xf32, #tpu.memory_space<vmem>>, %arg7: memref<9x128x128xbf16, #tpu.memory_space<vmem>>, %arg8: memref<1x128xf32, #tpu.memory_space<vmem>>, %arg9: memref<1x256x128xbf16, #tpu.memory_space<vmem>>, %arg10: memref<1x1x128xf32, #tpu.memory_space<vmem>>, %arg11: memref<1x1x128xf32, #tpu.memory_space<vmem>>) attributes {dimension_semantics = [#tpu.dimension_semantics<parallel>, #tpu.dimension_semantics<parallel>], iteration_bounds = array<i64: 2, 1>, scalar_prefetch = 0 : i64, scratch_operands = 0 : i64, tpu.core_type = #tpu.core_type<tc>, window_params = [{transform_indices = @transform_0, window_bounds = array<i64: 1, 16, 128>}, {transform_indices = @transform_1, window_bounds = array<i64: 1, 256, 128>}, {transform_indices = @transform_2, window_bounds = array<i64: 1, 16, 128>}, {pipeline_mode = #tpu.pipeline_mode<synchronous>, transform_indices = @transform_3, window_bounds = array<i64: 1, 128>}, {pipeline_mode = #tpu.pipeline_mode<synchronous>, transform_indices = @transform_4, window_bounds = array<i64: 1, 128>}, {pipeline_mode = #tpu.pipeline_mode<synchronous>, transform_indices = @transform_5, window_bounds = array<i64: 9, 128, 128>}, {pipeline_mode = #tpu.pipeline_mode<synchronous>, transform_indices = @transform_6, window_bounds = array<i64: 1, 128>}, {transform_indices = @transform_7, window_bounds = array<i64: 1, 256, 128>}, {transform_indices = @transform_8, window_bounds = array<i64: 1, 1, 128>}, {transform_indices = @transform_9, window_bounds = array<i64: 1, 1, 128>}]} {
    %c0 = arith.constant 0 : index
    %c0_0 = arith.constant 0 : index
    %c0_1 = arith.constant 0 : index
    %0 = vector.load %arg2[%c0, %c0_0, %c0_1] : memref<1x16x128xbf16, #tpu.memory_space<vmem>>, vector<1x16x128xbf16>
    %1 = vector.shape_cast %0 : vector<1x16x128xbf16> to vector<16x128xbf16>
    %c0_2 = arith.constant 0 : index
    %c0_3 = arith.constant 0 : index
    %c0_4 = arith.constant 0 : index
    %2 = vector.load %arg3[%c0_2, %c0_3, %c0_4] : memref<1x256x128xbf16, #tpu.memory_space<vmem>>, vector<1x256x128xbf16>
    %3 = vector.shape_cast %2 : vector<1x256x128xbf16> to vector<256x128xbf16>
    %c0_5 = arith.constant 0 : index
    %c0_6 = arith.constant 0 : index
    %c0_7 = arith.constant 0 : index
    %4 = vector.load %arg4[%c0_5, %c0_6, %c0_7] : memref<1x16x128xbf16, #tpu.memory_space<vmem>>, vector<1x16x128xbf16>
    %5 = vector.shape_cast %4 : vector<1x16x128xbf16> to vector<16x128xbf16>
    %6 = tpu.concatenate %1, %3, %5 in 0 : vector<16x128xbf16>, vector<256x128xbf16>, vector<16x128xbf16> -> vector<288x128xbf16>
    %7 = arith.extf %6 : vector<288x128xbf16> to vector<288x128xf32>
    %c0_8 = arith.constant 0 : index
    %c0_9 = arith.constant 0 : index
    %8 = vector.load %arg5[%c0_8, %c0_9] : memref<1x128xf32, #tpu.memory_space<vmem>>, vector<1x128xf32>
    %9 = vector.broadcast %8 : vector<1x128xf32> to vector<288x128xf32>
    %10 = arith.mulf %7, %9 : vector<288x128xf32>
    %c0_10 = arith.constant 0 : index
    %c0_11 = arith.constant 0 : index
    %11 = vector.load %arg6[%c0_10, %c0_11] : memref<1x128xf32, #tpu.memory_space<vmem>>, vector<1x128xf32>
    %12 = vector.broadcast %11 : vector<1x128xf32> to vector<288x128xf32>
    %13 = arith.addf %10, %12 : vector<288x128xf32>
    %cst = arith.constant 0.000000e+00 : f32
    %14 = vector.broadcast %cst : f32 to vector<288x128xf32>
    %15 = arith.maximumf %13, %14 : vector<288x128xf32>
    %16 = tpu.iota {dimensions = array<i32: 0>} : vector<288x128xi32>
    %c256_i32 = arith.constant 256 : i32
    %17 = arith.muli %arg1, %c256_i32 : i32
    %c16_i32 = arith.constant 16 : i32
    %18 = arith.subi %17, %c16_i32 : i32
    %19 = vector.broadcast %18 : i32 to vector<288x128xi32>
    %20 = arith.addi %16, %19 : vector<288x128xi32>
    %c0_i32 = arith.constant 0 : i32
    %21 = vector.broadcast %c0_i32 : i32 to vector<288x128xi32>
    %22 = arith.cmpi sge, %20, %21 : vector<288x128xi32>
    %c256_i32_12 = arith.constant 256 : i32
    %23 = vector.broadcast %c256_i32_12 : i32 to vector<288x128xi32>
    %24 = arith.cmpi slt, %20, %23 : vector<288x128xi32>
    %25 = arith.andi %22, %24 : vector<288x128xi1>
    %cst_13 = arith.constant 0.000000e+00 : f32
    %26 = vector.broadcast %cst_13 : f32 to vector<288x128xf32>
    %27 = arith.select %25, %15, %26 : vector<288x128xi1>, vector<288x128xf32>
    %c16_i32_14 = arith.constant 16 : i32
    %c0_i32_15 = arith.constant 0 : i32
    %28 = arith.cmpi eq, %c16_i32_14, %c0_i32_15 : i32
    %c1_i32 = arith.constant 1 : i32
    %29 = arith.select %28, %c1_i32, %c16_i32_14 : i32
    %30 = vector.broadcast %29 : i32 to vector<288x128xi32>
    %31 = arith.remsi %16, %30 : vector<288x128xi32>
    %c0_i32_16 = arith.constant 0 : i32
    %32 = vector.broadcast %c0_i32_16 : i32 to vector<288x128xi32>
    %33 = arith.cmpi ne, %31, %32 : vector<288x128xi32>
    %c0_i32_17 = arith.constant 0 : i32
    %34 = vector.broadcast %c0_i32_17 : i32 to vector<288x128xi32>
    %35 = arith.cmpi slt, %31, %34 : vector<288x128xi32>
    %c0_i32_18 = arith.constant 0 : i32
    %36 = arith.cmpi slt, %29, %c0_i32_18 : i32
    %37 = vector.broadcast %36 : i1 to vector<288x128xi1>
    %38 = vector.broadcast %37 : vector<288x128xi1> to vector<288x128xi1>
    %39 = arith.xori %35, %38 : vector<288x128xi1>
    %40 = arith.andi %39, %33 : vector<288x128xi1>
    %41 = vector.broadcast %29 : i32 to vector<288x128xi32>
    %42 = arith.addi %31, %41 : vector<288x128xi32>
    %43 = arith.select %40, %42, %31 : vector<288x128xi1>, vector<288x128xi32>
    %c0_i32_19 = arith.constant 0 : i32
    %44 = vector.broadcast %c0_i32_19 : i32 to vector<288x128xi32>
    %45 = arith.cmpi ne, %43, %44 : vector<288x128xi32>
    %46 = vector.extract_strided_slice %27 {offsets = [0, 0], sizes = [1, 128], strides = [1, 1]} : vector<288x128xf32> to vector<1x128xf32>
    %47 = vector.extract_strided_slice %27 {offsets = [0, 0], sizes = [287, 128], strides = [1, 1]} : vector<288x128xf32> to vector<287x128xf32>
    %48 = tpu.concatenate %46, %47 in 0 : vector<1x128xf32>, vector<287x128xf32> -> vector<288x128xf32>
    %cst_20 = arith.constant 0.000000e+00 : f32
    %49 = vector.broadcast %cst_20 : f32 to vector<288x128xf32>
    %50 = arith.select %45, %48, %49 : vector<288x128xi1>, vector<288x128xf32>
    %c15_i32 = arith.constant 15 : i32
    %51 = vector.broadcast %c15_i32 : i32 to vector<288x128xi32>
    %52 = arith.cmpi ne, %43, %51 : vector<288x128xi32>
    %53 = vector.extract_strided_slice %27 {offsets = [1, 0], sizes = [287, 128], strides = [1, 1]} : vector<288x128xf32> to vector<287x128xf32>
    %54 = vector.extract_strided_slice %27 {offsets = [287, 0], sizes = [1, 128], strides = [1, 1]} : vector<288x128xf32> to vector<1x128xf32>
    %55 = tpu.concatenate %53, %54 in 0 : vector<287x128xf32>, vector<1x128xf32> -> vector<288x128xf32>
    %cst_21 = arith.constant 0.000000e+00 : f32
    %56 = vector.broadcast %cst_21 : f32 to vector<288x128xf32>
    %57 = arith.select %52, %55, %56 : vector<288x128xi1>, vector<288x128xf32>
    %58 = arith.truncf %27 : vector<288x128xf32> to vector<288x128xbf16>
    %59 = arith.truncf %50 : vector<288x128xf32> to vector<288x128xbf16>
    %60 = arith.truncf %57 : vector<288x128xf32> to vector<288x128xbf16>
    %cst_22 = arith.constant 0.000000e+00 : f32
    %61 = vector.broadcast %cst_22 : f32 to vector<256x128xf32>
    %62 = vector.extract_strided_slice %59 {offsets = [0, 0], sizes = [256, 128], strides = [1, 1]} : vector<288x128xbf16> to vector<256x128xbf16>
    %c0_23 = arith.constant 0 : index
    %c0_24 = arith.constant 0 : index
    %c0_25 = arith.constant 0 : index
    %63 = vector.load %arg7[%c0_23, %c0_24, %c0_25] : memref<9x128x128xbf16, #tpu.memory_space<vmem>>, vector<1x128x128xbf16>
    %64 = vector.shape_cast %63 : vector<1x128x128xbf16> to vector<128x128xbf16>
    %cst_26 = arith.constant dense<0.000000e+00> : vector<256x128xf32>
    %65 = tpu.matmul %62, %64, %cst_26 {dimension_numbers = #tpu.dot_dimension_numbers<[1], [0], [0], [1], [0, 0, 1, 1], [], []>} : vector<256x128xbf16>, vector<128x128xbf16>, vector<256x128xf32> -> vector<256x128xf32>
    %66 = arith.addf %61, %65 : vector<256x128xf32>
    %67 = vector.extract_strided_slice %58 {offsets = [0, 0], sizes = [256, 128], strides = [1, 1]} : vector<288x128xbf16> to vector<256x128xbf16>
    %c1 = arith.constant 1 : index
    %c0_27 = arith.constant 0 : index
    %c0_28 = arith.constant 0 : index
    %68 = vector.load %arg7[%c1, %c0_27, %c0_28] : memref<9x128x128xbf16, #tpu.memory_space<vmem>>, vector<1x128x128xbf16>
    %69 = vector.shape_cast %68 : vector<1x128x128xbf16> to vector<128x128xbf16>
    %cst_29 = arith.constant dense<0.000000e+00> : vector<256x128xf32>
    %70 = tpu.matmul %67, %69, %cst_29 {dimension_numbers = #tpu.dot_dimension_numbers<[1], [0], [0], [1], [0, 0, 1, 1], [], []>} : vector<256x128xbf16>, vector<128x128xbf16>, vector<256x128xf32> -> vector<256x128xf32>
    %71 = arith.addf %66, %70 : vector<256x128xf32>
    %72 = vector.extract_strided_slice %60 {offsets = [0, 0], sizes = [256, 128], strides = [1, 1]} : vector<288x128xbf16> to vector<256x128xbf16>
    %c2 = arith.constant 2 : index
    %c0_30 = arith.constant 0 : index
    %c0_31 = arith.constant 0 : index
    %73 = vector.load %arg7[%c2, %c0_30, %c0_31] : memref<9x128x128xbf16, #tpu.memory_space<vmem>>, vector<1x128x128xbf16>
    %74 = vector.shape_cast %73 : vector<1x128x128xbf16> to vector<128x128xbf16>
    %cst_32 = arith.constant dense<0.000000e+00> : vector<256x128xf32>
    %75 = tpu.matmul %72, %74, %cst_32 {dimension_numbers = #tpu.dot_dimension_numbers<[1], [0], [0], [1], [0, 0, 1, 1], [], []>} : vector<256x128xbf16>, vector<128x128xbf16>, vector<256x128xf32> -> vector<256x128xf32>
    %76 = arith.addf %71, %75 : vector<256x128xf32>
    %77 = vector.extract_strided_slice %59 {offsets = [16, 0], sizes = [256, 128], strides = [1, 1]} : vector<288x128xbf16> to vector<256x128xbf16>
    %c3 = arith.constant 3 : index
    %c0_33 = arith.constant 0 : index
    %c0_34 = arith.constant 0 : index
    %78 = vector.load %arg7[%c3, %c0_33, %c0_34] : memref<9x128x128xbf16, #tpu.memory_space<vmem>>, vector<1x128x128xbf16>
    %79 = vector.shape_cast %78 : vector<1x128x128xbf16> to vector<128x128xbf16>
    %cst_35 = arith.constant dense<0.000000e+00> : vector<256x128xf32>
    %80 = tpu.matmul %77, %79, %cst_35 {dimension_numbers = #tpu.dot_dimension_numbers<[1], [0], [0], [1], [0, 0, 1, 1], [], []>} : vector<256x128xbf16>, vector<128x128xbf16>, vector<256x128xf32> -> vector<256x128xf32>
    %81 = arith.addf %76, %80 : vector<256x128xf32>
    %82 = vector.extract_strided_slice %58 {offsets = [16, 0], sizes = [256, 128], strides = [1, 1]} : vector<288x128xbf16> to vector<256x128xbf16>
    %c4 = arith.constant 4 : index
    %c0_36 = arith.constant 0 : index
    %c0_37 = arith.constant 0 : index
    %83 = vector.load %arg7[%c4, %c0_36, %c0_37] : memref<9x128x128xbf16, #tpu.memory_space<vmem>>, vector<1x128x128xbf16>
    %84 = vector.shape_cast %83 : vector<1x128x128xbf16> to vector<128x128xbf16>
    %cst_38 = arith.constant dense<0.000000e+00> : vector<256x128xf32>
    %85 = tpu.matmul %82, %84, %cst_38 {dimension_numbers = #tpu.dot_dimension_numbers<[1], [0], [0], [1], [0, 0, 1, 1], [], []>} : vector<256x128xbf16>, vector<128x128xbf16>, vector<256x128xf32> -> vector<256x128xf32>
    %86 = arith.addf %81, %85 : vector<256x128xf32>
    %87 = vector.extract_strided_slice %60 {offsets = [16, 0], sizes = [256, 128], strides = [1, 1]} : vector<288x128xbf16> to vector<256x128xbf16>
    %c5 = arith.constant 5 : index
    %c0_39 = arith.constant 0 : index
    %c0_40 = arith.constant 0 : index
    %88 = vector.load %arg7[%c5, %c0_39, %c0_40] : memref<9x128x128xbf16, #tpu.memory_space<vmem>>, vector<1x128x128xbf16>
    %89 = vector.shape_cast %88 : vector<1x128x128xbf16> to vector<128x128xbf16>
    %cst_41 = arith.constant dense<0.000000e+00> : vector<256x128xf32>
    %90 = tpu.matmul %87, %89, %cst_41 {dimension_numbers = #tpu.dot_dimension_numbers<[1], [0], [0], [1], [0, 0, 1, 1], [], []>} : vector<256x128xbf16>, vector<128x128xbf16>, vector<256x128xf32> -> vector<256x128xf32>
    %91 = arith.addf %86, %90 : vector<256x128xf32>
    %92 = vector.extract_strided_slice %59 {offsets = [32, 0], sizes = [256, 128], strides = [1, 1]} : vector<288x128xbf16> to vector<256x128xbf16>
    %c6 = arith.constant 6 : index
    %c0_42 = arith.constant 0 : index
    %c0_43 = arith.constant 0 : index
    %93 = vector.load %arg7[%c6, %c0_42, %c0_43] : memref<9x128x128xbf16, #tpu.memory_space<vmem>>, vector<1x128x128xbf16>
    %94 = vector.shape_cast %93 : vector<1x128x128xbf16> to vector<128x128xbf16>
    %cst_44 = arith.constant dense<0.000000e+00> : vector<256x128xf32>
    %95 = tpu.matmul %92, %94, %cst_44 {dimension_numbers = #tpu.dot_dimension_numbers<[1], [0], [0], [1], [0, 0, 1, 1], [], []>} : vector<256x128xbf16>, vector<128x128xbf16>, vector<256x128xf32> -> vector<256x128xf32>
    %96 = arith.addf %91, %95 : vector<256x128xf32>
    %97 = vector.extract_strided_slice %58 {offsets = [32, 0], sizes = [256, 128], strides = [1, 1]} : vector<288x128xbf16> to vector<256x128xbf16>
    %c7 = arith.constant 7 : index
    %c0_45 = arith.constant 0 : index
    %c0_46 = arith.constant 0 : index
    %98 = vector.load %arg7[%c7, %c0_45, %c0_46] : memref<9x128x128xbf16, #tpu.memory_space<vmem>>, vector<1x128x128xbf16>
    %99 = vector.shape_cast %98 : vector<1x128x128xbf16> to vector<128x128xbf16>
    %cst_47 = arith.constant dense<0.000000e+00> : vector<256x128xf32>
    %100 = tpu.matmul %97, %99, %cst_47 {dimension_numbers = #tpu.dot_dimension_numbers<[1], [0], [0], [1], [0, 0, 1, 1], [], []>} : vector<256x128xbf16>, vector<128x128xbf16>, vector<256x128xf32> -> vector<256x128xf32>
    %101 = arith.addf %96, %100 : vector<256x128xf32>
    %102 = vector.extract_strided_slice %60 {offsets = [32, 0], sizes = [256, 128], strides = [1, 1]} : vector<288x128xbf16> to vector<256x128xbf16>
    %c8 = arith.constant 8 : index
    %c0_48 = arith.constant 0 : index
    %c0_49 = arith.constant 0 : index
    %103 = vector.load %arg7[%c8, %c0_48, %c0_49] : memref<9x128x128xbf16, #tpu.memory_space<vmem>>, vector<1x128x128xbf16>
    %104 = vector.shape_cast %103 : vector<1x128x128xbf16> to vector<128x128xbf16>
    %cst_50 = arith.constant dense<0.000000e+00> : vector<256x128xf32>
    %105 = tpu.matmul %102, %104, %cst_50 {dimension_numbers = #tpu.dot_dimension_numbers<[1], [0], [0], [1], [0, 0, 1, 1], [], []>} : vector<256x128xbf16>, vector<128x128xbf16>, vector<256x128xf32> -> vector<256x128xf32>
    %106 = arith.addf %101, %105 : vector<256x128xf32>
    %c0_51 = arith.constant 0 : index
    %c0_52 = arith.constant 0 : index
    %107 = vector.load %arg8[%c0_51, %c0_52] : memref<1x128xf32, #tpu.memory_space<vmem>>, vector<1x128xf32>
    %108 = vector.broadcast %107 : vector<1x128xf32> to vector<256x128xf32>
    %109 = arith.addf %106, %108 : vector<256x128xf32>
    %110 = arith.truncf %109 : vector<256x128xf32> to vector<256x128xbf16>
    %c0_53 = arith.constant 0 : index
    %c0_54 = arith.constant 0 : index
    %c0_55 = arith.constant 0 : index
    %111 = vector.load %arg9[%c0_53, %c0_54, %c0_55] : memref<1x256x128xbf16, #tpu.memory_space<vmem>>, vector<1x256x128xbf16>
    %112 = vector.shape_cast %111 : vector<1x256x128xbf16> to vector<256x128xbf16>
    %113 = vector.shape_cast %110 : vector<256x128xbf16> to vector<1x256x128xbf16>
    tpu.vector_store %arg9[%c0_53, %c0_54, %c0_55], %113 {strides = array<i32>} : memref<1x256x128xbf16, #tpu.memory_space<vmem>>, vector<1x256x128xbf16>,
    %cst_56 = arith.constant dense<0.000000e+00> : vector<128xf32>
    %114 = vector.multi_reduction <add>, %109, %cst_56 [0] : vector<256x128xf32> to vector<128xf32>
    %115 = vector.shape_cast %114 : vector<128xf32> to vector<1x128xf32>
    %c0_57 = arith.constant 0 : index
    %c0_58 = arith.constant 0 : index
    %c0_59 = arith.constant 0 : index
    %116 = vector.load %arg10[%c0_57, %c0_58, %c0_59] : memref<1x1x128xf32, #tpu.memory_space<vmem>>, vector<1x1x128xf32>
    %117 = vector.shape_cast %116 : vector<1x1x128xf32> to vector<1x128xf32>
    %118 = vector.shape_cast %115 : vector<1x128xf32> to vector<1x1x128xf32>
    tpu.vector_store %arg10[%c0_57, %c0_58, %c0_59], %118 {strides = array<i32>} : memref<1x1x128xf32, #tpu.memory_space<vmem>>, vector<1x1x128xf32>,
    %119 = arith.mulf %109, %109 : vector<256x128xf32>
    %cst_60 = arith.constant dense<0.000000e+00> : vector<128xf32>
    %120 = vector.multi_reduction <add>, %119, %cst_60 [0] : vector<256x128xf32> to vector<128xf32>
    %121 = vector.shape_cast %120 : vector<128xf32> to vector<1x128xf32>
    %c0_61 = arith.constant 0 : index
    %c0_62 = arith.constant 0 : index
    %c0_63 = arith.constant 0 : index
    %122 = vector.load %arg11[%c0_61, %c0_62, %c0_63] : memref<1x1x128xf32, #tpu.memory_space<vmem>>, vector<1x1x128xf32>
    %123 = vector.shape_cast %122 : vector<1x1x128xf32> to vector<1x128xf32>
    %124 = vector.shape_cast %121 : vector<1x128xf32> to vector<1x1x128xf32>
    tpu.vector_store %arg11[%c0_61, %c0_62, %c0_63], %124 {strides = array<i32>} : memref<1x1x128xf32, #tpu.memory_space<vmem>>, vector<1x1x128xf32>,
    return
  }
  func.func @transform_0(%arg0: i32, %arg1: i32) -> (i32, i32, i32) {
    %c16_i32 = arith.constant 16 : i32
    %0 = arith.muli %arg1, %c16_i32 : i32
    %c1_i32 = arith.constant 1 : i32
    %1 = arith.subi %0, %c1_i32 : i32
    %c0_i32 = arith.constant 0 : i32
    %2 = arith.maxsi %1, %c0_i32 : i32
    %c0_i32_0 = arith.constant 0 : i32
    %c0_i32_1 = arith.constant 0 : i32
    return %arg0, %2, %c0_i32_0 : i32, i32, i32
  }
  func.func @transform_1(%arg0: i32, %arg1: i32) -> (i32, i32, i32) {
    %c0_i32 = arith.constant 0 : i32
    %c0_i32_0 = arith.constant 0 : i32
    return %arg0, %arg1, %c0_i32 : i32, i32, i32
  }
  func.func @transform_2(%arg0: i32, %arg1: i32) -> (i32, i32, i32) {
    %c1_i32 = arith.constant 1 : i32
    %0 = arith.addi %arg1, %c1_i32 : i32
    %c16_i32 = arith.constant 16 : i32
    %1 = arith.muli %0, %c16_i32 : i32
    %c15_i32 = arith.constant 15 : i32
    %2 = arith.minsi %1, %c15_i32 : i32
    %c0_i32 = arith.constant 0 : i32
    %c0_i32_0 = arith.constant 0 : i32
    return %arg0, %2, %c0_i32 : i32, i32, i32
  }
  func.func @transform_3(%arg0: i32, %arg1: i32) -> (i32, i32) {
    %c0_i32 = arith.constant 0 : i32
    %c0_i32_0 = arith.constant 0 : i32
    %c0_i32_1 = arith.constant 0 : i32
    return %c0_i32, %c0_i32_0 : i32, i32
  }
  func.func @transform_4(%arg0: i32, %arg1: i32) -> (i32, i32) {
    %c0_i32 = arith.constant 0 : i32
    %c0_i32_0 = arith.constant 0 : i32
    %c0_i32_1 = arith.constant 0 : i32
    return %c0_i32, %c0_i32_0 : i32, i32
  }
  func.func @transform_5(%arg0: i32, %arg1: i32) -> (i32, i32, i32) {
    %c0_i32 = arith.constant 0 : i32
    %c0_i32_0 = arith.constant 0 : i32
    %c0_i32_1 = arith.constant 0 : i32
    %c0_i32_2 = arith.constant 0 : i32
    return %c0_i32, %c0_i32_0, %c0_i32_1 : i32, i32, i32
  }
  func.func @transform_6(%arg0: i32, %arg1: i32) -> (i32, i32) {
    %c0_i32 = arith.constant 0 : i32
    %c0_i32_0 = arith.constant 0 : i32
    %c0_i32_1 = arith.constant 0 : i32
    return %c0_i32, %c0_i32_0 : i32, i32
  }
  func.func @transform_7(%arg0: i32, %arg1: i32) -> (i32, i32, i32) {
    %c0_i32 = arith.constant 0 : i32
    %c0_i32_0 = arith.constant 0 : i32
    return %arg0, %arg1, %c0_i32 : i32, i32, i32
  }
  func.func @transform_8(%arg0: i32, %arg1: i32) -> (i32, i32, i32) {
    %c1_i32 = arith.constant 1 : i32
    %0 = arith.muli %arg0, %c1_i32 : i32
    %1 = arith.addi %0, %arg1 : i32
    %c0_i32 = arith.constant 0 : i32
    %c0_i32_0 = arith.constant 0 : i32
    %c0_i32_1 = arith.constant 0 : i32
    return %1, %c0_i32, %c0_i32_0 : i32, i32, i32
  }
  func.func @transform_9(%arg0: i32, %arg1: i32) -> (i32, i32, i32) {
    %c1_i32 = arith.constant 1 : i32
    %0 = arith.muli %arg0, %c1_i32 : i32
    %1 = arith.addi %0, %arg1 : i32
    %c0_i32 = arith.constant 0 : i32
    %c0_i32_0 = arith.constant 0 : i32
    %c0_i32_1 = arith.constant 0 : i32
    return %1, %c0_i32, %c0_i32_0 : i32, i32, i32
  }
}

module attributes {stable_mosaic.version = 11 : i64} {
  func.func @bn_relu_nchw_kernel(%arg0: i32, %arg1: i32, %arg2: memref<1x256x128xbf16, #tpu.memory_space<vmem>>, %arg3: memref<1x128xf32, #tpu.memory_space<vmem>>, %arg4: memref<1x128xf32, #tpu.memory_space<vmem>>, %arg5: memref<1x8x256xf32, #tpu.memory_space<vmem>>) attributes {dimension_semantics = [#tpu.dimension_semantics<parallel>, #tpu.dimension_semantics<parallel>], iteration_bounds = array<i64: 2, 1>, scalar_prefetch = 0 : i64, scratch_operands = 0 : i64, tpu.core_type = #tpu.core_type<tc>, window_params = [{transform_indices = @transform_0, window_bounds = array<i64: 1, 256, 128>}, {pipeline_mode = #tpu.pipeline_mode<synchronous>, transform_indices = @transform_1, window_bounds = array<i64: 1, 128>}, {pipeline_mode = #tpu.pipeline_mode<synchronous>, transform_indices = @transform_2, window_bounds = array<i64: 1, 128>}, {transform_indices = @transform_3, window_bounds = array<i64: 1, 8, 256>}]} {
    %c0 = arith.constant 0 : index
    %c0_0 = arith.constant 0 : index
    %c0_1 = arith.constant 0 : index
    %0 = vector.load %arg2[%c0, %c0_0, %c0_1] : memref<1x256x128xbf16, #tpu.memory_space<vmem>>, vector<1x256x128xbf16>
    %1 = vector.shape_cast %0 : vector<1x256x128xbf16> to vector<256x128xbf16>
    %2 = arith.extf %1 : vector<256x128xbf16> to vector<256x128xf32>
    %c0_2 = arith.constant 0 : index
    %c0_3 = arith.constant 0 : index
    %3 = vector.load %arg3[%c0_2, %c0_3] : memref<1x128xf32, #tpu.memory_space<vmem>>, vector<1x128xf32>
    %4 = vector.broadcast %3 : vector<1x128xf32> to vector<256x128xf32>
    %5 = arith.mulf %2, %4 : vector<256x128xf32>
    %c0_4 = arith.constant 0 : index
    %c0_5 = arith.constant 0 : index
    %6 = vector.load %arg4[%c0_4, %c0_5] : memref<1x128xf32, #tpu.memory_space<vmem>>, vector<1x128xf32>
    %7 = vector.broadcast %6 : vector<1x128xf32> to vector<256x128xf32>
    %8 = arith.addf %5, %7 : vector<256x128xf32>
    %cst = arith.constant 0.000000e+00 : f32
    %9 = vector.broadcast %cst : f32 to vector<256x128xf32>
    %10 = arith.maximumf %8, %9 : vector<256x128xf32>
    %11 = tpu.transpose %10, [1, 0] : vector<256x128xf32> -> vector<128x256xf32>
    %12 = vector.extract_strided_slice %11 {offsets = [0, 0], sizes = [8, 256], strides = [1, 1]} : vector<128x256xf32> to vector<8x256xf32>
    %c0_6 = arith.constant 0 : index
    %c0_7 = arith.constant 0 : index
    %c0_8 = arith.constant 0 : index
    %13 = vector.load %arg5[%c0_6, %c0_7, %c0_8] : memref<1x8x256xf32, #tpu.memory_space<vmem>>, vector<1x8x256xf32>
    %14 = vector.shape_cast %13 : vector<1x8x256xf32> to vector<8x256xf32>
    %15 = vector.shape_cast %12 : vector<8x256xf32> to vector<1x8x256xf32>
    tpu.vector_store %arg5[%c0_6, %c0_7, %c0_8], %15 {strides = array<i32>} : memref<1x8x256xf32, #tpu.memory_space<vmem>>, vector<1x8x256xf32>,
    return
  }
  func.func @transform_0(%arg0: i32, %arg1: i32) -> (i32, i32, i32) {
    %c0_i32 = arith.constant 0 : i32
    %c0_i32_0 = arith.constant 0 : i32
    return %arg0, %arg1, %c0_i32 : i32, i32, i32
  }
  func.func @transform_1(%arg0: i32, %arg1: i32) -> (i32, i32) {
    %c0_i32 = arith.constant 0 : i32
    %c0_i32_0 = arith.constant 0 : i32
    %c0_i32_1 = arith.constant 0 : i32
    return %c0_i32, %c0_i32_0 : i32, i32
  }
  func.func @transform_2(%arg0: i32, %arg1: i32) -> (i32, i32) {
    %c0_i32 = arith.constant 0 : i32
    %c0_i32_0 = arith.constant 0 : i32
    %c0_i32_1 = arith.constant 0 : i32
    return %c0_i32, %c0_i32_0 : i32, i32
  }
  func.func @transform_3(%arg0: i32, %arg1: i32) -> (i32, i32, i32) {
    %c0_i32 = arith.constant 0 : i32
    %c0_i32_0 = arith.constant 0 : i32
    return %arg0, %c0_i32, %arg1 : i32, i32, i32
  }
}

</mosaic_0001>

<llo_original>
// kernel: conv_block_forward.5
$region0: #{conv_block_forward.5}
  #allocation0 [shape = 'u32[]', space=smem, size = 0x4, offset = 0x4, fixed_abs, tag = 'smem constant byte address 0x4 - core index']
  #allocation1 [shape = 'u32[72,128]{1,0:T(1,128)}', space=vmem, size = 0x9000, scoped, tag = 'internal scratch']
  %s0 = inlined_call_operand.vmem [shape: bf16[2,256,128], index: 0, kind: input, shape index: {}]
  %s1 = inlined_call_operand.vmem [shape: f32[1,128], index: 1, kind: input, shape index: {}]
  %s2 = inlined_call_operand.vmem [shape: f32[1,128], index: 2, kind: input, shape index: {}]
  %s3 = inlined_call_operand.vmem [shape: f32[2,8,256], index: 3, kind: output, shape index: {}]
  %s4 = sld [smem:[#allocation0]]
  $region45: #{conv_block_forward.5} parent=0
    _
  %s6 = ssub.s32 1, %s4
  %s7 = scalar_select 0, %s6, %s4
  loop: start=0, step=1, limit=4
  $region2: #{conv_block_forward.5} parent=0 // loop_pre_header
    _
  $region3: #{conv_block_forward.5} parent=0 // loop_header
    %s9 = sphi 0, %s13
    %p10 = scmp.ge.s32.totalorder %s9, 4
    %s16 = sphi 0, %s28
    %s17 = sphi 0, %s24
    %s18 = sphi 0, %s16
    %s19 = sphi 0, %s17
    %s20 = sphi 0, %s18
    %s21 = sphi 0, %s19
    %s33 = sphi 0, %s35
    %s36 = sphi 0, %s33
    %s37 = sphi 0, %s36
    %s53 = sphi 0, %s37
    %s57 = sphi 0, %s57
    %s59 = sphi 0, %s57
    %s60 = sphi 0, %s59
    %s74 = sphi 0, %s60
    %s78 = sphi 0, %s78
    %s80 = sphi 0, %s78
    %s81 = sphi 0, %s80
    %s95 = sphi 0, %s81
    %s103 = sphi 0, %s105
    %s106 = sphi 0, %s103
    %s107 = sphi 0, %s106
    %s123 = sphi 0, %s107
  $region4: #{conv_block_forward.5} parent=0 // loop_header_branch
    %12 = sbr.rel (%p10) target = $region8
  $region5: #{conv_block_forward.5} parent=0 // loop_body
    %s14 = ssub.s32 %s9, 1
    %s15 = ssub.s32 %s9, 2
    %s22 = sadd.s32 1, %s17
    %p23 = scmp.ge.s32.totalorder %s22, 1
    %s24 = scalar_select %p23, 0, %s22
    %s25 = sadd.s32 1, %s16
    %s26 = scalar_select %p23, %s25, %s16
    %p27 = scmp.ge.s32.totalorder %s26, 2
    %s28 = scalar_select %p27, 0, %s26
    %s29 = ssub.s32 %s16, %s28
    %s30 = ssub.s32 %s17, %s24
    %s31 = sor.u32 %s29, %s30
    %p32 = scmp.eq.s32.totalorder %s31, 0
    %s34 = sadd.s32 %s33, 1
    %s35 = scalar_select %p32, %s33, %s34
    %p38 = pneg %p32
    %p39 = scmp.eq.s32.totalorder %s9, 1
    %p40 = por %p38, %p39
    %p41 = scmp.ne.s32.totalorder %s33, %s36
    %p42 = scmp.eq.s32.totalorder %s9, 0
    %p43 = por %p41, %p42
    %p44 = scmp.ne.s32.totalorder %s33, %s36
    %p45 = scmp.eq.s32.totalorder %s14, 1
    %p46 = por %p44, %p45
    %p47 = scmp.ne.s32.totalorder %s36, %s37
    %p48 = scmp.eq.s32.totalorder %s14, 0
    %p49 = por %p47, %p48
    %p50 = scmp.ne.s32.totalorder %s36, %s37
    %p51 = scmp.eq.s32.totalorder %s15, 1
    %p52 = por %p50, %p51
    %p54 = scmp.ne.s32.totalorder %s37, %s53
    %p55 = scmp.eq.s32.totalorder %s15, 0
    %p56 = por %p54, %p55
    %s58 = sadd.s32 %s57, 1
    %p61 = scmp.eq.s32.totalorder %s9, 1
    %p62 = scmp.ne.s32.totalorder %s57, %s59
    %p63 = scmp.eq.s32.totalorder %s9, 0
    %p64 = por %p62, %p63
    %p65 = scmp.ne.s32.totalorder %s57, %s59
    %p66 = scmp.eq.s32.totalorder %s14, 1
    %p67 = por %p65, %p66
    %p68 = scmp.ne.s32.totalorder %s59, %s60
    %p69 = scmp.eq.s32.totalorder %s14, 0
    %p70 = por %p68, %p69
    %p71 = scmp.ne.s32.totalorder %s59, %s60
    %p72 = scmp.eq.s32.totalorder %s15, 1
    %p73 = por %p71, %p72
    %p75 = scmp.ne.s32.totalorder %s60, %s74
    %p76 = scmp.eq.s32.totalorder %s15, 0
    %p77 = por %p75, %p76
    %s79 = sadd.s32 %s78, 1
    %p82 = scmp.eq.s32.totalorder %s9, 1
    %p83 = scmp.ne.s32.totalorder %s78, %s80
    %p84 = scmp.eq.s32.totalorder %s9, 0
    %p85 = por %p83, %p84
    %p86 = scmp.ne.s32.totalorder %s78, %s80
    %p87 = scmp.eq.s32.totalorder %s14, 1
    %p88 = por %p86, %p87
    %p89 = scmp.ne.s32.totalorder %s80, %s81
    %p90 = scmp.eq.s32.totalorder %s14, 0
    %p91 = por %p89, %p90
    %p92 = scmp.ne.s32.totalorder %s80, %s81
    %p93 = scmp.eq.s32.totalorder %s15, 1
    %p94 = por %p92, %p93
    %p96 = scmp.ne.s32.totalorder %s81, %s95
    %p97 = scmp.eq.s32.totalorder %s15, 0
    %p98 = por %p96, %p97
    %s99 = ssub.s32 %s16, %s28
    %s100 = ssub.s32 %s17, %s24
    %s101 = sor.u32 %s99, %s100
    %p102 = scmp.eq.s32.totalorder %s101, 0
    %s104 = sadd.s32 %s103, 1
    %s105 = scalar_select %p102, %s103, %s104
    %p108 = pneg %p102
    %p109 = scmp.eq.s32.totalorder %s9, 1
    %p110 = por %p108, %p109
    %p111 = scmp.ne.s32.totalorder %s103, %s106
    %p112 = scmp.eq.s32.totalorder %s9, 0
    %p113 = por %p111, %p112
    %p114 = scmp.ne.s32.totalorder %s103, %s106
    %p115 = scmp.eq.s32.totalorder %s14, 1
    %p116 = por %p114, %p115
    %p117 = scmp.ne.s32.totalorder %s106, %s107
    %p118 = scmp.eq.s32.totalorder %s14, 0
    %p119 = por %p117, %p118
    %p120 = scmp.ne.s32.totalorder %s106, %s107
    %p121 = scmp.eq.s32.totalorder %s15, 1
    %p122 = por %p120, %p121
    %p124 = scmp.ne.s32.totalorder %s107, %s123
    %p125 = scmp.eq.s32.totalorder %s15, 0
    %p126 = por %p124, %p125
    %p127 = scmp.le.s32.totalorder 1, %s9
    %p128 = scmp.lt.s32.totalorder %s9, 3
    %p129 = pnand %p127, %p128
    %p130 = pneg %p129
    // Predicated region
    $region9: #{conv_block_forward.5} parent=5 // pred_check
      _
    $region10: #{conv_block_forward.5} parent=5 // pred_check_branch
      %132 = sbr.rel (%p129) target = $region12
    $region11: #{conv_block_forward.5} parent=5 // pred_region
      %s133 = ssub.s32 %s9, 1
      // Predicated region
      $region13: #{conv_block_forward.5} parent=11 // pred_check
        %p134 = pneg %p70
      $region14: #{conv_block_forward.5} parent=11 // pred_check_branch
        %136 = sbr.rel (%p134) target = $region16
      $region15: #{conv_block_forward.5} parent=11 // pred_region
        _
      $region16: #{conv_block_forward.5} parent=11 // pred_fallthru
        _
      // Predicated region
      $region17: #{conv_block_forward.5} parent=11 // pred_check
        %p137 = pneg %p91
      $region18: #{conv_block_forward.5} parent=11 // pred_check_branch
        %139 = sbr.rel (%p137) target = $region20
      $region19: #{conv_block_forward.5} parent=11 // pred_region
        _
      $region20: #{conv_block_forward.5} parent=11 // pred_fallthru
        _
    $region12: #{conv_block_forward.5} parent=5 // pred_fallthru
      _
    %p140 = scmp.lt.s32.totalorder %s9, 2
    // Predicated region
    $region21: #{conv_block_forward.5} parent=5 // pred_check
      %p141 = pneg %p140
    $region22: #{conv_block_forward.5} parent=5 // pred_check_branch
      %143 = sbr.rel (%p141) target = $region24
    $region23: #{conv_block_forward.5} parent=5 // pred_region
      // Predicated region
      $region25: #{conv_block_forward.5} parent=23 // pred_check
        %p144 = pneg %p43
      $region26: #{conv_block_forward.5} parent=23 // pred_check_branch
        %146 = sbr.rel (%p144) target = $region28
      $region27: #{conv_block_forward.5} parent=23 // pred_region
        %s147 = smul.u32 32, %s17
        %p148 = scmp.lt.s32.totalorder %s16, 1
        %s149 = scalar_select %p148, %s16, 1
        %p150 = scmp.lt.s32.totalorder %s147, 31
        %s151 = scalar_select %p150, %s147, 31
        %s152 = smul.addr %s149, 32
        %s153 = sadd.s32 %s151, %s152
        %s154 = smul.addr %s153, 4
        %s155 = scalar_lea.vmem %s0, %s154
        %s156 = smul.u32 32, %s17
      $region28: #{conv_block_forward.5} parent=23 // pred_fallthru
        _
    $region24: #{conv_block_forward.5} parent=5 // pred_fallthru
      _
    %p157 = scmp.le.s32.totalorder 1, %s9
    %p158 = scmp.lt.s32.totalorder %s9, 3
    %p159 = pnand %p157, %p158
    %p160 = pneg %p159
    // Predicated region
    $region29: #{conv_block_forward.5} parent=5 // pred_check
      _
    $region30: #{conv_block_forward.5} parent=5 // pred_check_branch
      %162 = sbr.rel (%p159) target = $region32
    $region31: #{conv_block_forward.5} parent=5 // pred_region
      %s163 = ssub.s32 %s9, 1
      %s164 = smul.u32 32, %s19
      %p165 = scmp.lt.s32.totalorder %s18, 1
      %s166 = scalar_select %p165, %s18, 1
      %p167 = scmp.lt.s32.totalorder %s164, 31
      %s168 = scalar_select %p167, %s164, 31
      %s169 = smul.addr %s166, 32
      %s170 = sadd.s32 %s168, %s169
      %s171 = smul.addr %s170, 4
      %s172 = scalar_lea.vmem %s0, %s171
      %p173 = pneg %p49
      %p174 = pneg %p46
      %p175 = pneg %p70
      %p176 = pneg %p67
      %p177 = pneg %p91
      %p178 = pneg %p88
      %p179 = pneg %p119
      %p180 = pneg %p116
      %s181 = smul.u32 2, %s19
      %p182 = scmp.lt.s32.totalorder %s18, 1
      %s183 = scalar_select %p182, %s18, 1
      %p184 = scmp.lt.s32.totalorder %s181, 1
      %s185 = scalar_select %p184, %s181, 1
      %s186 = smul.addr %s183, 2
      %s187 = sadd.s32 %s185, %s186
      %s188 = smul.addr %s187, 8
      %s189 = scalar_lea.vmem %s3, %s188
      %s190 = smul.u32 32, %s19
      %p191 = scmp.lt.s32.totalorder %s18, 1
      %s192 = scalar_select %p191, %s18, 1
      %p193 = scmp.lt.s32.totalorder %s190, 31
      %s194 = scalar_select %p193, %s190, 31
      %s195 = smul.addr %s192, 32
      %s196 = sadd.s32 %s194, %s195
      %s197 = smul.addr %s196, 4
      %s198 = scalar_lea.vmem %s0, %s197
      %s199 = smul.u32 32, %s19
      %s200 = smul.u32 2, %s19
      %p201 = scmp.lt.s32.totalorder %s18, 1
      %s202 = scalar_select %p201, %s18, 1
      %p203 = scmp.lt.s32.totalorder %s200, 1
      %s204 = scalar_select %p203, %s200, 1
      %s205 = smul.addr %s202, 2
      %s206 = sadd.s32 %s204, %s205
      %s207 = smul.addr %s206, 8
      %s208 = scalar_lea.vmem %s3, %s207
      %s209 = smul.u32 2, %s19
      %v210 = vld [vmem:[%s198] sm:$0xf]
      %v211 = vld [vmem:[%s198 + $0x4] sm:$0xf]
      %v212 = vld [vmem:[%s198 + $0x8] sm:$0xf]
      %v213 = vld [vmem:[%s198 + $0xc] sm:$0xf]
      %v214 = vld [vmem:[%s198 + $0x10] sm:$0xf]
      %v215 = vld [vmem:[%s198 + $0x14] sm:$0xf]
      %v216 = vld [vmem:[%s198 + $0x18] sm:$0xf]
      %v217 = vld [vmem:[%s198 + $0x1c] sm:$0xf]
      %v218 = vld [vmem:[%s198 + $0x20] sm:$0xf]
      %v219 = vld [vmem:[%s198 + $0x24] sm:$0xf]
      %v220 = vld [vmem:[%s198 + $0x28] sm:$0xf]
      %v221 = vld [vmem:[%s198 + $0x2c] sm:$0xf]
      %v222 = vld [vmem:[%s198 + $0x30] sm:$0xf]
      %v223 = vld [vmem:[%s198 + $0x34] sm:$0xf]
      %v224 = vld [vmem:[%s198 + $0x38] sm:$0xf]
      %v225 = vld [vmem:[%s198 + $0x3c] sm:$0xf]
      %v226 = vld [vmem:[%s198 + $0x40] sm:$0xf]
      %v227 = vld [vmem:[%s198 + $0x44] sm:$0xf]
      %v228 = vld [vmem:[%s198 + $0x48] sm:$0xf]
      %v229 = vld [vmem:[%s198 + $0x4c] sm:$0xf]
      %v230 = vld [vmem:[%s198 + $0x50] sm:$0xf]
      %v231 = vld [vmem:[%s198 + $0x54] sm:$0xf]
      %v232 = vld [vmem:[%s198 + $0x58] sm:$0xf]
      %v233 = vld [vmem:[%s198 + $0x5c] sm:$0xf]
      %v234 = vld [vmem:[%s198 + $0x60] sm:$0xf]
      %v235 = vld [vmem:[%s198 + $0x64] sm:$0xf]
      %v236 = vld [vmem:[%s198 + $0x68] sm:$0xf]
      %v237 = vld [vmem:[%s198 + $0x6c] sm:$0xf]
      %v238 = vld [vmem:[%s198 + $0x70] sm:$0xf]
      %v239 = vld [vmem:[%s198 + $0x74] sm:$0xf]
      %v240 = vld [vmem:[%s198 + $0x78] sm:$0xf]
      %v241 = vld [vmem:[%s198 + $0x7c] sm:$0xf]
      %v242 = vunpack.c.l.bf16 %v210
      %v243 = vunpack.c.l.bf16 %v211
      %v244 = vunpack.c.l.bf16 %v212
      %v245 = vunpack.c.l.bf16 %v213
      %v246 = vunpack.c.l.bf16 %v214
      %v247 = vunpack.c.l.bf16 %v215
      %v248 = vunpack.c.l.bf16 %v216
      %v249 = vunpack.c.l.bf16 %v217
      %v250 = vunpack.c.l.bf16 %v218
      %v251 = vunpack.c.l.bf16 %v219
      %v252 = vunpack.c.l.bf16 %v220
      %v253 = vunpack.c.l.bf16 %v221
      %v254 = vunpack.c.l.bf16 %v222
      %v255 = vunpack.c.l.bf16 %v223
      %v256 = vunpack.c.l.bf16 %v224
      %v257 = vunpack.c.l.bf16 %v225
      %v258 = vunpack.c.l.bf16 %v226
      %v259 = vunpack.c.l.bf16 %v227
      %v260 = vunpack.c.l.bf16 %v228
      %v261 = vunpack.c.l.bf16 %v229
      %v262 = vunpack.c.l.bf16 %v230
      %v263 = vunpack.c.l.bf16 %v231
      %v264 = vunpack.c.l.bf16 %v232
      %v265 = vunpack.c.l.bf16 %v233
      %v266 = vunpack.c.l.bf16 %v234
      %v267 = vunpack.c.l.bf16 %v235
      %v268 = vunpack.c.l.bf16 %v236
      %v269 = vunpack.c.l.bf16 %v237
      %v270 = vunpack.c.l.bf16 %v238
      %v271 = vunpack.c.l.bf16 %v239
      %v272 = vunpack.c.l.bf16 %v240
      %v273 = vunpack.c.l.bf16 %v241
      %v274 = vld [vmem:[%s1] sm:$0x1]
      %v276 = vperm.slane %v274, 0
      %v278 = vmul.f32 %v242, %v276
      %v279 = vmul.f32 %v243, %v276
      %v280 = vmul.f32 %v244, %v276
      %v281 = vmul.f32 %v245, %v276
      %v282 = vmul.f32 %v246, %v276
      %v283 = vmul.f32 %v247, %v276
      %v284 = vmul.f32 %v248, %v276
      %v285 = vmul.f32 %v249, %v276
      %v286 = vmul.f32 %v250, %v276
      %v287 = vmul.f32 %v251, %v276
      %v288 = vmul.f32 %v252, %v276
      %v289 = vmul.f32 %v253, %v276
      %v290 = vmul.f32 %v254, %v276
      %v291 = vmul.f32 %v255, %v276
      %v292 = vmul.f32 %v256, %v276
      %v293 = vmul.f32 %v257, %v276
      %v294 = vmul.f32 %v258, %v276
      %v295 = vmul.f32 %v259, %v276
      %v296 = vmul.f32 %v260, %v276
      %v297 = vmul.f32 %v261, %v276
      %v298 = vmul.f32 %v262, %v276
      %v299 = vmul.f32 %v263, %v276
      %v300 = vmul.f32 %v264, %v276
      %v301 = vmul.f32 %v265, %v276
      %v302 = vmul.f32 %v266, %v276
      %v303 = vmul.f32 %v267, %v276
      %v304 = vmul.f32 %v268, %v276
      %v305 = vmul.f32 %v269, %v276
      %v306 = vmul.f32 %v270, %v276
      %v307 = vmul.f32 %v271, %v276
      %v308 = vmul.f32 %v272, %v276
      %v309 = vmul.f32 %v273, %v276
      %v310 = vld [vmem:[%s2] sm:$0x1]
      %v312 = vperm.slane %v310, 0
      %v314 = vadd.f32 %v278, %v312
      %v315 = vadd.f32 %v279, %v312
      %v316 = vadd.f32 %v280, %v312
      %v317 = vadd.f32 %v281, %v312
      %v318 = vadd.f32 %v282, %v312
      %v319 = vadd.f32 %v283, %v312
      %v320 = vadd.f32 %v284, %v312
      %v321 = vadd.f32 %v285, %v312
      %v322 = vadd.f32 %v286, %v312
      %v323 = vadd.f32 %v287, %v312
      %v324 = vadd.f32 %v288, %v312
      %v325 = vadd.f32 %v289, %v312
      %v326 = vadd.f32 %v290, %v312
      %v327 = vadd.f32 %v291, %v312
      %v328 = vadd.f32 %v292, %v312
      %v329 = vadd.f32 %v293, %v312
      %v330 = vadd.f32 %v294, %v312
      %v331 = vadd.f32 %v295, %v312
      %v332 = vadd.f32 %v296, %v312
      %v333 = vadd.f32 %v297, %v312
      %v334 = vadd.f32 %v298, %v312
      %v335 = vadd.f32 %v299, %v312
      %v336 = vadd.f32 %v300, %v312
      %v337 = vadd.f32 %v301, %v312
      %v338 = vadd.f32 %v302, %v312
      %v339 = vadd.f32 %v303, %v312
      %v340 = vadd.f32 %v304, %v312
      %v341 = vadd.f32 %v305, %v312
      %v342 = vadd.f32 %v306, %v312
      %v343 = vadd.f32 %v307, %v312
      %v344 = vadd.f32 %v308, %v312
      %v345 = vadd.f32 %v309, %v312
      %v346 = vmax.f32 %v314, 0.0
      %v347 = vmax.f32 %v315, 0.0
      %v348 = vmax.f32 %v316, 0.0
      %v349 = vmax.f32 %v317, 0.0
      %v350 = vmax.f32 %v318, 0.0
      %v351 = vmax.f32 %v319, 0.0
      %v352 = vmax.f32 %v320, 0.0
      %v353 = vmax.f32 %v321, 0.0
      %v354 = vmax.f32 %v322, 0.0
      %v355 = vmax.f32 %v323, 0.0
      %v356 = vmax.f32 %v324, 0.0
      %v357 = vmax.f32 %v325, 0.0
      %v358 = vmax.f32 %v326, 0.0
      %v359 = vmax.f32 %v327, 0.0
      %v360 = vmax.f32 %v328, 0.0
      %v361 = vmax.f32 %v329, 0.0
      %v362 = vmax.f32 %v330, 0.0
      %v363 = vmax.f32 %v331, 0.0
      %v364 = vmax.f32 %v332, 0.0
      %v365 = vmax.f32 %v333, 0.0
      %v366 = vmax.f32 %v334, 0.0
      %v367 = vmax.f32 %v335, 0.0
      %v368 = vmax.f32 %v336, 0.0
      %v369 = vmax.f32 %v337, 0.0
      %v370 = vmax.f32 %v338, 0.0
      %v371 = vmax.f32 %v339, 0.0
      %v372 = vmax.f32 %v340, 0.0
      %v373 = vmax.f32 %v341, 0.0
      %v374 = vmax.f32 %v342, 0.0
      %v375 = vmax.f32 %v343, 0.0
      %v376 = vmax.f32 %v344, 0.0
      %v377 = vmax.f32 %v345, 0.0
      %378 = vxpose.xlu0.b32.start [1/16] %v346, 128
      %379 = vxpose.xlu0.b32.cont [2/16] %v347, 128
      %380 = vxpose.xlu0.b32.cont [3/16] %v348, 128
      %381 = vxpose.xlu0.b32.cont [4/16] %v349, 128
      %382 = vxpose.xlu0.b32.cont [5/16] %v350, 128
      %383 = vxpose.xlu0.b32.cont [6/16] %v351, 128
      %384 = vxpose.xlu0.b32.cont [7/16] %v352, 128
      %385 = vxpose.xlu0.b32.cont [8/16] %v353, 128
      %386 = vxpose.xlu0.b32.cont [9/16] %v354, 128
      %387 = vxpose.xlu0.b32.cont [10/16] %v355, 128
      %388 = vxpose.xlu0.b32.cont [11/16] %v356, 128
      %389 = vxpose.xlu0.b32.cont [12/16] %v357, 128
      %390 = vxpose.xlu0.b32.cont [13/16] %v358, 128
      %391 = vxpose.xlu0.b32.cont [14/16] %v359, 128
      %392 = vxpose.xlu0.b32.cont [15/16] %v360, 128
      %393 = vxpose.xlu0.b32.end [16/16] %v361, 128
      %v394 = vpop.trf.xlu0
      %v395 = vpop.trf.xlu0
      %v396 = vpop.trf.xlu0
      %v397 = vpop.trf.xlu0
      %v398 = vpop.trf.xlu0
      %v399 = vpop.trf.xlu0
      %v400 = vpop.trf.xlu0
      %v401 = vpop.trf.xlu0
      %v402 = vpop.trf.xlu0
      %v403 = vpop.trf.xlu0
      %v404 = vpop.trf.xlu0
      %v405 = vpop.trf.xlu0
      %v406 = vpop.trf.xlu0
      %v407 = vpop.trf.xlu0
      %v408 = vpop.trf.xlu0
      %v409 = vpop.trf.xlu0
      %410 = vxpose.xlu0.b32.start [1/16] %v362, 128
      %411 = vxpose.xlu0.b32.cont [2/16] %v363, 128
      %412 = vxpose.xlu0.b32.cont [3/16] %v364, 128
      %413 = vxpose.xlu0.b32.cont [4/16] %v365, 128
      %414 = vxpose.xlu0.b32.cont [5/16] %v366, 128
      %415 = vxpose.xlu0.b32.cont [6/16] %v367, 128
      %416 = vxpose.xlu0.b32.cont [7/16] %v368, 128
      %417 = vxpose.xlu0.b32.cont [8/16] %v369, 128
      %418 = vxpose.xlu0.b32.cont [9/16] %v370, 128
      %419 = vxpose.xlu0.b32.cont [10/16] %v371, 128
      %420 = vxpose.xlu0.b32.cont [11/16] %v372, 128
      %421 = vxpose.xlu0.b32.cont [12/16] %v373, 128
      %422 = vxpose.xlu0.b32.cont [13/16] %v374, 128
      %423 = vxpose.xlu0.b32.cont [14/16] %v375, 128
      %424 = vxpose.xlu0.b32.cont [15/16] %v376, 128
      %425 = vxpose.xlu0.b32.end [16/16] %v377, 128
      %v426 = vpop.trf.xlu0
      %v427 = vpop.trf.xlu0
      %v428 = vpop.trf.xlu0
      %v429 = vpop.trf.xlu0
      %v430 = vpop.trf.xlu0
      %v431 = vpop.trf.xlu0
      %v432 = vpop.trf.xlu0
      %v433 = vpop.trf.xlu0
      %v434 = vpop.trf.xlu0
      %v435 = vpop.trf.xlu0
      %v436 = vpop.trf.xlu0
      %v437 = vpop.trf.xlu0
      %v438 = vpop.trf.xlu0
      %v439 = vpop.trf.xlu0
      %v440 = vpop.trf.xlu0
      %v441 = vpop.trf.xlu0
      %442 = vst [vmem:[%s208] sm:$0xff] %v394
      %443 = vst [vmem:[%s208 + $0x8] sm:$0xff] %v426
      %s444 = smul.u32 2, %s19
      %p445 = scmp.lt.s32.totalorder %s18, 1
      %s446 = scalar_select %p445, %s18, 1
      %p447 = scmp.lt.s32.totalorder %s444, 1
      %s448 = scalar_select %p447, %s444, 1
      %s449 = smul.addr %s446, 2
      %s450 = sadd.s32 %s448, %s449
      %s451 = smul.addr %s450, 8
      %s452 = scalar_lea.vmem %s3, %s451
      // Predicated region
      $region33: #{conv_block_forward.5} parent=31 // pred_check
        %p453 = pneg %p116
      $region34: #{conv_block_forward.5} parent=31 // pred_check_branch
        %455 = sbr.rel (%p453) target = $region36
      $region35: #{conv_block_forward.5} parent=31 // pred_region
        %s456 = smul.u32 2, %s19
      $region36: #{conv_block_forward.5} parent=31 // pred_fallthru
        _
    $region32: #{conv_block_forward.5} parent=5 // pred_fallthru
      _
    %p457 = scmp.le.s32.totalorder 2, %s9
    // Predicated region
    $region37: #{conv_block_forward.5} parent=5 // pred_check
      %p458 = pneg %p457
    $region38: #{conv_block_forward.5} parent=5 // pred_check_branch
      %460 = sbr.rel (%p458) target = $region40
    $region39: #{conv_block_forward.5} parent=5 // pred_region
      %s461 = ssub.s32 %s9, 2
      // Predicated region
      $region41: #{conv_block_forward.5} parent=39 // pred_check
        %p462 = pneg %p122
      $region42: #{conv_block_forward.5} parent=39 // pred_check_branch
        %464 = sbr.rel (%p462) target = $region44
      $region43: #{conv_block_forward.5} parent=39 // pred_region
        %s465 = smul.u32 2, %s21
        %p466 = scmp.lt.s32.totalorder %s20, 1
        %s467 = scalar_select %p466, %s20, 1
        %p468 = scmp.lt.s32.totalorder %s465, 1
        %s469 = scalar_select %p468, %s465, 1
        %s470 = smul.addr %s467, 2
        %s471 = sadd.s32 %s469, %s470
        %s472 = smul.addr %s471, 8
        %s473 = scalar_lea.vmem %s3, %s472
      $region44: #{conv_block_forward.5} parent=39 // pred_fallthru
        _
    $region40: #{conv_block_forward.5} parent=5 // pred_fallthru
      _
  $region6: #{conv_block_forward.5} parent=0 // loop_footer
    %s13 = sadd.s32 1, %s9
  $region7: #{conv_block_forward.5} parent=0 // loop_footer_branch
    %8 = sbr.rel target = $region3
  $region8: #{conv_block_forward.5} parent=0 // loop_exit
    _

// kernel: conv_block_forward.3
$region0: #{conv_block_forward.3}
  #allocation0 [shape = 'u32[]', space=smem, size = 0x4, offset = 0x4, fixed_abs, tag = 'smem constant byte address 0x4 - core index']
  #allocation1 [shape = 'u32[72,128]{1,0:T(1,128)}', space=vmem, size = 0x9000, scoped, tag = 'internal scratch']
  %s0 = inlined_call_operand.vmem [shape: bf16[2,256,4], index: 0, kind: input, shape index: {}, may-alias: {0,1,2}]
  %s1 = inlined_call_operand.vmem [shape: bf16[2,256,4], index: 1, kind: input, shape index: {}, may-alias: {0,1,2}]
  %s2 = inlined_call_operand.vmem [shape: bf16[2,256,4], index: 2, kind: input, shape index: {}, may-alias: {0,1,2}]
  %s3 = inlined_call_operand.vmem [shape: f32[1,4], index: 3, kind: input, shape index: {}]
  %s4 = inlined_call_operand.vmem [shape: f32[1,4], index: 4, kind: input, shape index: {}]
  %s5 = inlined_call_operand.vmem [shape: bf16[9,4,128], index: 5, kind: input, shape index: {}]
  %s6 = inlined_call_operand.vmem [shape: f32[1,128], index: 6, kind: input, shape index: {}]
  %s7 = inlined_call_operand.vmem [shape: bf16[2,256,128], index: 7, kind: output, shape index: {0}]
  %s8 = inlined_call_operand.vmem [shape: f32[2,1,128], index: 8, kind: output, shape index: {1}]
  %s9 = inlined_call_operand.vmem [shape: f32[2,1,128], index: 9, kind: output, shape index: {2}]
  %10 = xla_tuple %s7, %s8, %s9
  %s11 = sld [smem:[#allocation0]]
  $region77: #{conv_block_forward.3} parent=0
    _
  %s13 = ssub.s32 1, %s11
  %s14 = scalar_select 0, %s13, %s11
  loop: start=0, step=1, limit=4
  $region2: #{conv_block_forward.3} parent=0 // loop_pre_header
    _
  $region3: #{conv_block_forward.3} parent=0 // loop_header
    %s16 = sphi 0, %s20
    %p17 = scmp.ge.s32.totalorder %s16, 4
    %s23 = sphi 0, %s35
    %s24 = sphi 0, %s31
    %s25 = sphi 0, %s23
    %s26 = sphi 0, %s24
    %s27 = sphi 0, %s25
    %s28 = sphi 0, %s26
    %s48 = sphi 0, %s50
    %s51 = sphi 0, %s48
    %s52 = sphi 0, %s51
    %s68 = sphi 0, %s52
    %s76 = sphi 0, %s78
    %s79 = sphi 0, %s76
    %s80 = sphi 0, %s79
    %s96 = sphi 0, %s80
    %s112 = sphi 0, %s114
    %s115 = sphi 0, %s112
    %s116 = sphi 0, %s115
    %s132 = sphi 0, %s116
    %s136 = sphi 0, %s136
    %s138 = sphi 0, %s136
    %s139 = sphi 0, %s138
    %s153 = sphi 0, %s139
    %s157 = sphi 0, %s157
    %s159 = sphi 0, %s157
    %s160 = sphi 0, %s159
    %s174 = sphi 0, %s160
    %s178 = sphi 0, %s178
    %s180 = sphi 0, %s178
    %s181 = sphi 0, %s180
    %s195 = sphi 0, %s181
    %s199 = sphi 0, %s199
    %s201 = sphi 0, %s199
    %s202 = sphi 0, %s201
    %s216 = sphi 0, %s202
    %s224 = sphi 0, %s226
    %s227 = sphi 0, %s224
    %s228 = sphi 0, %s227
    %s244 = sphi 0, %s228
    %s252 = sphi 0, %s254
    %s255 = sphi 0, %s252
    %s256 = sphi 0, %s255
    %s272 = sphi 0, %s256
    %s280 = sphi 0, %s282
    %s283 = sphi 0, %s280
    %s284 = sphi 0, %s283
    %s300 = sphi 0, %s284
  $region4: #{conv_block_forward.3} parent=0 // loop_header_branch
    %19 = sbr.rel (%p17) target = $region8
  $region5: #{conv_block_forward.3} parent=0 // loop_body
    %s21 = ssub.s32 %s16, 1
    %s22 = ssub.s32 %s16, 2
    %s29 = sadd.s32 1, %s24
    %p30 = scmp.ge.s32.totalorder %s29, 1
    %s31 = scalar_select %p30, 0, %s29
    %s32 = sadd.s32 1, %s23
    %s33 = scalar_select %p30, %s32, %s23
    %p34 = scmp.ge.s32.totalorder %s33, 2
    %s35 = scalar_select %p34, 0, %s33
    %s36 = smul.u32 %s24, 16
    %s37 = ssub.s32 %s36, 1
    %p38 = scmp.gt.s32.totalorder %s37, 0
    %s39 = scalar_select %p38, %s37, 0
    %s40 = smul.u32 %s31, 16
    %s41 = ssub.s32 %s40, 1
    %p42 = scmp.gt.s32.totalorder %s41, 0
    %s43 = scalar_select %p42, %s41, 0
    %s44 = ssub.s32 %s23, %s35
    %s45 = ssub.s32 %s39, %s43
    %s46 = sor.u32 %s44, %s45
    %p47 = scmp.eq.s32.totalorder %s46, 0
    %s49 = sadd.s32 %s48, 1
    %s50 = scalar_select %p47, %s48, %s49
    %p53 = pneg %p47
    %p54 = scmp.eq.s32.totalorder %s16, 1
    %p55 = por %p53, %p54
    %p56 = scmp.ne.s32.totalorder %s48, %s51
    %p57 = scmp.eq.s32.totalorder %s16, 0
    %p58 = por %p56, %p57
    %p59 = scmp.ne.s32.totalorder %s48, %s51
    %p60 = scmp.eq.s32.totalorder %s21, 1
    %p61 = por %p59, %p60
    %p62 = scmp.ne.s32.totalorder %s51, %s52
    %p63 = scmp.eq.s32.totalorder %s21, 0
    %p64 = por %p62, %p63
    %p65 = scmp.ne.s32.totalorder %s51, %s52
    %p66 = scmp.eq.s32.totalorder %s22, 1
    %p67 = por %p65, %p66
    %p69 = scmp.ne.s32.totalorder %s52, %s68
    %p70 = scmp.eq.s32.totalorder %s22, 0
    %p71 = por %p69, %p70
    %s72 = ssub.s32 %s23, %s35
    %s73 = ssub.s32 %s24, %s31
    %s74 = sor.u32 %s72, %s73
    %p75 = scmp.eq.s32.totalorder %s74, 0
    %s77 = sadd.s32 %s76, 1
    %s78 = scalar_select %p75, %s76, %s77
    %p81 = pneg %p75
    %p82 = scmp.eq.s32.totalorder %s16, 1
    %p83 = por %p81, %p82
    %p84 = scmp.ne.s32.totalorder %s76, %s79
    %p85 = scmp.eq.s32.totalorder %s16, 0
    %p86 = por %p84, %p85
    %p87 = scmp.ne.s32.totalorder %s76, %s79
    %p88 = scmp.eq.s32.totalorder %s21, 1
    %p89 = por %p87, %p88
    %p90 = scmp.ne.s32.totalorder %s79, %s80
    %p91 = scmp.eq.s32.totalorder %s21, 0
    %p92 = por %p90, %p91
    %p93 = scmp.ne.s32.totalorder %s79, %s80
    %p94 = scmp.eq.s32.totalorder %s22, 1
    %p95 = por %p93, %p94
    %p97 = scmp.ne.s32.totalorder %s80, %s96
    %p98 = scmp.eq.s32.totalorder %s22, 0
    %p99 = por %p97, %p98
    %s100 = sadd.s32 %s24, 1
    %s101 = smul.u32 %s100, 16
    %p102 = scmp.lt.s32.totalorder %s101, 15
    %s103 = scalar_select %p102, %s101, 15
    %s104 = sadd.s32 %s31, 1
    %s105 = smul.u32 %s104, 16
    %p106 = scmp.lt.s32.totalorder %s105, 15
    %s107 = scalar_select %p106, %s105, 15
    %s108 = ssub.s32 %s23, %s35
    %s109 = ssub.s32 %s103, %s107
    %s110 = sor.u32 %s108, %s109
    %p111 = scmp.eq.s32.totalorder %s110, 0
    %s113 = sadd.s32 %s112, 1
    %s114 = scalar_select %p111, %s112, %s113
    %p117 = pneg %p111
    %p118 = scmp.eq.s32.totalorder %s16, 1
    %p119 = por %p117, %p118
    %p120 = scmp.ne.s32.totalorder %s112, %s115
    %p121 = scmp.eq.s32.totalorder %s16, 0
    %p122 = por %p120, %p121
    %p123 = scmp.ne.s32.totalorder %s112, %s115
    %p124 = scmp.eq.s32.totalorder %s21, 1
    %p125 = por %p123, %p124
    %p126 = scmp.ne.s32.totalorder %s115, %s116
    %p127 = scmp.eq.s32.totalorder %s21, 0
    %p128 = por %p126, %p127
    %p129 = scmp.ne.s32.totalorder %s115, %s116
    %p130 = scmp.eq.s32.totalorder %s22, 1
    %p131 = por %p129, %p130
    %p133 = scmp.ne.s32.totalorder %s116, %s132
    %p134 = scmp.eq.s32.totalorder %s22, 0
    %p135 = por %p133, %p134
    %s137 = sadd.s32 %s136, 1
    %p140 = scmp.eq.s32.totalorder %s16, 1
    %p141 = scmp.ne.s32.totalorder %s136, %s138
    %p142 = scmp.eq.s32.totalorder %s16, 0
    %p143 = por %p141, %p142
    %p144 = scmp.ne.s32.totalorder %s136, %s138
    %p145 = scmp.eq.s32.totalorder %s21, 1
    %p146 = por %p144, %p145
    %p147 = scmp.ne.s32.totalorder %s138, %s139
    %p148 = scmp.eq.s32.totalorder %s21, 0
    %p149 = por %p147, %p148
    %p150 = scmp.ne.s32.totalorder %s138, %s139
    %p151 = scmp.eq.s32.totalorder %s22, 1
    %p152 = por %p150, %p151
    %p154 = scmp.ne.s32.totalorder %s139, %s153
    %p155 = scmp.eq.s32.totalorder %s22, 0
    %p156 = por %p154, %p155
    %s158 = sadd.s32 %s157, 1
    %p161 = scmp.eq.s32.totalorder %s16, 1
    %p162 = scmp.ne.s32.totalorder %s157, %s159
    %p163 = scmp.eq.s32.totalorder %s16, 0
    %p164 = por %p162, %p163
    %p165 = scmp.ne.s32.totalorder %s157, %s159
    %p166 = scmp.eq.s32.totalorder %s21, 1
    %p167 = por %p165, %p166
    %p168 = scmp.ne.s32.totalorder %s159, %s160
    %p169 = scmp.eq.s32.totalorder %s21, 0
    %p170 = por %p168, %p169
    %p171 = scmp.ne.s32.totalorder %s159, %s160
    %p172 = scmp.eq.s32.totalorder %s22, 1
    %p173 = por %p171, %p172
    %p175 = scmp.ne.s32.totalorder %s160, %s174
    %p176 = scmp.eq.s32.totalorder %s22, 0
    %p177 = por %p175, %p176
    %s179 = sadd.s32 %s178, 1
    %p182 = scmp.eq.s32.totalorder %s16, 1
    %p183 = scmp.ne.s32.totalorder %s178, %s180
    %p184 = scmp.eq.s32.totalorder %s16, 0
    %p185 = por %p183, %p184
    %p186 = scmp.ne.s32.totalorder %s178, %s180
    %p187 = scmp.eq.s32.totalorder %s21, 1
    %p188 = por %p186, %p187
    %p189 = scmp.ne.s32.totalorder %s180, %s181
    %p190 = scmp.eq.s32.totalorder %s21, 0
    %p191 = por %p189, %p190
    %p192 = scmp.ne.s32.totalorder %s180, %s181
    %p193 = scmp.eq.s32.totalorder %s22, 1
    %p194 = por %p192, %p193
    %p196 = scmp.ne.s32.totalorder %s181, %s195
    %p197 = scmp.eq.s32.totalorder %s22, 0
    %p198 = por %p196, %p197
    %s200 = sadd.s32 %s199, 1
    %p203 = scmp.eq.s32.totalorder %s16, 1
    %p204 = scmp.ne.s32.totalorder %s199, %s201
    %p205 = scmp.eq.s32.totalorder %s16, 0
    %p206 = por %p204, %p205
    %p207 = scmp.ne.s32.totalorder %s199, %s201
    %p208 = scmp.eq.s32.totalorder %s21, 1
    %p209 = por %p207, %p208
    %p210 = scmp.ne.s32.totalorder %s201, %s202
    %p211 = scmp.eq.s32.totalorder %s21, 0
    %p212 = por %p210, %p211
    %p213 = scmp.ne.s32.totalorder %s201, %s202
    %p214 = scmp.eq.s32.totalorder %s22, 1
    %p215 = por %p213, %p214
    %p217 = scmp.ne.s32.totalorder %s202, %s216
    %p218 = scmp.eq.s32.totalorder %s22, 0
    %p219 = por %p217, %p218
    %s220 = ssub.s32 %s23, %s35
    %s221 = ssub.s32 %s24, %s31
    %s222 = sor.u32 %s220, %s221
    %p223 = scmp.eq.s32.totalorder %s222, 0
    %s225 = sadd.s32 %s224, 1
    %s226 = scalar_select %p223, %s224, %s225
    %p229 = pneg %p223
    %p230 = scmp.eq.s32.totalorder %s16, 1
    %p231 = por %p229, %p230
    %p232 = scmp.ne.s32.totalorder %s224, %s227
    %p233 = scmp.eq.s32.totalorder %s16, 0
    %p234 = por %p232, %p233
    %p235 = scmp.ne.s32.totalorder %s224, %s227
    %p236 = scmp.eq.s32.totalorder %s21, 1
    %p237 = por %p235, %p236
    %p238 = scmp.ne.s32.totalorder %s227, %s228
    %p239 = scmp.eq.s32.totalorder %s21, 0
    %p240 = por %p238, %p239
    %p241 = scmp.ne.s32.totalorder %s227, %s228
    %p242 = scmp.eq.s32.totalorder %s22, 1
    %p243 = por %p241, %p242
    %p245 = scmp.ne.s32.totalorder %s228, %s244
    %p246 = scmp.eq.s32.totalorder %s22, 0
    %p247 = por %p245, %p246
    %s248 = sadd.s32 %s23, %s24
    %s249 = sadd.s32 %s35, %s31
    %s250 = ssub.s32 %s248, %s249
    %p251 = scmp.eq.s32.totalorder %s250, 0
    %s253 = sadd.s32 %s252, 1
    %s254 = scalar_select %p251, %s252, %s253
    %p257 = pneg %p251
    %p258 = scmp.eq.s32.totalorder %s16, 1
    %p259 = por %p257, %p258
    %p260 = scmp.ne.s32.totalorder %s252, %s255
    %p261 = scmp.eq.s32.totalorder %s16, 0
    %p262 = por %p260, %p261
    %p263 = scmp.ne.s32.totalorder %s252, %s255
    %p264 = scmp.eq.s32.totalorder %s21, 1
    %p265 = por %p263, %p264
    %p266 = scmp.ne.s32.totalorder %s255, %s256
    %p267 = scmp.eq.s32.totalorder %s21, 0
    %p268 = por %p266, %p267
    %p269 = scmp.ne.s32.totalorder %s255, %s256
    %p270 = scmp.eq.s32.totalorder %s22, 1
    %p271 = por %p269, %p270
    %p273 = scmp.ne.s32.totalorder %s256, %s272
    %p274 = scmp.eq.s32.totalorder %s22, 0
    %p275 = por %p273, %p274
    %s276 = sadd.s32 %s23, %s24
    %s277 = sadd.s32 %s35, %s31
    %s278 = ssub.s32 %s276, %s277
    %p279 = scmp.eq.s32.totalorder %s278, 0
    %s281 = sadd.s32 %s280, 1
    %s282 = scalar_select %p279, %s280, %s281
    %p285 = pneg %p279
    %p286 = scmp.eq.s32.totalorder %s16, 1
    %p287 = por %p285, %p286
    %p288 = scmp.ne.s32.totalorder %s280, %s283
    %p289 = scmp.eq.s32.totalorder %s16, 0
    %p290 = por %p288, %p289
    %p291 = scmp.ne.s32.totalorder %s280, %s283
    %p292 = scmp.eq.s32.totalorder %s21, 1
    %p293 = por %p291, %p292
    %p294 = scmp.ne.s32.totalorder %s283, %s284
    %p295 = scmp.eq.s32.totalorder %s21, 0
    %p296 = por %p294, %p295
    %p297 = scmp.ne.s32.totalorder %s283, %s284
    %p298 = scmp.eq.s32.totalorder %s22, 1
    %p299 = por %p297, %p298
    %p301 = scmp.ne.s32.totalorder %s284, %s300
    %p302 = scmp.eq.s32.totalorder %s22, 0
    %p303 = por %p301, %p302
    %p304 = scmp.le.s32.totalorder 1, %s16
    %p305 = scmp.lt.s32.totalorder %s16, 3
    %p306 = pnand %p304, %p305
    %p307 = pneg %p306
    // Predicated region
    $region9: #{conv_block_forward.3} parent=5 // pred_check
      _
    $region10: #{conv_block_forward.3} parent=5 // pred_check_branch
      %309 = sbr.rel (%p306) target = $region12
    $region11: #{conv_block_forward.3} parent=5 // pred_region
      %s310 = ssub.s32 %s16, 1
      // Predicated region
      $region13: #{conv_block_forward.3} parent=11 // pred_check
        %p311 = pneg %p149
      $region14: #{conv_block_forward.3} parent=11 // pred_check_branch
        %313 = sbr.rel (%p311) target = $region16
      $region15: #{conv_block_forward.3} parent=11 // pred_region
        _
      $region16: #{conv_block_forward.3} parent=11 // pred_fallthru
        _
      // Predicated region
      $region17: #{conv_block_forward.3} parent=11 // pred_check
        %p314 = pneg %p170
      $region18: #{conv_block_forward.3} parent=11 // pred_check_branch
        %316 = sbr.rel (%p314) target = $region20
      $region19: #{conv_block_forward.3} parent=11 // pred_region
        _
      $region20: #{conv_block_forward.3} parent=11 // pred_fallthru
        _
      // Predicated region
      $region21: #{conv_block_forward.3} parent=11 // pred_check
        %p317 = pneg %p191
      $region22: #{conv_block_forward.3} parent=11 // pred_check_branch
        %319 = sbr.rel (%p317) target = $region24
      $region23: #{conv_block_forward.3} parent=11 // pred_region
        _
      $region24: #{conv_block_forward.3} parent=11 // pred_fallthru
        _
      // Predicated region
      $region25: #{conv_block_forward.3} parent=11 // pred_check
        %p320 = pneg %p212
      $region26: #{conv_block_forward.3} parent=11 // pred_check_branch
        %322 = sbr.rel (%p320) target = $region28
      $region27: #{conv_block_forward.3} parent=11 // pred_region
        _
      $region28: #{conv_block_forward.3} parent=11 // pred_fallthru
        _
    $region12: #{conv_block_forward.3} parent=5 // pred_fallthru
      _
    %p323 = scmp.lt.s32.totalorder %s16, 2
    // Predicated region
    $region29: #{conv_block_forward.3} parent=5 // pred_check
      %p324 = pneg %p323
    $region30: #{conv_block_forward.3} parent=5 // pred_check_branch
      %326 = sbr.rel (%p324) target = $region32
    $region31: #{conv_block_forward.3} parent=5 // pred_region
      // Predicated region
      $region33: #{conv_block_forward.3} parent=31 // pred_check
        %p327 = pneg %p58
      $region34: #{conv_block_forward.3} parent=31 // pred_check_branch
        %329 = sbr.rel (%p327) target = $region36
      $region35: #{conv_block_forward.3} parent=31 // pred_region
        %s330 = smul.u32 %s24, 16
        %s331 = ssub.s32 %s330, 1
        %p332 = scmp.gt.s32.totalorder %s331, 0
        %s333 = scalar_select %p332, %s331, 0
        %s334 = smul.u32 2, %s333
        %p335 = scmp.lt.s32.totalorder %s23, 1
        %s336 = scalar_select %p335, %s23, 1
        %p337 = scmp.lt.s32.totalorder %s334, 31
        %s338 = scalar_select %p337, %s334, 31
        %s339 = smul.addr %s336, 32
        %s340 = sadd.s32 %s338, %s339
        %s341 = smul.addr %s340, 4
        %s342 = scalar_lea.vmem %s0, %s341
        %s343 = smul.u32 %s24, 16
        %s344 = ssub.s32 %s343, 1
        %p345 = scmp.gt.s32.totalorder %s344, 0
        %s346 = scalar_select %p345, %s344, 0
        %s347 = smul.u32 2, %s346
      $region36: #{conv_block_forward.3} parent=31 // pred_fallthru
        _
      // Predicated region
      $region37: #{conv_block_forward.3} parent=31 // pred_check
        %p348 = pneg %p86
      $region38: #{conv_block_forward.3} parent=31 // pred_check_branch
        %350 = sbr.rel (%p348) target = $region40
      $region39: #{conv_block_forward.3} parent=31 // pred_region
        %s351 = smul.u32 32, %s24
        %p352 = scmp.lt.s32.totalorder %s23, 1
        %s353 = scalar_select %p352, %s23, 1
        %p354 = scmp.lt.s32.totalorder %s351, 31
        %s355 = scalar_select %p354, %s351, 31
        %s356 = smul.addr %s353, 32
        %s357 = sadd.s32 %s355, %s356
        %s358 = smul.addr %s357, 4
        %s359 = scalar_lea.vmem %s1, %s358
        %s360 = smul.u32 32, %s24
      $region40: #{conv_block_forward.3} parent=31 // pred_fallthru
        _
      // Predicated region
      $region41: #{conv_block_forward.3} parent=31 // pred_check
        %p361 = pneg %p122
      $region42: #{conv_block_forward.3} parent=31 // pred_check_branch
        %363 = sbr.rel (%p361) target = $region44
      $region43: #{conv_block_forward.3} parent=31 // pred_region
        %s364 = sadd.s32 %s24, 1
        %s365 = smul.u32 %s364, 16
        %p366 = scmp.lt.s32.totalorder %s365, 15
        %s367 = scalar_select %p366, %s365, 15
        %s368 = smul.u32 2, %s367
        %p369 = scmp.lt.s32.totalorder %s23, 1
        %s370 = scalar_select %p369, %s23, 1
        %p371 = scmp.lt.s32.totalorder %s368, 31
        %s372 = scalar_select %p371, %s368, 31
        %s373 = smul.addr %s370, 32
        %s374 = sadd.s32 %s372, %s373
        %s375 = smul.addr %s374, 4
        %s376 = scalar_lea.vmem %s2, %s375
        %s377 = sadd.s32 %s24, 1
        %s378 = smul.u32 %s377, 16
        %p379 = scmp.lt.s32.totalorder %s378, 15
        %s380 = scalar_select %p379, %s378, 15
        %s381 = smul.u32 2, %s380
      $region44: #{conv_block_forward.3} parent=31 // pred_fallthru
        _
    $region32: #{conv_block_forward.3} parent=5 // pred_fallthru
      _
    %p382 = scmp.le.s32.totalorder 1, %s16
    %p383 = scmp.lt.s32.totalorder %s16, 3
    %p384 = pnand %p382, %p383
    %p385 = pneg %p384
    // Predicated region
    $region45: #{conv_block_forward.3} parent=5 // pred_check
      _
    $region46: #{conv_block_forward.3} parent=5 // pred_check_branch
      %387 = sbr.rel (%p384) target = $region48
    $region47: #{conv_block_forward.3} parent=5 // pred_region
      %s388 = ssub.s32 %s16, 1
      %s389 = smul.u32 %s26, 16
      %s390 = ssub.s32 %s389, 1
      %p391 = scmp.gt.s32.totalorder %s390, 0
      %s392 = scalar_select %p391, %s390, 0
      %s393 = smul.u32 2, %s392
      %p394 = scmp.lt.s32.totalorder %s25, 1
      %s395 = scalar_select %p394, %s25, 1
      %p396 = scmp.lt.s32.totalorder %s393, 31
      %s397 = scalar_select %p396, %s393, 31
      %s398 = smul.addr %s395, 32
      %s399 = sadd.s32 %s397, %s398
      %s400 = smul.addr %s399, 4
      %s401 = scalar_lea.vmem %s0, %s400
      %p402 = pneg %p64
      %p403 = pneg %p61
      %s404 = smul.u32 32, %s26
      %p405 = scmp.lt.s32.totalorder %s25, 1
      %s406 = scalar_select %p405, %s25, 1
      %p407 = scmp.lt.s32.totalorder %s404, 31
      %s408 = scalar_select %p407, %s404, 31
      %s409 = smul.addr %s406, 32
      %s410 = sadd.s32 %s408, %s409
      %s411 = smul.addr %s410, 4
      %s412 = scalar_lea.vmem %s1, %s411
      %p413 = pneg %p92
      %p414 = pneg %p89
      %s415 = sadd.s32 %s26, 1
      %s416 = smul.u32 %s415, 16
      %p417 = scmp.lt.s32.totalorder %s416, 15
      %s418 = scalar_select %p417, %s416, 15
      %s419 = smul.u32 2, %s418
      %p420 = scmp.lt.s32.totalorder %s25, 1
      %s421 = scalar_select %p420, %s25, 1
      %p422 = scmp.lt.s32.totalorder %s419, 31
      %s423 = scalar_select %p422, %s419, 31
      %s424 = smul.addr %s421, 32
      %s425 = sadd.s32 %s423, %s424
      %s426 = smul.addr %s425, 4
      %s427 = scalar_lea.vmem %s2, %s426
      %p428 = pneg %p128
      %p429 = pneg %p125
      %p430 = pneg %p149
      %p431 = pneg %p146
      %p432 = pneg %p170
      %p433 = pneg %p167
      %p434 = pneg %p191
      %p435 = pneg %p188
      %p436 = pneg %p212
      %p437 = pneg %p209
      %p438 = pneg %p240
      %p439 = pneg %p237
      %s440 = smul.u32 32, %s26
      %p441 = scmp.lt.s32.totalorder %s25, 1
      %s442 = scalar_select %p441, %s25, 1
      %p443 = scmp.lt.s32.totalorder %s440, 31
      %s444 = scalar_select %p443, %s440, 31
      %s445 = smul.addr %s442, 32
      %s446 = sadd.s32 %s444, %s445
      %s447 = smul.addr %s446, 4
      %s448 = scalar_lea.vmem %s7, %s447
      %p449 = pneg %p268
      %p450 = pneg %p265
      %s451 = sadd.s32 %s25, %s26
      %p452 = scmp.lt.s32.totalorder %s451, 1
      %s453 = scalar_select %p452, %s451, 1
      %s454 = scalar_lea.vmem %s8, %s453
      %p455 = pneg %p296
      %p456 = pneg %p293
      %s457 = sadd.s32 %s25, %s26
      %p458 = scmp.lt.s32.totalorder %s457, 1
      %s459 = scalar_select %p458, %s457, 1
      %s460 = scalar_lea.vmem %s9, %s459
      %s461 = smul.u32 %s26, 16
      %s462 = ssub.s32 %s461, 1
      %p463 = scmp.gt.s32.totalorder %s462, 0
      %s464 = scalar_select %p463, %s462, 0
      %s465 = smul.u32 2, %s464
      %p466 = scmp.lt.s32.totalorder %s25, 1
      %s467 = scalar_select %p466, %s25, 1
      %p468 = scmp.lt.s32.totalorder %s465, 31
      %s469 = scalar_select %p468, %s465, 31
      %s470 = smul.addr %s467, 32
      %s471 = sadd.s32 %s469, %s470
      %s472 = smul.addr %s471, 4
      %s473 = scalar_lea.vmem %s0, %s472
      %s474 = smul.u32 %s26, 16
      %s475 = ssub.s32 %s474, 1
      %p476 = scmp.gt.s32.totalorder %s475, 0
      %s477 = scalar_select %p476, %s475, 0
      %s478 = smul.u32 2, %s477
      %s479 = smul.u32 32, %s26
      %p480 = scmp.lt.s32.totalorder %s25, 1
      %s481 = scalar_select %p480, %s25, 1
      %p482 = scmp.lt.s32.totalorder %s479, 31
      %s483 = scalar_select %p482, %s479, 31
      %s484 = smul.addr %s481, 32
      %s485 = sadd.s32 %s483, %s484
      %s486 = smul.addr %s485, 4
      %s487 = scalar_lea.vmem %s1, %s486
      %s488 = smul.u32 32, %s26
      %s489 = sadd.s32 %s26, 1
      %s490 = smul.u32 %s489, 16
      %p491 = scmp.lt.s32.totalorder %s490, 15
      %s492 = scalar_select %p491, %s490, 15
      %s493 = smul.u32 2, %s492
      %p494 = scmp.lt.s32.totalorder %s25, 1
      %s495 = scalar_select %p494, %s25, 1
      %p496 = scmp.lt.s32.totalorder %s493, 31
      %s497 = scalar_select %p496, %s493, 31
      %s498 = smul.addr %s495, 32
      %s499 = sadd.s32 %s497, %s498
      %s500 = smul.addr %s499, 4
      %s501 = scalar_lea.vmem %s2, %s500
      %s502 = sadd.s32 %s26, 1
      %s503 = smul.u32 %s502, 16
      %p504 = scmp.lt.s32.totalorder %s503, 15
      %s505 = scalar_select %p504, %s503, 15
      %s506 = smul.u32 2, %s505
      %s507 = smul.u32 32, %s26
      %p508 = scmp.lt.s32.totalorder %s25, 1
      %s509 = scalar_select %p508, %s25, 1
      %p510 = scmp.lt.s32.totalorder %s507, 31
      %s511 = scalar_select %p510, %s507, 31
      %s512 = smul.addr %s509, 32
      %s513 = sadd.s32 %s511, %s512
      %s514 = smul.addr %s513, 4
      %s515 = scalar_lea.vmem %s7, %s514
      %s516 = smul.u32 32, %s26
      %s517 = sadd.s32 %s25, %s26
      %p518 = scmp.lt.s32.totalorder %s517, 1
      %s519 = scalar_select %p518, %s517, 1
      %s520 = scalar_lea.vmem %s8, %s519
      %s521 = sadd.s32 %s25, %s26
      %s522 = sadd.s32 %s25, %s26
      %p523 = scmp.lt.s32.totalorder %s522, 1
      %s524 = scalar_select %p523, %s522, 1
      %s525 = scalar_lea.vmem %s9, %s524
      %s526 = sadd.s32 %s25, %s26
      %v528 = vld [vmem:[%s473] sm:$0xf]
      %v529 = vld [vmem:[%s473 + $0x4] sm:$0xf]
      %v530 = vld [vmem:[%s487] sm:$0xf]
      %v531 = vld [vmem:[%s487 + $0x4] sm:$0xf]
      %v532 = vld [vmem:[%s487 + $0x8] sm:$0xf]
      %v533 = vld [vmem:[%s487 + $0xc] sm:$0xf]
      %v534 = vld [vmem:[%s487 + $0x10] sm:$0xf]
      %v535 = vld [vmem:[%s487 + $0x14] sm:$0xf]
      %v536 = vld [vmem:[%s487 + $0x18] sm:$0xf]
      %v537 = vld [vmem:[%s487 + $0x1c] sm:$0xf]
      %v538 = vld [vmem:[%s487 + $0x20] sm:$0xf]
      %v539 = vld [vmem:[%s487 + $0x24] sm:$0xf]
      %v540 = vld [vmem:[%s487 + $0x28] sm:$0xf]
      %v541 = vld [vmem:[%s487 + $0x2c] sm:$0xf]
      %v542 = vld [vmem:[%s487 + $0x30] sm:$0xf]
      %v543 = vld [vmem:[%s487 + $0x34] sm:$0xf]
      %v544 = vld [vmem:[%s487 + $0x38] sm:$0xf]
      %v545 = vld [vmem:[%s487 + $0x3c] sm:$0xf]
      %v546 = vld [vmem:[%s487 + $0x40] sm:$0xf]
      %v547 = vld [vmem:[%s487 + $0x44] sm:$0xf]
      %v548 = vld [vmem:[%s487 + $0x48] sm:$0xf]
      %v549 = vld [vmem:[%s487 + $0x4c] sm:$0xf]
      %v550 = vld [vmem:[%s487 + $0x50] sm:$0xf]
      %v551 = vld [vmem:[%s487 + $0x54] sm:$0xf]
      %v552 = vld [vmem:[%s487 + $0x58] sm:$0xf]
      %v553 = vld [vmem:[%s487 + $0x5c] sm:$0xf]
      %v554 = vld [vmem:[%s487 + $0x60] sm:$0xf]
      %v555 = vld [vmem:[%s487 + $0x64] sm:$0xf]
      %v556 = vld [vmem:[%s487 + $0x68] sm:$0xf]
      %v557 = vld [vmem:[%s487 + $0x6c] sm:$0xf]
      %v558 = vld [vmem:[%s487 + $0x70] sm:$0xf]
      %v559 = vld [vmem:[%s487 + $0x74] sm:$0xf]
      %v560 = vld [vmem:[%s487 + $0x78] sm:$0xf]
      %v561 = vld [vmem:[%s487 + $0x7c] sm:$0xf]
      %v562 = vld [vmem:[%s501] sm:$0xf]
      %v563 = vld [vmem:[%s501 + $0x4] sm:$0xf]
      %v566 = vunpack.c.l.b16 %v528
      %v567 = vunpack.c.l.b16 %v529
      %v568 = vpack.c.b16 %v567, %v566
      %v602 = vunpack.c.l.b16 %v530
      %v603 = vunpack.c.l.b16 %v531
      %v604 = vunpack.c.l.b16 %v532
      %v605 = vunpack.c.l.b16 %v533
      %v606 = vunpack.c.l.b16 %v534
      %v607 = vunpack.c.l.b16 %v535
      %v608 = vunpack.c.l.b16 %v536
      %v609 = vunpack.c.l.b16 %v537
      %v610 = vunpack.c.l.b16 %v538
      %v611 = vunpack.c.l.b16 %v539
      %v612 = vunpack.c.l.b16 %v540
      %v613 = vunpack.c.l.b16 %v541
      %v614 = vunpack.c.l.b16 %v542
      %v615 = vunpack.c.l.b16 %v543
      %v616 = vunpack.c.l.b16 %v544
      %v617 = vunpack.c.l.b16 %v545
      %v618 = vunpack.c.l.b16 %v546
      %v619 = vunpack.c.l.b16 %v547
      %v620 = vunpack.c.l.b16 %v548
      %v621 = vunpack.c.l.b16 %v549
      %v622 = vunpack.c.l.b16 %v550
      %v623 = vunpack.c.l.b16 %v551
      %v624 = vunpack.c.l.b16 %v552
      %v625 = vunpack.c.l.b16 %v553
      %v626 = vunpack.c.l.b16 %v554
      %v627 = vunpack.c.l.b16 %v555
      %v628 = vunpack.c.l.b16 %v556
      %v629 = vunpack.c.l.b16 %v557
      %v630 = vunpack.c.l.b16 %v558
      %v631 = vunpack.c.l.b16 %v559
      %v632 = vunpack.c.l.b16 %v560
      %v633 = vunpack.c.l.b16 %v561
      %v634 = vpack.c.b16 %v603, %v602
      %v635 = vpack.c.b16 %v605, %v604
      %v636 = vpack.c.b16 %v607, %v606
      %v637 = vpack.c.b16 %v609, %v608
      %v638 = vpack.c.b16 %v611, %v610
      %v639 = vpack.c.b16 %v613, %v612
      %v640 = vpack.c.b16 %v615, %v614
      %v641 = vpack.c.b16 %v617, %v616
      %v642 = vpack.c.b16 %v619, %v618
      %v643 = vpack.c.b16 %v621, %v620
      %v644 = vpack.c.b16 %v623, %v622
      %v645 = vpack.c.b16 %v625, %v624
      %v646 = vpack.c.b16 %v627, %v626
      %v647 = vpack.c.b16 %v629, %v628
      %v648 = vpack.c.b16 %v631, %v630
      %v649 = vpack.c.b16 %v633, %v632
      %v668 = vunpack.c.l.b16 %v562
      %v669 = vunpack.c.l.b16 %v563
      %v670 = vpack.c.b16 %v669, %v668
      %v672 = vunpack.c.l.bf16 %v568
      %v673 = vunpack.c.h.bf16 %v568
      %v674 = vunpack.c.l.bf16 %v634
      %v675 = vunpack.c.h.bf16 %v634
      %v676 = vunpack.c.l.bf16 %v635
      %v677 = vunpack.c.h.bf16 %v635
      %v678 = vunpack.c.l.bf16 %v636
      %v679 = vunpack.c.h.bf16 %v636
      %v680 = vunpack.c.l.bf16 %v637
      %v681 = vunpack.c.h.bf16 %v637
      %v682 = vunpack.c.l.bf16 %v638
      %v683 = vunpack.c.h.bf16 %v638
      %v684 = vunpack.c.l.bf16 %v639
      %v685 = vunpack.c.h.bf16 %v639
      %v686 = vunpack.c.l.bf16 %v640
      %v687 = vunpack.c.h.bf16 %v640
      %v688 = vunpack.c.l.bf16 %v641
      %v689 = vunpack.c.h.bf16 %v641
      %v690 = vunpack.c.l.bf16 %v642
      %v691 = vunpack.c.h.bf16 %v642
      %v692 = vunpack.c.l.bf16 %v643
      %v693 = vunpack.c.h.bf16 %v643
      %v694 = vunpack.c.l.bf16 %v644
      %v695 = vunpack.c.h.bf16 %v644
      %v696 = vunpack.c.l.bf16 %v645
      %v697 = vunpack.c.h.bf16 %v645
      %v698 = vunpack.c.l.bf16 %v646
      %v699 = vunpack.c.h.bf16 %v646
      %v700 = vunpack.c.l.bf16 %v647
      %v701 = vunpack.c.h.bf16 %v647
      %v702 = vunpack.c.l.bf16 %v648
      %v703 = vunpack.c.h.bf16 %v648
      %v704 = vunpack.c.l.bf16 %v649
      %v705 = vunpack.c.h.bf16 %v649
      %v706 = vunpack.c.l.bf16 %v670
      %v707 = vunpack.c.h.bf16 %v670
      %v708 = vld [vmem:[%s3] sm:$0x1]
      %v710 = vperm.slane %v708, 0
      %v712 = vmul.f32 %v672, %v710
      %v713 = vmul.f32 %v673, %v710
      %v714 = vmul.f32 %v674, %v710
      %v715 = vmul.f32 %v675, %v710
      %v716 = vmul.f32 %v676, %v710
      %v717 = vmul.f32 %v677, %v710
      %v718 = vmul.f32 %v678, %v710
      %v719 = vmul.f32 %v679, %v710
      %v720 = vmul.f32 %v680, %v710
      %v721 = vmul.f32 %v681, %v710
      %v722 = vmul.f32 %v682, %v710
      %v723 = vmul.f32 %v683, %v710
      %v724 = vmul.f32 %v684, %v710
      %v725 = vmul.f32 %v685, %v710
      %v726 = vmul.f32 %v686, %v710
      %v727 = vmul.f32 %v687, %v710
      %v728 = vmul.f32 %v688, %v710
      %v729 = vmul.f32 %v689, %v710
      %v730 = vmul.f32 %v690, %v710
      %v731 = vmul.f32 %v691, %v710
      %v732 = vmul.f32 %v692, %v710
      %v733 = vmul.f32 %v693, %v710
      %v734 = vmul.f32 %v694, %v710
      %v735 = vmul.f32 %v695, %v710
      %v736 = vmul.f32 %v696, %v710
      %v737 = vmul.f32 %v697, %v710
      %v738 = vmul.f32 %v698, %v710
      %v739 = vmul.f32 %v699, %v710
      %v740 = vmul.f32 %v700, %v710
      %v741 = vmul.f32 %v701, %v710
      %v742 = vmul.f32 %v702, %v710
      %v743 = vmul.f32 %v703, %v710
      %v744 = vmul.f32 %v704, %v710
      %v745 = vmul.f32 %v705, %v710
      %v746 = vmul.f32 %v706, %v710
      %v747 = vmul.f32 %v707, %v710
      %v748 = vld [vmem:[%s4] sm:$0x1]
      %v750 = vperm.slane %v748, 0
      %v752 = vadd.f32 %v712, %v750
      %v753 = vadd.f32 %v713, %v750
      %v754 = vadd.f32 %v714, %v750
      %v755 = vadd.f32 %v715, %v750
      %v756 = vadd.f32 %v716, %v750
      %v757 = vadd.f32 %v717, %v750
      %v758 = vadd.f32 %v718, %v750
      %v759 = vadd.f32 %v719, %v750
      %v760 = vadd.f32 %v720, %v750
      %v761 = vadd.f32 %v721, %v750
      %v762 = vadd.f32 %v722, %v750
      %v763 = vadd.f32 %v723, %v750
      %v764 = vadd.f32 %v724, %v750
      %v765 = vadd.f32 %v725, %v750
      %v766 = vadd.f32 %v726, %v750
      %v767 = vadd.f32 %v727, %v750
      %v768 = vadd.f32 %v728, %v750
      %v769 = vadd.f32 %v729, %v750
      %v770 = vadd.f32 %v730, %v750
      %v771 = vadd.f32 %v731, %v750
      %v772 = vadd.f32 %v732, %v750
      %v773 = vadd.f32 %v733, %v750
      %v774 = vadd.f32 %v734, %v750
      %v775 = vadd.f32 %v735, %v750
      %v776 = vadd.f32 %v736, %v750
      %v777 = vadd.f32 %v737, %v750
      %v778 = vadd.f32 %v738, %v750
      %v779 = vadd.f32 %v739, %v750
      %v780 = vadd.f32 %v740, %v750
      %v781 = vadd.f32 %v741, %v750
      %v782 = vadd.f32 %v742, %v750
      %v783 = vadd.f32 %v743, %v750
      %v784 = vadd.f32 %v744, %v750
      %v785 = vadd.f32 %v745, %v750
      %v786 = vadd.f32 %v746, %v750
      %v787 = vadd.f32 %v747, %v750
      %v788 = vlaneseq
      %v789 = vshrl.u32 %v788, 7
      %v790 = vadd.s32 %v789, 8
      %v791 = vadd.s32 %v789, 16
      %v792 = vadd.s32 %v789, 24
      %v793 = vadd.s32 %v789, 32
      %v794 = vadd.s32 %v789, 40
      %v795 = vadd.s32 %v789, 48
      %v796 = vadd.s32 %v789, 56
      %v797 = vadd.s32 %v789, 64
      %v798 = vadd.s32 %v789, 72
      %v799 = vadd.s32 %v789, 80
      %v800 = vadd.s32 %v789, 88
      %v801 = vadd.s32 %v789, 96
      %v802 = vadd.s32 %v789, 104
      %v803 = vadd.s32 %v789, 112
      %v804 = vadd.s32 %v789, 120
      %v805 = vadd.s32 %v789, 128
      %v806 = vadd.s32 %v789, 136
      %v807 = vadd.s32 %v789, 144
      %v808 = vadd.s32 %v789, 152
      %v809 = vadd.s32 %v789, 160
      %v810 = vadd.s32 %v789, 168
      %v811 = vadd.s32 %v789, 176
      %v812 = vadd.s32 %v789, 184
      %v813 = vadd.s32 %v789, 192
      %v814 = vadd.s32 %v789, 200
      %v815 = vadd.s32 %v789, 208
      %v816 = vadd.s32 %v789, 216
      %v817 = vadd.s32 %v789, 224
      %v818 = vadd.s32 %v789, 232
      %v819 = vadd.s32 %v789, 240
      %v820 = vadd.s32 %v789, 248
      %v821 = vadd.s32 %v789, 256
      %v822 = vadd.s32 %v789, 264
      %v823 = vadd.s32 %v789, 272
      %v824 = vadd.s32 %v789, 280
      %s825 = smul.u32 %s26, 256
      %s826 = ssub.s32 %s825, 16
      %v827 = vstv %s826
      %v828 = vadd.s32 %v789, %v827
      %v829 = vadd.s32 %v790, %v827
      %v830 = vadd.s32 %v791, %v827
      %v831 = vadd.s32 %v792, %v827
      %v832 = vadd.s32 %v793, %v827
      %v833 = vadd.s32 %v794, %v827
      %v834 = vadd.s32 %v795, %v827
      %v835 = vadd.s32 %v796, %v827
      %v836 = vadd.s32 %v797, %v827
      %v837 = vadd.s32 %v798, %v827
      %v838 = vadd.s32 %v799, %v827
      %v839 = vadd.s32 %v800, %v827
      %v840 = vadd.s32 %v801, %v827
      %v841 = vadd.s32 %v802, %v827
      %v842 = vadd.s32 %v803, %v827
      %v843 = vadd.s32 %v804, %v827
      %v844 = vadd.s32 %v805, %v827
      %v845 = vadd.s32 %v806, %v827
      %v846 = vadd.s32 %v807, %v827
      %v847 = vadd.s32 %v808, %v827
      %v848 = vadd.s32 %v809, %v827
      %v849 = vadd.s32 %v810, %v827
      %v850 = vadd.s32 %v811, %v827
      %v851 = vadd.s32 %v812, %v827
      %v852 = vadd.s32 %v813, %v827
      %v853 = vadd.s32 %v814, %v827
      %v854 = vadd.s32 %v815, %v827
      %v855 = vadd.s32 %v816, %v827
      %v856 = vadd.s32 %v817, %v827
      %v857 = vadd.s32 %v818, %v827
      %v858 = vadd.s32 %v819, %v827
      %v859 = vadd.s32 %v820, %v827
      %v860 = vadd.s32 %v821, %v827
      %v861 = vadd.s32 %v822, %v827
      %v862 = vadd.s32 %v823, %v827
      %v863 = vadd.s32 %v824, %v827
      %vm864 = vcmp.ge.s32.totalorder %v828, 0
      %vm865 = vcmp.ge.s32.totalorder %v829, 0
      %vm866 = vcmp.ge.s32.totalorder %v830, 0
      %vm867 = vcmp.ge.s32.totalorder %v831, 0
      %vm868 = vcmp.ge.s32.totalorder %v832, 0
      %vm869 = vcmp.ge.s32.totalorder %v833, 0
      %vm870 = vcmp.ge.s32.totalorder %v834, 0
      %vm871 = vcmp.ge.s32.totalorder %v835, 0
      %vm872 = vcmp.ge.s32.totalorder %v836, 0
      %vm873 = vcmp.ge.s32.totalorder %v837, 0
      %vm874 = vcmp.ge.s32.totalorder %v838, 0
      %vm875 = vcmp.ge.s32.totalorder %v839, 0
      %vm876 = vcmp.ge.s32.totalorder %v840, 0
      %vm877 = vcmp.ge.s32.totalorder %v841, 0
      %vm878 = vcmp.ge.s32.totalorder %v842, 0
      %vm879 = vcmp.ge.s32.totalorder %v843, 0
      %vm880 = vcmp.ge.s32.totalorder %v844, 0
      %vm881 = vcmp.ge.s32.totalorder %v845, 0
      %vm882 = vcmp.ge.s32.totalorder %v846, 0
      %vm883 = vcmp.ge.s32.totalorder %v847, 0
      %vm884 = vcmp.ge.s32.totalorder %v848, 0
      %vm885 = vcmp.ge.s32.totalorder %v849, 0
      %vm886 = vcmp.ge.s32.totalorder %v850, 0
      %vm887 = vcmp.ge.s32.totalorder %v851, 0
      %vm888 = vcmp.ge.s32.totalorder %v852, 0
      %vm889 = vcmp.ge.s32.totalorder %v853, 0
      %vm890 = vcmp.ge.s32.totalorder %v854, 0
      %vm891 = vcmp.ge.s32.totalorder %v855, 0
      %vm892 = vcmp.ge.s32.totalorder %v856, 0
      %vm893 = vcmp.ge.s32.totalorder %v857, 0
      %vm894 = vcmp.ge.s32.totalorder %v858, 0
      %vm895 = vcmp.ge.s32.totalorder %v859, 0
      %vm896 = vcmp.ge.s32.totalorder %v860, 0
      %vm897 = vcmp.ge.s32.totalorder %v861, 0
      %vm898 = vcmp.ge.s32.totalorder %v862, 0
      %vm899 = vcmp.ge.s32.totalorder %v863, 0
      %vm900 = vcmp.lt.s32.totalorder %v828, 256
      %vm901 = vcmp.lt.s32.totalorder %v829, 256
      %vm902 = vcmp.lt.s32.totalorder %v830, 256
      %vm903 = vcmp.lt.s32.totalorder %v831, 256
      %vm904 = vcmp.lt.s32.totalorder %v832, 256
      %vm905 = vcmp.lt.s32.totalorder %v833, 256
      %vm906 = vcmp.lt.s32.totalorder %v834, 256
      %vm907 = vcmp.lt.s32.totalorder %v835, 256
      %vm908 = vcmp.lt.s32.totalorder %v836, 256
      %vm909 = vcmp.lt.s32.totalorder %v837, 256
      %vm910 = vcmp.lt.s32.totalorder %v838, 256
      %vm911 = vcmp.lt.s32.totalorder %v839, 256
      %vm912 = vcmp.lt.s32.totalorder %v840, 256
      %vm913 = vcmp.lt.s32.totalorder %v841, 256
      %vm914 = vcmp.lt.s32.totalorder %v842, 256
      %vm915 = vcmp.lt.s32.totalorder %v843, 256
      %vm916 = vcmp.lt.s32.totalorder %v844, 256
      %vm917 = vcmp.lt.s32.totalorder %v845, 256
      %vm918 = vcmp.lt.s32.totalorder %v846, 256
      %vm919 = vcmp.lt.s32.totalorder %v847, 256
      %vm920 = vcmp.lt.s32.totalorder %v848, 256
      %vm921 = vcmp.lt.s32.totalorder %v849, 256
      %vm922 = vcmp.lt.s32.totalorder %v850, 256
      %vm923 = vcmp.lt.s32.totalorder %v851, 256
      %vm924 = vcmp.lt.s32.totalorder %v852, 256
      %vm925 = vcmp.lt.s32.totalorder %v853, 256
      %vm926 = vcmp.lt.s32.totalorder %v854, 256
      %vm927 = vcmp.lt.s32.totalorder %v855, 256
      %vm928 = vcmp.lt.s32.totalorder %v856, 256
      %vm929 = vcmp.lt.s32.totalorder %v857, 256
      %vm930 = vcmp.lt.s32.totalorder %v858, 256
      %vm931 = vcmp.lt.s32.totalorder %v859, 256
      %vm932 = vcmp.lt.s32.totalorder %v860, 256
      %vm933 = vcmp.lt.s32.totalorder %v861, 256
      %vm934 = vcmp.lt.s32.totalorder %v862, 256
      %vm935 = vcmp.lt.s32.totalorder %v863, 256
      %vm936 = vmand %vm864, %vm900
      %vm937 = vmand %vm865, %vm901
      %vm938 = vmand %vm866, %vm902
      %vm939 = vmand %vm867, %vm903
      %vm940 = vmand %vm868, %vm904
      %vm941 = vmand %vm869, %vm905
      %vm942 = vmand %vm870, %vm906
      %vm943 = vmand %vm871, %vm907
      %vm944 = vmand %vm872, %vm908
      %vm945 = vmand %vm873, %vm909
      %vm946 = vmand %vm874, %vm910
      %vm947 = vmand %vm875, %vm911
      %vm948 = vmand %vm876, %vm912
      %vm949 = vmand %vm877, %vm913
      %vm950 = vmand %vm878, %vm914
      %vm951 = vmand %vm879, %vm915
      %vm952 = vmand %vm880, %vm916
      %vm953 = vmand %vm881, %vm917
      %vm954 = vmand %vm882, %vm918
      %vm955 = vmand %vm883, %vm919
      %vm956 = vmand %vm884, %vm920
      %vm957 = vmand %vm885, %vm921
      %vm958 = vmand %vm886, %vm922
      %vm959 = vmand %vm887, %vm923
      %vm960 = vmand %vm888, %vm924
      %vm961 = vmand %vm889, %vm925
      %vm962 = vmand %vm890, %vm926
      %vm963 = vmand %vm891, %vm927
      %vm964 = vmand %vm892, %vm928
      %vm965 = vmand %vm893, %vm929
      %vm966 = vmand %vm894, %vm930
      %vm967 = vmand %vm895, %vm931
      %vm968 = vmand %vm896, %vm932
      %vm969 = vmand %vm897, %vm933
      %vm970 = vmand %vm898, %vm934
      %vm971 = vmand %vm899, %vm935
      %v972 = vsel %vm936, %v752, 0.0
      %v973 = vsel %vm937, %v753, 0.0
      %v974 = vsel %vm938, %v754, 0.0
      %v975 = vsel %vm939, %v755, 0.0
      %v976 = vsel %vm940, %v756, 0.0
      %v977 = vsel %vm941, %v757, 0.0
      %v978 = vsel %vm942, %v758, 0.0
      %v979 = vsel %vm943, %v759, 0.0
      %v980 = vsel %vm944, %v760, 0.0
      %v981 = vsel %vm945, %v761, 0.0
      %v982 = vsel %vm946, %v762, 0.0
      %v983 = vsel %vm947, %v763, 0.0
      %v984 = vsel %vm948, %v764, 0.0
      %v985 = vsel %vm949, %v765, 0.0
      %v986 = vsel %vm950, %v766, 0.0
      %v987 = vsel %vm951, %v767, 0.0
      %v988 = vsel %vm952, %v768, 0.0
      %v989 = vsel %vm953, %v769, 0.0
      %v990 = vsel %vm954, %v770, 0.0
      %v991 = vsel %vm955, %v771, 0.0
      %v992 = vsel %vm956, %v772, 0.0
      %v993 = vsel %vm957, %v773, 0.0
      %v994 = vsel %vm958, %v774, 0.0
      %v995 = vsel %vm959, %v775, 0.0
      %v996 = vsel %vm960, %v776, 0.0
      %v997 = vsel %vm961, %v777, 0.0
      %v998 = vsel %vm962, %v778, 0.0
      %v999 = vsel %vm963, %v779, 0.0
      %v1000 = vsel %vm964, %v780, 0.0
      %v1001 = vsel %vm965, %v781, 0.0
      %v1002 = vsel %vm966, %v782, 0.0
      %v1003 = vsel %vm967, %v783, 0.0
      %v1004 = vsel %vm968, %v784, 0.0
      %v1005 = vsel %vm969, %v785, 0.0
      %v1006 = vsel %vm970, %v786, 0.0
      %v1007 = vsel %vm971, %v787, 0.0
      %vm1008 = vcmp.lt.s32.totalorder %v789, 0
      %v1009 = vsub.s32 0, %v789
      %v1010 = vsel %vm1008, %v1009, %v789
      %v1011 = vshrl.u32 %v1010, 4
      %v1012 = vand.u32 %v1010, 15
      %v1013 = vsub.s32 0, %v1012
      %v1014 = vsel %vm1008, %v1013, %v1012
      %vm1015 = vcmp.lt.s32.totalorder %v790, 0
      %v1016 = vsub.s32 0, %v790
      %v1017 = vsel %vm1015, %v1016, %v790
      %v1018 = vshrl.u32 %v1017, 4
      %v1019 = vand.u32 %v1017, 15
      %v1020 = vsub.s32 0, %v1019
      %v1021 = vsel %vm1015, %v1020, %v1019
      %vm1022 = vcmp.lt.s32.totalorder %v791, 0
      %v1023 = vsub.s32 0, %v791
      %v1024 = vsel %vm1022, %v1023, %v791
      %v1025 = vshrl.u32 %v1024, 4
      %v1026 = vand.u32 %v1024, 15
      %v1027 = vsub.s32 0, %v1026
      %v1028 = vsel %vm1022, %v1027, %v1026
      %vm1029 = vcmp.lt.s32.totalorder %v792, 0
      %v1030 = vsub.s32 0, %v792
      %v1031 = vsel %vm1029, %v1030, %v792
      %v1032 = vshrl.u32 %v1031, 4
      %v1033 = vand.u32 %v1031, 15
      %v1034 = vsub.s32 0, %v1033
      %v1035 = vsel %vm1029, %v1034, %v1033
      %vm1036 = vcmp.lt.s32.totalorder %v793, 0
      %v1037 = vsub.s32 0, %v793
      %v1038 = vsel %vm1036, %v1037, %v793
      %v1039 = vshrl.u32 %v1038, 4
      %v1040 = vand.u32 %v1038, 15
      %v1041 = vsub.s32 0, %v1040
      %v1042 = vsel %vm1036, %v1041, %v1040
      %vm1043 = vcmp.lt.s32.totalorder %v794, 0
      %v1044 = vsub.s32 0, %v794
      %v1045 = vsel %vm1043, %v1044, %v794
      %v1046 = vshrl.u32 %v1045, 4
      %v1047 = vand.u32 %v1045, 15
      %v1048 = vsub.s32 0, %v1047
      %v1049 = vsel %vm1043, %v1048, %v1047
      %vm1050 = vcmp.lt.s32.totalorder %v795, 0
      %v1051 = vsub.s32 0, %v795
      %v1052 = vsel %vm1050, %v1051, %v795
      %v1053 = vshrl.u32 %v1052, 4
      %v1054 = vand.u32 %v1052, 15
      %v1055 = vsub.s32 0, %v1054
      %v1056 = vsel %vm1050, %v1055, %v1054
      %vm1057 = vcmp.lt.s32.totalorder %v796, 0
      %v1058 = vsub.s32 0, %v796
      %v1059 = vsel %vm1057, %v1058, %v796
      %v1060 = vshrl.u32 %v1059, 4
      %v1061 = vand.u32 %v1059, 15
      %v1062 = vsub.s32 0, %v1061
      %v1063 = vsel %vm1057, %v1062, %v1061
      %vm1064 = vcmp.lt.s32.totalorder %v797, 0
      %v1065 = vsub.s32 0, %v797
      %v1066 = vsel %vm1064, %v1065, %v797
      %v1067 = vshrl.u32 %v1066, 4
      %v1068 = vand.u32 %v1066, 15
      %v1069 = vsub.s32 0, %v1068
      %v1070 = vsel %vm1064, %v1069, %v1068
      %vm1071 = vcmp.lt.s32.totalorder %v798, 0
      %v1072 = vsub.s32 0, %v798
      %v1073 = vsel %vm1071, %v1072, %v798
      %v1074 = vshrl.u32 %v1073, 4
      %v1075 = vand.u32 %v1073, 15
      %v1076 = vsub.s32 0, %v1075
      %v1077 = vsel %vm1071, %v1076, %v1075
      %vm1078 = vcmp.lt.s32.totalorder %v799, 0
      %v1079 = vsub.s32 0, %v799
      %v1080 = vsel %vm1078, %v1079, %v799
      %v1081 = vshrl.u32 %v1080, 4
      %v1082 = vand.u32 %v1080, 15
      %v1083 = vsub.s32 0, %v1082
      %v1084 = vsel %vm1078, %v1083, %v1082
      %vm1085 = vcmp.lt.s32.totalorder %v800, 0
      %v1086 = vsub.s32 0, %v800
      %v1087 = vsel %vm1085, %v1086, %v800
      %v1088 = vshrl.u32 %v1087, 4
      %v1089 = vand.u32 %v1087, 15
      %v1090 = vsub.s32 0, %v1089
      %v1091 = vsel %vm1085, %v1090, %v1089
      %vm1092 = vcmp.lt.s32.totalorder %v801, 0
      %v1093 = vsub.s32 0, %v801
      %v1094 = vsel %vm1092, %v1093, %v801
      %v1095 = vshrl.u32 %v1094, 4
      %v1096 = vand.u32 %v1094, 15
      %v1097 = vsub.s32 0, %v1096
      %v1098 = vsel %vm1092, %v1097, %v1096
      %vm1099 = vcmp.lt.s32.totalorder %v802, 0
      %v1100 = vsub.s32 0, %v802
      %v1101 = vsel %vm1099, %v1100, %v802
      %v1102 = vshrl.u32 %v1101, 4
      %v1103 = vand.u32 %v1101, 15
      %v1104 = vsub.s32 0, %v1103
      %v1105 = vsel %vm1099, %v1104, %v1103
      %vm1106 = vcmp.lt.s32.totalorder %v803, 0
      %v1107 = vsub.s32 0, %v803
      %v1108 = vsel %vm1106, %v1107, %v803
      %v1109 = vshrl.u32 %v1108, 4
      %v1110 = vand.u32 %v1108, 15
      %v1111 = vsub.s32 0, %v1110
      %v1112 = vsel %vm1106, %v1111, %v1110
      %vm1113 = vcmp.lt.s32.totalorder %v804, 0
      %v1114 = vsub.s32 0, %v804
      %v1115 = vsel %vm1113, %v1114, %v804
      %v1116 = vshrl.u32 %v1115, 4
      %v1117 = vand.u32 %v1115, 15
      %v1118 = vsub.s32 0, %v1117
      %v1119 = vsel %vm1113, %v1118, %v1117
      %vm1120 = vcmp.lt.s32.totalorder %v805, 0
      %v1121 = vsub.s32 0, %v805
      %v1122 = vsel %vm1120, %v1121, %v805
      %v1123 = vshrl.u32 %v1122, 4
      %v1124 = vand.u32 %v1122, 15
      %v1125 = vsub.s32 0, %v1124
      %v1126 = vsel %vm1120, %v1125, %v1124
      %vm1127 = vcmp.lt.s32.totalorder %v806, 0
      %v1128 = vsub.s32 0, %v806
      %v1129 = vsel %vm1127, %v1128, %v806
      %v1130 = vshrl.u32 %v1129, 4
      %v1131 = vand.u32 %v1129, 15
      %v1132 = vsub.s32 0, %v1131
      %v1133 = vsel %vm1127, %v1132, %v1131
      %vm1134 = vcmp.lt.s32.totalorder %v807, 0
      %v1135 = vsub.s32 0, %v807
      %v1136 = vsel %vm1134, %v1135, %v807
      %v1137 = vshrl.u32 %v1136, 4
      %v1138 = vand.u32 %v1136, 15
      %v1139 = vsub.s32 0, %v1138
      %v1140 = vsel %vm1134, %v1139, %v1138
      %vm1141 = vcmp.lt.s32.totalorder %v808, 0
      %v1142 = vsub.s32 0, %v808
      %v1143 = vsel %vm1141, %v1142, %v808
      %v1144 = vshrl.u32 %v1143, 4
      %v1145 = vand.u32 %v1143, 15
      %v1146 = vsub.s32 0, %v1145
      %v1147 = vsel %vm1141, %v1146, %v1145
      %vm1148 = vcmp.lt.s32.totalorder %v809, 0
      %v1149 = vsub.s32 0, %v809
      %v1150 = vsel %vm1148, %v1149, %v809
      %v1151 = vshrl.u32 %v1150, 4
      %v1152 = vand.u32 %v1150, 15
      %v1153 = vsub.s32 0, %v1152
      %v1154 = vsel %vm1148, %v1153, %v1152
      %vm1155 = vcmp.lt.s32.totalorder %v810, 0
      %v1156 = vsub.s32 0, %v810
      %v1157 = vsel %vm1155, %v1156, %v810
      %v1158 = vshrl.u32 %v1157, 4
      %v1159 = vand.u32 %v1157, 15
      %v1160 = vsub.s32 0, %v1159
      %v1161 = vsel %vm1155, %v1160, %v1159
      %vm1162 = vcmp.lt.s32.totalorder %v811, 0
      %v1163 = vsub.s32 0, %v811
      %v1164 = vsel %vm1162, %v1163, %v811
      %v1165 = vshrl.u32 %v1164, 4
      %v1166 = vand.u32 %v1164, 15
      %v1167 = vsub.s32 0, %v1166
      %v1168 = vsel %vm1162, %v1167, %v1166
      %vm1169 = vcmp.lt.s32.totalorder %v812, 0
      %v1170 = vsub.s32 0, %v812
      %v1171 = vsel %vm1169, %v1170, %v812
      %v1172 = vshrl.u32 %v1171, 4
      %v1173 = vand.u32 %v1171, 15
      %v1174 = vsub.s32 0, %v1173
      %v1175 = vsel %vm1169, %v1174, %v1173
      %vm1176 = vcmp.lt.s32.totalorder %v813, 0
      %v1177 = vsub.s32 0, %v813
      %v1178 = vsel %vm1176, %v1177, %v813
      %v1179 = vshrl.u32 %v1178, 4
      %v1180 = vand.u32 %v1178, 15
      %v1181 = vsub.s32 0, %v1180
      %v1182 = vsel %vm1176, %v1181, %v1180
      %vm1183 = vcmp.lt.s32.totalorder %v814, 0
      %v1184 = vsub.s32 0, %v814
      %v1185 = vsel %vm1183, %v1184, %v814
      %v1186 = vshrl.u32 %v1185, 4
      %v1187 = vand.u32 %v1185, 15
      %v1188 = vsub.s32 0, %v1187
      %v1189 = vsel %vm1183, %v1188, %v1187
      %vm1190 = vcmp.lt.s32.totalorder %v815, 0
      %v1191 = vsub.s32 0, %v815
      %v1192 = vsel %vm1190, %v1191, %v815
      %v1193 = vshrl.u32 %v1192, 4
      %v1194 = vand.u32 %v1192, 15
      %v1195 = vsub.s32 0, %v1194
      %v1196 = vsel %vm1190, %v1195, %v1194
      %vm1197 = vcmp.lt.s32.totalorder %v816, 0
      %v1198 = vsub.s32 0, %v816
      %v1199 = vsel %vm1197, %v1198, %v816
      %v1200 = vshrl.u32 %v1199, 4
      %v1201 = vand.u32 %v1199, 15
      %v1202 = vsub.s32 0, %v1201
      %v1203 = vsel %vm1197, %v1202, %v1201
      %vm1204 = vcmp.lt.s32.totalorder %v817, 0
      %v1205 = vsub.s32 0, %v817
      %v1206 = vsel %vm1204, %v1205, %v817
      %v1207 = vshrl.u32 %v1206, 4
      %v1208 = vand.u32 %v1206, 15
      %v1209 = vsub.s32 0, %v1208
      %v1210 = vsel %vm1204, %v1209, %v1208
      %vm1211 = vcmp.lt.s32.totalorder %v818, 0
      %v1212 = vsub.s32 0, %v818
      %v1213 = vsel %vm1211, %v1212, %v818
      %v1214 = vshrl.u32 %v1213, 4
      %v1215 = vand.u32 %v1213, 15
      %v1216 = vsub.s32 0, %v1215
      %v1217 = vsel %vm1211, %v1216, %v1215
      %vm1218 = vcmp.lt.s32.totalorder %v819, 0
      %v1219 = vsub.s32 0, %v819
      %v1220 = vsel %vm1218, %v1219, %v819
      %v1221 = vshrl.u32 %v1220, 4
      %v1222 = vand.u32 %v1220, 15
      %v1223 = vsub.s32 0, %v1222
      %v1224 = vsel %vm1218, %v1223, %v1222
      %vm1225 = vcmp.lt.s32.totalorder %v820, 0
      %v1226 = vsub.s32 0, %v820
      %v1227 = vsel %vm1225, %v1226, %v820
      %v1228 = vshrl.u32 %v1227, 4
      %v1229 = vand.u32 %v1227, 15
      %v1230 = vsub.s32 0, %v1229
      %v1231 = vsel %vm1225, %v1230, %v1229
      %vm1232 = vcmp.lt.s32.totalorder %v821, 0
      %v1233 = vsub.s32 0, %v821
      %v1234 = vsel %vm1232, %v1233, %v821
      %v1235 = vshrl.u32 %v1234, 4
      %v1236 = vand.u32 %v1234, 15
      %v1237 = vsub.s32 0, %v1236
      %v1238 = vsel %vm1232, %v1237, %v1236
      %vm1239 = vcmp.lt.s32.totalorder %v822, 0
      %v1240 = vsub.s32 0, %v822
      %v1241 = vsel %vm1239, %v1240, %v822
      %v1242 = vshrl.u32 %v1241, 4
      %v1243 = vand.u32 %v1241, 15
      %v1244 = vsub.s32 0, %v1243
      %v1245 = vsel %vm1239, %v1244, %v1243
      %vm1246 = vcmp.lt.s32.totalorder %v823, 0
      %v1247 = vsub.s32 0, %v823
      %v1248 = vsel %vm1246, %v1247, %v823
      %v1249 = vshrl.u32 %v1248, 4
      %v1250 = vand.u32 %v1248, 15
      %v1251 = vsub.s32 0, %v1250
      %v1252 = vsel %vm1246, %v1251, %v1250
      %vm1253 = vcmp.lt.s32.totalorder %v824, 0
      %v1254 = vsub.s32 0, %v824
      %v1255 = vsel %vm1253, %v1254, %v824
      %v1256 = vshrl.u32 %v1255, 4
      %v1257 = vand.u32 %v1255, 15
      %v1258 = vsub.s32 0, %v1257
      %v1259 = vsel %vm1253, %v1258, %v1257
      %vm1260 = vcmp.ne.s32.totalorder %v1014, 0
      %vm1261 = vcmp.ne.s32.totalorder %v1021, 0
      %vm1262 = vcmp.ne.s32.totalorder %v1028, 0
      %vm1263 = vcmp.ne.s32.totalorder %v1035, 0
      %vm1264 = vcmp.ne.s32.totalorder %v1042, 0
      %vm1265 = vcmp.ne.s32.totalorder %v1049, 0
      %vm1266 = vcmp.ne.s32.totalorder %v1056, 0
      %vm1267 = vcmp.ne.s32.totalorder %v1063, 0
      %vm1268 = vcmp.ne.s32.totalorder %v1070, 0
      %vm1269 = vcmp.ne.s32.totalorder %v1077, 0
      %vm1270 = vcmp.ne.s32.totalorder %v1084, 0
      %vm1271 = vcmp.ne.s32.totalorder %v1091, 0
      %vm1272 = vcmp.ne.s32.totalorder %v1098, 0
      %vm1273 = vcmp.ne.s32.totalorder %v1105, 0
      %vm1274 = vcmp.ne.s32.totalorder %v1112, 0
      %vm1275 = vcmp.ne.s32.totalorder %v1119, 0
      %vm1276 = vcmp.ne.s32.totalorder %v1126, 0
      %vm1277 = vcmp.ne.s32.totalorder %v1133, 0
      %vm1278 = vcmp.ne.s32.totalorder %v1140, 0
      %vm1279 = vcmp.ne.s32.totalorder %v1147, 0
      %vm1280 = vcmp.ne.s32.totalorder %v1154, 0
      %vm1281 = vcmp.ne.s32.totalorder %v1161, 0
      %vm1282 = vcmp.ne.s32.totalorder %v1168, 0
      %vm1283 = vcmp.ne.s32.totalorder %v1175, 0
      %vm1284 = vcmp.ne.s32.totalorder %v1182, 0
      %vm1285 = vcmp.ne.s32.totalorder %v1189, 0
      %vm1286 = vcmp.ne.s32.totalorder %v1196, 0
      %vm1287 = vcmp.ne.s32.totalorder %v1203, 0
      %vm1288 = vcmp.ne.s32.totalorder %v1210, 0
      %vm1289 = vcmp.ne.s32.totalorder %v1217, 0
      %vm1290 = vcmp.ne.s32.totalorder %v1224, 0
      %vm1291 = vcmp.ne.s32.totalorder %v1231, 0
      %vm1292 = vcmp.ne.s32.totalorder %v1238, 0
      %vm1293 = vcmp.ne.s32.totalorder %v1245, 0
      %vm1294 = vcmp.ne.s32.totalorder %v1252, 0
      %vm1295 = vcmp.ne.s32.totalorder %v1259, 0
      %vm1296 = vcmp.lt.s32.totalorder %v1014, 0
      %vm1297 = vcmp.lt.s32.totalorder %v1021, 0
      %vm1298 = vcmp.lt.s32.totalorder %v1028, 0
      %vm1299 = vcmp.lt.s32.totalorder %v1035, 0
      %vm1300 = vcmp.lt.s32.totalorder %v1042, 0
      %vm1301 = vcmp.lt.s32.totalorder %v1049, 0
      %vm1302 = vcmp.lt.s32.totalorder %v1056, 0
      %vm1303 = vcmp.lt.s32.totalorder %v1063, 0
      %vm1304 = vcmp.lt.s32.totalorder %v1070, 0
      %vm1305 = vcmp.lt.s32.totalorder %v1077, 0
      %vm1306 = vcmp.lt.s32.totalorder %v1084, 0
      %vm1307 = vcmp.lt.s32.totalorder %v1091, 0
      %vm1308 = vcmp.lt.s32.totalorder %v1098, 0
      %vm1309 = vcmp.lt.s32.totalorder %v1105, 0
      %vm1310 = vcmp.lt.s32.totalorder %v1112, 0
      %vm1311 = vcmp.lt.s32.totalorder %v1119, 0
      %vm1312 = vcmp.lt.s32.totalorder %v1126, 0
      %vm1313 = vcmp.lt.s32.totalorder %v1133, 0
      %vm1314 = vcmp.lt.s32.totalorder %v1140, 0
      %vm1315 = vcmp.lt.s32.totalorder %v1147, 0
      %vm1316 = vcmp.lt.s32.totalorder %v1154, 0
      %vm1317 = vcmp.lt.s32.totalorder %v1161, 0
      %vm1318 = vcmp.lt.s32.totalorder %v1168, 0
      %vm1319 = vcmp.lt.s32.totalorder %v1175, 0
      %vm1320 = vcmp.lt.s32.totalorder %v1182, 0
      %vm1321 = vcmp.lt.s32.totalorder %v1189, 0
      %vm1322 = vcmp.lt.s32.totalorder %v1196, 0
      %vm1323 = vcmp.lt.s32.totalorder %v1203, 0
      %vm1324 = vcmp.lt.s32.totalorder %v1210, 0
      %vm1325 = vcmp.lt.s32.totalorder %v1217, 0
      %vm1326 = vcmp.lt.s32.totalorder %v1224, 0
      %vm1327 = vcmp.lt.s32.totalorder %v1231, 0
      %vm1328 = vcmp.lt.s32.totalorder %v1238, 0
      %vm1329 = vcmp.lt.s32.totalorder %v1245, 0
      %vm1330 = vcmp.lt.s32.totalorder %v1252, 0
      %vm1331 = vcmp.lt.s32.totalorder %v1259, 0
      %vm1332 = vmand %vm1296, %vm1260
      %vm1333 = vmand %vm1297, %vm1261
      %vm1334 = vmand %vm1298, %vm1262
      %vm1335 = vmand %vm1299, %vm1263
      %vm1336 = vmand %vm1300, %vm1264
      %vm1337 = vmand %vm1301, %vm1265
      %vm1338 = vmand %vm1302, %vm1266
      %vm1339 = vmand %vm1303, %vm1267
      %vm1340 = vmand %vm1304, %vm1268
      %vm1341 = vmand %vm1305, %vm1269
      %vm1342 = vmand %vm1306, %vm1270
      %vm1343 = vmand %vm1307, %vm1271
      %vm1344 = vmand %vm1308, %vm1272
      %vm1345 = vmand %vm1309, %vm1273
      %vm1346 = vmand %vm1310, %vm1274
      %vm1347 = vmand %vm1311, %vm1275
      %vm1348 = vmand %vm1312, %vm1276
      %vm1349 = vmand %vm1313, %vm1277
      %vm1350 = vmand %vm1314, %vm1278
      %vm1351 = vmand %vm1315, %vm1279
      %vm1352 = vmand %vm1316, %vm1280
      %vm1353 = vmand %vm1317, %vm1281
      %vm1354 = vmand %vm1318, %vm1282
      %vm1355 = vmand %vm1319, %vm1283
      %vm1356 = vmand %vm1320, %vm1284
      %vm1357 = vmand %vm1321, %vm1285
      %vm1358 = vmand %vm1322, %vm1286
      %vm1359 = vmand %vm1323, %vm1287
      %vm1360 = vmand %vm1324, %vm1288
      %vm1361 = vmand %vm1325, %vm1289
      %vm1362 = vmand %vm1326, %vm1290
      %vm1363 = vmand %vm1327, %vm1291
      %vm1364 = vmand %vm1328, %vm1292
      %vm1365 = vmand %vm1329, %vm1293
      %vm1366 = vmand %vm1330, %vm1294
      %vm1367 = vmand %vm1331, %vm1295
      %v1368 = vadd.s32 %v1014, 16
      %v1369 = vadd.s32 %v1021, 16
      %v1370 = vadd.s32 %v1028, 16
      %v1371 = vadd.s32 %v1035, 16
      %v1372 = vadd.s32 %v1042, 16
      %v1373 = vadd.s32 %v1049, 16
      %v1374 = vadd.s32 %v1056, 16
      %v1375 = vadd.s32 %v1063, 16
      %v1376 = vadd.s32 %v1070, 16
      %v1377 = vadd.s32 %v1077, 16
      %v1378 = vadd.s32 %v1084, 16
      %v1379 = vadd.s32 %v1091, 16
      %v1380 = vadd.s32 %v1098, 16
      %v1381 = vadd.s32 %v1105, 16
      %v1382 = vadd.s32 %v1112, 16
      %v1383 = vadd.s32 %v1119, 16
      %v1384 = vadd.s32 %v1126, 16
      %v1385 = vadd.s32 %v1133, 16
      %v1386 = vadd.s32 %v1140, 16
      %v1387 = vadd.s32 %v1147, 16
      %v1388 = vadd.s32 %v1154, 16
      %v1389 = vadd.s32 %v1161, 16
      %v1390 = vadd.s32 %v1168, 16
      %v1391 = vadd.s32 %v1175, 16
      %v1392 = vadd.s32 %v1182, 16
      %v1393 = vadd.s32 %v1189, 16
      %v1394 = vadd.s32 %v1196, 16
      %v1395 = vadd.s32 %v1203, 16
      %v1396 = vadd.s32 %v1210, 16
      %v1397 = vadd.s32 %v1217, 16
      %v1398 = vadd.s32 %v1224, 16
      %v1399 = vadd.s32 %v1231, 16
      %v1400 = vadd.s32 %v1238, 16
      %v1401 = vadd.s32 %v1245, 16
      %v1402 = vadd.s32 %v1252, 16
      %v1403 = vadd.s32 %v1259, 16
      %v1404 = vsel %vm1332, %v1368, %v1014
      %v1405 = vsel %vm1333, %v1369, %v1021
      %v1406 = vsel %vm1334, %v1370, %v1028
      %v1407 = vsel %vm1335, %v1371, %v1035
      %v1408 = vsel %vm1336, %v1372, %v1042
      %v1409 = vsel %vm1337, %v1373, %v1049
      %v1410 = vsel %vm1338, %v1374, %v1056
      %v1411 = vsel %vm1339, %v1375, %v1063
      %v1412 = vsel %vm1340, %v1376, %v1070
      %v1413 = vsel %vm1341, %v1377, %v1077
      %v1414 = vsel %vm1342, %v1378, %v1084
      %v1415 = vsel %vm1343, %v1379, %v1091
      %v1416 = vsel %vm1344, %v1380, %v1098
      %v1417 = vsel %vm1345, %v1381, %v1105
      %v1418 = vsel %vm1346, %v1382, %v1112
      %v1419 = vsel %vm1347, %v1383, %v1119
      %v1420 = vsel %vm1348, %v1384, %v1126
      %v1421 = vsel %vm1349, %v1385, %v1133
      %v1422 = vsel %vm1350, %v1386, %v1140
      %v1423 = vsel %vm1351, %v1387, %v1147
      %v1424 = vsel %vm1352, %v1388, %v1154
      %v1425 = vsel %vm1353, %v1389, %v1161
      %v1426 = vsel %vm1354, %v1390, %v1168
      %v1427 = vsel %vm1355, %v1391, %v1175
      %v1428 = vsel %vm1356, %v1392, %v1182
      %v1429 = vsel %vm1357, %v1393, %v1189
      %v1430 = vsel %vm1358, %v1394, %v1196
      %v1431 = vsel %vm1359, %v1395, %v1203
      %v1432 = vsel %vm1360, %v1396, %v1210
      %v1433 = vsel %vm1361, %v1397, %v1217
      %v1434 = vsel %vm1362, %v1398, %v1224
      %v1435 = vsel %vm1363, %v1399, %v1231
      %v1436 = vsel %vm1364, %v1400, %v1238
      %v1437 = vsel %vm1365, %v1401, %v1245
      %v1438 = vsel %vm1366, %v1402, %v1252
      %v1439 = vsel %vm1367, %v1403, %v1259
      %vm1440 = vcmp.ne.s32.totalorder %v1404, 0
      %vm1441 = vcmp.ne.s32.totalorder %v1405, 0
      %vm1442 = vcmp.ne.s32.totalorder %v1406, 0
      %vm1443 = vcmp.ne.s32.totalorder %v1407, 0
      %vm1444 = vcmp.ne.s32.totalorder %v1408, 0
      %vm1445 = vcmp.ne.s32.totalorder %v1409, 0
      %vm1446 = vcmp.ne.s32.totalorder %v1410, 0
      %vm1447 = vcmp.ne.s32.totalorder %v1411, 0
      %vm1448 = vcmp.ne.s32.totalorder %v1412, 0
      %vm1449 = vcmp.ne.s32.totalorder %v1413, 0
      %vm1450 = vcmp.ne.s32.totalorder %v1414, 0
      %vm1451 = vcmp.ne.s32.totalorder %v1415, 0
      %vm1452 = vcmp.ne.s32.totalorder %v1416, 0
      %vm1453 = vcmp.ne.s32.totalorder %v1417, 0
      %vm1454 = vcmp.ne.s32.totalorder %v1418, 0
      %vm1455 = vcmp.ne.s32.totalorder %v1419, 0
      %vm1456 = vcmp.ne.s32.totalorder %v1420, 0
      %vm1457 = vcmp.ne.s32.totalorder %v1421, 0
      %vm1458 = vcmp.ne.s32.totalorder %v1422, 0
      %vm1459 = vcmp.ne.s32.totalorder %v1423, 0
      %vm1460 = vcmp.ne.s32.totalorder %v1424, 0
      %vm1461 = vcmp.ne.s32.totalorder %v1425, 0
      %vm1462 = vcmp.ne.s32.totalorder %v1426, 0
      %vm1463 = vcmp.ne.s32.totalorder %v1427, 0
      %vm1464 = vcmp.ne.s32.totalorder %v1428, 0
      %vm1465 = vcmp.ne.s32.totalorder %v1429, 0
      %vm1466 = vcmp.ne.s32.totalorder %v1430, 0
      %vm1467 = vcmp.ne.s32.totalorder %v1431, 0
      %vm1468 = vcmp.ne.s32.totalorder %v1432, 0
      %vm1469 = vcmp.ne.s32.totalorder %v1433, 0
      %vm1470 = vcmp.ne.s32.totalorder %v1434, 0
      %vm1471 = vcmp.ne.s32.totalorder %v1435, 0
      %vm1472 = vcmp.ne.s32.totalorder %v1436, 0
      %vm1473 = vcmp.ne.s32.totalorder %v1437, 0
      %vm1474 = vcmp.ne.s32.totalorder %v1438, 0
      %vm1475 = vcmp.ne.s32.totalorder %v1439, 0
      %vm1512 = vcmask 1040384
      %v1513 = vrot.slane %v972, 7
      %v1514 = vrot.slane %v973, 7
      %v1515 = vsel %vm1512, %v1513, %v1514
      %v1516 = vrot.slane %v974, 7
      %v1517 = vsel %vm1512, %v1514, %v1516
      %v1518 = vrot.slane %v975, 7
      %v1519 = vsel %vm1512, %v1516, %v1518
      %v1520 = vrot.slane %v976, 7
      %v1521 = vsel %vm1512, %v1518, %v1520
      %v1522 = vrot.slane %v977, 7
      %v1523 = vsel %vm1512, %v1520, %v1522
      %v1524 = vrot.slane %v978, 7
      %v1525 = vsel %vm1512, %v1522, %v1524
      %v1526 = vrot.slane %v979, 7
      %v1527 = vsel %vm1512, %v1524, %v1526
      %v1528 = vrot.slane %v980, 7
      %v1529 = vsel %vm1512, %v1526, %v1528
      %v1530 = vrot.slane %v981, 7
      %v1531 = vsel %vm1512, %v1528, %v1530
      %v1532 = vrot.slane %v982, 7
      %v1533 = vsel %vm1512, %v1530, %v1532
      %v1534 = vrot.slane %v983, 7
      %v1535 = vsel %vm1512, %v1532, %v1534
      %v1536 = vrot.slane %v984, 7
      %v1537 = vsel %vm1512, %v1534, %v1536
      %v1538 = vrot.slane %v985, 7
      %v1539 = vsel %vm1512, %v1536, %v1538
      %v1540 = vrot.slane %v986, 7
      %v1541 = vsel %vm1512, %v1538, %v1540
      %v1542 = vrot.slane %v987, 7
      %v1543 = vsel %vm1512, %v1540, %v1542
      %v1544 = vrot.slane %v988, 7
      %v1545 = vsel %vm1512, %v1542, %v1544
      %v1546 = vrot.slane %v989, 7
      %v1547 = vsel %vm1512, %v1544, %v1546
      %v1548 = vrot.slane %v990, 7
      %v1549 = vsel %vm1512, %v1546, %v1548
      %v1550 = vrot.slane %v991, 7
      %v1551 = vsel %vm1512, %v1548, %v1550
      %v1552 = vrot.slane %v992, 7
      %v1553 = vsel %vm1512, %v1550, %v1552
      %v1554 = vrot.slane %v993, 7
      %v1555 = vsel %vm1512, %v1552, %v1554
      %v1556 = vrot.slane %v994, 7
      %v1557 = vsel %vm1512, %v1554, %v1556
      %v1558 = vrot.slane %v995, 7
      %v1559 = vsel %vm1512, %v1556, %v1558
      %v1560 = vrot.slane %v996, 7
      %v1561 = vsel %vm1512, %v1558, %v1560
      %v1562 = vrot.slane %v997, 7
      %v1563 = vsel %vm1512, %v1560, %v1562
      %v1564 = vrot.slane %v998, 7
      %v1565 = vsel %vm1512, %v1562, %v1564
      %v1566 = vrot.slane %v999, 7
      %v1567 = vsel %vm1512, %v1564, %v1566
      %v1568 = vrot.slane %v1000, 7
      %v1569 = vsel %vm1512, %v1566, %v1568
      %v1570 = vrot.slane %v1001, 7
      %v1571 = vsel %vm1512, %v1568, %v1570
      %v1572 = vrot.slane %v1002, 7
      %v1573 = vsel %vm1512, %v1570, %v1572
      %v1574 = vrot.slane %v1003, 7
      %v1575 = vsel %vm1512, %v1572, %v1574
      %v1576 = vrot.slane %v1004, 7
      %v1577 = vsel %vm1512, %v1574, %v1576
      %v1578 = vrot.slane %v1005, 7
      %v1579 = vsel %vm1512, %v1576, %v1578
      %v1580 = vrot.slane %v1006, 7
      %v1581 = vsel %vm1512, %v1578, %v1580
      %v1582 = vrot.slane %v1007, 7
      %v1583 = vsel %vm1512, %v1580, %v1582
      %v1620 = vsel %vm1512, %v972, %v1513
      %v1621 = vsel %vm1440, %v1620, 0.0
      %v1622 = vsel %vm1441, %v1515, 0.0
      %v1623 = vsel %vm1442, %v1517, 0.0
      %v1624 = vsel %vm1443, %v1519, 0.0
      %v1625 = vsel %vm1444, %v1521, 0.0
      %v1626 = vsel %vm1445, %v1523, 0.0
      %v1627 = vsel %vm1446, %v1525, 0.0
      %v1628 = vsel %vm1447, %v1527, 0.0
      %v1629 = vsel %vm1448, %v1529, 0.0
      %v1630 = vsel %vm1449, %v1531, 0.0
      %v1631 = vsel %vm1450, %v1533, 0.0
      %v1632 = vsel %vm1451, %v1535, 0.0
      %v1633 = vsel %vm1452, %v1537, 0.0
      %v1634 = vsel %vm1453, %v1539, 0.0
      %v1635 = vsel %vm1454, %v1541, 0.0
      %v1636 = vsel %vm1455, %v1543, 0.0
      %v1637 = vsel %vm1456, %v1545, 0.0
      %v1638 = vsel %vm1457, %v1547, 0.0
      %v1639 = vsel %vm1458, %v1549, 0.0
      %v1640 = vsel %vm1459, %v1551, 0.0
      %v1641 = vsel %vm1460, %v1553, 0.0
      %v1642 = vsel %vm1461, %v1555, 0.0
      %v1643 = vsel %vm1462, %v1557, 0.0
      %v1644 = vsel %vm1463, %v1559, 0.0
      %v1645 = vsel %vm1464, %v1561, 0.0
      %v1646 = vsel %vm1465, %v1563, 0.0
      %v1647 = vsel %vm1466, %v1565, 0.0
      %v1648 = vsel %vm1467, %v1567, 0.0
      %v1649 = vsel %vm1468, %v1569, 0.0
      %v1650 = vsel %vm1469, %v1571, 0.0
      %v1651 = vsel %vm1470, %v1573, 0.0
      %v1652 = vsel %vm1471, %v1575, 0.0
      %v1653 = vsel %vm1472, %v1577, 0.0
      %v1654 = vsel %vm1473, %v1579, 0.0
      %v1655 = vsel %vm1474, %v1581, 0.0
      %v1656 = vsel %vm1475, %v1583, 0.0
      %vm1657 = vcmp.ne.s32.totalorder %v1404, 15
      %vm1658 = vcmp.ne.s32.totalorder %v1405, 15
      %vm1659 = vcmp.ne.s32.totalorder %v1406, 15
      %vm1660 = vcmp.ne.s32.totalorder %v1407, 15
      %vm1661 = vcmp.ne.s32.totalorder %v1408, 15
      %vm1662 = vcmp.ne.s32.totalorder %v1409, 15
      %vm1663 = vcmp.ne.s32.totalorder %v1410, 15
      %vm1664 = vcmp.ne.s32.totalorder %v1411, 15
      %vm1665 = vcmp.ne.s32.totalorder %v1412, 15
      %vm1666 = vcmp.ne.s32.totalorder %v1413, 15
      %vm1667 = vcmp.ne.s32.totalorder %v1414, 15
      %vm1668 = vcmp.ne.s32.totalorder %v1415, 15
      %vm1669 = vcmp.ne.s32.totalorder %v1416, 15
      %vm1670 = vcmp.ne.s32.totalorder %v1417, 15
      %vm1671 = vcmp.ne.s32.totalorder %v1418, 15
      %vm1672 = vcmp.ne.s32.totalorder %v1419, 15
      %vm1673 = vcmp.ne.s32.totalorder %v1420, 15
      %vm1674 = vcmp.ne.s32.totalorder %v1421, 15
      %vm1675 = vcmp.ne.s32.totalorder %v1422, 15
      %vm1676 = vcmp.ne.s32.totalorder %v1423, 15
      %vm1677 = vcmp.ne.s32.totalorder %v1424, 15
      %vm1678 = vcmp.ne.s32.totalorder %v1425, 15
      %vm1679 = vcmp.ne.s32.totalorder %v1426, 15
      %vm1680 = vcmp.ne.s32.totalorder %v1427, 15
      %vm1681 = vcmp.ne.s32.totalorder %v1428, 15
      %vm1682 = vcmp.ne.s32.totalorder %v1429, 15
      %vm1683 = vcmp.ne.s32.totalorder %v1430, 15
      %vm1684 = vcmp.ne.s32.totalorder %v1431, 15
      %vm1685 = vcmp.ne.s32.totalorder %v1432, 15
      %vm1686 = vcmp.ne.s32.totalorder %v1433, 15
      %vm1687 = vcmp.ne.s32.totalorder %v1434, 15
      %vm1688 = vcmp.ne.s32.totalorder %v1435, 15
      %vm1689 = vcmp.ne.s32.totalorder %v1436, 15
      %vm1690 = vcmp.ne.s32.totalorder %v1437, 15
      %vm1691 = vcmp.ne.s32.totalorder %v1438, 15
      %vm1692 = vcmp.ne.s32.totalorder %v1439, 15
      %vm1693 = vcmask 1046528
      %v1694 = vrot.slane %v972, 1
      %v1695 = vrot.slane %v973, 1
      %v1696 = vsel %vm1693, %v1694, %v1695
      %v1697 = vrot.slane %v974, 1
      %v1698 = vsel %vm1693, %v1695, %v1697
      %v1699 = vrot.slane %v975, 1
      %v1700 = vsel %vm1693, %v1697, %v1699
      %v1701 = vrot.slane %v976, 1
      %v1702 = vsel %vm1693, %v1699, %v1701
      %v1703 = vrot.slane %v977, 1
      %v1704 = vsel %vm1693, %v1701, %v1703
      %v1705 = vrot.slane %v978, 1
      %v1706 = vsel %vm1693, %v1703, %v1705
      %v1707 = vrot.slane %v979, 1
      %v1708 = vsel %vm1693, %v1705, %v1707
      %v1709 = vrot.slane %v980, 1
      %v1710 = vsel %vm1693, %v1707, %v1709
      %v1711 = vrot.slane %v981, 1
      %v1712 = vsel %vm1693, %v1709, %v1711
      %v1713 = vrot.slane %v982, 1
      %v1714 = vsel %vm1693, %v1711, %v1713
      %v1715 = vrot.slane %v983, 1
      %v1716 = vsel %vm1693, %v1713, %v1715
      %v1717 = vrot.slane %v984, 1
      %v1718 = vsel %vm1693, %v1715, %v1717
      %v1719 = vrot.slane %v985, 1
      %v1720 = vsel %vm1693, %v1717, %v1719
      %v1721 = vrot.slane %v986, 1
      %v1722 = vsel %vm1693, %v1719, %v1721
      %v1723 = vrot.slane %v987, 1
      %v1724 = vsel %vm1693, %v1721, %v1723
      %v1725 = vrot.slane %v988, 1
      %v1726 = vsel %vm1693, %v1723, %v1725
      %v1727 = vrot.slane %v989, 1
      %v1728 = vsel %vm1693, %v1725, %v1727
      %v1729 = vrot.slane %v990, 1
      %v1730 = vsel %vm1693, %v1727, %v1729
      %v1731 = vrot.slane %v991, 1
      %v1732 = vsel %vm1693, %v1729, %v1731
      %v1733 = vrot.slane %v992, 1
      %v1734 = vsel %vm1693, %v1731, %v1733
      %v1735 = vrot.slane %v993, 1
      %v1736 = vsel %vm1693, %v1733, %v1735
      %v1737 = vrot.slane %v994, 1
      %v1738 = vsel %vm1693, %v1735, %v1737
      %v1739 = vrot.slane %v995, 1
      %v1740 = vsel %vm1693, %v1737, %v1739
      %v1741 = vrot.slane %v996, 1
      %v1742 = vsel %vm1693, %v1739, %v1741
      %v1743 = vrot.slane %v997, 1
      %v1744 = vsel %vm1693, %v1741, %v1743
      %v1745 = vrot.slane %v998, 1
      %v1746 = vsel %vm1693, %v1743, %v1745
      %v1747 = vrot.slane %v999, 1
      %v1748 = vsel %vm1693, %v1745, %v1747
      %v1749 = vrot.slane %v1000, 1
      %v1750 = vsel %vm1693, %v1747, %v1749
      %v1751 = vrot.slane %v1001, 1
      %v1752 = vsel %vm1693, %v1749, %v1751
      %v1753 = vrot.slane %v1002, 1
      %v1754 = vsel %vm1693, %v1751, %v1753
      %v1755 = vrot.slane %v1003, 1
      %v1756 = vsel %vm1693, %v1753, %v1755
      %v1757 = vrot.slane %v1004, 1
      %v1758 = vsel %vm1693, %v1755, %v1757
      %v1759 = vrot.slane %v1005, 1
      %v1760 = vsel %vm1693, %v1757, %v1759
      %v1761 = vrot.slane %v1006, 1
      %v1762 = vsel %vm1693, %v1759, %v1761
      %v1763 = vrot.slane %v1007, 1
      %v1764 = vsel %vm1693, %v1761, %v1763
      %v1801 = vsel %vm1693, %v1763, %v1007
      %v1802 = vsel %vm1657, %v1696, 0.0
      %v1803 = vsel %vm1658, %v1698, 0.0
      %v1804 = vsel %vm1659, %v1700, 0.0
      %v1805 = vsel %vm1660, %v1702, 0.0
      %v1806 = vsel %vm1661, %v1704, 0.0
      %v1807 = vsel %vm1662, %v1706, 0.0
      %v1808 = vsel %vm1663, %v1708, 0.0
      %v1809 = vsel %vm1664, %v1710, 0.0
      %v1810 = vsel %vm1665, %v1712, 0.0
      %v1811 = vsel %vm1666, %v1714, 0.0
      %v1812 = vsel %vm1667, %v1716, 0.0
      %v1813 = vsel %vm1668, %v1718, 0.0
      %v1814 = vsel %vm1669, %v1720, 0.0
      %v1815 = vsel %vm1670, %v1722, 0.0
      %v1816 = vsel %vm1671, %v1724, 0.0
      %v1817 = vsel %vm1672, %v1726, 0.0
      %v1818 = vsel %vm1673, %v1728, 0.0
      %v1819 = vsel %vm1674, %v1730, 0.0
      %v1820 = vsel %vm1675, %v1732, 0.0
      %v1821 = vsel %vm1676, %v1734, 0.0
      %v1822 = vsel %vm1677, %v1736, 0.0
      %v1823 = vsel %vm1678, %v1738, 0.0
      %v1824 = vsel %vm1679, %v1740, 0.0
      %v1825 = vsel %vm1680, %v1742, 0.0
      %v1826 = vsel %vm1681, %v1744, 0.0
      %v1827 = vsel %vm1682, %v1746, 0.0
      %v1828 = vsel %vm1683, %v1748, 0.0
      %v1829 = vsel %vm1684, %v1750, 0.0
      %v1830 = vsel %vm1685, %v1752, 0.0
      %v1831 = vsel %vm1686, %v1754, 0.0
      %v1832 = vsel %vm1687, %v1756, 0.0
      %v1833 = vsel %vm1688, %v1758, 0.0
      %v1834 = vsel %vm1689, %v1760, 0.0
      %v1835 = vsel %vm1690, %v1762, 0.0
      %v1836 = vsel %vm1691, %v1764, 0.0
      %v1837 = vsel %vm1692, %v1801, 0.0
      %v1838 = vpack.c.bf16 %v972, %v972
      %v1839 = vpack.c.bf16 %v973, %v973
      %v1840 = vpack.c.bf16 %v974, %v974
      %v1841 = vpack.c.bf16 %v975, %v975
      %v1842 = vpack.c.bf16 %v976, %v976
      %v1843 = vpack.c.bf16 %v977, %v977
      %v1844 = vpack.c.bf16 %v978, %v978
      %v1845 = vpack.c.bf16 %v979, %v979
      %v1846 = vpack.c.bf16 %v980, %v980
      %v1847 = vpack.c.bf16 %v981, %v981
      %v1848 = vpack.c.bf16 %v982, %v982
      %v1849 = vpack.c.bf16 %v983, %v983
      %v1850 = vpack.c.bf16 %v984, %v984
      %v1851 = vpack.c.bf16 %v985, %v985
      %v1852 = vpack.c.bf16 %v986, %v986
      %v1853 = vpack.c.bf16 %v987, %v987
      %v1854 = vpack.c.bf16 %v988, %v988
      %v1855 = vpack.c.bf16 %v989, %v989
      %v1856 = vpack.c.bf16 %v990, %v990
      %v1857 = vpack.c.bf16 %v991, %v991
      %v1858 = vpack.c.bf16 %v992, %v992
      %v1859 = vpack.c.bf16 %v993, %v993
      %v1860 = vpack.c.bf16 %v994, %v994
      %v1861 = vpack.c.bf16 %v995, %v995
      %v1862 = vpack.c.bf16 %v996, %v996
      %v1863 = vpack.c.bf16 %v997, %v997
      %v1864 = vpack.c.bf16 %v998, %v998
      %v1865 = vpack.c.bf16 %v999, %v999
      %v1866 = vpack.c.bf16 %v1000, %v1000
      %v1867 = vpack.c.bf16 %v1001, %v1001
      %v1868 = vpack.c.bf16 %v1002, %v1002
      %v1869 = vpack.c.bf16 %v1003, %v1003
      %v1870 = vpack.c.bf16 %v1004, %v1004
      %v1871 = vpack.c.bf16 %v1005, %v1005
      %v1872 = vpack.c.bf16 %v1006, %v1006
      %v1873 = vpack.c.bf16 %v1007, %v1007
      %v1874 = vpack.c.bf16 %v1621, %v1621
      %v1875 = vpack.c.bf16 %v1622, %v1622
      %v1876 = vpack.c.bf16 %v1623, %v1623
      %v1877 = vpack.c.bf16 %v1624, %v1624
      %v1878 = vpack.c.bf16 %v1625, %v1625
      %v1879 = vpack.c.bf16 %v1626, %v1626
      %v1880 = vpack.c.bf16 %v1627, %v1627
      %v1881 = vpack.c.bf16 %v1628, %v1628
      %v1882 = vpack.c.bf16 %v1629, %v1629
      %v1883 = vpack.c.bf16 %v1630, %v1630
      %v1884 = vpack.c.bf16 %v1631, %v1631
      %v1885 = vpack.c.bf16 %v1632, %v1632
      %v1886 = vpack.c.bf16 %v1633, %v1633
      %v1887 = vpack.c.bf16 %v1634, %v1634
      %v1888 = vpack.c.bf16 %v1635, %v1635
      %v1889 = vpack.c.bf16 %v1636, %v1636
      %v1890 = vpack.c.bf16 %v1637, %v1637
      %v1891 = vpack.c.bf16 %v1638, %v1638
      %v1892 = vpack.c.bf16 %v1639, %v1639
      %v1893 = vpack.c.bf16 %v1640, %v1640
      %v1894 = vpack.c.bf16 %v1641, %v1641
      %v1895 = vpack.c.bf16 %v1642, %v1642
      %v1896 = vpack.c.bf16 %v1643, %v1643
      %v1897 = vpack.c.bf16 %v1644, %v1644
      %v1898 = vpack.c.bf16 %v1645, %v1645
      %v1899 = vpack.c.bf16 %v1646, %v1646
      %v1900 = vpack.c.bf16 %v1647, %v1647
      %v1901 = vpack.c.bf16 %v1648, %v1648
      %v1902 = vpack.c.bf16 %v1649, %v1649
      %v1903 = vpack.c.bf16 %v1650, %v1650
      %v1904 = vpack.c.bf16 %v1651, %v1651
      %v1905 = vpack.c.bf16 %v1652, %v1652
      %v1906 = vpack.c.bf16 %v1653, %v1653
      %v1907 = vpack.c.bf16 %v1654, %v1654
      %v1908 = vpack.c.bf16 %v1655, %v1655
      %v1909 = vpack.c.bf16 %v1656, %v1656
      %v1910 = vpack.c.bf16 %v1802, %v1802
      %v1911 = vpack.c.bf16 %v1803, %v1803
      %v1912 = vpack.c.bf16 %v1804, %v1804
      %v1913 = vpack.c.bf16 %v1805, %v1805
      %v1914 = vpack.c.bf16 %v1806, %v1806
      %v1915 = vpack.c.bf16 %v1807, %v1807
      %v1916 = vpack.c.bf16 %v1808, %v1808
      %v1917 = vpack.c.bf16 %v1809, %v1809
      %v1918 = vpack.c.bf16 %v1810, %v1810
      %v1919 = vpack.c.bf16 %v1811, %v1811
      %v1920 = vpack.c.bf16 %v1812, %v1812
      %v1921 = vpack.c.bf16 %v1813, %v1813
      %v1922 = vpack.c.bf16 %v1814, %v1814
      %v1923 = vpack.c.bf16 %v1815, %v1815
      %v1924 = vpack.c.bf16 %v1816, %v1816
      %v1925 = vpack.c.bf16 %v1817, %v1817
      %v1926 = vpack.c.bf16 %v1818, %v1818
      %v1927 = vpack.c.bf16 %v1819, %v1819
      %v1928 = vpack.c.bf16 %v1820, %v1820
      %v1929 = vpack.c.bf16 %v1821, %v1821
      %v1930 = vpack.c.bf16 %v1822, %v1822
      %v1931 = vpack.c.bf16 %v1823, %v1823
      %v1932 = vpack.c.bf16 %v1824, %v1824
      %v1933 = vpack.c.bf16 %v1825, %v1825
      %v1934 = vpack.c.bf16 %v1826, %v1826
      %v1935 = vpack.c.bf16 %v1827, %v1827
      %v1936 = vpack.c.bf16 %v1828, %v1828
      %v1937 = vpack.c.bf16 %v1829, %v1829
      %v1938 = vpack.c.bf16 %v1830, %v1830
      %v1939 = vpack.c.bf16 %v1831, %v1831
      %v1940 = vpack.c.bf16 %v1832, %v1832
      %v1941 = vpack.c.bf16 %v1833, %v1833
      %v1942 = vpack.c.bf16 %v1834, %v1834
      %v1943 = vpack.c.bf16 %v1835, %v1835
      %v1944 = vpack.c.bf16 %v1836, %v1836
      %v1945 = vpack.c.bf16 %v1837, %v1837
      %v1946 = vld [vmem:[%s5] sm:$0x3]
      %s1947 = scalar_lea.vmem %s5, 2
      %v1948 = vld [vmem:[%s1947] sm:$0x3]
      %v1981 = vunpack.c.l.b16 %v1838
      %v1982 = vunpack.c.l.b16 %v1839
      %v1983 = vunpack.c.l.b16 %v1840
      %v1984 = vunpack.c.l.b16 %v1841
      %v1985 = vunpack.c.l.b16 %v1842
      %v1986 = vunpack.c.l.b16 %v1843
      %v1987 = vunpack.c.l.b16 %v1844
      %v1988 = vunpack.c.l.b16 %v1845
      %v1989 = vunpack.c.l.b16 %v1846
      %v1990 = vunpack.c.l.b16 %v1847
      %v1991 = vunpack.c.l.b16 %v1848
      %v1992 = vunpack.c.l.b16 %v1849
      %v1993 = vunpack.c.l.b16 %v1850
      %v1994 = vunpack.c.l.b16 %v1851
      %v1995 = vunpack.c.l.b16 %v1852
      %v1996 = vunpack.c.l.b16 %v1853
      %v1997 = vunpack.c.l.b16 %v1854
      %v1998 = vunpack.c.l.b16 %v1855
      %v1999 = vunpack.c.l.b16 %v1856
      %v2000 = vunpack.c.l.b16 %v1857
      %v2001 = vunpack.c.l.b16 %v1858
      %v2002 = vunpack.c.l.b16 %v1859
      %v2003 = vunpack.c.l.b16 %v1860
      %v2004 = vunpack.c.l.b16 %v1861
      %v2005 = vunpack.c.l.b16 %v1862
      %v2006 = vunpack.c.l.b16 %v1863
      %v2007 = vunpack.c.l.b16 %v1864
      %v2008 = vunpack.c.l.b16 %v1865
      %v2009 = vunpack.c.l.b16 %v1866
      %v2010 = vunpack.c.l.b16 %v1867
      %v2011 = vunpack.c.l.b16 %v1868
      %v2012 = vunpack.c.l.b16 %v1869
      %v2013 = vpack.c.b16 %v1982, %v1981
      %v2014 = vpack.c.b16 %v1984, %v1983
      %v2015 = vpack.c.b16 %v1986, %v1985
      %v2016 = vpack.c.b16 %v1988, %v1987
      %v2017 = vpack.c.b16 %v1990, %v1989
      %v2018 = vpack.c.b16 %v1992, %v1991
      %v2019 = vpack.c.b16 %v1994, %v1993
      %v2020 = vpack.c.b16 %v1996, %v1995
      %v2021 = vpack.c.b16 %v1998, %v1997
      %v2022 = vpack.c.b16 %v2000, %v1999
      %v2023 = vpack.c.b16 %v2002, %v2001
      %v2024 = vpack.c.b16 %v2004, %v2003
      %v2025 = vpack.c.b16 %v2006, %v2005
      %v2026 = vpack.c.b16 %v2008, %v2007
      %v2027 = vpack.c.b16 %v2010, %v2009
      %v2028 = vpack.c.b16 %v2012, %v2011
      %vm2029 = vcmask 31744
      %v2031 = vsel %vm2029, %v2013, 0
      %v2034 = vsel %vm2029, %v2014, 0
      %v2037 = vsel %vm2029, %v2015, 0
      %v2040 = vsel %vm2029, %v2016, 0
      %v2043 = vsel %vm2029, %v2017, 0
      %v2046 = vsel %vm2029, %v2018, 0
      %v2049 = vsel %vm2029, %v2019, 0
      %v2052 = vsel %vm2029, %v2020, 0
      %v2055 = vsel %vm2029, %v2021, 0
      %v2058 = vsel %vm2029, %v2022, 0
      %v2061 = vsel %vm2029, %v2023, 0
      %v2064 = vsel %vm2029, %v2024, 0
      %v2067 = vsel %vm2029, %v2025, 0
      %v2070 = vsel %vm2029, %v2026, 0
      %v2073 = vsel %vm2029, %v2027, 0
      %v2076 = vsel %vm2029, %v2028, 0
      %vm2078 = vcmask 1041408
      %v2080 = vsel %vm2078, %v1948, 0
      %2082 = vmatpush.bf16.msra.mxu0 0
      %2083 = vmatpush.bf16.msra.mxu0 0
      %2084 = vmatpush.bf16.msra.mxu0 0
      %2085 = vmatpush.bf16.msra.mxu0 0
      %2086 = vmatpush.bf16.msra.mxu0 0
      %2087 = vmatpush.bf16.msra.mxu0 0
      %2088 = vmatpush.bf16.msra.mxu0 0
      %2089 = vmatpush.bf16.msra.mxu0 %v2080
      %2090 = vmatmul.bf16.gmra.mxu0 %v2031
      %v2091 = vpop.f32.mrf.mxu0
      %v2092 = vadd.f32 0.0, %v2091
      %v2093 = vpop.f32.mrf.mxu0
      %v2094 = vadd.f32 0.0, %v2093
      %2095 = vmatmul.bf16.gmra.mxu0 %v2034
      %v2096 = vpop.f32.mrf.mxu0
      %v2097 = vadd.f32 0.0, %v2096
      %v2098 = vpop.f32.mrf.mxu0
      %v2099 = vadd.f32 0.0, %v2098
      %2100 = vmatmul.bf16.gmra.mxu0 %v2037
      %v2101 = vpop.f32.mrf.mxu0
      %v2102 = vadd.f32 0.0, %v2101
      %v2103 = vpop.f32.mrf.mxu0
      %v2104 = vadd.f32 0.0, %v2103
      %2105 = vmatmul.bf16.gmra.mxu0 %v2040
      %v2106 = vpop.f32.mrf.mxu0
      %v2107 = vadd.f32 0.0, %v2106
      %v2108 = vpop.f32.mrf.mxu0
      %v2109 = vadd.f32 0.0, %v2108
      %2110 = vmatmul.bf16.gmra.mxu0 %v2043
      %v2111 = vpop.f32.mrf.mxu0
      %v2112 = vadd.f32 0.0, %v2111
      %v2113 = vpop.f32.mrf.mxu0
      %v2114 = vadd.f32 0.0, %v2113
      %2115 = vmatmul.bf16.gmra.mxu0 %v2046
      %v2116 = vpop.f32.mrf.mxu0
      %v2117 = vadd.f32 0.0, %v2116
      %v2118 = vpop.f32.mrf.mxu0
      %v2119 = vadd.f32 0.0, %v2118
      %2120 = vmatmul.bf16.gmra.mxu0 %v2049
      %v2121 = vpop.f32.mrf.mxu0
      %v2122 = vadd.f32 0.0, %v2121
      %v2123 = vpop.f32.mrf.mxu0
      %v2124 = vadd.f32 0.0, %v2123
      %2125 = vmatmul.bf16.gmra.mxu0 %v2052
      %v2126 = vpop.f32.mrf.mxu0
      %v2127 = vadd.f32 0.0, %v2126
      %v2128 = vpop.f32.mrf.mxu0
      %v2129 = vadd.f32 0.0, %v2128
      %2130 = vmatmul.bf16.gmra.mxu0 %v2055
      %v2131 = vpop.f32.mrf.mxu0
      %v2132 = vadd.f32 0.0, %v2131
      %v2133 = vpop.f32.mrf.mxu0
      %v2134 = vadd.f32 0.0, %v2133
      %2135 = vmatmul.bf16.gmra.mxu0 %v2058
      %v2136 = vpop.f32.mrf.mxu0
      %v2137 = vadd.f32 0.0, %v2136
      %v2138 = vpop.f32.mrf.mxu0
      %v2139 = vadd.f32 0.0, %v2138
      %2140 = vmatmul.bf16.gmra.mxu0 %v2061
      %v2141 = vpop.f32.mrf.mxu0
      %v2142 = vadd.f32 0.0, %v2141
      %v2143 = vpop.f32.mrf.mxu0
      %v2144 = vadd.f32 0.0, %v2143
      %2145 = vmatmul.bf16.gmra.mxu0 %v2064
      %v2146 = vpop.f32.mrf.mxu0
      %v2147 = vadd.f32 0.0, %v2146
      %v2148 = vpop.f32.mrf.mxu0
      %v2149 = vadd.f32 0.0, %v2148
      %2150 = vmatmul.bf16.gmra.mxu0 %v2067
      %v2151 = vpop.f32.mrf.mxu0
      %v2152 = vadd.f32 0.0, %v2151
      %v2153 = vpop.f32.mrf.mxu0
      %v2154 = vadd.f32 0.0, %v2153
      %2155 = vmatmul.bf16.gmra.mxu0 %v2070
      %v2156 = vpop.f32.mrf.mxu0
      %v2157 = vadd.f32 0.0, %v2156
      %v2158 = vpop.f32.mrf.mxu0
      %v2159 = vadd.f32 0.0, %v2158
      %2160 = vmatmul.bf16.gmra.mxu0 %v2073
      %v2161 = vpop.f32.mrf.mxu0
      %v2162 = vadd.f32 0.0, %v2161
      %v2163 = vpop.f32.mrf.mxu0
      %v2164 = vadd.f32 0.0, %v2163
      %2165 = vmatmul.bf16.gmra.mxu0 %v2076
      %v2166 = vpop.f32.mrf.mxu0
      %v2167 = vadd.f32 0.0, %v2166
      %v2168 = vpop.f32.mrf.mxu0
      %v2169 = vadd.f32 0.0, %v2168
      %2170 = vdwg.mxu0
      %v2203 = vunpack.c.l.b16 %v1874
      %v2204 = vunpack.c.l.b16 %v1875
      %v2205 = vunpack.c.l.b16 %v1876
      %v2206 = vunpack.c.l.b16 %v1877
      %v2207 = vunpack.c.l.b16 %v1878
      %v2208 = vunpack.c.l.b16 %v1879
      %v2209 = vunpack.c.l.b16 %v1880
      %v2210 = vunpack.c.l.b16 %v1881
      %v2211 = vunpack.c.l.b16 %v1882
      %v2212 = vunpack.c.l.b16 %v1883
      %v2213 = vunpack.c.l.b16 %v1884
      %v2214 = vunpack.c.l.b16 %v1885
      %v2215 = vunpack.c.l.b16 %v1886
      %v2216 = vunpack.c.l.b16 %v1887
      %v2217 = vunpack.c.l.b16 %v1888
      %v2218 = vunpack.c.l.b16 %v1889
      %v2219 = vunpack.c.l.b16 %v1890
      %v2220 = vunpack.c.l.b16 %v1891
      %v2221 = vunpack.c.l.b16 %v1892
      %v2222 = vunpack.c.l.b16 %v1893
      %v2223 = vunpack.c.l.b16 %v1894
      %v2224 = vunpack.c.l.b16 %v1895
      %v2225 = vunpack.c.l.b16 %v1896
      %v2226 = vunpack.c.l.b16 %v1897
      %v2227 = vunpack.c.l.b16 %v1898
      %v2228 = vunpack.c.l.b16 %v1899
      %v2229 = vunpack.c.l.b16 %v1900
      %v2230 = vunpack.c.l.b16 %v1901
      %v2231 = vunpack.c.l.b16 %v1902
      %v2232 = vunpack.c.l.b16 %v1903
      %v2233 = vunpack.c.l.b16 %v1904
      %v2234 = vunpack.c.l.b16 %v1905
      %v2235 = vpack.c.b16 %v2204, %v2203
      %v2236 = vpack.c.b16 %v2206, %v2205
      %v2237 = vpack.c.b16 %v2208, %v2207
      %v2238 = vpack.c.b16 %v2210, %v2209
      %v2239 = vpack.c.b16 %v2212, %v2211
      %v2240 = vpack.c.b16 %v2214, %v2213
      %v2241 = vpack.c.b16 %v2216, %v2215
      %v2242 = vpack.c.b16 %v2218, %v2217
      %v2243 = vpack.c.b16 %v2220, %v2219
      %v2244 = vpack.c.b16 %v2222, %v2221
      %v2245 = vpack.c.b16 %v2224, %v2223
      %v2246 = vpack.c.b16 %v2226, %v2225
      %v2247 = vpack.c.b16 %v2228, %v2227
      %v2248 = vpack.c.b16 %v2230, %v2229
      %v2249 = vpack.c.b16 %v2232, %v2231
      %v2250 = vpack.c.b16 %v2234, %v2233
      %v2252 = vsel %vm2029, %v2235, 0
      %v2255 = vsel %vm2029, %v2236, 0
      %v2258 = vsel %vm2029, %v2237, 0
      %v2261 = vsel %vm2029, %v2238, 0
      %v2264 = vsel %vm2029, %v2239, 0
      %v2267 = vsel %vm2029, %v2240, 0
      %v2270 = vsel %vm2029, %v2241, 0
      %v2273 = vsel %vm2029, %v2242, 0
      %v2276 = vsel %vm2029, %v2243, 0
      %v2279 = vsel %vm2029, %v2244, 0
      %v2282 = vsel %vm2029, %v2245, 0
      %v2285 = vsel %vm2029, %v2246, 0
      %v2288 = vsel %vm2029, %v2247, 0
      %v2291 = vsel %vm2029, %v2248, 0
      %v2294 = vsel %vm2029, %v2249, 0
      %v2297 = vsel %vm2029, %v2250, 0
      %v2300 = vsel %vm2078, %v1946, 0
      %2302 = vmatpush.bf16.msra.mxu0 0
      %2303 = vmatpush.bf16.msra.mxu0 0
      %2304 = vmatpush.bf16.msra.mxu0 0
      %2305 = vmatpush.bf16.msra.mxu0 0
      %2306 = vmatpush.bf16.msra.mxu0 0
      %2307 = vmatpush.bf16.msra.mxu0 0
      %2308 = vmatpush.bf16.msra.mxu0 0
      %2309 = vmatpush.bf16.msra.mxu0 %v2300
      %2310 = vmatmul.bf16.gmra.mxu0 %v2252
      %v2311 = vpop.f32.mrf.mxu0
      %v2312 = vadd.f32 %v2092, %v2311
      %v2313 = vpop.f32.mrf.mxu0
      %v2314 = vadd.f32 %v2094, %v2313
      %2315 = vmatmul.bf16.gmra.mxu0 %v2255
      %v2316 = vpop.f32.mrf.mxu0
      %v2317 = vadd.f32 %v2097, %v2316
      %v2318 = vpop.f32.mrf.mxu0
      %v2319 = vadd.f32 %v2099, %v2318
      %2320 = vmatmul.bf16.gmra.mxu0 %v2258
      %v2321 = vpop.f32.mrf.mxu0
      %v2322 = vadd.f32 %v2102, %v2321
      %v2323 = vpop.f32.mrf.mxu0
      %v2324 = vadd.f32 %v2104, %v2323
      %2325 = vmatmul.bf16.gmra.mxu0 %v2261
      %v2326 = vpop.f32.mrf.mxu0
      %v2327 = vadd.f32 %v2107, %v2326
      %v2328 = vpop.f32.mrf.mxu0
      %v2329 = vadd.f32 %v2109, %v2328
      %2330 = vmatmul.bf16.gmra.mxu0 %v2264
      %v2331 = vpop.f32.mrf.mxu0
      %v2332 = vadd.f32 %v2112, %v2331
      %v2333 = vpop.f32.mrf.mxu0
      %v2334 = vadd.f32 %v2114, %v2333
      %2335 = vmatmul.bf16.gmra.mxu0 %v2267
      %v2336 = vpop.f32.mrf.mxu0
      %v2337 = vadd.f32 %v2117, %v2336
      %v2338 = vpop.f32.mrf.mxu0
      %v2339 = vadd.f32 %v2119, %v2338
      %2340 = vmatmul.bf16.gmra.mxu0 %v2270
      %v2341 = vpop.f32.mrf.mxu0
      %v2342 = vadd.f32 %v2122, %v2341
      %v2343 = vpop.f32.mrf.mxu0
      %v2344 = vadd.f32 %v2124, %v2343
      %2345 = vmatmul.bf16.gmra.mxu0 %v2273
      %v2346 = vpop.f32.mrf.mxu0
      %v2347 = vadd.f32 %v2127, %v2346
      %v2348 = vpop.f32.mrf.mxu0
      %v2349 = vadd.f32 %v2129, %v2348
      %2350 = vmatmul.bf16.gmra.mxu0 %v2276
      %v2351 = vpop.f32.mrf.mxu0
      %v2352 = vadd.f32 %v2132, %v2351
      %v2353 = vpop.f32.mrf.mxu0
      %v2354 = vadd.f32 %v2134, %v2353
      %2355 = vmatmul.bf16.gmra.mxu0 %v2279
      %v2356 = vpop.f32.mrf.mxu0
      %v2357 = vadd.f32 %v2137, %v2356
      %v2358 = vpop.f32.mrf.mxu0
      %v2359 = vadd.f32 %v2139, %v2358
      %2360 = vmatmul.bf16.gmra.mxu0 %v2282
      %v2361 = vpop.f32.mrf.mxu0
      %v2362 = vadd.f32 %v2142, %v2361
      %v2363 = vpop.f32.mrf.mxu0
      %v2364 = vadd.f32 %v2144, %v2363
      %2365 = vmatmul.bf16.gmra.mxu0 %v2285
      %v2366 = vpop.f32.mrf.mxu0
      %v2367 = vadd.f32 %v2147, %v2366
      %v2368 = vpop.f32.mrf.mxu0
      %v2369 = vadd.f32 %v2149, %v2368
      %2370 = vmatmul.bf16.gmra.mxu0 %v2288
      %v2371 = vpop.f32.mrf.mxu0
      %v2372 = vadd.f32 %v2152, %v2371
      %v2373 = vpop.f32.mrf.mxu0
      %v2374 = vadd.f32 %v2154, %v2373
      %2375 = vmatmul.bf16.gmra.mxu0 %v2291
      %v2376 = vpop.f32.mrf.mxu0
      %v2377 = vadd.f32 %v2157, %v2376
      %v2378 = vpop.f32.mrf.mxu0
      %v2379 = vadd.f32 %v2159, %v2378
      %2380 = vmatmul.bf16.gmra.mxu0 %v2294
      %v2381 = vpop.f32.mrf.mxu0
      %v2382 = vadd.f32 %v2162, %v2381
      %v2383 = vpop.f32.mrf.mxu0
      %v2384 = vadd.f32 %v2164, %v2383
      %2385 = vmatmul.bf16.gmra.mxu0 %v2297
      %v2386 = vpop.f32.mrf.mxu0
      %v2387 = vadd.f32 %v2167, %v2386
      %v2388 = vpop.f32.mrf.mxu0
      %v2389 = vadd.f32 %v2169, %v2388
      %2390 = vdwg.mxu0
      %s2391 = scalar_lea.vmem %s5, 4
      %v2392 = vld [vmem:[%s2391] sm:$0x3]
      %v2425 = vunpack.c.l.b16 %v1910
      %v2426 = vunpack.c.l.b16 %v1911
      %v2427 = vunpack.c.l.b16 %v1912
      %v2428 = vunpack.c.l.b16 %v1913
      %v2429 = vunpack.c.l.b16 %v1914
      %v2430 = vunpack.c.l.b16 %v1915
      %v2431 = vunpack.c.l.b16 %v1916
      %v2432 = vunpack.c.l.b16 %v1917
      %v2433 = vunpack.c.l.b16 %v1918
      %v2434 = vunpack.c.l.b16 %v1919
      %v2435 = vunpack.c.l.b16 %v1920
      %v2436 = vunpack.c.l.b16 %v1921
      %v2437 = vunpack.c.l.b16 %v1922
      %v2438 = vunpack.c.l.b16 %v1923
      %v2439 = vunpack.c.l.b16 %v1924
      %v2440 = vunpack.c.l.b16 %v1925
      %v2441 = vunpack.c.l.b16 %v1926
      %v2442 = vunpack.c.l.b16 %v1927
      %v2443 = vunpack.c.l.b16 %v1928
      %v2444 = vunpack.c.l.b16 %v1929
      %v2445 = vunpack.c.l.b16 %v1930
      %v2446 = vunpack.c.l.b16 %v1931
      %v2447 = vunpack.c.l.b16 %v1932
      %v2448 = vunpack.c.l.b16 %v1933
      %v2449 = vunpack.c.l.b16 %v1934
      %v2450 = vunpack.c.l.b16 %v1935
      %v2451 = vunpack.c.l.b16 %v1936
      %v2452 = vunpack.c.l.b16 %v1937
      %v2453 = vunpack.c.l.b16 %v1938
      %v2454 = vunpack.c.l.b16 %v1939
      %v2455 = vunpack.c.l.b16 %v1940
      %v2456 = vunpack.c.l.b16 %v1941
      %v2457 = vpack.c.b16 %v2426, %v2425
      %v2458 = vpack.c.b16 %v2428, %v2427
      %v2459 = vpack.c.b16 %v2430, %v2429
      %v2460 = vpack.c.b16 %v2432, %v2431
      %v2461 = vpack.c.b16 %v2434, %v2433
      %v2462 = vpack.c.b16 %v2436, %v2435
      %v2463 = vpack.c.b16 %v2438, %v2437
      %v2464 = vpack.c.b16 %v2440, %v2439
      %v2465 = vpack.c.b16 %v2442, %v2441
      %v2466 = vpack.c.b16 %v2444, %v2443
      %v2467 = vpack.c.b16 %v2446, %v2445
      %v2468 = vpack.c.b16 %v2448, %v2447
      %v2469 = vpack.c.b16 %v2450, %v2449
      %v2470 = vpack.c.b16 %v2452, %v2451
      %v2471 = vpack.c.b16 %v2454, %v2453
      %v2472 = vpack.c.b16 %v2456, %v2455
      %v2474 = vsel %vm2029, %v2457, 0
      %v2477 = vsel %vm2029, %v2458, 0
      %v2480 = vsel %vm2029, %v2459, 0
      %v2483 = vsel %vm2029, %v2460, 0
      %v2486 = vsel %vm2029, %v2461, 0
      %v2489 = vsel %vm2029, %v2462, 0
      %v2492 = vsel %vm2029, %v2463, 0
      %v2495 = vsel %vm2029, %v2464, 0
      %v2498 = vsel %vm2029, %v2465, 0
      %v2501 = vsel %vm2029, %v2466, 0
      %v2504 = vsel %vm2029, %v2467, 0
      %v2507 = vsel %vm2029, %v2468, 0
      %v2510 = vsel %vm2029, %v2469, 0
      %v2513 = vsel %vm2029, %v2470, 0
      %v2516 = vsel %vm2029, %v2471, 0
      %v2519 = vsel %vm2029, %v2472, 0
      %v2522 = vsel %vm2078, %v2392, 0
      %2524 = vmatpush.bf16.msra.mxu0 0
      %2525 = vmatpush.bf16.msra.mxu0 0
      %2526 = vmatpush.bf16.msra.mxu0 0
      %2527 = vmatpush.bf16.msra.mxu0 0
      %2528 = vmatpush.bf16.msra.mxu0 0
      %2529 = vmatpush.bf16.msra.mxu0 0
      %2530 = vmatpush.bf16.msra.mxu0 0
      %2531 = vmatpush.bf16.msra.mxu0 %v2522
      %2532 = vmatmul.bf16.gmra.mxu0 %v2474
      %v2533 = vpop.f32.mrf.mxu0
      %v2534 = vadd.f32 0.0, %v2533
      %v2535 = vpop.f32.mrf.mxu0
      %v2536 = vadd.f32 0.0, %v2535
      %2537 = vmatmul.bf16.gmra.mxu0 %v2477
      %v2538 = vpop.f32.mrf.mxu0
      %v2539 = vadd.f32 0.0, %v2538
      %v2540 = vpop.f32.mrf.mxu0
      %v2541 = vadd.f32 0.0, %v2540
      %2542 = vmatmul.bf16.gmra.mxu0 %v2480
      %v2543 = vpop.f32.mrf.mxu0
      %v2544 = vadd.f32 0.0, %v2543
      %v2545 = vpop.f32.mrf.mxu0
      %v2546 = vadd.f32 0.0, %v2545
      %2547 = vmatmul.bf16.gmra.mxu0 %v2483
      %v2548 = vpop.f32.mrf.mxu0
      %v2549 = vadd.f32 0.0, %v2548
      %v2550 = vpop.f32.mrf.mxu0
      %v2551 = vadd.f32 0.0, %v2550
      %2552 = vmatmul.bf16.gmra.mxu0 %v2486
      %v2553 = vpop.f32.mrf.mxu0
      %v2554 = vadd.f32 0.0, %v2553
      %v2555 = vpop.f32.mrf.mxu0
      %v2556 = vadd.f32 0.0, %v2555
      %2557 = vmatmul.bf16.gmra.mxu0 %v2489
      %v2558 = vpop.f32.mrf.mxu0
      %v2559 = vadd.f32 0.0, %v2558
      %v2560 = vpop.f32.mrf.mxu0
      %v2561 = vadd.f32 0.0, %v2560
      %2562 = vmatmul.bf16.gmra.mxu0 %v2492
      %v2563 = vpop.f32.mrf.mxu0
      %v2564 = vadd.f32 0.0, %v2563
      %v2565 = vpop.f32.mrf.mxu0
      %v2566 = vadd.f32 0.0, %v2565
      %2567 = vmatmul.bf16.gmra.mxu0 %v2495
      %v2568 = vpop.f32.mrf.mxu0
      %v2569 = vadd.f32 0.0, %v2568
      %v2570 = vpop.f32.mrf.mxu0
      %v2571 = vadd.f32 0.0, %v2570
      %2572 = vmatmul.bf16.gmra.mxu0 %v2498
      %v2573 = vpop.f32.mrf.mxu0
      %v2574 = vadd.f32 0.0, %v2573
      %v2575 = vpop.f32.mrf.mxu0
      %v2576 = vadd.f32 0.0, %v2575
      %2577 = vmatmul.bf16.gmra.mxu0 %v2501
      %v2578 = vpop.f32.mrf.mxu0
      %v2579 = vadd.f32 0.0, %v2578
      %v2580 = vpop.f32.mrf.mxu0
      %v2581 = vadd.f32 0.0, %v2580
      %2582 = vmatmul.bf16.gmra.mxu0 %v2504
      %v2583 = vpop.f32.mrf.mxu0
      %v2584 = vadd.f32 0.0, %v2583
      %v2585 = vpop.f32.mrf.mxu0
      %v2586 = vadd.f32 0.0, %v2585
      %2587 = vmatmul.bf16.gmra.mxu0 %v2507
      %v2588 = vpop.f32.mrf.mxu0
      %v2589 = vadd.f32 0.0, %v2588
      %v2590 = vpop.f32.mrf.mxu0
      %v2591 = vadd.f32 0.0, %v2590
      %2592 = vmatmul.bf16.gmra.mxu0 %v2510
      %v2593 = vpop.f32.mrf.mxu0
      %v2594 = vadd.f32 0.0, %v2593
      %v2595 = vpop.f32.mrf.mxu0
      %v2596 = vadd.f32 0.0, %v2595
      %2597 = vmatmul.bf16.gmra.mxu0 %v2513
      %v2598 = vpop.f32.mrf.mxu0
      %v2599 = vadd.f32 0.0, %v2598
      %v2600 = vpop.f32.mrf.mxu0
      %v2601 = vadd.f32 0.0, %v2600
      %2602 = vmatmul.bf16.gmra.mxu0 %v2516
      %v2603 = vpop.f32.mrf.mxu0
      %v2604 = vadd.f32 0.0, %v2603
      %v2605 = vpop.f32.mrf.mxu0
      %v2606 = vadd.f32 0.0, %v2605
      %2607 = vmatmul.bf16.gmra.mxu0 %v2519
      %v2608 = vpop.f32.mrf.mxu0
      %v2609 = vadd.f32 0.0, %v2608
      %v2610 = vpop.f32.mrf.mxu0
      %v2611 = vadd.f32 0.0, %v2610
      %2612 = vdwg.mxu0
      %v2613 = vadd.f32 %v2312, %v2534
      %v2614 = vadd.f32 %v2314, %v2536
      %v2615 = vadd.f32 %v2317, %v2539
      %v2616 = vadd.f32 %v2319, %v2541
      %v2617 = vadd.f32 %v2322, %v2544
      %v2618 = vadd.f32 %v2324, %v2546
      %v2619 = vadd.f32 %v2327, %v2549
      %v2620 = vadd.f32 %v2329, %v2551
      %v2621 = vadd.f32 %v2332, %v2554
      %v2622 = vadd.f32 %v2334, %v2556
      %v2623 = vadd.f32 %v2337, %v2559
      %v2624 = vadd.f32 %v2339, %v2561
      %v2625 = vadd.f32 %v2342, %v2564
      %v2626 = vadd.f32 %v2344, %v2566
      %v2627 = vadd.f32 %v2347, %v2569
      %v2628 = vadd.f32 %v2349, %v2571
      %v2629 = vadd.f32 %v2352, %v2574
      %v2630 = vadd.f32 %v2354, %v2576
      %v2631 = vadd.f32 %v2357, %v2579
      %v2632 = vadd.f32 %v2359, %v2581
      %v2633 = vadd.f32 %v2362, %v2584
      %v2634 = vadd.f32 %v2364, %v2586
      %v2635 = vadd.f32 %v2367, %v2589
      %v2636 = vadd.f32 %v2369, %v2591
      %v2637 = vadd.f32 %v2372, %v2594
      %v2638 = vadd.f32 %v2374, %v2596
      %v2639 = vadd.f32 %v2377, %v2599
      %v2640 = vadd.f32 %v2379, %v2601
      %v2641 = vadd.f32 %v2382, %v2604
      %v2642 = vadd.f32 %v2384, %v2606
      %v2643 = vadd.f32 %v2387, %v2609
      %v2644 = vadd.f32 %v2389, %v2611
      %s2645 = scalar_lea.vmem %s5, 6
      %v2646 = vld [vmem:[%s2645] sm:$0x3]
      %v2649 = vunpack.c.l.b16 %v1906
      %v2650 = vunpack.c.l.b16 %v1907
      %v2651 = vpack.c.b16 %v2650, %v2649
      %v2653 = vsel %vm2029, %v2651, 0
      %v2656 = vsel %vm2078, %v2646, 0
      %2658 = vmatpush.bf16.msra.mxu0 0
      %2659 = vmatpush.bf16.msra.mxu0 0
      %2660 = vmatpush.bf16.msra.mxu0 0
      %2661 = vmatpush.bf16.msra.mxu0 0
      %2662 = vmatpush.bf16.msra.mxu0 0
      %2663 = vmatpush.bf16.msra.mxu0 0
      %2664 = vmatpush.bf16.msra.mxu0 0
      %2665 = vmatpush.bf16.msra.mxu0 %v2656
      %2666 = vmatmul.bf16.gmra.mxu0 %v2255
      %v2667 = vpop.f32.mrf.mxu0
      %v2668 = vadd.f32 0.0, %v2667
      %v2669 = vpop.f32.mrf.mxu0
      %v2670 = vadd.f32 0.0, %v2669
      %2671 = vmatmul.bf16.gmra.mxu0 %v2258
      %v2672 = vpop.f32.mrf.mxu0
      %v2673 = vadd.f32 0.0, %v2672
      %v2674 = vpop.f32.mrf.mxu0
      %v2675 = vadd.f32 0.0, %v2674
      %2676 = vmatmul.bf16.gmra.mxu0 %v2261
      %v2677 = vpop.f32.mrf.mxu0
      %v2678 = vadd.f32 0.0, %v2677
      %v2679 = vpop.f32.mrf.mxu0
      %v2680 = vadd.f32 0.0, %v2679
      %2681 = vmatmul.bf16.gmra.mxu0 %v2264
      %v2682 = vpop.f32.mrf.mxu0
      %v2683 = vadd.f32 0.0, %v2682
      %v2684 = vpop.f32.mrf.mxu0
      %v2685 = vadd.f32 0.0, %v2684
      %2686 = vmatmul.bf16.gmra.mxu0 %v2267
      %v2687 = vpop.f32.mrf.mxu0
      %v2688 = vadd.f32 0.0, %v2687
      %v2689 = vpop.f32.mrf.mxu0
      %v2690 = vadd.f32 0.0, %v2689
      %2691 = vmatmul.bf16.gmra.mxu0 %v2270
      %v2692 = vpop.f32.mrf.mxu0
      %v2693 = vadd.f32 0.0, %v2692
      %v2694 = vpop.f32.mrf.mxu0
      %v2695 = vadd.f32 0.0, %v2694
      %2696 = vmatmul.bf16.gmra.mxu0 %v2273
      %v2697 = vpop.f32.mrf.mxu0
      %v2698 = vadd.f32 0.0, %v2697
      %v2699 = vpop.f32.mrf.mxu0
      %v2700 = vadd.f32 0.0, %v2699
      %2701 = vmatmul.bf16.gmra.mxu0 %v2276
      %v2702 = vpop.f32.mrf.mxu0
      %v2703 = vadd.f32 0.0, %v2702
      %v2704 = vpop.f32.mrf.mxu0
      %v2705 = vadd.f32 0.0, %v2704
      %2706 = vmatmul.bf16.gmra.mxu0 %v2279
      %v2707 = vpop.f32.mrf.mxu0
      %v2708 = vadd.f32 0.0, %v2707
      %v2709 = vpop.f32.mrf.mxu0
      %v2710 = vadd.f32 0.0, %v2709
      %2711 = vmatmul.bf16.gmra.mxu0 %v2282
      %v2712 = vpop.f32.mrf.mxu0
      %v2713 = vadd.f32 0.0, %v2712
      %v2714 = vpop.f32.mrf.mxu0
      %v2715 = vadd.f32 0.0, %v2714
      %2716 = vmatmul.bf16.gmra.mxu0 %v2285
      %v2717 = vpop.f32.mrf.mxu0
      %v2718 = vadd.f32 0.0, %v2717
      %v2719 = vpop.f32.mrf.mxu0
      %v2720 = vadd.f32 0.0, %v2719
      %2721 = vmatmul.bf16.gmra.mxu0 %v2288
      %v2722 = vpop.f32.mrf.mxu0
      %v2723 = vadd.f32 0.0, %v2722
      %v2724 = vpop.f32.mrf.mxu0
      %v2725 = vadd.f32 0.0, %v2724
      %2726 = vmatmul.bf16.gmra.mxu0 %v2291
      %v2727 = vpop.f32.mrf.mxu0
      %v2728 = vadd.f32 0.0, %v2727
      %v2729 = vpop.f32.mrf.mxu0
      %v2730 = vadd.f32 0.0, %v2729
      %2731 = vmatmul.bf16.gmra.mxu0 %v2294
      %v2732 = vpop.f32.mrf.mxu0
      %v2733 = vadd.f32 0.0, %v2732
      %v2734 = vpop.f32.mrf.mxu0
      %v2735 = vadd.f32 0.0, %v2734
      %2736 = vmatmul.bf16.gmra.mxu0 %v2297
      %v2737 = vpop.f32.mrf.mxu0
      %v2738 = vadd.f32 0.0, %v2737
      %v2739 = vpop.f32.mrf.mxu0
      %v2740 = vadd.f32 0.0, %v2739
      %2741 = vmatmul.bf16.gmra.mxu0 %v2653
      %v2742 = vpop.f32.mrf.mxu0
      %v2743 = vadd.f32 0.0, %v2742
      %v2744 = vpop.f32.mrf.mxu0
      %v2745 = vadd.f32 0.0, %v2744
      %2746 = vdwg.mxu0
      %v2747 = vadd.f32 %v2613, %v2668
      %v2748 = vadd.f32 %v2614, %v2670
      %v2749 = vadd.f32 %v2615, %v2673
      %v2750 = vadd.f32 %v2616, %v2675
      %v2751 = vadd.f32 %v2617, %v2678
      %v2752 = vadd.f32 %v2618, %v2680
      %v2753 = vadd.f32 %v2619, %v2683
      %v2754 = vadd.f32 %v2620, %v2685
      %v2755 = vadd.f32 %v2621, %v2688
      %v2756 = vadd.f32 %v2622, %v2690
      %v2757 = vadd.f32 %v2623, %v2693
      %v2758 = vadd.f32 %v2624, %v2695
      %v2759 = vadd.f32 %v2625, %v2698
      %v2760 = vadd.f32 %v2626, %v2700
      %v2761 = vadd.f32 %v2627, %v2703
      %v2762 = vadd.f32 %v2628, %v2705
      %v2763 = vadd.f32 %v2629, %v2708
      %v2764 = vadd.f32 %v2630, %v2710
      %v2765 = vadd.f32 %v2631, %v2713
      %v2766 = vadd.f32 %v2632, %v2715
      %v2767 = vadd.f32 %v2633, %v2718
      %v2768 = vadd.f32 %v2634, %v2720
      %v2769 = vadd.f32 %v2635, %v2723
      %v2770 = vadd.f32 %v2636, %v2725
      %v2771 = vadd.f32 %v2637, %v2728
      %v2772 = vadd.f32 %v2638, %v2730
      %v2773 = vadd.f32 %v2639, %v2733
      %v2774 = vadd.f32 %v2640, %v2735
      %v2775 = vadd.f32 %v2641, %v2738
      %v2776 = vadd.f32 %v2642, %v2740
      %v2777 = vadd.f32 %v2643, %v2743
      %v2778 = vadd.f32 %v2644, %v2745
      %s2779 = scalar_lea.vmem %s5, 8
      %v2780 = vld [vmem:[%s2779] sm:$0x3]
      %v2783 = vunpack.c.l.b16 %v1870
      %v2784 = vunpack.c.l.b16 %v1871
      %v2785 = vpack.c.b16 %v2784, %v2783
      %v2787 = vsel %vm2029, %v2785, 0
      %v2790 = vsel %vm2078, %v2780, 0
      %2792 = vmatpush.bf16.msra.mxu0 0
      %2793 = vmatpush.bf16.msra.mxu0 0
      %2794 = vmatpush.bf16.msra.mxu0 0
      %2795 = vmatpush.bf16.msra.mxu0 0
      %2796 = vmatpush.bf16.msra.mxu0 0
      %2797 = vmatpush.bf16.msra.mxu0 0
      %2798 = vmatpush.bf16.msra.mxu0 0
      %2799 = vmatpush.bf16.msra.mxu0 %v2790
      %2800 = vmatmul.bf16.gmra.mxu0 %v2034
      %v2801 = vpop.f32.mrf.mxu0
      %v2802 = vadd.f32 0.0, %v2801
      %v2803 = vpop.f32.mrf.mxu0
      %v2804 = vadd.f32 0.0, %v2803
      %2805 = vmatmul.bf16.gmra.mxu0 %v2037
      %v2806 = vpop.f32.mrf.mxu0
      %v2807 = vadd.f32 0.0, %v2806
      %v2808 = vpop.f32.mrf.mxu0
      %v2809 = vadd.f32 0.0, %v2808
      %2810 = vmatmul.bf16.gmra.mxu0 %v2040
      %v2811 = vpop.f32.mrf.mxu0
      %v2812 = vadd.f32 0.0, %v2811
      %v2813 = vpop.f32.mrf.mxu0
      %v2814 = vadd.f32 0.0, %v2813
      %2815 = vmatmul.bf16.gmra.mxu0 %v2043
      %v2816 = vpop.f32.mrf.mxu0
      %v2817 = vadd.f32 0.0, %v2816
      %v2818 = vpop.f32.mrf.mxu0
      %v2819 = vadd.f32 0.0, %v2818
      %2820 = vmatmul.bf16.gmra.mxu0 %v2046
      %v2821 = vpop.f32.mrf.mxu0
      %v2822 = vadd.f32 0.0, %v2821
      %v2823 = vpop.f32.mrf.mxu0
      %v2824 = vadd.f32 0.0, %v2823
      %2825 = vmatmul.bf16.gmra.mxu0 %v2049
      %v2826 = vpop.f32.mrf.mxu0
      %v2827 = vadd.f32 0.0, %v2826
      %v2828 = vpop.f32.mrf.mxu0
      %v2829 = vadd.f32 0.0, %v2828
      %2830 = vmatmul.bf16.gmra.mxu0 %v2052
      %v2831 = vpop.f32.mrf.mxu0
      %v2832 = vadd.f32 0.0, %v2831
      %v2833 = vpop.f32.mrf.mxu0
      %v2834 = vadd.f32 0.0, %v2833
      %2835 = vmatmul.bf16.gmra.mxu0 %v2055
      %v2836 = vpop.f32.mrf.mxu0
      %v2837 = vadd.f32 0.0, %v2836
      %v2838 = vpop.f32.mrf.mxu0
      %v2839 = vadd.f32 0.0, %v2838
      %2840 = vmatmul.bf16.gmra.mxu0 %v2058
      %v2841 = vpop.f32.mrf.mxu0
      %v2842 = vadd.f32 0.0, %v2841
      %v2843 = vpop.f32.mrf.mxu0
      %v2844 = vadd.f32 0.0, %v2843
      %2845 = vmatmul.bf16.gmra.mxu0 %v2061
      %v2846 = vpop.f32.mrf.mxu0
      %v2847 = vadd.f32 0.0, %v2846
      %v2848 = vpop.f32.mrf.mxu0
      %v2849 = vadd.f32 0.0, %v2848
      %2850 = vmatmul.bf16.gmra.mxu0 %v2064
      %v2851 = vpop.f32.mrf.mxu0
      %v2852 = vadd.f32 0.0, %v2851
      %v2853 = vpop.f32.mrf.mxu0
      %v2854 = vadd.f32 0.0, %v2853
      %2855 = vmatmul.bf16.gmra.mxu0 %v2067
      %v2856 = vpop.f32.mrf.mxu0
      %v2857 = vadd.f32 0.0, %v2856
      %v2858 = vpop.f32.mrf.mxu0
      %v2859 = vadd.f32 0.0, %v2858
      %2860 = vmatmul.bf16.gmra.mxu0 %v2070
      %v2861 = vpop.f32.mrf.mxu0
      %v2862 = vadd.f32 0.0, %v2861
      %v2863 = vpop.f32.mrf.mxu0
      %v2864 = vadd.f32 0.0, %v2863
      %2865 = vmatmul.bf16.gmra.mxu0 %v2073
      %v2866 = vpop.f32.mrf.mxu0
      %v2867 = vadd.f32 0.0, %v2866
      %v2868 = vpop.f32.mrf.mxu0
      %v2869 = vadd.f32 0.0, %v2868
      %2870 = vmatmul.bf16.gmra.mxu0 %v2076
      %v2871 = vpop.f32.mrf.mxu0
      %v2872 = vadd.f32 0.0, %v2871
      %v2873 = vpop.f32.mrf.mxu0
      %v2874 = vadd.f32 0.0, %v2873
      %2875 = vmatmul.bf16.gmra.mxu0 %v2787
      %v2876 = vpop.f32.mrf.mxu0
      %v2877 = vadd.f32 0.0, %v2876
      %v2878 = vpop.f32.mrf.mxu0
      %v2879 = vadd.f32 0.0, %v2878
      %2880 = vdwg.mxu0
      %v2881 = vadd.f32 %v2747, %v2802
      %v2882 = vadd.f32 %v2748, %v2804
      %v2883 = vadd.f32 %v2749, %v2807
      %v2884 = vadd.f32 %v2750, %v2809
      %v2885 = vadd.f32 %v2751, %v2812
      %v2886 = vadd.f32 %v2752, %v2814
      %v2887 = vadd.f32 %v2753, %v2817
      %v2888 = vadd.f32 %v2754, %v2819
      %v2889 = vadd.f32 %v2755, %v2822
      %v2890 = vadd.f32 %v2756, %v2824
      %v2891 = vadd.f32 %v2757, %v2827
      %v2892 = vadd.f32 %v2758, %v2829
      %v2893 = vadd.f32 %v2759, %v2832
      %v2894 = vadd.f32 %v2760, %v2834
      %v2895 = vadd.f32 %v2761, %v2837
      %v2896 = vadd.f32 %v2762, %v2839
      %v2897 = vadd.f32 %v2763, %v2842
      %v2898 = vadd.f32 %v2764, %v2844
      %v2899 = vadd.f32 %v2765, %v2847
      %v2900 = vadd.f32 %v2766, %v2849
      %v2901 = vadd.f32 %v2767, %v2852
      %v2902 = vadd.f32 %v2768, %v2854
      %v2903 = vadd.f32 %v2769, %v2857
      %v2904 = vadd.f32 %v2770, %v2859
      %v2905 = vadd.f32 %v2771, %v2862
      %v2906 = vadd.f32 %v2772, %v2864
      %v2907 = vadd.f32 %v2773, %v2867
      %v2908 = vadd.f32 %v2774, %v2869
      %v2909 = vadd.f32 %v2775, %v2872
      %v2910 = vadd.f32 %v2776, %v2874
      %v2911 = vadd.f32 %v2777, %v2877
      %v2912 = vadd.f32 %v2778, %v2879
      %s2913 = scalar_lea.vmem %s5, 10
      %v2914 = vld [vmem:[%s2913] sm:$0x3]
      %v2917 = vunpack.c.l.b16 %v1942
      %v2918 = vunpack.c.l.b16 %v1943
      %v2919 = vpack.c.b16 %v2918, %v2917
      %v2921 = vsel %vm2029, %v2919, 0
      %v2924 = vsel %vm2078, %v2914, 0
      %2926 = vmatpush.bf16.msra.mxu0 0
      %2927 = vmatpush.bf16.msra.mxu0 0
      %2928 = vmatpush.bf16.msra.mxu0 0
      %2929 = vmatpush.bf16.msra.mxu0 0
      %2930 = vmatpush.bf16.msra.mxu0 0
      %2931 = vmatpush.bf16.msra.mxu0 0
      %2932 = vmatpush.bf16.msra.mxu0 0
      %2933 = vmatpush.bf16.msra.mxu0 %v2924
      %2934 = vmatmul.bf16.gmra.mxu0 %v2477
      %v2935 = vpop.f32.mrf.mxu0
      %v2936 = vadd.f32 0.0, %v2935
      %v2937 = vpop.f32.mrf.mxu0
      %v2938 = vadd.f32 0.0, %v2937
      %2939 = vmatmul.bf16.gmra.mxu0 %v2480
      %v2940 = vpop.f32.mrf.mxu0
      %v2941 = vadd.f32 0.0, %v2940
      %v2942 = vpop.f32.mrf.mxu0
      %v2943 = vadd.f32 0.0, %v2942
      %2944 = vmatmul.bf16.gmra.mxu0 %v2483
      %v2945 = vpop.f32.mrf.mxu0
      %v2946 = vadd.f32 0.0, %v2945
      %v2947 = vpop.f32.mrf.mxu0
      %v2948 = vadd.f32 0.0, %v2947
      %2949 = vmatmul.bf16.gmra.mxu0 %v2486
      %v2950 = vpop.f32.mrf.mxu0
      %v2951 = vadd.f32 0.0, %v2950
      %v2952 = vpop.f32.mrf.mxu0
      %v2953 = vadd.f32 0.0, %v2952
      %2954 = vmatmul.bf16.gmra.mxu0 %v2489
      %v2955 = vpop.f32.mrf.mxu0
      %v2956 = vadd.f32 0.0, %v2955
      %v2957 = vpop.f32.mrf.mxu0
      %v2958 = vadd.f32 0.0, %v2957
      %2959 = vmatmul.bf16.gmra.mxu0 %v2492
      %v2960 = vpop.f32.mrf.mxu0
      %v2961 = vadd.f32 0.0, %v2960
      %v2962 = vpop.f32.mrf.mxu0
      %v2963 = vadd.f32 0.0, %v2962
      %2964 = vmatmul.bf16.gmra.mxu0 %v2495
      %v2965 = vpop.f32.mrf.mxu0
      %v2966 = vadd.f32 0.0, %v2965
      %v2967 = vpop.f32.mrf.mxu0
      %v2968 = vadd.f32 0.0, %v2967
      %2969 = vmatmul.bf16.gmra.mxu0 %v2498
      %v2970 = vpop.f32.mrf.mxu0
      %v2971 = vadd.f32 0.0, %v2970
      %v2972 = vpop.f32.mrf.mxu0
      %v2973 = vadd.f32 0.0, %v2972
      %2974 = vmatmul.bf16.gmra.mxu0 %v2501
      %v2975 = vpop.f32.mrf.mxu0
      %v2976 = vadd.f32 0.0, %v2975
      %v2977 = vpop.f32.mrf.mxu0
      %v2978 = vadd.f32 0.0, %v2977
      %2979 = vmatmul.bf16.gmra.mxu0 %v2504
      %v2980 = vpop.f32.mrf.mxu0
      %v2981 = vadd.f32 0.0, %v2980
      %v2982 = vpop.f32.mrf.mxu0
      %v2983 = vadd.f32 0.0, %v2982
      %2984 = vmatmul.bf16.gmra.mxu0 %v2507
      %v2985 = vpop.f32.mrf.mxu0
      %v2986 = vadd.f32 0.0, %v2985
      %v2987 = vpop.f32.mrf.mxu0
      %v2988 = vadd.f32 0.0, %v2987
      %2989 = vmatmul.bf16.gmra.mxu0 %v2510
      %v2990 = vpop.f32.mrf.mxu0
      %v2991 = vadd.f32 0.0, %v2990
      %v2992 = vpop.f32.mrf.mxu0
      %v2993 = vadd.f32 0.0, %v2992
      %2994 = vmatmul.bf16.gmra.mxu0 %v2513
      %v2995 = vpop.f32.mrf.mxu0
      %v2996 = vadd.f32 0.0, %v2995
      %v2997 = vpop.f32.mrf.mxu0
      %v2998 = vadd.f32 0.0, %v2997
      %2999 = vmatmul.bf16.gmra.mxu0 %v2516
      %v3000 = vpop.f32.mrf.mxu0
      %v3001 = vadd.f32 0.0, %v3000
      %v3002 = vpop.f32.mrf.mxu0
      %v3003 = vadd.f32 0.0, %v3002
      %3004 = vmatmul.bf16.gmra.mxu0 %v2519
      %v3005 = vpop.f32.mrf.mxu0
      %v3006 = vadd.f32 0.0, %v3005
      %v3007 = vpop.f32.mrf.mxu0
      %v3008 = vadd.f32 0.0, %v3007
      %3009 = vmatmul.bf16.gmra.mxu0 %v2921
      %v3010 = vpop.f32.mrf.mxu0
      %v3011 = vadd.f32 0.0, %v3010
      %v3012 = vpop.f32.mrf.mxu0
      %v3013 = vadd.f32 0.0, %v3012
      %3014 = vdwg.mxu0
      %v3015 = vadd.f32 %v2881, %v2936
      %v3016 = vadd.f32 %v2882, %v2938
      %v3017 = vadd.f32 %v2883, %v2941
      %v3018 = vadd.f32 %v2884, %v2943
      %v3019 = vadd.f32 %v2885, %v2946
      %v3020 = vadd.f32 %v2886, %v2948
      %v3021 = vadd.f32 %v2887, %v2951
      %v3022 = vadd.f32 %v2888, %v2953
      %v3023 = vadd.f32 %v2889, %v2956
      %v3024 = vadd.f32 %v2890, %v2958
      %v3025 = vadd.f32 %v2891, %v2961
      %v3026 = vadd.f32 %v2892, %v2963
      %v3027 = vadd.f32 %v2893, %v2966
      %v3028 = vadd.f32 %v2894, %v2968
      %v3029 = vadd.f32 %v2895, %v2971
      %v3030 = vadd.f32 %v2896, %v2973
      %v3031 = vadd.f32 %v2897, %v2976
      %v3032 = vadd.f32 %v2898, %v2978
      %v3033 = vadd.f32 %v2899, %v2981
      %v3034 = vadd.f32 %v2900, %v2983
      %v3035 = vadd.f32 %v2901, %v2986
      %v3036 = vadd.f32 %v2902, %v2988
      %v3037 = vadd.f32 %v2903, %v2991
      %v3038 = vadd.f32 %v2904, %v2993
      %v3039 = vadd.f32 %v2905, %v2996
      %v3040 = vadd.f32 %v2906, %v2998
      %v3041 = vadd.f32 %v2907, %v3001
      %v3042 = vadd.f32 %v2908, %v3003
      %v3043 = vadd.f32 %v2909, %v3006
      %v3044 = vadd.f32 %v2910, %v3008
      %v3045 = vadd.f32 %v2911, %v3011
      %v3046 = vadd.f32 %v2912, %v3013
      %s3047 = scalar_lea.vmem %s5, 12
      %v3048 = vld [vmem:[%s3047] sm:$0x3]
      %v3051 = vunpack.c.l.b16 %v1908
      %v3052 = vunpack.c.l.b16 %v1909
      %v3053 = vpack.c.b16 %v3052, %v3051
      %v3055 = vsel %vm2029, %v3053, 0
      %v3058 = vsel %vm2078, %v3048, 0
      %3060 = vmatpush.bf16.msra.mxu0 0
      %3061 = vmatpush.bf16.msra.mxu0 0
      %3062 = vmatpush.bf16.msra.mxu0 0
      %3063 = vmatpush.bf16.msra.mxu0 0
      %3064 = vmatpush.bf16.msra.mxu0 0
      %3065 = vmatpush.bf16.msra.mxu0 0
      %3066 = vmatpush.bf16.msra.mxu0 0
      %3067 = vmatpush.bf16.msra.mxu0 %v3058
      %3068 = vmatmul.bf16.gmra.mxu0 %v2258
      %v3069 = vpop.f32.mrf.mxu0
      %v3070 = vadd.f32 0.0, %v3069
      %v3071 = vpop.f32.mrf.mxu0
      %v3072 = vadd.f32 0.0, %v3071
      %3073 = vmatmul.bf16.gmra.mxu0 %v2261
      %v3074 = vpop.f32.mrf.mxu0
      %v3075 = vadd.f32 0.0, %v3074
      %v3076 = vpop.f32.mrf.mxu0
      %v3077 = vadd.f32 0.0, %v3076
      %3078 = vmatmul.bf16.gmra.mxu0 %v2264
      %v3079 = vpop.f32.mrf.mxu0
      %v3080 = vadd.f32 0.0, %v3079
      %v3081 = vpop.f32.mrf.mxu0
      %v3082 = vadd.f32 0.0, %v3081
      %3083 = vmatmul.bf16.gmra.mxu0 %v2267
      %v3084 = vpop.f32.mrf.mxu0
      %v3085 = vadd.f32 0.0, %v3084
      %v3086 = vpop.f32.mrf.mxu0
      %v3087 = vadd.f32 0.0, %v3086
      %3088 = vmatmul.bf16.gmra.mxu0 %v2270
      %v3089 = vpop.f32.mrf.mxu0
      %v3090 = vadd.f32 0.0, %v3089
      %v3091 = vpop.f32.mrf.mxu0
      %v3092 = vadd.f32 0.0, %v3091
      %3093 = vmatmul.bf16.gmra.mxu0 %v2273
      %v3094 = vpop.f32.mrf.mxu0
      %v3095 = vadd.f32 0.0, %v3094
      %v3096 = vpop.f32.mrf.mxu0
      %v3097 = vadd.f32 0.0, %v3096
      %3098 = vmatmul.bf16.gmra.mxu0 %v2276
      %v3099 = vpop.f32.mrf.mxu0
      %v3100 = vadd.f32 0.0, %v3099
      %v3101 = vpop.f32.mrf.mxu0
      %v3102 = vadd.f32 0.0, %v3101
      %3103 = vmatmul.bf16.gmra.mxu0 %v2279
      %v3104 = vpop.f32.mrf.mxu0
      %v3105 = vadd.f32 0.0, %v3104
      %v3106 = vpop.f32.mrf.mxu0
      %v3107 = vadd.f32 0.0, %v3106
      %3108 = vmatmul.bf16.gmra.mxu0 %v2282
      %v3109 = vpop.f32.mrf.mxu0
      %v3110 = vadd.f32 0.0, %v3109
      %v3111 = vpop.f32.mrf.mxu0
      %v3112 = vadd.f32 0.0, %v3111
      %3113 = vmatmul.bf16.gmra.mxu0 %v2285
      %v3114 = vpop.f32.mrf.mxu0
      %v3115 = vadd.f32 0.0, %v3114
      %v3116 = vpop.f32.mrf.mxu0
      %v3117 = vadd.f32 0.0, %v3116
      %3118 = vmatmul.bf16.gmra.mxu0 %v2288
      %v3119 = vpop.f32.mrf.mxu0
      %v3120 = vadd.f32 0.0, %v3119
      %v3121 = vpop.f32.mrf.mxu0
      %v3122 = vadd.f32 0.0, %v3121
      %3123 = vmatmul.bf16.gmra.mxu0 %v2291
      %v3124 = vpop.f32.mrf.mxu0
      %v3125 = vadd.f32 0.0, %v3124
      %v3126 = vpop.f32.mrf.mxu0
      %v3127 = vadd.f32 0.0, %v3126
      %3128 = vmatmul.bf16.gmra.mxu0 %v2294
      %v3129 = vpop.f32.mrf.mxu0
      %v3130 = vadd.f32 0.0, %v3129
      %v3131 = vpop.f32.mrf.mxu0
      %v3132 = vadd.f32 0.0, %v3131
      %3133 = vmatmul.bf16.gmra.mxu0 %v2297
      %v3134 = vpop.f32.mrf.mxu0
      %v3135 = vadd.f32 0.0, %v3134
      %v3136 = vpop.f32.mrf.mxu0
      %v3137 = vadd.f32 0.0, %v3136
      %3138 = vmatmul.bf16.gmra.mxu0 %v2653
      %v3139 = vpop.f32.mrf.mxu0
      %v3140 = vadd.f32 0.0, %v3139
      %v3141 = vpop.f32.mrf.mxu0
      %v3142 = vadd.f32 0.0, %v3141
      %3143 = vmatmul.bf16.gmra.mxu0 %v3055
      %v3144 = vpop.f32.mrf.mxu0
      %v3145 = vadd.f32 0.0, %v3144
      %v3146 = vpop.f32.mrf.mxu0
      %v3147 = vadd.f32 0.0, %v3146
      %3148 = vdwg.mxu0
      %v3149 = vadd.f32 %v3015, %v3070
      %v3150 = vadd.f32 %v3016, %v3072
      %v3151 = vadd.f32 %v3017, %v3075
      %v3152 = vadd.f32 %v3018, %v3077
      %v3153 = vadd.f32 %v3019, %v3080
      %v3154 = vadd.f32 %v3020, %v3082
      %v3155 = vadd.f32 %v3021, %v3085
      %v3156 = vadd.f32 %v3022, %v3087
      %v3157 = vadd.f32 %v3023, %v3090
      %v3158 = vadd.f32 %v3024, %v3092
      %v3159 = vadd.f32 %v3025, %v3095
      %v3160 = vadd.f32 %v3026, %v3097
      %v3161 = vadd.f32 %v3027, %v3100
      %v3162 = vadd.f32 %v3028, %v3102
      %v3163 = vadd.f32 %v3029, %v3105
      %v3164 = vadd.f32 %v3030, %v3107
      %v3165 = vadd.f32 %v3031, %v3110
      %v3166 = vadd.f32 %v3032, %v3112
      %v3167 = vadd.f32 %v3033, %v3115
      %v3168 = vadd.f32 %v3034, %v3117
      %v3169 = vadd.f32 %v3035, %v3120
      %v3170 = vadd.f32 %v3036, %v3122
      %v3171 = vadd.f32 %v3037, %v3125
      %v3172 = vadd.f32 %v3038, %v3127
      %v3173 = vadd.f32 %v3039, %v3130
      %v3174 = vadd.f32 %v3040, %v3132
      %v3175 = vadd.f32 %v3041, %v3135
      %v3176 = vadd.f32 %v3042, %v3137
      %v3177 = vadd.f32 %v3043, %v3140
      %v3178 = vadd.f32 %v3044, %v3142
      %v3179 = vadd.f32 %v3045, %v3145
      %v3180 = vadd.f32 %v3046, %v3147
      %s3181 = scalar_lea.vmem %s5, 14
      %v3182 = vld [vmem:[%s3181] sm:$0x3]
      %v3185 = vunpack.c.l.b16 %v1872
      %v3186 = vunpack.c.l.b16 %v1873
      %v3187 = vpack.c.b16 %v3186, %v3185
      %v3189 = vsel %vm2029, %v3187, 0
      %v3192 = vsel %vm2078, %v3182, 0
      %3194 = vmatpush.bf16.msra.mxu0 0
      %3195 = vmatpush.bf16.msra.mxu0 0
      %3196 = vmatpush.bf16.msra.mxu0 0
      %3197 = vmatpush.bf16.msra.mxu0 0
      %3198 = vmatpush.bf16.msra.mxu0 0
      %3199 = vmatpush.bf16.msra.mxu0 0
      %3200 = vmatpush.bf16.msra.mxu0 0
      %3201 = vmatpush.bf16.msra.mxu0 %v3192
      %3202 = vmatmul.bf16.gmra.mxu0 %v2037
      %v3203 = vpop.f32.mrf.mxu0
      %v3204 = vadd.f32 0.0, %v3203
      %v3205 = vpop.f32.mrf.mxu0
      %v3206 = vadd.f32 0.0, %v3205
      %3207 = vmatmul.bf16.gmra.mxu0 %v2040
      %v3208 = vpop.f32.mrf.mxu0
      %v3209 = vadd.f32 0.0, %v3208
      %v3210 = vpop.f32.mrf.mxu0
      %v3211 = vadd.f32 0.0, %v3210
      %3212 = vmatmul.bf16.gmra.mxu0 %v2043
      %v3213 = vpop.f32.mrf.mxu0
      %v3214 = vadd.f32 0.0, %v3213
      %v3215 = vpop.f32.mrf.mxu0
      %v3216 = vadd.f32 0.0, %v3215
      %3217 = vmatmul.bf16.gmra.mxu0 %v2046
      %v3218 = vpop.f32.mrf.mxu0
      %v3219 = vadd.f32 0.0, %v3218
      %v3220 = vpop.f32.mrf.mxu0
      %v3221 = vadd.f32 0.0, %v3220
      %3222 = vmatmul.bf16.gmra.mxu0 %v2049
      %v3223 = vpop.f32.mrf.mxu0
      %v3224 = vadd.f32 0.0, %v3223
      %v3225 = vpop.f32.mrf.mxu0
      %v3226 = vadd.f32 0.0, %v3225
      %3227 = vmatmul.bf16.gmra.mxu0 %v2052
      %v3228 = vpop.f32.mrf.mxu0
      %v3229 = vadd.f32 0.0, %v3228
      %v3230 = vpop.f32.mrf.mxu0
      %v3231 = vadd.f32 0.0, %v3230
      %3232 = vmatmul.bf16.gmra.mxu0 %v2055
      %v3233 = vpop.f32.mrf.mxu0
      %v3234 = vadd.f32 0.0, %v3233
      %v3235 = vpop.f32.mrf.mxu0
      %v3236 = vadd.f32 0.0, %v3235
      %3237 = vmatmul.bf16.gmra.mxu0 %v2058
      %v3238 = vpop.f32.mrf.mxu0
      %v3239 = vadd.f32 0.0, %v3238
      %v3240 = vpop.f32.mrf.mxu0
      %v3241 = vadd.f32 0.0, %v3240
      %3242 = vmatmul.bf16.gmra.mxu0 %v2061
      %v3243 = vpop.f32.mrf.mxu0
      %v3244 = vadd.f32 0.0, %v3243
      %v3245 = vpop.f32.mrf.mxu0
      %v3246 = vadd.f32 0.0, %v3245
      %3247 = vmatmul.bf16.gmra.mxu0 %v2064
      %v3248 = vpop.f32.mrf.mxu0
      %v3249 = vadd.f32 0.0, %v3248
      %v3250 = vpop.f32.mrf.mxu0
      %v3251 = vadd.f32 0.0, %v3250
      %3252 = vmatmul.bf16.gmra.mxu0 %v2067
      %v3253 = vpop.f32.mrf.mxu0
      %v3254 = vadd.f32 0.0, %v3253
      %v3255 = vpop.f32.mrf.mxu0
      %v3256 = vadd.f32 0.0, %v3255
      %3257 = vmatmul.bf16.gmra.mxu0 %v2070
      %v3258 = vpop.f32.mrf.mxu0
      %v3259 = vadd.f32 0.0, %v3258
      %v3260 = vpop.f32.mrf.mxu0
      %v3261 = vadd.f32 0.0, %v3260
      %3262 = vmatmul.bf16.gmra.mxu0 %v2073
      %v3263 = vpop.f32.mrf.mxu0
      %v3264 = vadd.f32 0.0, %v3263
      %v3265 = vpop.f32.mrf.mxu0
      %v3266 = vadd.f32 0.0, %v3265
      %3267 = vmatmul.bf16.gmra.mxu0 %v2076
      %v3268 = vpop.f32.mrf.mxu0
      %v3269 = vadd.f32 0.0, %v3268
      %v3270 = vpop.f32.mrf.mxu0
      %v3271 = vadd.f32 0.0, %v3270
      %3272 = vmatmul.bf16.gmra.mxu0 %v2787
      %v3273 = vpop.f32.mrf.mxu0
      %v3274 = vadd.f32 0.0, %v3273
      %v3275 = vpop.f32.mrf.mxu0
      %v3276 = vadd.f32 0.0, %v3275
      %3277 = vmatmul.bf16.gmra.mxu0 %v3189
      %v3278 = vpop.f32.mrf.mxu0
      %v3279 = vadd.f32 0.0, %v3278
      %v3280 = vpop.f32.mrf.mxu0
      %v3281 = vadd.f32 0.0, %v3280
      %3282 = vdwg.mxu0
      %v3283 = vadd.f32 %v3149, %v3204
      %v3284 = vadd.f32 %v3150, %v3206
      %v3285 = vadd.f32 %v3151, %v3209
      %v3286 = vadd.f32 %v3152, %v3211
      %v3287 = vadd.f32 %v3153, %v3214
      %v3288 = vadd.f32 %v3154, %v3216
      %v3289 = vadd.f32 %v3155, %v3219
      %v3290 = vadd.f32 %v3156, %v3221
      %v3291 = vadd.f32 %v3157, %v3224
      %v3292 = vadd.f32 %v3158, %v3226
      %v3293 = vadd.f32 %v3159, %v3229
      %v3294 = vadd.f32 %v3160, %v3231
      %v3295 = vadd.f32 %v3161, %v3234
      %v3296 = vadd.f32 %v3162, %v3236
      %v3297 = vadd.f32 %v3163, %v3239
      %v3298 = vadd.f32 %v3164, %v3241
      %v3299 = vadd.f32 %v3165, %v3244
      %v3300 = vadd.f32 %v3166, %v3246
      %v3301 = vadd.f32 %v3167, %v3249
      %v3302 = vadd.f32 %v3168, %v3251
      %v3303 = vadd.f32 %v3169, %v3254
      %v3304 = vadd.f32 %v3170, %v3256
      %v3305 = vadd.f32 %v3171, %v3259
      %v3306 = vadd.f32 %v3172, %v3261
      %v3307 = vadd.f32 %v3173, %v3264
      %v3308 = vadd.f32 %v3174, %v3266
      %v3309 = vadd.f32 %v3175, %v3269
      %v3310 = vadd.f32 %v3176, %v3271
      %v3311 = vadd.f32 %v3177, %v3274
      %v3312 = vadd.f32 %v3178, %v3276
      %v3313 = vadd.f32 %v3179, %v3279
      %v3314 = vadd.f32 %v3180, %v3281
      %s3315 = scalar_lea.vmem %s5, 16
      %v3316 = vld [vmem:[%s3315] sm:$0x3]
      %v3319 = vunpack.c.l.b16 %v1944
      %v3320 = vunpack.c.l.b16 %v1945
      %v3321 = vpack.c.b16 %v3320, %v3319
      %v3323 = vsel %vm2029, %v3321, 0
      %v3326 = vsel %vm2078, %v3316, 0
      %3328 = vmatpush.bf16.msra.mxu0 0
      %3329 = vmatpush.bf16.msra.mxu0 0
      %3330 = vmatpush.bf16.msra.mxu0 0
      %3331 = vmatpush.bf16.msra.mxu0 0
      %3332 = vmatpush.bf16.msra.mxu0 0
      %3333 = vmatpush.bf16.msra.mxu0 0
      %3334 = vmatpush.bf16.msra.mxu0 0
      %3335 = vmatpush.bf16.msra.mxu0 %v3326
      %3336 = vmatmul.bf16.gmra.mxu0 %v2480
      %v3337 = vpop.f32.mrf.mxu0
      %v3338 = vadd.f32 0.0, %v3337
      %v3339 = vpop.f32.mrf.mxu0
      %v3340 = vadd.f32 0.0, %v3339
      %3341 = vmatmul.bf16.gmra.mxu0 %v2483
      %v3342 = vpop.f32.mrf.mxu0
      %v3343 = vadd.f32 0.0, %v3342
      %v3344 = vpop.f32.mrf.mxu0
      %v3345 = vadd.f32 0.0, %v3344
      %3346 = vmatmul.bf16.gmra.mxu0 %v2486
      %v3347 = vpop.f32.mrf.mxu0
      %v3348 = vadd.f32 0.0, %v3347
      %v3349 = vpop.f32.mrf.mxu0
      %v3350 = vadd.f32 0.0, %v3349
      %3351 = vmatmul.bf16.gmra.mxu0 %v2489
      %v3352 = vpop.f32.mrf.mxu0
      %v3353 = vadd.f32 0.0, %v3352
      %v3354 = vpop.f32.mrf.mxu0
      %v3355 = vadd.f32 0.0, %v3354
      %3356 = vmatmul.bf16.gmra.mxu0 %v2492
      %v3357 = vpop.f32.mrf.mxu0
      %v3358 = vadd.f32 0.0, %v3357
      %v3359 = vpop.f32.mrf.mxu0
      %v3360 = vadd.f32 0.0, %v3359
      %3361 = vmatmul.bf16.gmra.mxu0 %v2495
      %v3362 = vpop.f32.mrf.mxu0
      %v3363 = vadd.f32 0.0, %v3362
      %v3364 = vpop.f32.mrf.mxu0
      %v3365 = vadd.f32 0.0, %v3364
      %3366 = vmatmul.bf16.gmra.mxu0 %v2498
      %v3367 = vpop.f32.mrf.mxu0
      %v3368 = vadd.f32 0.0, %v3367
      %v3369 = vpop.f32.mrf.mxu0
      %v3370 = vadd.f32 0.0, %v3369
      %3371 = vmatmul.bf16.gmra.mxu0 %v2501
      %v3372 = vpop.f32.mrf.mxu0
      %v3373 = vadd.f32 0.0, %v3372
      %v3374 = vpop.f32.mrf.mxu0
      %v3375 = vadd.f32 0.0, %v3374
      %3376 = vmatmul.bf16.gmra.mxu0 %v2504
      %v3377 = vpop.f32.mrf.mxu0
      %v3378 = vadd.f32 0.0, %v3377
      %v3379 = vpop.f32.mrf.mxu0
      %v3380 = vadd.f32 0.0, %v3379
      %3381 = vmatmul.bf16.gmra.mxu0 %v2507
      %v3382 = vpop.f32.mrf.mxu0
      %v3383 = vadd.f32 0.0, %v3382
      %v3384 = vpop.f32.mrf.mxu0
      %v3385 = vadd.f32 0.0, %v3384
      %3386 = vmatmul.bf16.gmra.mxu0 %v2510
      %v3387 = vpop.f32.mrf.mxu0
      %v3388 = vadd.f32 0.0, %v3387
      %v3389 = vpop.f32.mrf.mxu0
      %v3390 = vadd.f32 0.0, %v3389
      %3391 = vmatmul.bf16.gmra.mxu0 %v2513
      %v3392 = vpop.f32.mrf.mxu0
      %v3393 = vadd.f32 0.0, %v3392
      %v3394 = vpop.f32.mrf.mxu0
      %v3395 = vadd.f32 0.0, %v3394
      %3396 = vmatmul.bf16.gmra.mxu0 %v2516
      %v3397 = vpop.f32.mrf.mxu0
      %v3398 = vadd.f32 0.0, %v3397
      %v3399 = vpop.f32.mrf.mxu0
      %v3400 = vadd.f32 0.0, %v3399
      %3401 = vmatmul.bf16.gmra.mxu0 %v2519
      %v3402 = vpop.f32.mrf.mxu0
      %v3403 = vadd.f32 0.0, %v3402
      %v3404 = vpop.f32.mrf.mxu0
      %v3405 = vadd.f32 0.0, %v3404
      %3406 = vmatmul.bf16.gmra.mxu0 %v2921
      %v3407 = vpop.f32.mrf.mxu0
      %v3408 = vadd.f32 0.0, %v3407
      %v3409 = vpop.f32.mrf.mxu0
      %v3410 = vadd.f32 0.0, %v3409
      %3411 = vmatmul.bf16.gmra.mxu0 %v3323
      %v3412 = vpop.f32.mrf.mxu0
      %v3413 = vadd.f32 0.0, %v3412
      %v3414 = vpop.f32.mrf.mxu0
      %v3415 = vadd.f32 0.0, %v3414
      %3416 = vdwg.mxu0
      %v3417 = vadd.f32 %v3283, %v3338
      %v3418 = vadd.f32 %v3284, %v3340
      %v3419 = vadd.f32 %v3285, %v3343
      %v3420 = vadd.f32 %v3286, %v3345
      %v3421 = vadd.f32 %v3287, %v3348
      %v3422 = vadd.f32 %v3288, %v3350
      %v3423 = vadd.f32 %v3289, %v3353
      %v3424 = vadd.f32 %v3290, %v3355
      %v3425 = vadd.f32 %v3291, %v3358
      %v3426 = vadd.f32 %v3292, %v3360
      %v3427 = vadd.f32 %v3293, %v3363
      %v3428 = vadd.f32 %v3294, %v3365
      %v3429 = vadd.f32 %v3295, %v3368
      %v3430 = vadd.f32 %v3296, %v3370
      %v3431 = vadd.f32 %v3297, %v3373
      %v3432 = vadd.f32 %v3298, %v3375
      %v3433 = vadd.f32 %v3299, %v3378
      %v3434 = vadd.f32 %v3300, %v3380
      %v3435 = vadd.f32 %v3301, %v3383
      %v3436 = vadd.f32 %v3302, %v3385
      %v3437 = vadd.f32 %v3303, %v3388
      %v3438 = vadd.f32 %v3304, %v3390
      %v3439 = vadd.f32 %v3305, %v3393
      %v3440 = vadd.f32 %v3306, %v3395
      %v3441 = vadd.f32 %v3307, %v3398
      %v3442 = vadd.f32 %v3308, %v3400
      %v3443 = vadd.f32 %v3309, %v3403
      %v3444 = vadd.f32 %v3310, %v3405
      %v3445 = vadd.f32 %v3311, %v3408
      %v3446 = vadd.f32 %v3312, %v3410
      %v3447 = vadd.f32 %v3313, %v3413
      %v3448 = vadd.f32 %v3314, %v3415
      %v3449 = vld [vmem:[%s6] sm:$0x1]
      %v3451 = vperm.slane %v3449, 0
      %v3453 = vadd.f32 %v3417, %v3451
      %v3454 = vadd.f32 %v3418, %v3451
      %v3455 = vadd.f32 %v3419, %v3451
      %v3456 = vadd.f32 %v3420, %v3451
      %v3457 = vadd.f32 %v3421, %v3451
      %v3458 = vadd.f32 %v3422, %v3451
      %v3459 = vadd.f32 %v3423, %v3451
      %v3460 = vadd.f32 %v3424, %v3451
      %v3461 = vadd.f32 %v3425, %v3451
      %v3462 = vadd.f32 %v3426, %v3451
      %v3463 = vadd.f32 %v3427, %v3451
      %v3464 = vadd.f32 %v3428, %v3451
      %v3465 = vadd.f32 %v3429, %v3451
      %v3466 = vadd.f32 %v3430, %v3451
      %v3467 = vadd.f32 %v3431, %v3451
      %v3468 = vadd.f32 %v3432, %v3451
      %v3469 = vadd.f32 %v3433, %v3451
      %v3470 = vadd.f32 %v3434, %v3451
      %v3471 = vadd.f32 %v3435, %v3451
      %v3472 = vadd.f32 %v3436, %v3451
      %v3473 = vadd.f32 %v3437, %v3451
      %v3474 = vadd.f32 %v3438, %v3451
      %v3475 = vadd.f32 %v3439, %v3451
      %v3476 = vadd.f32 %v3440, %v3451
      %v3477 = vadd.f32 %v3441, %v3451
      %v3478 = vadd.f32 %v3442, %v3451
      %v3479 = vadd.f32 %v3443, %v3451
      %v3480 = vadd.f32 %v3444, %v3451
      %v3481 = vadd.f32 %v3445, %v3451
      %v3482 = vadd.f32 %v3446, %v3451
      %v3483 = vadd.f32 %v3447, %v3451
      %v3484 = vadd.f32 %v3448, %v3451
      %v3485 = vpack.c.bf16 %v3453, %v3453
      %v3486 = vpack.c.bf16 %v3454, %v3454
      %v3487 = vpack.c.bf16 %v3455, %v3455
      %v3488 = vpack.c.bf16 %v3456, %v3456
      %v3489 = vpack.c.bf16 %v3457, %v3457
      %v3490 = vpack.c.bf16 %v3458, %v3458
      %v3491 = vpack.c.bf16 %v3459, %v3459
      %v3492 = vpack.c.bf16 %v3460, %v3460
      %v3493 = vpack.c.bf16 %v3461, %v3461
      %v3494 = vpack.c.bf16 %v3462, %v3462
      %v3495 = vpack.c.bf16 %v3463, %v3463
      %v3496 = vpack.c.bf16 %v3464, %v3464
      %v3497 = vpack.c.bf16 %v3465, %v3465
      %v3498 = vpack.c.bf16 %v3466, %v3466
      %v3499 = vpack.c.bf16 %v3467, %v3467
      %v3500 = vpack.c.bf16 %v3468, %v3468
      %v3501 = vpack.c.bf16 %v3469, %v3469
      %v3502 = vpack.c.bf16 %v3470, %v3470
      %v3503 = vpack.c.bf16 %v3471, %v3471
      %v3504 = vpack.c.bf16 %v3472, %v3472
      %v3505 = vpack.c.bf16 %v3473, %v3473
      %v3506 = vpack.c.bf16 %v3474, %v3474
      %v3507 = vpack.c.bf16 %v3475, %v3475
      %v3508 = vpack.c.bf16 %v3476, %v3476
      %v3509 = vpack.c.bf16 %v3477, %v3477
      %v3510 = vpack.c.bf16 %v3478, %v3478
      %v3511 = vpack.c.bf16 %v3479, %v3479
      %v3512 = vpack.c.bf16 %v3480, %v3480
      %v3513 = vpack.c.bf16 %v3481, %v3481
      %v3514 = vpack.c.bf16 %v3482, %v3482
      %v3515 = vpack.c.bf16 %v3483, %v3483
      %v3516 = vpack.c.bf16 %v3484, %v3484
      %3517 = vst [vmem:[%s515] sm:$0xf] %v3485
      %3518 = vst [vmem:[%s515 + $0x4] sm:$0xf] %v3486
      %3519 = vst [vmem:[%s515 + $0x8] sm:$0xf] %v3487
      %3520 = vst [vmem:[%s515 + $0xc] sm:$0xf] %v3488
      %3521 = vst [vmem:[%s515 + $0x10] sm:$0xf] %v3489
      %3522 = vst [vmem:[%s515 + $0x14] sm:$0xf] %v3490
      %3523 = vst [vmem:[%s515 + $0x18] sm:$0xf] %v3491
      %3524 = vst [vmem:[%s515 + $0x1c] sm:$0xf] %v3492
      %3525 = vst [vmem:[%s515 + $0x20] sm:$0xf] %v3493
      %3526 = vst [vmem:[%s515 + $0x24] sm:$0xf] %v3494
      %3527 = vst [vmem:[%s515 + $0x28] sm:$0xf] %v3495
      %3528 = vst [vmem:[%s515 + $0x2c] sm:$0xf] %v3496
      %3529 = vst [vmem:[%s515 + $0x30] sm:$0xf] %v3497
      %3530 = vst [vmem:[%s515 + $0x34] sm:$0xf] %v3498
      %3531 = vst [vmem:[%s515 + $0x38] sm:$0xf] %v3499
      %3532 = vst [vmem:[%s515 + $0x3c] sm:$0xf] %v3500
      %3533 = vst [vmem:[%s515 + $0x40] sm:$0xf] %v3501
      %3534 = vst [vmem:[%s515 + $0x44] sm:$0xf] %v3502
      %3535 = vst [vmem:[%s515 + $0x48] sm:$0xf] %v3503
      %3536 = vst [vmem:[%s515 + $0x4c] sm:$0xf] %v3504
      %3537 = vst [vmem:[%s515 + $0x50] sm:$0xf] %v3505
      %3538 = vst [vmem:[%s515 + $0x54] sm:$0xf] %v3506
      %3539 = vst [vmem:[%s515 + $0x58] sm:$0xf] %v3507
      %3540 = vst [vmem:[%s515 + $0x5c] sm:$0xf] %v3508
      %3541 = vst [vmem:[%s515 + $0x60] sm:$0xf] %v3509
      %3542 = vst [vmem:[%s515 + $0x64] sm:$0xf] %v3510
      %3543 = vst [vmem:[%s515 + $0x68] sm:$0xf] %v3511
      %3544 = vst [vmem:[%s515 + $0x6c] sm:$0xf] %v3512
      %3545 = vst [vmem:[%s515 + $0x70] sm:$0xf] %v3513
      %3546 = vst [vmem:[%s515 + $0x74] sm:$0xf] %v3514
      %3547 = vst [vmem:[%s515 + $0x78] sm:$0xf] %v3515
      %3548 = vst [vmem:[%s515 + $0x7c] sm:$0xf] %v3516
      %v3549 = vadd.f32 %v3453, %v3454
      %v3550 = vadd.f32 %v3549, %v3455
      %v3551 = vadd.f32 %v3550, %v3456
      %v3552 = vadd.f32 %v3551, %v3457
      %v3553 = vadd.f32 %v3552, %v3458
      %v3554 = vadd.f32 %v3553, %v3459
      %v3555 = vadd.f32 %v3554, %v3460
      %v3556 = vadd.f32 %v3555, %v3461
      %v3557 = vadd.f32 %v3556, %v3462
      %v3558 = vadd.f32 %v3557, %v3463
      %v3559 = vadd.f32 %v3558, %v3464
      %v3560 = vadd.f32 %v3559, %v3465
      %v3561 = vadd.f32 %v3560, %v3466
      %v3562 = vadd.f32 %v3561, %v3467
      %v3563 = vadd.f32 %v3562, %v3468
      %v3564 = vadd.f32 %v3563, %v3469
      %v3565 = vadd.f32 %v3564, %v3470
      %v3566 = vadd.f32 %v3565, %v3471
      %v3567 = vadd.f32 %v3566, %v3472
      %v3568 = vadd.f32 %v3567, %v3473
      %v3569 = vadd.f32 %v3568, %v3474
      %v3570 = vadd.f32 %v3569, %v3475
      %v3571 = vadd.f32 %v3570, %v3476
      %v3572 = vadd.f32 %v3571, %v3477
      %v3573 = vadd.f32 %v3572, %v3478
      %v3574 = vadd.f32 %v3573, %v3479
      %v3575 = vadd.f32 %v3574, %v3480
      %v3576 = vadd.f32 %v3575, %v3481
      %v3577 = vadd.f32 %v3576, %v3482
      %v3578 = vadd.f32 %v3577, %v3483
      %v3579 = vadd.f32 %v3578, %v3484
      %v3580 = vrot.slane %v3579, 4
      %v3581 = vadd.f32 %v3579, %v3580
      %v3582 = vrot.slane %v3581, 2
      %v3583 = vadd.f32 %v3581, %v3582
      %v3584 = vrot.slane %v3583, 1
      %v3585 = vadd.f32 %v3583, %v3584
      %3586 = vst [vmem:[%s520] sm:$0x1] %v3585
      %v3587 = vmul.f32 %v3453, %v3453
      %v3588 = vmul.f32 %v3454, %v3454
      %v3589 = vmul.f32 %v3455, %v3455
      %v3590 = vmul.f32 %v3456, %v3456
      %v3591 = vmul.f32 %v3457, %v3457
      %v3592 = vmul.f32 %v3458, %v3458
      %v3593 = vmul.f32 %v3459, %v3459
      %v3594 = vmul.f32 %v3460, %v3460
      %v3595 = vmul.f32 %v3461, %v3461
      %v3596 = vmul.f32 %v3462, %v3462
      %v3597 = vmul.f32 %v3463, %v3463
      %v3598 = vmul.f32 %v3464, %v3464
      %v3599 = vmul.f32 %v3465, %v3465
      %v3600 = vmul.f32 %v3466, %v3466
      %v3601 = vmul.f32 %v3467, %v3467
      %v3602 = vmul.f32 %v3468, %v3468
      %v3603 = vmul.f32 %v3469, %v3469
      %v3604 = vmul.f32 %v3470, %v3470
      %v3605 = vmul.f32 %v3471, %v3471
      %v3606 = vmul.f32 %v3472, %v3472
      %v3607 = vmul.f32 %v3473, %v3473
      %v3608 = vmul.f32 %v3474, %v3474
      %v3609 = vmul.f32 %v3475, %v3475
      %v3610 = vmul.f32 %v3476, %v3476
      %v3611 = vmul.f32 %v3477, %v3477
      %v3612 = vmul.f32 %v3478, %v3478
      %v3613 = vmul.f32 %v3479, %v3479
      %v3614 = vmul.f32 %v3480, %v3480
      %v3615 = vmul.f32 %v3481, %v3481
      %v3616 = vmul.f32 %v3482, %v3482
      %v3617 = vmul.f32 %v3483, %v3483
      %v3618 = vmul.f32 %v3484, %v3484
      %v3619 = vadd.f32 %v3587, %v3588
      %v3620 = vadd.f32 %v3619, %v3589
      %v3621 = vadd.f32 %v3620, %v3590
      %v3622 = vadd.f32 %v3621, %v3591
      %v3623 = vadd.f32 %v3622, %v3592
      %v3624 = vadd.f32 %v3623, %v3593
      %v3625 = vadd.f32 %v3624, %v3594
      %v3626 = vadd.f32 %v3625, %v3595
      %v3627 = vadd.f32 %v3626, %v3596
      %v3628 = vadd.f32 %v3627, %v3597
      %v3629 = vadd.f32 %v3628, %v3598
      %v3630 = vadd.f32 %v3629, %v3599
      %v3631 = vadd.f32 %v3630, %v3600
      %v3632 = vadd.f32 %v3631, %v3601
      %v3633 = vadd.f32 %v3632, %v3602
      %v3634 = vadd.f32 %v3633, %v3603
      %v3635 = vadd.f32 %v3634, %v3604
      %v3636 = vadd.f32 %v3635, %v3605
      %v3637 = vadd.f32 %v3636, %v3606
      %v3638 = vadd.f32 %v3637, %v3607
      %v3639 = vadd.f32 %v3638, %v3608
      %v3640 = vadd.f32 %v3639, %v3609
      %v3641 = vadd.f32 %v3640, %v3610
      %v3642 = vadd.f32 %v3641, %v3611
      %v3643 = vadd.f32 %v3642, %v3612
      %v3644 = vadd.f32 %v3643, %v3613
      %v3645 = vadd.f32 %v3644, %v3614
      %v3646 = vadd.f32 %v3645, %v3615
      %v3647 = vadd.f32 %v3646, %v3616
      %v3648 = vadd.f32 %v3647, %v3617
      %v3649 = vadd.f32 %v3648, %v3618
      %v3650 = vrot.slane %v3649, 4
      %v3651 = vadd.f32 %v3649, %v3650
      %v3652 = vrot.slane %v3651, 2
      %v3653 = vadd.f32 %v3651, %v3652
      %v3654 = vrot.slane %v3653, 1
      %v3655 = vadd.f32 %v3653, %v3654
      %3656 = vst [vmem:[%s525] sm:$0x1] %v3655
      %s3657 = smul.u32 32, %s26
      %p3658 = scmp.lt.s32.totalorder %s25, 1
      %s3659 = scalar_select %p3658, %s25, 1
      %p3660 = scmp.lt.s32.totalorder %s3657, 31
      %s3661 = scalar_select %p3660, %s3657, 31
      %s3662 = smul.addr %s3659, 32
      %s3663 = sadd.s32 %s3661, %s3662
      %s3664 = smul.addr %s3663, 4
      %s3665 = scalar_lea.vmem %s7, %s3664
      %s3666 = sadd.s32 %s25, %s26
      %p3667 = scmp.lt.s32.totalorder %s3666, 1
      %s3668 = scalar_select %p3667, %s3666, 1
      %s3669 = scalar_lea.vmem %s8, %s3668
      %s3670 = sadd.s32 %s25, %s26
      %p3671 = scmp.lt.s32.totalorder %s3670, 1
      %s3672 = scalar_select %p3671, %s3670, 1
      %s3673 = scalar_lea.vmem %s9, %s3672
      // Predicated region
      $region49: #{conv_block_forward.3} parent=47 // pred_check
        %p3674 = pneg %p237
      $region50: #{conv_block_forward.3} parent=47 // pred_check_branch
        %3676 = sbr.rel (%p3674) target = $region52
      $region51: #{conv_block_forward.3} parent=47 // pred_region
        %s3677 = smul.u32 32, %s26
      $region52: #{conv_block_forward.3} parent=47 // pred_fallthru
        _
      // Predicated region
      $region53: #{conv_block_forward.3} parent=47 // pred_check
        %p3678 = pneg %p265
      $region54: #{conv_block_forward.3} parent=47 // pred_check_branch
        %3680 = sbr.rel (%p3678) target = $region56
      $region55: #{conv_block_forward.3} parent=47 // pred_region
        %s3681 = sadd.s32 %s25, %s26
      $region56: #{conv_block_forward.3} parent=47 // pred_fallthru
        _
      // Predicated region
      $region57: #{conv_block_forward.3} parent=47 // pred_check
        %p3682 = pneg %p293
      $region58: #{conv_block_forward.3} parent=47 // pred_check_branch
        %3684 = sbr.rel (%p3682) target = $region60
      $region59: #{conv_block_forward.3} parent=47 // pred_region
        %s3685 = sadd.s32 %s25, %s26
      $region60: #{conv_block_forward.3} parent=47 // pred_fallthru
        _
    $region48: #{conv_block_forward.3} parent=5 // pred_fallthru
      _
    %p3686 = scmp.le.s32.totalorder 2, %s16
    // Predicated region
    $region61: #{conv_block_forward.3} parent=5 // pred_check
      %p3687 = pneg %p3686
    $region62: #{conv_block_forward.3} parent=5 // pred_check_branch
      %3689 = sbr.rel (%p3687) target = $region64
    $region63: #{conv_block_forward.3} parent=5 // pred_region
      %s3690 = ssub.s32 %s16, 2
      // Predicated region
      $region65: #{conv_block_forward.3} parent=63 // pred_check
        %p3691 = pneg %p243
      $region66: #{conv_block_forward.3} parent=63 // pred_check_branch
        %3693 = sbr.rel (%p3691) target = $region68
      $region67: #{conv_block_forward.3} parent=63 // pred_region
        %s3694 = smul.u32 32, %s28
        %p3695 = scmp.lt.s32.totalorder %s27, 1
        %s3696 = scalar_select %p3695, %s27, 1
        %p3697 = scmp.lt.s32.totalorder %s3694, 31
        %s3698 = scalar_select %p3697, %s3694, 31
        %s3699 = smul.addr %s3696, 32
        %s3700 = sadd.s32 %s3698, %s3699
        %s3701 = smul.addr %s3700, 4
        %s3702 = scalar_lea.vmem %s7, %s3701
      $region68: #{conv_block_forward.3} parent=63 // pred_fallthru
        _
      // Predicated region
      $region69: #{conv_block_forward.3} parent=63 // pred_check
        %p3703 = pneg %p271
      $region70: #{conv_block_forward.3} parent=63 // pred_check_branch
        %3705 = sbr.rel (%p3703) target = $region72
      $region71: #{conv_block_forward.3} parent=63 // pred_region
        %s3706 = sadd.s32 %s27, %s28
        %p3707 = scmp.lt.s32.totalorder %s3706, 1
        %s3708 = scalar_select %p3707, %s3706, 1
        %s3709 = scalar_lea.vmem %s8, %s3708
      $region72: #{conv_block_forward.3} parent=63 // pred_fallthru
        _
      // Predicated region
      $region73: #{conv_block_forward.3} parent=63 // pred_check
        %p3710 = pneg %p299
      $region74: #{conv_block_forward.3} parent=63 // pred_check_branch
        %3712 = sbr.rel (%p3710) target = $region76
      $region75: #{conv_block_forward.3} parent=63 // pred_region
        %s3713 = sadd.s32 %s27, %s28
        %p3714 = scmp.lt.s32.totalorder %s3713, 1
        %s3715 = scalar_select %p3714, %s3713, 1
        %s3716 = scalar_lea.vmem %s9, %s3715
      $region76: #{conv_block_forward.3} parent=63 // pred_fallthru
        _
    $region64: #{conv_block_forward.3} parent=5 // pred_fallthru
      _
  $region6: #{conv_block_forward.3} parent=0 // loop_footer
    %s20 = sadd.s32 1, %s16
  $region7: #{conv_block_forward.3} parent=0 // loop_footer_branch
    %15 = sbr.rel target = $region3
  $region8: #{conv_block_forward.3} parent=0 // loop_exit
    _

// kernel: conv_block_forward.4
$region0: #{conv_block_forward.4}
  #allocation0 [shape = 'u32[]', space=smem, size = 0x4, offset = 0x4, fixed_abs, tag = 'smem constant byte address 0x4 - core index']
  #allocation1 [shape = 'u32[72,128]{1,0:T(1,128)}', space=vmem, size = 0x9000, scoped, tag = 'internal scratch']
  %s0 = inlined_call_operand.vmem [shape: bf16[2,256,128], index: 0, kind: input, shape index: {}, may-alias: {0,1,2}]
  %s1 = inlined_call_operand.vmem [shape: bf16[2,256,128], index: 1, kind: input, shape index: {}, may-alias: {0,1,2}]
  %s2 = inlined_call_operand.vmem [shape: bf16[2,256,128], index: 2, kind: input, shape index: {}, may-alias: {0,1,2}]
  %s3 = inlined_call_operand.vmem [shape: f32[1,128], index: 3, kind: input, shape index: {}]
  %s4 = inlined_call_operand.vmem [shape: f32[1,128], index: 4, kind: input, shape index: {}]
  %s5 = inlined_call_operand.vmem [shape: bf16[9,128,128], index: 5, kind: input, shape index: {}]
  %s6 = inlined_call_operand.vmem [shape: f32[1,128], index: 6, kind: input, shape index: {}]
  %s7 = inlined_call_operand.vmem [shape: bf16[2,256,128], index: 7, kind: output, shape index: {0}]
  %s8 = inlined_call_operand.vmem [shape: f32[2,1,128], index: 8, kind: output, shape index: {1}]
  %s9 = inlined_call_operand.vmem [shape: f32[2,1,128], index: 9, kind: output, shape index: {2}]
  %10 = xla_tuple %s7, %s8, %s9
  %s11 = sld [smem:[#allocation0]]
  $region77: #{conv_block_forward.4} parent=0
    _
  %s13 = ssub.s32 1, %s11
  %s14 = scalar_select 0, %s13, %s11
  loop: start=0, step=1, limit=4
  $region2: #{conv_block_forward.4} parent=0 // loop_pre_header
    _
  $region3: #{conv_block_forward.4} parent=0 // loop_header
    %s16 = sphi 0, %s20
    %p17 = scmp.ge.s32.totalorder %s16, 4
    %s23 = sphi 0, %s35
    %s24 = sphi 0, %s31
    %s25 = sphi 0, %s23
    %s26 = sphi 0, %s24
    %s27 = sphi 0, %s25
    %s28 = sphi 0, %s26
    %s48 = sphi 0, %s50
    %s51 = sphi 0, %s48
    %s52 = sphi 0, %s51
    %s68 = sphi 0, %s52
    %s76 = sphi 0, %s78
    %s79 = sphi 0, %s76
    %s80 = sphi 0, %s79
    %s96 = sphi 0, %s80
    %s112 = sphi 0, %s114
    %s115 = sphi 0, %s112
    %s116 = sphi 0, %s115
    %s132 = sphi 0, %s116
    %s136 = sphi 0, %s136
    %s138 = sphi 0, %s136
    %s139 = sphi 0, %s138
    %s153 = sphi 0, %s139
    %s157 = sphi 0, %s157
    %s159 = sphi 0, %s157
    %s160 = sphi 0, %s159
    %s174 = sphi 0, %s160
    %s178 = sphi 0, %s178
    %s180 = sphi 0, %s178
    %s181 = sphi 0, %s180
    %s195 = sphi 0, %s181
    %s199 = sphi 0, %s199
    %s201 = sphi 0, %s199
    %s202 = sphi 0, %s201
    %s216 = sphi 0, %s202
    %s224 = sphi 0, %s226
    %s227 = sphi 0, %s224
    %s228 = sphi 0, %s227
    %s244 = sphi 0, %s228
    %s252 = sphi 0, %s254
    %s255 = sphi 0, %s252
    %s256 = sphi 0, %s255
    %s272 = sphi 0, %s256
    %s280 = sphi 0, %s282
    %s283 = sphi 0, %s280
    %s284 = sphi 0, %s283
    %s300 = sphi 0, %s284
  $region4: #{conv_block_forward.4} parent=0 // loop_header_branch
    %19 = sbr.rel (%p17) target = $region8
  $region5: #{conv_block_forward.4} parent=0 // loop_body
    %s21 = ssub.s32 %s16, 1
    %s22 = ssub.s32 %s16, 2
    %s29 = sadd.s32 1, %s24
    %p30 = scmp.ge.s32.totalorder %s29, 1
    %s31 = scalar_select %p30, 0, %s29
    %s32 = sadd.s32 1, %s23
    %s33 = scalar_select %p30, %s32, %s23
    %p34 = scmp.ge.s32.totalorder %s33, 2
    %s35 = scalar_select %p34, 0, %s33
    %s36 = smul.u32 %s24, 16
    %s37 = ssub.s32 %s36, 1
    %p38 = scmp.gt.s32.totalorder %s37, 0
    %s39 = scalar_select %p38, %s37, 0
    %s40 = smul.u32 %s31, 16
    %s41 = ssub.s32 %s40, 1
    %p42 = scmp.gt.s32.totalorder %s41, 0
    %s43 = scalar_select %p42, %s41, 0
    %s44 = ssub.s32 %s23, %s35
    %s45 = ssub.s32 %s39, %s43
    %s46 = sor.u32 %s44, %s45
    %p47 = scmp.eq.s32.totalorder %s46, 0
    %s49 = sadd.s32 %s48, 1
    %s50 = scalar_select %p47, %s48, %s49
    %p53 = pneg %p47
    %p54 = scmp.eq.s32.totalorder %s16, 1
    %p55 = por %p53, %p54
    %p56 = scmp.ne.s32.totalorder %s48, %s51
    %p57 = scmp.eq.s32.totalorder %s16, 0
    %p58 = por %p56, %p57
    %p59 = scmp.ne.s32.totalorder %s48, %s51
    %p60 = scmp.eq.s32.totalorder %s21, 1
    %p61 = por %p59, %p60
    %p62 = scmp.ne.s32.totalorder %s51, %s52
    %p63 = scmp.eq.s32.totalorder %s21, 0
    %p64 = por %p62, %p63
    %p65 = scmp.ne.s32.totalorder %s51, %s52
    %p66 = scmp.eq.s32.totalorder %s22, 1
    %p67 = por %p65, %p66
    %p69 = scmp.ne.s32.totalorder %s52, %s68
    %p70 = scmp.eq.s32.totalorder %s22, 0
    %p71 = por %p69, %p70
    %s72 = ssub.s32 %s23, %s35
    %s73 = ssub.s32 %s24, %s31
    %s74 = sor.u32 %s72, %s73
    %p75 = scmp.eq.s32.totalorder %s74, 0
    %s77 = sadd.s32 %s76, 1
    %s78 = scalar_select %p75, %s76, %s77
    %p81 = pneg %p75
    %p82 = scmp.eq.s32.totalorder %s16, 1
    %p83 = por %p81, %p82
    %p84 = scmp.ne.s32.totalorder %s76, %s79
    %p85 = scmp.eq.s32.totalorder %s16, 0
    %p86 = por %p84, %p85
    %p87 = scmp.ne.s32.totalorder %s76, %s79
    %p88 = scmp.eq.s32.totalorder %s21, 1
    %p89 = por %p87, %p88
    %p90 = scmp.ne.s32.totalorder %s79, %s80
    %p91 = scmp.eq.s32.totalorder %s21, 0
    %p92 = por %p90, %p91
    %p93 = scmp.ne.s32.totalorder %s79, %s80
    %p94 = scmp.eq.s32.totalorder %s22, 1
    %p95 = por %p93, %p94
    %p97 = scmp.ne.s32.totalorder %s80, %s96
    %p98 = scmp.eq.s32.totalorder %s22, 0
    %p99 = por %p97, %p98
    %s100 = sadd.s32 %s24, 1
    %s101 = smul.u32 %s100, 16
    %p102 = scmp.lt.s32.totalorder %s101, 15
    %s103 = scalar_select %p102, %s101, 15
    %s104 = sadd.s32 %s31, 1
    %s105 = smul.u32 %s104, 16
    %p106 = scmp.lt.s32.totalorder %s105, 15
    %s107 = scalar_select %p106, %s105, 15
    %s108 = ssub.s32 %s23, %s35
    %s109 = ssub.s32 %s103, %s107
    %s110 = sor.u32 %s108, %s109
    %p111 = scmp.eq.s32.totalorder %s110, 0
    %s113 = sadd.s32 %s112, 1
    %s114 = scalar_select %p111, %s112, %s113
    %p117 = pneg %p111
    %p118 = scmp.eq.s32.totalorder %s16, 1
    %p119 = por %p117, %p118
    %p120 = scmp.ne.s32.totalorder %s112, %s115
    %p121 = scmp.eq.s32.totalorder %s16, 0
    %p122 = por %p120, %p121
    %p123 = scmp.ne.s32.totalorder %s112, %s115
    %p124 = scmp.eq.s32.totalorder %s21, 1
    %p125 = por %p123, %p124
    %p126 = scmp.ne.s32.totalorder %s115, %s116
    %p127 = scmp.eq.s32.totalorder %s21, 0
    %p128 = por %p126, %p127
    %p129 = scmp.ne.s32.totalorder %s115, %s116
    %p130 = scmp.eq.s32.totalorder %s22, 1
    %p131 = por %p129, %p130
    %p133 = scmp.ne.s32.totalorder %s116, %s132
    %p134 = scmp.eq.s32.totalorder %s22, 0
    %p135 = por %p133, %p134
    %s137 = sadd.s32 %s136, 1
    %p140 = scmp.eq.s32.totalorder %s16, 1
    %p141 = scmp.ne.s32.totalorder %s136, %s138
    %p142 = scmp.eq.s32.totalorder %s16, 0
    %p143 = por %p141, %p142
    %p144 = scmp.ne.s32.totalorder %s136, %s138
    %p145 = scmp.eq.s32.totalorder %s21, 1
    %p146 = por %p144, %p145
    %p147 = scmp.ne.s32.totalorder %s138, %s139
    %p148 = scmp.eq.s32.totalorder %s21, 0
    %p149 = por %p147, %p148
    %p150 = scmp.ne.s32.totalorder %s138, %s139
    %p151 = scmp.eq.s32.totalorder %s22, 1
    %p152 = por %p150, %p151
    %p154 = scmp.ne.s32.totalorder %s139, %s153
    %p155 = scmp.eq.s32.totalorder %s22, 0
    %p156 = por %p154, %p155
    %s158 = sadd.s32 %s157, 1
    %p161 = scmp.eq.s32.totalorder %s16, 1
    %p162 = scmp.ne.s32.totalorder %s157, %s159
    %p163 = scmp.eq.s32.totalorder %s16, 0
    %p164 = por %p162, %p163
    %p165 = scmp.ne.s32.totalorder %s157, %s159
    %p166 = scmp.eq.s32.totalorder %s21, 1
    %p167 = por %p165, %p166
    %p168 = scmp.ne.s32.totalorder %s159, %s160
    %p169 = scmp.eq.s32.totalorder %s21, 0
    %p170 = por %p168, %p169
    %p171 = scmp.ne.s32.totalorder %s159, %s160
    %p172 = scmp.eq.s32.totalorder %s22, 1
    %p173 = por %p171, %p172
    %p175 = scmp.ne.s32.totalorder %s160, %s174
    %p176 = scmp.eq.s32.totalorder %s22, 0
    %p177 = por %p175, %p176
    %s179 = sadd.s32 %s178, 1
    %p182 = scmp.eq.s32.totalorder %s16, 1
    %p183 = scmp.ne.s32.totalorder %s178, %s180
    %p184 = scmp.eq.s32.totalorder %s16, 0
    %p185 = por %p183, %p184
    %p186 = scmp.ne.s32.totalorder %s178, %s180
    %p187 = scmp.eq.s32.totalorder %s21, 1
    %p188 = por %p186, %p187
    %p189 = scmp.ne.s32.totalorder %s180, %s181
    %p190 = scmp.eq.s32.totalorder %s21, 0
    %p191 = por %p189, %p190
    %p192 = scmp.ne.s32.totalorder %s180, %s181
    %p193 = scmp.eq.s32.totalorder %s22, 1
    %p194 = por %p192, %p193
    %p196 = scmp.ne.s32.totalorder %s181, %s195
    %p197 = scmp.eq.s32.totalorder %s22, 0
    %p198 = por %p196, %p197
    %s200 = sadd.s32 %s199, 1
    %p203 = scmp.eq.s32.totalorder %s16, 1
    %p204 = scmp.ne.s32.totalorder %s199, %s201
    %p205 = scmp.eq.s32.totalorder %s16, 0
    %p206 = por %p204, %p205
    %p207 = scmp.ne.s32.totalorder %s199, %s201
    %p208 = scmp.eq.s32.totalorder %s21, 1
    %p209 = por %p207, %p208
    %p210 = scmp.ne.s32.totalorder %s201, %s202
    %p211 = scmp.eq.s32.totalorder %s21, 0
    %p212 = por %p210, %p211
    %p213 = scmp.ne.s32.totalorder %s201, %s202
    %p214 = scmp.eq.s32.totalorder %s22, 1
    %p215 = por %p213, %p214
    %p217 = scmp.ne.s32.totalorder %s202, %s216
    %p218 = scmp.eq.s32.totalorder %s22, 0
    %p219 = por %p217, %p218
    %s220 = ssub.s32 %s23, %s35
    %s221 = ssub.s32 %s24, %s31
    %s222 = sor.u32 %s220, %s221
    %p223 = scmp.eq.s32.totalorder %s222, 0
    %s225 = sadd.s32 %s224, 1
    %s226 = scalar_select %p223, %s224, %s225
    %p229 = pneg %p223
    %p230 = scmp.eq.s32.totalorder %s16, 1
    %p231 = por %p229, %p230
    %p232 = scmp.ne.s32.totalorder %s224, %s227
    %p233 = scmp.eq.s32.totalorder %s16, 0
    %p234 = por %p232, %p233
    %p235 = scmp.ne.s32.totalorder %s224, %s227
    %p236 = scmp.eq.s32.totalorder %s21, 1
    %p237 = por %p235, %p236
    %p238 = scmp.ne.s32.totalorder %s227, %s228
    %p239 = scmp.eq.s32.totalorder %s21, 0
    %p240 = por %p238, %p239
    %p241 = scmp.ne.s32.totalorder %s227, %s228
    %p242 = scmp.eq.s32.totalorder %s22, 1
    %p243 = por %p241, %p242
    %p245 = scmp.ne.s32.totalorder %s228, %s244
    %p246 = scmp.eq.s32.totalorder %s22, 0
    %p247 = por %p245, %p246
    %s248 = sadd.s32 %s23, %s24
    %s249 = sadd.s32 %s35, %s31
    %s250 = ssub.s32 %s248, %s249
    %p251 = scmp.eq.s32.totalorder %s250, 0
    %s253 = sadd.s32 %s252, 1
    %s254 = scalar_select %p251, %s252, %s253
    %p257 = pneg %p251
    %p258 = scmp.eq.s32.totalorder %s16, 1
    %p259 = por %p257, %p258
    %p260 = scmp.ne.s32.totalorder %s252, %s255
    %p261 = scmp.eq.s32.totalorder %s16, 0
    %p262 = por %p260, %p261
    %p263 = scmp.ne.s32.totalorder %s252, %s255
    %p264 = scmp.eq.s32.totalorder %s21, 1
    %p265 = por %p263, %p264
    %p266 = scmp.ne.s32.totalorder %s255, %s256
    %p267 = scmp.eq.s32.totalorder %s21, 0
    %p268 = por %p266, %p267
    %p269 = scmp.ne.s32.totalorder %s255, %s256
    %p270 = scmp.eq.s32.totalorder %s22, 1
    %p271 = por %p269, %p270
    %p273 = scmp.ne.s32.totalorder %s256, %s272
    %p274 = scmp.eq.s32.totalorder %s22, 0
    %p275 = por %p273, %p274
    %s276 = sadd.s32 %s23, %s24
    %s277 = sadd.s32 %s35, %s31
    %s278 = ssub.s32 %s276, %s277
    %p279 = scmp.eq.s32.totalorder %s278, 0
    %s281 = sadd.s32 %s280, 1
    %s282 = scalar_select %p279, %s280, %s281
    %p285 = pneg %p279
    %p286 = scmp.eq.s32.totalorder %s16, 1
    %p287 = por %p285, %p286
    %p288 = scmp.ne.s32.totalorder %s280, %s283
    %p289 = scmp.eq.s32.totalorder %s16, 0
    %p290 = por %p288, %p289
    %p291 = scmp.ne.s32.totalorder %s280, %s283
    %p292 = scmp.eq.s32.totalorder %s21, 1
    %p293 = por %p291, %p292
    %p294 = scmp.ne.s32.totalorder %s283, %s284
    %p295 = scmp.eq.s32.totalorder %s21, 0
    %p296 = por %p294, %p295
    %p297 = scmp.ne.s32.totalorder %s283, %s284
    %p298 = scmp.eq.s32.totalorder %s22, 1
    %p299 = por %p297, %p298
    %p301 = scmp.ne.s32.totalorder %s284, %s300
    %p302 = scmp.eq.s32.totalorder %s22, 0
    %p303 = por %p301, %p302
    %p304 = scmp.le.s32.totalorder 1, %s16
    %p305 = scmp.lt.s32.totalorder %s16, 3
    %p306 = pnand %p304, %p305
    %p307 = pneg %p306
    // Predicated region
    $region9: #{conv_block_forward.4} parent=5 // pred_check
      _
    $region10: #{conv_block_forward.4} parent=5 // pred_check_branch
      %309 = sbr.rel (%p306) target = $region12
    $region11: #{conv_block_forward.4} parent=5 // pred_region
      %s310 = ssub.s32 %s16, 1
      // Predicated region
      $region13: #{conv_block_forward.4} parent=11 // pred_check
        %p311 = pneg %p149
      $region14: #{conv_block_forward.4} parent=11 // pred_check_branch
        %313 = sbr.rel (%p311) target = $region16
      $region15: #{conv_block_forward.4} parent=11 // pred_region
        _
      $region16: #{conv_block_forward.4} parent=11 // pred_fallthru
        _
      // Predicated region
      $region17: #{conv_block_forward.4} parent=11 // pred_check
        %p314 = pneg %p170
      $region18: #{conv_block_forward.4} parent=11 // pred_check_branch
        %316 = sbr.rel (%p314) target = $region20
      $region19: #{conv_block_forward.4} parent=11 // pred_region
        _
      $region20: #{conv_block_forward.4} parent=11 // pred_fallthru
        _
      // Predicated region
      $region21: #{conv_block_forward.4} parent=11 // pred_check
        %p317 = pneg %p191
      $region22: #{conv_block_forward.4} parent=11 // pred_check_branch
        %319 = sbr.rel (%p317) target = $region24
      $region23: #{conv_block_forward.4} parent=11 // pred_region
        _
      $region24: #{conv_block_forward.4} parent=11 // pred_fallthru
        _
      // Predicated region
      $region25: #{conv_block_forward.4} parent=11 // pred_check
        %p320 = pneg %p212
      $region26: #{conv_block_forward.4} parent=11 // pred_check_branch
        %322 = sbr.rel (%p320) target = $region28
      $region27: #{conv_block_forward.4} parent=11 // pred_region
        _
      $region28: #{conv_block_forward.4} parent=11 // pred_fallthru
        _
    $region12: #{conv_block_forward.4} parent=5 // pred_fallthru
      _
    %p323 = scmp.lt.s32.totalorder %s16, 2
    // Predicated region
    $region29: #{conv_block_forward.4} parent=5 // pred_check
      %p324 = pneg %p323
    $region30: #{conv_block_forward.4} parent=5 // pred_check_branch
      %326 = sbr.rel (%p324) target = $region32
    $region31: #{conv_block_forward.4} parent=5 // pred_region
      // Predicated region
      $region33: #{conv_block_forward.4} parent=31 // pred_check
        %p327 = pneg %p58
      $region34: #{conv_block_forward.4} parent=31 // pred_check_branch
        %329 = sbr.rel (%p327) target = $region36
      $region35: #{conv_block_forward.4} parent=31 // pred_region
        %s330 = smul.u32 %s24, 16
        %s331 = ssub.s32 %s330, 1
        %p332 = scmp.gt.s32.totalorder %s331, 0
        %s333 = scalar_select %p332, %s331, 0
        %s334 = smul.u32 2, %s333
        %p335 = scmp.lt.s32.totalorder %s23, 1
        %s336 = scalar_select %p335, %s23, 1
        %p337 = scmp.lt.s32.totalorder %s334, 31
        %s338 = scalar_select %p337, %s334, 31
        %s339 = smul.addr %s336, 32
        %s340 = sadd.s32 %s338, %s339
        %s341 = smul.addr %s340, 4
        %s342 = scalar_lea.vmem %s0, %s341
        %s343 = smul.u32 %s24, 16
        %s344 = ssub.s32 %s343, 1
        %p345 = scmp.gt.s32.totalorder %s344, 0
        %s346 = scalar_select %p345, %s344, 0
        %s347 = smul.u32 2, %s346
      $region36: #{conv_block_forward.4} parent=31 // pred_fallthru
        _
      // Predicated region
      $region37: #{conv_block_forward.4} parent=31 // pred_check
        %p348 = pneg %p86
      $region38: #{conv_block_forward.4} parent=31 // pred_check_branch
        %350 = sbr.rel (%p348) target = $region40
      $region39: #{conv_block_forward.4} parent=31 // pred_region
        %s351 = smul.u32 32, %s24
        %p352 = scmp.lt.s32.totalorder %s23, 1
        %s353 = scalar_select %p352, %s23, 1
        %p354 = scmp.lt.s32.totalorder %s351, 31
        %s355 = scalar_select %p354, %s351, 31
        %s356 = smul.addr %s353, 32
        %s357 = sadd.s32 %s355, %s356
        %s358 = smul.addr %s357, 4
        %s359 = scalar_lea.vmem %s1, %s358
        %s360 = smul.u32 32, %s24
      $region40: #{conv_block_forward.4} parent=31 // pred_fallthru
        _
      // Predicated region
      $region41: #{conv_block_forward.4} parent=31 // pred_check
        %p361 = pneg %p122
      $region42: #{conv_block_forward.4} parent=31 // pred_check_branch
        %363 = sbr.rel (%p361) target = $region44
      $region43: #{conv_block_forward.4} parent=31 // pred_region
        %s364 = sadd.s32 %s24, 1
        %s365 = smul.u32 %s364, 16
        %p366 = scmp.lt.s32.totalorder %s365, 15
        %s367 = scalar_select %p366, %s365, 15
        %s368 = smul.u32 2, %s367
        %p369 = scmp.lt.s32.totalorder %s23, 1
        %s370 = scalar_select %p369, %s23, 1
        %p371 = scmp.lt.s32.totalorder %s368, 31
        %s372 = scalar_select %p371, %s368, 31
        %s373 = smul.addr %s370, 32
        %s374 = sadd.s32 %s372, %s373
        %s375 = smul.addr %s374, 4
        %s376 = scalar_lea.vmem %s2, %s375
        %s377 = sadd.s32 %s24, 1
        %s378 = smul.u32 %s377, 16
        %p379 = scmp.lt.s32.totalorder %s378, 15
        %s380 = scalar_select %p379, %s378, 15
        %s381 = smul.u32 2, %s380
      $region44: #{conv_block_forward.4} parent=31 // pred_fallthru
        _
    $region32: #{conv_block_forward.4} parent=5 // pred_fallthru
      _
    %p382 = scmp.le.s32.totalorder 1, %s16
    %p383 = scmp.lt.s32.totalorder %s16, 3
    %p384 = pnand %p382, %p383
    %p385 = pneg %p384
    // Predicated region
    $region45: #{conv_block_forward.4} parent=5 // pred_check
      _
    $region46: #{conv_block_forward.4} parent=5 // pred_check_branch
      %387 = sbr.rel (%p384) target = $region48
    $region47: #{conv_block_forward.4} parent=5 // pred_region
      %s388 = ssub.s32 %s16, 1
      %s389 = smul.u32 %s26, 16
      %s390 = ssub.s32 %s389, 1
      %p391 = scmp.gt.s32.totalorder %s390, 0
      %s392 = scalar_select %p391, %s390, 0
      %s393 = smul.u32 2, %s392
      %p394 = scmp.lt.s32.totalorder %s25, 1
      %s395 = scalar_select %p394, %s25, 1
      %p396 = scmp.lt.s32.totalorder %s393, 31
      %s397 = scalar_select %p396, %s393, 31
      %s398 = smul.addr %s395, 32
      %s399 = sadd.s32 %s397, %s398
      %s400 = smul.addr %s399, 4
      %s401 = scalar_lea.vmem %s0, %s400
      %p402 = pneg %p64
      %p403 = pneg %p61
      %s404 = smul.u32 32, %s26
      %p405 = scmp.lt.s32.totalorder %s25, 1
      %s406 = scalar_select %p405, %s25, 1
      %p407 = scmp.lt.s32.totalorder %s404, 31
      %s408 = scalar_select %p407, %s404, 31
      %s409 = smul.addr %s406, 32
      %s410 = sadd.s32 %s408, %s409
      %s411 = smul.addr %s410, 4
      %s412 = scalar_lea.vmem %s1, %s411
      %p413 = pneg %p92
      %p414 = pneg %p89
      %s415 = sadd.s32 %s26, 1
      %s416 = smul.u32 %s415, 16
      %p417 = scmp.lt.s32.totalorder %s416, 15
      %s418 = scalar_select %p417, %s416, 15
      %s419 = smul.u32 2, %s418
      %p420 = scmp.lt.s32.totalorder %s25, 1
      %s421 = scalar_select %p420, %s25, 1
      %p422 = scmp.lt.s32.totalorder %s419, 31
      %s423 = scalar_select %p422, %s419, 31
      %s424 = smul.addr %s421, 32
      %s425 = sadd.s32 %s423, %s424
      %s426 = smul.addr %s425, 4
      %s427 = scalar_lea.vmem %s2, %s426
      %p428 = pneg %p128
      %p429 = pneg %p125
      %p430 = pneg %p149
      %p431 = pneg %p146
      %p432 = pneg %p170
      %p433 = pneg %p167
      %p434 = pneg %p191
      %p435 = pneg %p188
      %p436 = pneg %p212
      %p437 = pneg %p209
      %p438 = pneg %p240
      %p439 = pneg %p237
      %s440 = smul.u32 32, %s26
      %p441 = scmp.lt.s32.totalorder %s25, 1
      %s442 = scalar_select %p441, %s25, 1
      %p443 = scmp.lt.s32.totalorder %s440, 31
      %s444 = scalar_select %p443, %s440, 31
      %s445 = smul.addr %s442, 32
      %s446 = sadd.s32 %s444, %s445
      %s447 = smul.addr %s446, 4
      %s448 = scalar_lea.vmem %s7, %s447
      %p449 = pneg %p268
      %p450 = pneg %p265
      %s451 = sadd.s32 %s25, %s26
      %p452 = scmp.lt.s32.totalorder %s451, 1
      %s453 = scalar_select %p452, %s451, 1
      %s454 = scalar_lea.vmem %s8, %s453
      %p455 = pneg %p296
      %p456 = pneg %p293
      %s457 = sadd.s32 %s25, %s26
      %p458 = scmp.lt.s32.totalorder %s457, 1
      %s459 = scalar_select %p458, %s457, 1
      %s460 = scalar_lea.vmem %s9, %s459
      %s461 = smul.u32 %s26, 16
      %s462 = ssub.s32 %s461, 1
      %p463 = scmp.gt.s32.totalorder %s462, 0
      %s464 = scalar_select %p463, %s462, 0
      %s465 = smul.u32 2, %s464
      %p466 = scmp.lt.s32.totalorder %s25, 1
      %s467 = scalar_select %p466, %s25, 1
      %p468 = scmp.lt.s32.totalorder %s465, 31
      %s469 = scalar_select %p468, %s465, 31
      %s470 = smul.addr %s467, 32
      %s471 = sadd.s32 %s469, %s470
      %s472 = smul.addr %s471, 4
      %s473 = scalar_lea.vmem %s0, %s472
      %s474 = smul.u32 %s26, 16
      %s475 = ssub.s32 %s474, 1
      %p476 = scmp.gt.s32.totalorder %s475, 0
      %s477 = scalar_select %p476, %s475, 0
      %s478 = smul.u32 2, %s477
      %s479 = smul.u32 32, %s26
      %p480 = scmp.lt.s32.totalorder %s25, 1
      %s481 = scalar_select %p480, %s25, 1
      %p482 = scmp.lt.s32.totalorder %s479, 31
      %s483 = scalar_select %p482, %s479, 31
      %s484 = smul.addr %s481, 32
      %s485 = sadd.s32 %s483, %s484
      %s486 = smul.addr %s485, 4
      %s487 = scalar_lea.vmem %s1, %s486
      %s488 = smul.u32 32, %s26
      %s489 = sadd.s32 %s26, 1
      %s490 = smul.u32 %s489, 16
      %p491 = scmp.lt.s32.totalorder %s490, 15
      %s492 = scalar_select %p491, %s490, 15
      %s493 = smul.u32 2, %s492
      %p494 = scmp.lt.s32.totalorder %s25, 1
      %s495 = scalar_select %p494, %s25, 1
      %p496 = scmp.lt.s32.totalorder %s493, 31
      %s497 = scalar_select %p496, %s493, 31
      %s498 = smul.addr %s495, 32
      %s499 = sadd.s32 %s497, %s498
      %s500 = smul.addr %s499, 4
      %s501 = scalar_lea.vmem %s2, %s500
      %s502 = sadd.s32 %s26, 1
      %s503 = smul.u32 %s502, 16
      %p504 = scmp.lt.s32.totalorder %s503, 15
      %s505 = scalar_select %p504, %s503, 15
      %s506 = smul.u32 2, %s505
      %s507 = smul.u32 32, %s26
      %p508 = scmp.lt.s32.totalorder %s25, 1
      %s509 = scalar_select %p508, %s25, 1
      %p510 = scmp.lt.s32.totalorder %s507, 31
      %s511 = scalar_select %p510, %s507, 31
      %s512 = smul.addr %s509, 32
      %s513 = sadd.s32 %s511, %s512
      %s514 = smul.addr %s513, 4
      %s515 = scalar_lea.vmem %s7, %s514
      %s516 = smul.u32 32, %s26
      %s517 = sadd.s32 %s25, %s26
      %p518 = scmp.lt.s32.totalorder %s517, 1
      %s519 = scalar_select %p518, %s517, 1
      %s520 = scalar_lea.vmem %s8, %s519
      %s521 = sadd.s32 %s25, %s26
      %s522 = sadd.s32 %s25, %s26
      %p523 = scmp.lt.s32.totalorder %s522, 1
      %s524 = scalar_select %p523, %s522, 1
      %s525 = scalar_lea.vmem %s9, %s524
      %s526 = sadd.s32 %s25, %s26
      %v527 = vld [vmem:[%s473] sm:$0xf]
      %v528 = vld [vmem:[%s473 + $0x4] sm:$0xf]
      %v529 = vld [vmem:[%s487] sm:$0xf]
      %v530 = vld [vmem:[%s487 + $0x4] sm:$0xf]
      %v531 = vld [vmem:[%s487 + $0x8] sm:$0xf]
      %v532 = vld [vmem:[%s487 + $0xc] sm:$0xf]
      %v533 = vld [vmem:[%s487 + $0x10] sm:$0xf]
      %v534 = vld [vmem:[%s487 + $0x14] sm:$0xf]
      %v535 = vld [vmem:[%s487 + $0x18] sm:$0xf]
      %v536 = vld [vmem:[%s487 + $0x1c] sm:$0xf]
      %v537 = vld [vmem:[%s487 + $0x20] sm:$0xf]
      %v538 = vld [vmem:[%s487 + $0x24] sm:$0xf]
      %v539 = vld [vmem:[%s487 + $0x28] sm:$0xf]
      %v540 = vld [vmem:[%s487 + $0x2c] sm:$0xf]
      %v541 = vld [vmem:[%s487 + $0x30] sm:$0xf]
      %v542 = vld [vmem:[%s487 + $0x34] sm:$0xf]
      %v543 = vld [vmem:[%s487 + $0x38] sm:$0xf]
      %v544 = vld [vmem:[%s487 + $0x3c] sm:$0xf]
      %v545 = vld [vmem:[%s487 + $0x40] sm:$0xf]
      %v546 = vld [vmem:[%s487 + $0x44] sm:$0xf]
      %v547 = vld [vmem:[%s487 + $0x48] sm:$0xf]
      %v548 = vld [vmem:[%s487 + $0x4c] sm:$0xf]
      %v549 = vld [vmem:[%s487 + $0x50] sm:$0xf]
      %v550 = vld [vmem:[%s487 + $0x54] sm:$0xf]
      %v551 = vld [vmem:[%s487 + $0x58] sm:$0xf]
      %v552 = vld [vmem:[%s487 + $0x5c] sm:$0xf]
      %v553 = vld [vmem:[%s487 + $0x60] sm:$0xf]
      %v554 = vld [vmem:[%s487 + $0x64] sm:$0xf]
      %v555 = vld [vmem:[%s487 + $0x68] sm:$0xf]
      %v556 = vld [vmem:[%s487 + $0x6c] sm:$0xf]
      %v557 = vld [vmem:[%s487 + $0x70] sm:$0xf]
      %v558 = vld [vmem:[%s487 + $0x74] sm:$0xf]
      %v559 = vld [vmem:[%s487 + $0x78] sm:$0xf]
      %v560 = vld [vmem:[%s487 + $0x7c] sm:$0xf]
      %v561 = vld [vmem:[%s501] sm:$0xf]
      %v562 = vld [vmem:[%s501 + $0x4] sm:$0xf]
      %v565 = vunpack.c.l.b16 %v527
      %v566 = vunpack.c.l.b16 %v528
      %v567 = vpack.c.b16 %v566, %v565
      %v601 = vunpack.c.l.b16 %v529
      %v602 = vunpack.c.l.b16 %v530
      %v603 = vunpack.c.l.b16 %v531
      %v604 = vunpack.c.l.b16 %v532
      %v605 = vunpack.c.l.b16 %v533
      %v606 = vunpack.c.l.b16 %v534
      %v607 = vunpack.c.l.b16 %v535
      %v608 = vunpack.c.l.b16 %v536
      %v609 = vunpack.c.l.b16 %v537
      %v610 = vunpack.c.l.b16 %v538
      %v611 = vunpack.c.l.b16 %v539
      %v612 = vunpack.c.l.b16 %v540
      %v613 = vunpack.c.l.b16 %v541
      %v614 = vunpack.c.l.b16 %v542
      %v615 = vunpack.c.l.b16 %v543
      %v616 = vunpack.c.l.b16 %v544
      %v617 = vunpack.c.l.b16 %v545
      %v618 = vunpack.c.l.b16 %v546
      %v619 = vunpack.c.l.b16 %v547
      %v620 = vunpack.c.l.b16 %v548
      %v621 = vunpack.c.l.b16 %v549
      %v622 = vunpack.c.l.b16 %v550
      %v623 = vunpack.c.l.b16 %v551
      %v624 = vunpack.c.l.b16 %v552
      %v625 = vunpack.c.l.b16 %v553
      %v626 = vunpack.c.l.b16 %v554
      %v627 = vunpack.c.l.b16 %v555
      %v628 = vunpack.c.l.b16 %v556
      %v629 = vunpack.c.l.b16 %v557
      %v630 = vunpack.c.l.b16 %v558
      %v631 = vunpack.c.l.b16 %v559
      %v632 = vunpack.c.l.b16 %v560
      %v633 = vpack.c.b16 %v602, %v601
      %v634 = vpack.c.b16 %v604, %v603
      %v635 = vpack.c.b16 %v606, %v605
      %v636 = vpack.c.b16 %v608, %v607
      %v637 = vpack.c.b16 %v610, %v609
      %v638 = vpack.c.b16 %v612, %v611
      %v639 = vpack.c.b16 %v614, %v613
      %v640 = vpack.c.b16 %v616, %v615
      %v641 = vpack.c.b16 %v618, %v617
      %v642 = vpack.c.b16 %v620, %v619
      %v643 = vpack.c.b16 %v622, %v621
      %v644 = vpack.c.b16 %v624, %v623
      %v645 = vpack.c.b16 %v626, %v625
      %v646 = vpack.c.b16 %v628, %v627
      %v647 = vpack.c.b16 %v630, %v629
      %v648 = vpack.c.b16 %v632, %v631
      %v667 = vunpack.c.l.b16 %v561
      %v668 = vunpack.c.l.b16 %v562
      %v669 = vpack.c.b16 %v668, %v667
      %v671 = vunpack.c.l.bf16 %v567
      %v672 = vunpack.c.h.bf16 %v567
      %v673 = vunpack.c.l.bf16 %v633
      %v674 = vunpack.c.h.bf16 %v633
      %v675 = vunpack.c.l.bf16 %v634
      %v676 = vunpack.c.h.bf16 %v634
      %v677 = vunpack.c.l.bf16 %v635
      %v678 = vunpack.c.h.bf16 %v635
      %v679 = vunpack.c.l.bf16 %v636
      %v680 = vunpack.c.h.bf16 %v636
      %v681 = vunpack.c.l.bf16 %v637
      %v682 = vunpack.c.h.bf16 %v637
      %v683 = vunpack.c.l.bf16 %v638
      %v684 = vunpack.c.h.bf16 %v638
      %v685 = vunpack.c.l.bf16 %v639
      %v686 = vunpack.c.h.bf16 %v639
      %v687 = vunpack.c.l.bf16 %v640
      %v688 = vunpack.c.h.bf16 %v640
      %v689 = vunpack.c.l.bf16 %v641
      %v690 = vunpack.c.h.bf16 %v641
      %v691 = vunpack.c.l.bf16 %v642
      %v692 = vunpack.c.h.bf16 %v642
      %v693 = vunpack.c.l.bf16 %v643
      %v694 = vunpack.c.h.bf16 %v643
      %v695 = vunpack.c.l.bf16 %v644
      %v696 = vunpack.c.h.bf16 %v644
      %v697 = vunpack.c.l.bf16 %v645
      %v698 = vunpack.c.h.bf16 %v645
      %v699 = vunpack.c.l.bf16 %v646
      %v700 = vunpack.c.h.bf16 %v646
      %v701 = vunpack.c.l.bf16 %v647
      %v702 = vunpack.c.h.bf16 %v647
      %v703 = vunpack.c.l.bf16 %v648
      %v704 = vunpack.c.h.bf16 %v648
      %v705 = vunpack.c.l.bf16 %v669
      %v706 = vunpack.c.h.bf16 %v669
      %v707 = vld [vmem:[%s3] sm:$0x1]
      %v709 = vperm.slane %v707, 0
      %v711 = vmul.f32 %v671, %v709
      %v712 = vmul.f32 %v672, %v709
      %v713 = vmul.f32 %v673, %v709
      %v714 = vmul.f32 %v674, %v709
      %v715 = vmul.f32 %v675, %v709
      %v716 = vmul.f32 %v676, %v709
      %v717 = vmul.f32 %v677, %v709
      %v718 = vmul.f32 %v678, %v709
      %v719 = vmul.f32 %v679, %v709
      %v720 = vmul.f32 %v680, %v709
      %v721 = vmul.f32 %v681, %v709
      %v722 = vmul.f32 %v682, %v709
      %v723 = vmul.f32 %v683, %v709
      %v724 = vmul.f32 %v684, %v709
      %v725 = vmul.f32 %v685, %v709
      %v726 = vmul.f32 %v686, %v709
      %v727 = vmul.f32 %v687, %v709
      %v728 = vmul.f32 %v688, %v709
      %v729 = vmul.f32 %v689, %v709
      %v730 = vmul.f32 %v690, %v709
      %v731 = vmul.f32 %v691, %v709
      %v732 = vmul.f32 %v692, %v709
      %v733 = vmul.f32 %v693, %v709
      %v734 = vmul.f32 %v694, %v709
      %v735 = vmul.f32 %v695, %v709
      %v736 = vmul.f32 %v696, %v709
      %v737 = vmul.f32 %v697, %v709
      %v738 = vmul.f32 %v698, %v709
      %v739 = vmul.f32 %v699, %v709
      %v740 = vmul.f32 %v700, %v709
      %v741 = vmul.f32 %v701, %v709
      %v742 = vmul.f32 %v702, %v709
      %v743 = vmul.f32 %v703, %v709
      %v744 = vmul.f32 %v704, %v709
      %v745 = vmul.f32 %v705, %v709
      %v746 = vmul.f32 %v706, %v709
      %v747 = vld [vmem:[%s4] sm:$0x1]
      %v749 = vperm.slane %v747, 0
      %v751 = vadd.f32 %v711, %v749
      %v752 = vadd.f32 %v712, %v749
      %v753 = vadd.f32 %v713, %v749
      %v754 = vadd.f32 %v714, %v749
      %v755 = vadd.f32 %v715, %v749
      %v756 = vadd.f32 %v716, %v749
      %v757 = vadd.f32 %v717, %v749
      %v758 = vadd.f32 %v718, %v749
      %v759 = vadd.f32 %v719, %v749
      %v760 = vadd.f32 %v720, %v749
      %v761 = vadd.f32 %v721, %v749
      %v762 = vadd.f32 %v722, %v749
      %v763 = vadd.f32 %v723, %v749
      %v764 = vadd.f32 %v724, %v749
      %v765 = vadd.f32 %v725, %v749
      %v766 = vadd.f32 %v726, %v749
      %v767 = vadd.f32 %v727, %v749
      %v768 = vadd.f32 %v728, %v749
      %v769 = vadd.f32 %v729, %v749
      %v770 = vadd.f32 %v730, %v749
      %v771 = vadd.f32 %v731, %v749
      %v772 = vadd.f32 %v732, %v749
      %v773 = vadd.f32 %v733, %v749
      %v774 = vadd.f32 %v734, %v749
      %v775 = vadd.f32 %v735, %v749
      %v776 = vadd.f32 %v736, %v749
      %v777 = vadd.f32 %v737, %v749
      %v778 = vadd.f32 %v738, %v749
      %v779 = vadd.f32 %v739, %v749
      %v780 = vadd.f32 %v740, %v749
      %v781 = vadd.f32 %v741, %v749
      %v782 = vadd.f32 %v742, %v749
      %v783 = vadd.f32 %v743, %v749
      %v784 = vadd.f32 %v744, %v749
      %v785 = vadd.f32 %v745, %v749
      %v786 = vadd.f32 %v746, %v749
      %v787 = vmax.f32 %v751, 0.0
      %v788 = vmax.f32 %v752, 0.0
      %v789 = vmax.f32 %v753, 0.0
      %v790 = vmax.f32 %v754, 0.0
      %v791 = vmax.f32 %v755, 0.0
      %v792 = vmax.f32 %v756, 0.0
      %v793 = vmax.f32 %v757, 0.0
      %v794 = vmax.f32 %v758, 0.0
      %v795 = vmax.f32 %v759, 0.0
      %v796 = vmax.f32 %v760, 0.0
      %v797 = vmax.f32 %v761, 0.0
      %v798 = vmax.f32 %v762, 0.0
      %v799 = vmax.f32 %v763, 0.0
      %v800 = vmax.f32 %v764, 0.0
      %v801 = vmax.f32 %v765, 0.0
      %v802 = vmax.f32 %v766, 0.0
      %v803 = vmax.f32 %v767, 0.0
      %v804 = vmax.f32 %v768, 0.0
      %v805 = vmax.f32 %v769, 0.0
      %v806 = vmax.f32 %v770, 0.0
      %v807 = vmax.f32 %v771, 0.0
      %v808 = vmax.f32 %v772, 0.0
      %v809 = vmax.f32 %v773, 0.0
      %v810 = vmax.f32 %v774, 0.0
      %v811 = vmax.f32 %v775, 0.0
      %v812 = vmax.f32 %v776, 0.0
      %v813 = vmax.f32 %v777, 0.0
      %v814 = vmax.f32 %v778, 0.0
      %v815 = vmax.f32 %v779, 0.0
      %v816 = vmax.f32 %v780, 0.0
      %v817 = vmax.f32 %v781, 0.0
      %v818 = vmax.f32 %v782, 0.0
      %v819 = vmax.f32 %v783, 0.0
      %v820 = vmax.f32 %v784, 0.0
      %v821 = vmax.f32 %v785, 0.0
      %v822 = vmax.f32 %v786, 0.0
      %v823 = vlaneseq
      %v824 = vshrl.u32 %v823, 7
      %v825 = vadd.s32 %v824, 8
      %v826 = vadd.s32 %v824, 16
      %v827 = vadd.s32 %v824, 24
      %v828 = vadd.s32 %v824, 32
      %v829 = vadd.s32 %v824, 40
      %v830 = vadd.s32 %v824, 48
      %v831 = vadd.s32 %v824, 56
      %v832 = vadd.s32 %v824, 64
      %v833 = vadd.s32 %v824, 72
      %v834 = vadd.s32 %v824, 80
      %v835 = vadd.s32 %v824, 88
      %v836 = vadd.s32 %v824, 96
      %v837 = vadd.s32 %v824, 104
      %v838 = vadd.s32 %v824, 112
      %v839 = vadd.s32 %v824, 120
      %v840 = vadd.s32 %v824, 128
      %v841 = vadd.s32 %v824, 136
      %v842 = vadd.s32 %v824, 144
      %v843 = vadd.s32 %v824, 152
      %v844 = vadd.s32 %v824, 160
      %v845 = vadd.s32 %v824, 168
      %v846 = vadd.s32 %v824, 176
      %v847 = vadd.s32 %v824, 184
      %v848 = vadd.s32 %v824, 192
      %v849 = vadd.s32 %v824, 200
      %v850 = vadd.s32 %v824, 208
      %v851 = vadd.s32 %v824, 216
      %v852 = vadd.s32 %v824, 224
      %v853 = vadd.s32 %v824, 232
      %v854 = vadd.s32 %v824, 240
      %v855 = vadd.s32 %v824, 248
      %v856 = vadd.s32 %v824, 256
      %v857 = vadd.s32 %v824, 264
      %v858 = vadd.s32 %v824, 272
      %v859 = vadd.s32 %v824, 280
      %s860 = smul.u32 %s26, 256
      %s861 = ssub.s32 %s860, 16
      %v862 = vstv %s861
      %v863 = vadd.s32 %v824, %v862
      %v864 = vadd.s32 %v825, %v862
      %v865 = vadd.s32 %v826, %v862
      %v866 = vadd.s32 %v827, %v862
      %v867 = vadd.s32 %v828, %v862
      %v868 = vadd.s32 %v829, %v862
      %v869 = vadd.s32 %v830, %v862
      %v870 = vadd.s32 %v831, %v862
      %v871 = vadd.s32 %v832, %v862
      %v872 = vadd.s32 %v833, %v862
      %v873 = vadd.s32 %v834, %v862
      %v874 = vadd.s32 %v835, %v862
      %v875 = vadd.s32 %v836, %v862
      %v876 = vadd.s32 %v837, %v862
      %v877 = vadd.s32 %v838, %v862
      %v878 = vadd.s32 %v839, %v862
      %v879 = vadd.s32 %v840, %v862
      %v880 = vadd.s32 %v841, %v862
      %v881 = vadd.s32 %v842, %v862
      %v882 = vadd.s32 %v843, %v862
      %v883 = vadd.s32 %v844, %v862
      %v884 = vadd.s32 %v845, %v862
      %v885 = vadd.s32 %v846, %v862
      %v886 = vadd.s32 %v847, %v862
      %v887 = vadd.s32 %v848, %v862
      %v888 = vadd.s32 %v849, %v862
      %v889 = vadd.s32 %v850, %v862
      %v890 = vadd.s32 %v851, %v862
      %v891 = vadd.s32 %v852, %v862
      %v892 = vadd.s32 %v853, %v862
      %v893 = vadd.s32 %v854, %v862
      %v894 = vadd.s32 %v855, %v862
      %v895 = vadd.s32 %v856, %v862
      %v896 = vadd.s32 %v857, %v862
      %v897 = vadd.s32 %v858, %v862
      %v898 = vadd.s32 %v859, %v862
      %vm899 = vcmp.ge.s32.totalorder %v863, 0
      %vm900 = vcmp.ge.s32.totalorder %v864, 0
      %vm901 = vcmp.ge.s32.totalorder %v865, 0
      %vm902 = vcmp.ge.s32.totalorder %v866, 0
      %vm903 = vcmp.ge.s32.totalorder %v867, 0
      %vm904 = vcmp.ge.s32.totalorder %v868, 0
      %vm905 = vcmp.ge.s32.totalorder %v869, 0
      %vm906 = vcmp.ge.s32.totalorder %v870, 0
      %vm907 = vcmp.ge.s32.totalorder %v871, 0
      %vm908 = vcmp.ge.s32.totalorder %v872, 0
      %vm909 = vcmp.ge.s32.totalorder %v873, 0
      %vm910 = vcmp.ge.s32.totalorder %v874, 0
      %vm911 = vcmp.ge.s32.totalorder %v875, 0
      %vm912 = vcmp.ge.s32.totalorder %v876, 0
      %vm913 = vcmp.ge.s32.totalorder %v877, 0
      %vm914 = vcmp.ge.s32.totalorder %v878, 0
      %vm915 = vcmp.ge.s32.totalorder %v879, 0
      %vm916 = vcmp.ge.s32.totalorder %v880, 0
      %vm917 = vcmp.ge.s32.totalorder %v881, 0
      %vm918 = vcmp.ge.s32.totalorder %v882, 0
      %vm919 = vcmp.ge.s32.totalorder %v883, 0
      %vm920 = vcmp.ge.s32.totalorder %v884, 0
      %vm921 = vcmp.ge.s32.totalorder %v885, 0
      %vm922 = vcmp.ge.s32.totalorder %v886, 0
      %vm923 = vcmp.ge.s32.totalorder %v887, 0
      %vm924 = vcmp.ge.s32.totalorder %v888, 0
      %vm925 = vcmp.ge.s32.totalorder %v889, 0
      %vm926 = vcmp.ge.s32.totalorder %v890, 0
      %vm927 = vcmp.ge.s32.totalorder %v891, 0
      %vm928 = vcmp.ge.s32.totalorder %v892, 0
      %vm929 = vcmp.ge.s32.totalorder %v893, 0
      %vm930 = vcmp.ge.s32.totalorder %v894, 0
      %vm931 = vcmp.ge.s32.totalorder %v895, 0
      %vm932 = vcmp.ge.s32.totalorder %v896, 0
      %vm933 = vcmp.ge.s32.totalorder %v897, 0
      %vm934 = vcmp.ge.s32.totalorder %v898, 0
      %vm935 = vcmp.lt.s32.totalorder %v863, 256
      %vm936 = vcmp.lt.s32.totalorder %v864, 256
      %vm937 = vcmp.lt.s32.totalorder %v865, 256
      %vm938 = vcmp.lt.s32.totalorder %v866, 256
      %vm939 = vcmp.lt.s32.totalorder %v867, 256
      %vm940 = vcmp.lt.s32.totalorder %v868, 256
      %vm941 = vcmp.lt.s32.totalorder %v869, 256
      %vm942 = vcmp.lt.s32.totalorder %v870, 256
      %vm943 = vcmp.lt.s32.totalorder %v871, 256
      %vm944 = vcmp.lt.s32.totalorder %v872, 256
      %vm945 = vcmp.lt.s32.totalorder %v873, 256
      %vm946 = vcmp.lt.s32.totalorder %v874, 256
      %vm947 = vcmp.lt.s32.totalorder %v875, 256
      %vm948 = vcmp.lt.s32.totalorder %v876, 256
      %vm949 = vcmp.lt.s32.totalorder %v877, 256
      %vm950 = vcmp.lt.s32.totalorder %v878, 256
      %vm951 = vcmp.lt.s32.totalorder %v879, 256
      %vm952 = vcmp.lt.s32.totalorder %v880, 256
      %vm953 = vcmp.lt.s32.totalorder %v881, 256
      %vm954 = vcmp.lt.s32.totalorder %v882, 256
      %vm955 = vcmp.lt.s32.totalorder %v883, 256
      %vm956 = vcmp.lt.s32.totalorder %v884, 256
      %vm957 = vcmp.lt.s32.totalorder %v885, 256
      %vm958 = vcmp.lt.s32.totalorder %v886, 256
      %vm959 = vcmp.lt.s32.totalorder %v887, 256
      %vm960 = vcmp.lt.s32.totalorder %v888, 256
      %vm961 = vcmp.lt.s32.totalorder %v889, 256
      %vm962 = vcmp.lt.s32.totalorder %v890, 256
      %vm963 = vcmp.lt.s32.totalorder %v891, 256
      %vm964 = vcmp.lt.s32.totalorder %v892, 256
      %vm965 = vcmp.lt.s32.totalorder %v893, 256
      %vm966 = vcmp.lt.s32.totalorder %v894, 256
      %vm967 = vcmp.lt.s32.totalorder %v895, 256
      %vm968 = vcmp.lt.s32.totalorder %v896, 256
      %vm969 = vcmp.lt.s32.totalorder %v897, 256
      %vm970 = vcmp.lt.s32.totalorder %v898, 256
      %vm971 = vmand %vm899, %vm935
      %vm972 = vmand %vm900, %vm936
      %vm973 = vmand %vm901, %vm937
      %vm974 = vmand %vm902, %vm938
      %vm975 = vmand %vm903, %vm939
      %vm976 = vmand %vm904, %vm940
      %vm977 = vmand %vm905, %vm941
      %vm978 = vmand %vm906, %vm942
      %vm979 = vmand %vm907, %vm943
      %vm980 = vmand %vm908, %vm944
      %vm981 = vmand %vm909, %vm945
      %vm982 = vmand %vm910, %vm946
      %vm983 = vmand %vm911, %vm947
      %vm984 = vmand %vm912, %vm948
      %vm985 = vmand %vm913, %vm949
      %vm986 = vmand %vm914, %vm950
      %vm987 = vmand %vm915, %vm951
      %vm988 = vmand %vm916, %vm952
      %vm989 = vmand %vm917, %vm953
      %vm990 = vmand %vm918, %vm954
      %vm991 = vmand %vm919, %vm955
      %vm992 = vmand %vm920, %vm956
      %vm993 = vmand %vm921, %vm957
      %vm994 = vmand %vm922, %vm958
      %vm995 = vmand %vm923, %vm959
      %vm996 = vmand %vm924, %vm960
      %vm997 = vmand %vm925, %vm961
      %vm998 = vmand %vm926, %vm962
      %vm999 = vmand %vm927, %vm963
      %vm1000 = vmand %vm928, %vm964
      %vm1001 = vmand %vm929, %vm965
      %vm1002 = vmand %vm930, %vm966
      %vm1003 = vmand %vm931, %vm967
      %vm1004 = vmand %vm932, %vm968
      %vm1005 = vmand %vm933, %vm969
      %vm1006 = vmand %vm934, %vm970
      %v1007 = vsel %vm971, %v787, 0.0
      %v1008 = vsel %vm972, %v788, 0.0
      %v1009 = vsel %vm973, %v789, 0.0
      %v1010 = vsel %vm974, %v790, 0.0
      %v1011 = vsel %vm975, %v791, 0.0
      %v1012 = vsel %vm976, %v792, 0.0
      %v1013 = vsel %vm977, %v793, 0.0
      %v1014 = vsel %vm978, %v794, 0.0
      %v1015 = vsel %vm979, %v795, 0.0
      %v1016 = vsel %vm980, %v796, 0.0
      %v1017 = vsel %vm981, %v797, 0.0
      %v1018 = vsel %vm982, %v798, 0.0
      %v1019 = vsel %vm983, %v799, 0.0
      %v1020 = vsel %vm984, %v800, 0.0
      %v1021 = vsel %vm985, %v801, 0.0
      %v1022 = vsel %vm986, %v802, 0.0
      %v1023 = vsel %vm987, %v803, 0.0
      %v1024 = vsel %vm988, %v804, 0.0
      %v1025 = vsel %vm989, %v805, 0.0
      %v1026 = vsel %vm990, %v806, 0.0
      %v1027 = vsel %vm991, %v807, 0.0
      %v1028 = vsel %vm992, %v808, 0.0
      %v1029 = vsel %vm993, %v809, 0.0
      %v1030 = vsel %vm994, %v810, 0.0
      %v1031 = vsel %vm995, %v811, 0.0
      %v1032 = vsel %vm996, %v812, 0.0
      %v1033 = vsel %vm997, %v813, 0.0
      %v1034 = vsel %vm998, %v814, 0.0
      %v1035 = vsel %vm999, %v815, 0.0
      %v1036 = vsel %vm1000, %v816, 0.0
      %v1037 = vsel %vm1001, %v817, 0.0
      %v1038 = vsel %vm1002, %v818, 0.0
      %v1039 = vsel %vm1003, %v819, 0.0
      %v1040 = vsel %vm1004, %v820, 0.0
      %v1041 = vsel %vm1005, %v821, 0.0
      %v1042 = vsel %vm1006, %v822, 0.0
      %vm1043 = vcmp.lt.s32.totalorder %v824, 0
      %v1044 = vsub.s32 0, %v824
      %v1045 = vsel %vm1043, %v1044, %v824
      %v1046 = vshrl.u32 %v1045, 4
      %v1047 = vand.u32 %v1045, 15
      %v1048 = vsub.s32 0, %v1047
      %v1049 = vsel %vm1043, %v1048, %v1047
      %vm1050 = vcmp.lt.s32.totalorder %v825, 0
      %v1051 = vsub.s32 0, %v825
      %v1052 = vsel %vm1050, %v1051, %v825
      %v1053 = vshrl.u32 %v1052, 4
      %v1054 = vand.u32 %v1052, 15
      %v1055 = vsub.s32 0, %v1054
      %v1056 = vsel %vm1050, %v1055, %v1054
      %vm1057 = vcmp.lt.s32.totalorder %v826, 0
      %v1058 = vsub.s32 0, %v826
      %v1059 = vsel %vm1057, %v1058, %v826
      %v1060 = vshrl.u32 %v1059, 4
      %v1061 = vand.u32 %v1059, 15
      %v1062 = vsub.s32 0, %v1061
      %v1063 = vsel %vm1057, %v1062, %v1061
      %vm1064 = vcmp.lt.s32.totalorder %v827, 0
      %v1065 = vsub.s32 0, %v827
      %v1066 = vsel %vm1064, %v1065, %v827
      %v1067 = vshrl.u32 %v1066, 4
      %v1068 = vand.u32 %v1066, 15
      %v1069 = vsub.s32 0, %v1068
      %v1070 = vsel %vm1064, %v1069, %v1068
      %vm1071 = vcmp.lt.s32.totalorder %v828, 0
      %v1072 = vsub.s32 0, %v828
      %v1073 = vsel %vm1071, %v1072, %v828
      %v1074 = vshrl.u32 %v1073, 4
      %v1075 = vand.u32 %v1073, 15
      %v1076 = vsub.s32 0, %v1075
      %v1077 = vsel %vm1071, %v1076, %v1075
      %vm1078 = vcmp.lt.s32.totalorder %v829, 0
      %v1079 = vsub.s32 0, %v829
      %v1080 = vsel %vm1078, %v1079, %v829
      %v1081 = vshrl.u32 %v1080, 4
      %v1082 = vand.u32 %v1080, 15
      %v1083 = vsub.s32 0, %v1082
      %v1084 = vsel %vm1078, %v1083, %v1082
      %vm1085 = vcmp.lt.s32.totalorder %v830, 0
      %v1086 = vsub.s32 0, %v830
      %v1087 = vsel %vm1085, %v1086, %v830
      %v1088 = vshrl.u32 %v1087, 4
      %v1089 = vand.u32 %v1087, 15
      %v1090 = vsub.s32 0, %v1089
      %v1091 = vsel %vm1085, %v1090, %v1089
      %vm1092 = vcmp.lt.s32.totalorder %v831, 0
      %v1093 = vsub.s32 0, %v831
      %v1094 = vsel %vm1092, %v1093, %v831
      %v1095 = vshrl.u32 %v1094, 4
      %v1096 = vand.u32 %v1094, 15
      %v1097 = vsub.s32 0, %v1096
      %v1098 = vsel %vm1092, %v1097, %v1096
      %vm1099 = vcmp.lt.s32.totalorder %v832, 0
      %v1100 = vsub.s32 0, %v832
      %v1101 = vsel %vm1099, %v1100, %v832
      %v1102 = vshrl.u32 %v1101, 4
      %v1103 = vand.u32 %v1101, 15
      %v1104 = vsub.s32 0, %v1103
      %v1105 = vsel %vm1099, %v1104, %v1103
      %vm1106 = vcmp.lt.s32.totalorder %v833, 0
      %v1107 = vsub.s32 0, %v833
      %v1108 = vsel %vm1106, %v1107, %v833
      %v1109 = vshrl.u32 %v1108, 4
      %v1110 = vand.u32 %v1108, 15
      %v1111 = vsub.s32 0, %v1110
      %v1112 = vsel %vm1106, %v1111, %v1110
      %vm1113 = vcmp.lt.s32.totalorder %v834, 0
      %v1114 = vsub.s32 0, %v834
      %v1115 = vsel %vm1113, %v1114, %v834
      %v1116 = vshrl.u32 %v1115, 4
      %v1117 = vand.u32 %v1115, 15
      %v1118 = vsub.s32 0, %v1117
      %v1119 = vsel %vm1113, %v1118, %v1117
      %vm1120 = vcmp.lt.s32.totalorder %v835, 0
      %v1121 = vsub.s32 0, %v835
      %v1122 = vsel %vm1120, %v1121, %v835
      %v1123 = vshrl.u32 %v1122, 4
      %v1124 = vand.u32 %v1122, 15
      %v1125 = vsub.s32 0, %v1124
      %v1126 = vsel %vm1120, %v1125, %v1124
      %vm1127 = vcmp.lt.s32.totalorder %v836, 0
      %v1128 = vsub.s32 0, %v836
      %v1129 = vsel %vm1127, %v1128, %v836
      %v1130 = vshrl.u32 %v1129, 4
      %v1131 = vand.u32 %v1129, 15
      %v1132 = vsub.s32 0, %v1131
      %v1133 = vsel %vm1127, %v1132, %v1131
      %vm1134 = vcmp.lt.s32.totalorder %v837, 0
      %v1135 = vsub.s32 0, %v837
      %v1136 = vsel %vm1134, %v1135, %v837
      %v1137 = vshrl.u32 %v1136, 4
      %v1138 = vand.u32 %v1136, 15
      %v1139 = vsub.s32 0, %v1138
      %v1140 = vsel %vm1134, %v1139, %v1138
      %vm1141 = vcmp.lt.s32.totalorder %v838, 0
      %v1142 = vsub.s32 0, %v838
      %v1143 = vsel %vm1141, %v1142, %v838
      %v1144 = vshrl.u32 %v1143, 4
      %v1145 = vand.u32 %v1143, 15
      %v1146 = vsub.s32 0, %v1145
      %v1147 = vsel %vm1141, %v1146, %v1145
      %vm1148 = vcmp.lt.s32.totalorder %v839, 0
      %v1149 = vsub.s32 0, %v839
      %v1150 = vsel %vm1148, %v1149, %v839
      %v1151 = vshrl.u32 %v1150, 4
      %v1152 = vand.u32 %v1150, 15
      %v1153 = vsub.s32 0, %v1152
      %v1154 = vsel %vm1148, %v1153, %v1152
      %vm1155 = vcmp.lt.s32.totalorder %v840, 0
      %v1156 = vsub.s32 0, %v840
      %v1157 = vsel %vm1155, %v1156, %v840
      %v1158 = vshrl.u32 %v1157, 4
      %v1159 = vand.u32 %v1157, 15
      %v1160 = vsub.s32 0, %v1159
      %v1161 = vsel %vm1155, %v1160, %v1159
      %vm1162 = vcmp.lt.s32.totalorder %v841, 0
      %v1163 = vsub.s32 0, %v841
      %v1164 = vsel %vm1162, %v1163, %v841
      %v1165 = vshrl.u32 %v1164, 4
      %v1166 = vand.u32 %v1164, 15
      %v1167 = vsub.s32 0, %v1166
      %v1168 = vsel %vm1162, %v1167, %v1166
      %vm1169 = vcmp.lt.s32.totalorder %v842, 0
      %v1170 = vsub.s32 0, %v842
      %v1171 = vsel %vm1169, %v1170, %v842
      %v1172 = vshrl.u32 %v1171, 4
      %v1173 = vand.u32 %v1171, 15
      %v1174 = vsub.s32 0, %v1173
      %v1175 = vsel %vm1169, %v1174, %v1173
      %vm1176 = vcmp.lt.s32.totalorder %v843, 0
      %v1177 = vsub.s32 0, %v843
      %v1178 = vsel %vm1176, %v1177, %v843
      %v1179 = vshrl.u32 %v1178, 4
      %v1180 = vand.u32 %v1178, 15
      %v1181 = vsub.s32 0, %v1180
      %v1182 = vsel %vm1176, %v1181, %v1180
      %vm1183 = vcmp.lt.s32.totalorder %v844, 0
      %v1184 = vsub.s32 0, %v844
      %v1185 = vsel %vm1183, %v1184, %v844
      %v1186 = vshrl.u32 %v1185, 4
      %v1187 = vand.u32 %v1185, 15
      %v1188 = vsub.s32 0, %v1187
      %v1189 = vsel %vm1183, %v1188, %v1187
      %vm1190 = vcmp.lt.s32.totalorder %v845, 0
      %v1191 = vsub.s32 0, %v845
      %v1192 = vsel %vm1190, %v1191, %v845
      %v1193 = vshrl.u32 %v1192, 4
      %v1194 = vand.u32 %v1192, 15
      %v1195 = vsub.s32 0, %v1194
      %v1196 = vsel %vm1190, %v1195, %v1194
      %vm1197 = vcmp.lt.s32.totalorder %v846, 0
      %v1198 = vsub.s32 0, %v846
      %v1199 = vsel %vm1197, %v1198, %v846
      %v1200 = vshrl.u32 %v1199, 4
      %v1201 = vand.u32 %v1199, 15
      %v1202 = vsub.s32 0, %v1201
      %v1203 = vsel %vm1197, %v1202, %v1201
      %vm1204 = vcmp.lt.s32.totalorder %v847, 0
      %v1205 = vsub.s32 0, %v847
      %v1206 = vsel %vm1204, %v1205, %v847
      %v1207 = vshrl.u32 %v1206, 4
      %v1208 = vand.u32 %v1206, 15
      %v1209 = vsub.s32 0, %v1208
      %v1210 = vsel %vm1204, %v1209, %v1208
      %vm1211 = vcmp.lt.s32.totalorder %v848, 0
      %v1212 = vsub.s32 0, %v848
      %v1213 = vsel %vm1211, %v1212, %v848
      %v1214 = vshrl.u32 %v1213, 4
      %v1215 = vand.u32 %v1213, 15
      %v1216 = vsub.s32 0, %v1215
      %v1217 = vsel %vm1211, %v1216, %v1215
      %vm1218 = vcmp.lt.s32.totalorder %v849, 0
      %v1219 = vsub.s32 0, %v849
      %v1220 = vsel %vm1218, %v1219, %v849
      %v1221 = vshrl.u32 %v1220, 4
      %v1222 = vand.u32 %v1220, 15
      %v1223 = vsub.s32 0, %v1222
      %v1224 = vsel %vm1218, %v1223, %v1222
      %vm1225 = vcmp.lt.s32.totalorder %v850, 0
      %v1226 = vsub.s32 0, %v850
      %v1227 = vsel %vm1225, %v1226, %v850
      %v1228 = vshrl.u32 %v1227, 4
      %v1229 = vand.u32 %v1227, 15
      %v1230 = vsub.s32 0, %v1229
      %v1231 = vsel %vm1225, %v1230, %v1229
      %vm1232 = vcmp.lt.s32.totalorder %v851, 0
      %v1233 = vsub.s32 0, %v851
      %v1234 = vsel %vm1232, %v1233, %v851
      %v1235 = vshrl.u32 %v1234, 4
      %v1236 = vand.u32 %v1234, 15
      %v1237 = vsub.s32 0, %v1236
      %v1238 = vsel %vm1232, %v1237, %v1236
      %vm1239 = vcmp.lt.s32.totalorder %v852, 0
      %v1240 = vsub.s32 0, %v852
      %v1241 = vsel %vm1239, %v1240, %v852
      %v1242 = vshrl.u32 %v1241, 4
      %v1243 = vand.u32 %v1241, 15
      %v1244 = vsub.s32 0, %v1243
      %v1245 = vsel %vm1239, %v1244, %v1243
      %vm1246 = vcmp.lt.s32.totalorder %v853, 0
      %v1247 = vsub.s32 0, %v853
      %v1248 = vsel %vm1246, %v1247, %v853
      %v1249 = vshrl.u32 %v1248, 4
      %v1250 = vand.u32 %v1248, 15
      %v1251 = vsub.s32 0, %v1250
      %v1252 = vsel %vm1246, %v1251, %v1250
      %vm1253 = vcmp.lt.s32.totalorder %v854, 0
      %v1254 = vsub.s32 0, %v854
      %v1255 = vsel %vm1253, %v1254, %v854
      %v1256 = vshrl.u32 %v1255, 4
      %v1257 = vand.u32 %v1255, 15
      %v1258 = vsub.s32 0, %v1257
      %v1259 = vsel %vm1253, %v1258, %v1257
      %vm1260 = vcmp.lt.s32.totalorder %v855, 0
      %v1261 = vsub.s32 0, %v855
      %v1262 = vsel %vm1260, %v1261, %v855
      %v1263 = vshrl.u32 %v1262, 4
      %v1264 = vand.u32 %v1262, 15
      %v1265 = vsub.s32 0, %v1264
      %v1266 = vsel %vm1260, %v1265, %v1264
      %vm1267 = vcmp.lt.s32.totalorder %v856, 0
      %v1268 = vsub.s32 0, %v856
      %v1269 = vsel %vm1267, %v1268, %v856
      %v1270 = vshrl.u32 %v1269, 4
      %v1271 = vand.u32 %v1269, 15
      %v1272 = vsub.s32 0, %v1271
      %v1273 = vsel %vm1267, %v1272, %v1271
      %vm1274 = vcmp.lt.s32.totalorder %v857, 0
      %v1275 = vsub.s32 0, %v857
      %v1276 = vsel %vm1274, %v1275, %v857
      %v1277 = vshrl.u32 %v1276, 4
      %v1278 = vand.u32 %v1276, 15
      %v1279 = vsub.s32 0, %v1278
      %v1280 = vsel %vm1274, %v1279, %v1278
      %vm1281 = vcmp.lt.s32.totalorder %v858, 0
      %v1282 = vsub.s32 0, %v858
      %v1283 = vsel %vm1281, %v1282, %v858
      %v1284 = vshrl.u32 %v1283, 4
      %v1285 = vand.u32 %v1283, 15
      %v1286 = vsub.s32 0, %v1285
      %v1287 = vsel %vm1281, %v1286, %v1285
      %vm1288 = vcmp.lt.s32.totalorder %v859, 0
      %v1289 = vsub.s32 0, %v859
      %v1290 = vsel %vm1288, %v1289, %v859
      %v1291 = vshrl.u32 %v1290, 4
      %v1292 = vand.u32 %v1290, 15
      %v1293 = vsub.s32 0, %v1292
      %v1294 = vsel %vm1288, %v1293, %v1292
      %vm1295 = vcmp.ne.s32.totalorder %v1049, 0
      %vm1296 = vcmp.ne.s32.totalorder %v1056, 0
      %vm1297 = vcmp.ne.s32.totalorder %v1063, 0
      %vm1298 = vcmp.ne.s32.totalorder %v1070, 0
      %vm1299 = vcmp.ne.s32.totalorder %v1077, 0
      %vm1300 = vcmp.ne.s32.totalorder %v1084, 0
      %vm1301 = vcmp.ne.s32.totalorder %v1091, 0
      %vm1302 = vcmp.ne.s32.totalorder %v1098, 0
      %vm1303 = vcmp.ne.s32.totalorder %v1105, 0
      %vm1304 = vcmp.ne.s32.totalorder %v1112, 0
      %vm1305 = vcmp.ne.s32.totalorder %v1119, 0
      %vm1306 = vcmp.ne.s32.totalorder %v1126, 0
      %vm1307 = vcmp.ne.s32.totalorder %v1133, 0
      %vm1308 = vcmp.ne.s32.totalorder %v1140, 0
      %vm1309 = vcmp.ne.s32.totalorder %v1147, 0
      %vm1310 = vcmp.ne.s32.totalorder %v1154, 0
      %vm1311 = vcmp.ne.s32.totalorder %v1161, 0
      %vm1312 = vcmp.ne.s32.totalorder %v1168, 0
      %vm1313 = vcmp.ne.s32.totalorder %v1175, 0
      %vm1314 = vcmp.ne.s32.totalorder %v1182, 0
      %vm1315 = vcmp.ne.s32.totalorder %v1189, 0
      %vm1316 = vcmp.ne.s32.totalorder %v1196, 0
      %vm1317 = vcmp.ne.s32.totalorder %v1203, 0
      %vm1318 = vcmp.ne.s32.totalorder %v1210, 0
      %vm1319 = vcmp.ne.s32.totalorder %v1217, 0
      %vm1320 = vcmp.ne.s32.totalorder %v1224, 0
      %vm1321 = vcmp.ne.s32.totalorder %v1231, 0
      %vm1322 = vcmp.ne.s32.totalorder %v1238, 0
      %vm1323 = vcmp.ne.s32.totalorder %v1245, 0
      %vm1324 = vcmp.ne.s32.totalorder %v1252, 0
      %vm1325 = vcmp.ne.s32.totalorder %v1259, 0
      %vm1326 = vcmp.ne.s32.totalorder %v1266, 0
      %vm1327 = vcmp.ne.s32.totalorder %v1273, 0
      %vm1328 = vcmp.ne.s32.totalorder %v1280, 0
      %vm1329 = vcmp.ne.s32.totalorder %v1287, 0
      %vm1330 = vcmp.ne.s32.totalorder %v1294, 0
      %vm1331 = vcmp.lt.s32.totalorder %v1049, 0
      %vm1332 = vcmp.lt.s32.totalorder %v1056, 0
      %vm1333 = vcmp.lt.s32.totalorder %v1063, 0
      %vm1334 = vcmp.lt.s32.totalorder %v1070, 0
      %vm1335 = vcmp.lt.s32.totalorder %v1077, 0
      %vm1336 = vcmp.lt.s32.totalorder %v1084, 0
      %vm1337 = vcmp.lt.s32.totalorder %v1091, 0
      %vm1338 = vcmp.lt.s32.totalorder %v1098, 0
      %vm1339 = vcmp.lt.s32.totalorder %v1105, 0
      %vm1340 = vcmp.lt.s32.totalorder %v1112, 0
      %vm1341 = vcmp.lt.s32.totalorder %v1119, 0
      %vm1342 = vcmp.lt.s32.totalorder %v1126, 0
      %vm1343 = vcmp.lt.s32.totalorder %v1133, 0
      %vm1344 = vcmp.lt.s32.totalorder %v1140, 0
      %vm1345 = vcmp.lt.s32.totalorder %v1147, 0
      %vm1346 = vcmp.lt.s32.totalorder %v1154, 0
      %vm1347 = vcmp.lt.s32.totalorder %v1161, 0
      %vm1348 = vcmp.lt.s32.totalorder %v1168, 0
      %vm1349 = vcmp.lt.s32.totalorder %v1175, 0
      %vm1350 = vcmp.lt.s32.totalorder %v1182, 0
      %vm1351 = vcmp.lt.s32.totalorder %v1189, 0
      %vm1352 = vcmp.lt.s32.totalorder %v1196, 0
      %vm1353 = vcmp.lt.s32.totalorder %v1203, 0
      %vm1354 = vcmp.lt.s32.totalorder %v1210, 0
      %vm1355 = vcmp.lt.s32.totalorder %v1217, 0
      %vm1356 = vcmp.lt.s32.totalorder %v1224, 0
      %vm1357 = vcmp.lt.s32.totalorder %v1231, 0
      %vm1358 = vcmp.lt.s32.totalorder %v1238, 0
      %vm1359 = vcmp.lt.s32.totalorder %v1245, 0
      %vm1360 = vcmp.lt.s32.totalorder %v1252, 0
      %vm1361 = vcmp.lt.s32.totalorder %v1259, 0
      %vm1362 = vcmp.lt.s32.totalorder %v1266, 0
      %vm1363 = vcmp.lt.s32.totalorder %v1273, 0
      %vm1364 = vcmp.lt.s32.totalorder %v1280, 0
      %vm1365 = vcmp.lt.s32.totalorder %v1287, 0
      %vm1366 = vcmp.lt.s32.totalorder %v1294, 0
      %vm1367 = vmand %vm1331, %vm1295
      %vm1368 = vmand %vm1332, %vm1296
      %vm1369 = vmand %vm1333, %vm1297
      %vm1370 = vmand %vm1334, %vm1298
      %vm1371 = vmand %vm1335, %vm1299
      %vm1372 = vmand %vm1336, %vm1300
      %vm1373 = vmand %vm1337, %vm1301
      %vm1374 = vmand %vm1338, %vm1302
      %vm1375 = vmand %vm1339, %vm1303
      %vm1376 = vmand %vm1340, %vm1304
      %vm1377 = vmand %vm1341, %vm1305
      %vm1378 = vmand %vm1342, %vm1306
      %vm1379 = vmand %vm1343, %vm1307
      %vm1380 = vmand %vm1344, %vm1308
      %vm1381 = vmand %vm1345, %vm1309
      %vm1382 = vmand %vm1346, %vm1310
      %vm1383 = vmand %vm1347, %vm1311
      %vm1384 = vmand %vm1348, %vm1312
      %vm1385 = vmand %vm1349, %vm1313
      %vm1386 = vmand %vm1350, %vm1314
      %vm1387 = vmand %vm1351, %vm1315
      %vm1388 = vmand %vm1352, %vm1316
      %vm1389 = vmand %vm1353, %vm1317
      %vm1390 = vmand %vm1354, %vm1318
      %vm1391 = vmand %vm1355, %vm1319
      %vm1392 = vmand %vm1356, %vm1320
      %vm1393 = vmand %vm1357, %vm1321
      %vm1394 = vmand %vm1358, %vm1322
      %vm1395 = vmand %vm1359, %vm1323
      %vm1396 = vmand %vm1360, %vm1324
      %vm1397 = vmand %vm1361, %vm1325
      %vm1398 = vmand %vm1362, %vm1326
      %vm1399 = vmand %vm1363, %vm1327
      %vm1400 = vmand %vm1364, %vm1328
      %vm1401 = vmand %vm1365, %vm1329
      %vm1402 = vmand %vm1366, %vm1330
      %v1403 = vadd.s32 %v1049, 16
      %v1404 = vadd.s32 %v1056, 16
      %v1405 = vadd.s32 %v1063, 16
      %v1406 = vadd.s32 %v1070, 16
      %v1407 = vadd.s32 %v1077, 16
      %v1408 = vadd.s32 %v1084, 16
      %v1409 = vadd.s32 %v1091, 16
      %v1410 = vadd.s32 %v1098, 16
      %v1411 = vadd.s32 %v1105, 16
      %v1412 = vadd.s32 %v1112, 16
      %v1413 = vadd.s32 %v1119, 16
      %v1414 = vadd.s32 %v1126, 16
      %v1415 = vadd.s32 %v1133, 16
      %v1416 = vadd.s32 %v1140, 16
      %v1417 = vadd.s32 %v1147, 16
      %v1418 = vadd.s32 %v1154, 16
      %v1419 = vadd.s32 %v1161, 16
      %v1420 = vadd.s32 %v1168, 16
      %v1421 = vadd.s32 %v1175, 16
      %v1422 = vadd.s32 %v1182, 16
      %v1423 = vadd.s32 %v1189, 16
      %v1424 = vadd.s32 %v1196, 16
      %v1425 = vadd.s32 %v1203, 16
      %v1426 = vadd.s32 %v1210, 16
      %v1427 = vadd.s32 %v1217, 16
      %v1428 = vadd.s32 %v1224, 16
      %v1429 = vadd.s32 %v1231, 16
      %v1430 = vadd.s32 %v1238, 16
      %v1431 = vadd.s32 %v1245, 16
      %v1432 = vadd.s32 %v1252, 16
      %v1433 = vadd.s32 %v1259, 16
      %v1434 = vadd.s32 %v1266, 16
      %v1435 = vadd.s32 %v1273, 16
      %v1436 = vadd.s32 %v1280, 16
      %v1437 = vadd.s32 %v1287, 16
      %v1438 = vadd.s32 %v1294, 16
      %v1439 = vsel %vm1367, %v1403, %v1049
      %v1440 = vsel %vm1368, %v1404, %v1056
      %v1441 = vsel %vm1369, %v1405, %v1063
      %v1442 = vsel %vm1370, %v1406, %v1070
      %v1443 = vsel %vm1371, %v1407, %v1077
      %v1444 = vsel %vm1372, %v1408, %v1084
      %v1445 = vsel %vm1373, %v1409, %v1091
      %v1446 = vsel %vm1374, %v1410, %v1098
      %v1447 = vsel %vm1375, %v1411, %v1105
      %v1448 = vsel %vm1376, %v1412, %v1112
      %v1449 = vsel %vm1377, %v1413, %v1119
      %v1450 = vsel %vm1378, %v1414, %v1126
      %v1451 = vsel %vm1379, %v1415, %v1133
      %v1452 = vsel %vm1380, %v1416, %v1140
      %v1453 = vsel %vm1381, %v1417, %v1147
      %v1454 = vsel %vm1382, %v1418, %v1154
      %v1455 = vsel %vm1383, %v1419, %v1161
      %v1456 = vsel %vm1384, %v1420, %v1168
      %v1457 = vsel %vm1385, %v1421, %v1175
      %v1458 = vsel %vm1386, %v1422, %v1182
      %v1459 = vsel %vm1387, %v1423, %v1189
      %v1460 = vsel %vm1388, %v1424, %v1196
      %v1461 = vsel %vm1389, %v1425, %v1203
      %v1462 = vsel %vm1390, %v1426, %v1210
      %v1463 = vsel %vm1391, %v1427, %v1217
      %v1464 = vsel %vm1392, %v1428, %v1224
      %v1465 = vsel %vm1393, %v1429, %v1231
      %v1466 = vsel %vm1394, %v1430, %v1238
      %v1467 = vsel %vm1395, %v1431, %v1245
      %v1468 = vsel %vm1396, %v1432, %v1252
      %v1469 = vsel %vm1397, %v1433, %v1259
      %v1470 = vsel %vm1398, %v1434, %v1266
      %v1471 = vsel %vm1399, %v1435, %v1273
      %v1472 = vsel %vm1400, %v1436, %v1280
      %v1473 = vsel %vm1401, %v1437, %v1287
      %v1474 = vsel %vm1402, %v1438, %v1294
      %vm1475 = vcmp.ne.s32.totalorder %v1439, 0
      %vm1476 = vcmp.ne.s32.totalorder %v1440, 0
      %vm1477 = vcmp.ne.s32.totalorder %v1441, 0
      %vm1478 = vcmp.ne.s32.totalorder %v1442, 0
      %vm1479 = vcmp.ne.s32.totalorder %v1443, 0
      %vm1480 = vcmp.ne.s32.totalorder %v1444, 0
      %vm1481 = vcmp.ne.s32.totalorder %v1445, 0
      %vm1482 = vcmp.ne.s32.totalorder %v1446, 0
      %vm1483 = vcmp.ne.s32.totalorder %v1447, 0
      %vm1484 = vcmp.ne.s32.totalorder %v1448, 0
      %vm1485 = vcmp.ne.s32.totalorder %v1449, 0
      %vm1486 = vcmp.ne.s32.totalorder %v1450, 0
      %vm1487 = vcmp.ne.s32.totalorder %v1451, 0
      %vm1488 = vcmp.ne.s32.totalorder %v1452, 0
      %vm1489 = vcmp.ne.s32.totalorder %v1453, 0
      %vm1490 = vcmp.ne.s32.totalorder %v1454, 0
      %vm1491 = vcmp.ne.s32.totalorder %v1455, 0
      %vm1492 = vcmp.ne.s32.totalorder %v1456, 0
      %vm1493 = vcmp.ne.s32.totalorder %v1457, 0
      %vm1494 = vcmp.ne.s32.totalorder %v1458, 0
      %vm1495 = vcmp.ne.s32.totalorder %v1459, 0
      %vm1496 = vcmp.ne.s32.totalorder %v1460, 0
      %vm1497 = vcmp.ne.s32.totalorder %v1461, 0
      %vm1498 = vcmp.ne.s32.totalorder %v1462, 0
      %vm1499 = vcmp.ne.s32.totalorder %v1463, 0
      %vm1500 = vcmp.ne.s32.totalorder %v1464, 0
      %vm1501 = vcmp.ne.s32.totalorder %v1465, 0
      %vm1502 = vcmp.ne.s32.totalorder %v1466, 0
      %vm1503 = vcmp.ne.s32.totalorder %v1467, 0
      %vm1504 = vcmp.ne.s32.totalorder %v1468, 0
      %vm1505 = vcmp.ne.s32.totalorder %v1469, 0
      %vm1506 = vcmp.ne.s32.totalorder %v1470, 0
      %vm1507 = vcmp.ne.s32.totalorder %v1471, 0
      %vm1508 = vcmp.ne.s32.totalorder %v1472, 0
      %vm1509 = vcmp.ne.s32.totalorder %v1473, 0
      %vm1510 = vcmp.ne.s32.totalorder %v1474, 0
      %vm1547 = vcmask 1040384
      %v1548 = vrot.slane %v1007, 7
      %v1549 = vrot.slane %v1008, 7
      %v1550 = vsel %vm1547, %v1548, %v1549
      %v1551 = vrot.slane %v1009, 7
      %v1552 = vsel %vm1547, %v1549, %v1551
      %v1553 = vrot.slane %v1010, 7
      %v1554 = vsel %vm1547, %v1551, %v1553
      %v1555 = vrot.slane %v1011, 7
      %v1556 = vsel %vm1547, %v1553, %v1555
      %v1557 = vrot.slane %v1012, 7
      %v1558 = vsel %vm1547, %v1555, %v1557
      %v1559 = vrot.slane %v1013, 7
      %v1560 = vsel %vm1547, %v1557, %v1559
      %v1561 = vrot.slane %v1014, 7
      %v1562 = vsel %vm1547, %v1559, %v1561
      %v1563 = vrot.slane %v1015, 7
      %v1564 = vsel %vm1547, %v1561, %v1563
      %v1565 = vrot.slane %v1016, 7
      %v1566 = vsel %vm1547, %v1563, %v1565
      %v1567 = vrot.slane %v1017, 7
      %v1568 = vsel %vm1547, %v1565, %v1567
      %v1569 = vrot.slane %v1018, 7
      %v1570 = vsel %vm1547, %v1567, %v1569
      %v1571 = vrot.slane %v1019, 7
      %v1572 = vsel %vm1547, %v1569, %v1571
      %v1573 = vrot.slane %v1020, 7
      %v1574 = vsel %vm1547, %v1571, %v1573
      %v1575 = vrot.slane %v1021, 7
      %v1576 = vsel %vm1547, %v1573, %v1575
      %v1577 = vrot.slane %v1022, 7
      %v1578 = vsel %vm1547, %v1575, %v1577
      %v1579 = vrot.slane %v1023, 7
      %v1580 = vsel %vm1547, %v1577, %v1579
      %v1581 = vrot.slane %v1024, 7
      %v1582 = vsel %vm1547, %v1579, %v1581
      %v1583 = vrot.slane %v1025, 7
      %v1584 = vsel %vm1547, %v1581, %v1583
      %v1585 = vrot.slane %v1026, 7
      %v1586 = vsel %vm1547, %v1583, %v1585
      %v1587 = vrot.slane %v1027, 7
      %v1588 = vsel %vm1547, %v1585, %v1587
      %v1589 = vrot.slane %v1028, 7
      %v1590 = vsel %vm1547, %v1587, %v1589
      %v1591 = vrot.slane %v1029, 7
      %v1592 = vsel %vm1547, %v1589, %v1591
      %v1593 = vrot.slane %v1030, 7
      %v1594 = vsel %vm1547, %v1591, %v1593
      %v1595 = vrot.slane %v1031, 7
      %v1596 = vsel %vm1547, %v1593, %v1595
      %v1597 = vrot.slane %v1032, 7
      %v1598 = vsel %vm1547, %v1595, %v1597
      %v1599 = vrot.slane %v1033, 7
      %v1600 = vsel %vm1547, %v1597, %v1599
      %v1601 = vrot.slane %v1034, 7
      %v1602 = vsel %vm1547, %v1599, %v1601
      %v1603 = vrot.slane %v1035, 7
      %v1604 = vsel %vm1547, %v1601, %v1603
      %v1605 = vrot.slane %v1036, 7
      %v1606 = vsel %vm1547, %v1603, %v1605
      %v1607 = vrot.slane %v1037, 7
      %v1608 = vsel %vm1547, %v1605, %v1607
      %v1609 = vrot.slane %v1038, 7
      %v1610 = vsel %vm1547, %v1607, %v1609
      %v1611 = vrot.slane %v1039, 7
      %v1612 = vsel %vm1547, %v1609, %v1611
      %v1613 = vrot.slane %v1040, 7
      %v1614 = vsel %vm1547, %v1611, %v1613
      %v1615 = vrot.slane %v1041, 7
      %v1616 = vsel %vm1547, %v1613, %v1615
      %v1617 = vrot.slane %v1042, 7
      %v1618 = vsel %vm1547, %v1615, %v1617
      %v1655 = vsel %vm1547, %v1007, %v1548
      %v1656 = vsel %vm1475, %v1655, 0.0
      %v1657 = vsel %vm1476, %v1550, 0.0
      %v1658 = vsel %vm1477, %v1552, 0.0
      %v1659 = vsel %vm1478, %v1554, 0.0
      %v1660 = vsel %vm1479, %v1556, 0.0
      %v1661 = vsel %vm1480, %v1558, 0.0
      %v1662 = vsel %vm1481, %v1560, 0.0
      %v1663 = vsel %vm1482, %v1562, 0.0
      %v1664 = vsel %vm1483, %v1564, 0.0
      %v1665 = vsel %vm1484, %v1566, 0.0
      %v1666 = vsel %vm1485, %v1568, 0.0
      %v1667 = vsel %vm1486, %v1570, 0.0
      %v1668 = vsel %vm1487, %v1572, 0.0
      %v1669 = vsel %vm1488, %v1574, 0.0
      %v1670 = vsel %vm1489, %v1576, 0.0
      %v1671 = vsel %vm1490, %v1578, 0.0
      %v1672 = vsel %vm1491, %v1580, 0.0
      %v1673 = vsel %vm1492, %v1582, 0.0
      %v1674 = vsel %vm1493, %v1584, 0.0
      %v1675 = vsel %vm1494, %v1586, 0.0
      %v1676 = vsel %vm1495, %v1588, 0.0
      %v1677 = vsel %vm1496, %v1590, 0.0
      %v1678 = vsel %vm1497, %v1592, 0.0
      %v1679 = vsel %vm1498, %v1594, 0.0
      %v1680 = vsel %vm1499, %v1596, 0.0
      %v1681 = vsel %vm1500, %v1598, 0.0
      %v1682 = vsel %vm1501, %v1600, 0.0
      %v1683 = vsel %vm1502, %v1602, 0.0
      %v1684 = vsel %vm1503, %v1604, 0.0
      %v1685 = vsel %vm1504, %v1606, 0.0
      %v1686 = vsel %vm1505, %v1608, 0.0
      %v1687 = vsel %vm1506, %v1610, 0.0
      %v1688 = vsel %vm1507, %v1612, 0.0
      %v1689 = vsel %vm1508, %v1614, 0.0
      %v1690 = vsel %vm1509, %v1616, 0.0
      %v1691 = vsel %vm1510, %v1618, 0.0
      %vm1692 = vcmp.ne.s32.totalorder %v1439, 15
      %vm1693 = vcmp.ne.s32.totalorder %v1440, 15
      %vm1694 = vcmp.ne.s32.totalorder %v1441, 15
      %vm1695 = vcmp.ne.s32.totalorder %v1442, 15
      %vm1696 = vcmp.ne.s32.totalorder %v1443, 15
      %vm1697 = vcmp.ne.s32.totalorder %v1444, 15
      %vm1698 = vcmp.ne.s32.totalorder %v1445, 15
      %vm1699 = vcmp.ne.s32.totalorder %v1446, 15
      %vm1700 = vcmp.ne.s32.totalorder %v1447, 15
      %vm1701 = vcmp.ne.s32.totalorder %v1448, 15
      %vm1702 = vcmp.ne.s32.totalorder %v1449, 15
      %vm1703 = vcmp.ne.s32.totalorder %v1450, 15
      %vm1704 = vcmp.ne.s32.totalorder %v1451, 15
      %vm1705 = vcmp.ne.s32.totalorder %v1452, 15
      %vm1706 = vcmp.ne.s32.totalorder %v1453, 15
      %vm1707 = vcmp.ne.s32.totalorder %v1454, 15
      %vm1708 = vcmp.ne.s32.totalorder %v1455, 15
      %vm1709 = vcmp.ne.s32.totalorder %v1456, 15
      %vm1710 = vcmp.ne.s32.totalorder %v1457, 15
      %vm1711 = vcmp.ne.s32.totalorder %v1458, 15
      %vm1712 = vcmp.ne.s32.totalorder %v1459, 15
      %vm1713 = vcmp.ne.s32.totalorder %v1460, 15
      %vm1714 = vcmp.ne.s32.totalorder %v1461, 15
      %vm1715 = vcmp.ne.s32.totalorder %v1462, 15
      %vm1716 = vcmp.ne.s32.totalorder %v1463, 15
      %vm1717 = vcmp.ne.s32.totalorder %v1464, 15
      %vm1718 = vcmp.ne.s32.totalorder %v1465, 15
      %vm1719 = vcmp.ne.s32.totalorder %v1466, 15
      %vm1720 = vcmp.ne.s32.totalorder %v1467, 15
      %vm1721 = vcmp.ne.s32.totalorder %v1468, 15
      %vm1722 = vcmp.ne.s32.totalorder %v1469, 15
      %vm1723 = vcmp.ne.s32.totalorder %v1470, 15
      %vm1724 = vcmp.ne.s32.totalorder %v1471, 15
      %vm1725 = vcmp.ne.s32.totalorder %v1472, 15
      %vm1726 = vcmp.ne.s32.totalorder %v1473, 15
      %vm1727 = vcmp.ne.s32.totalorder %v1474, 15
      %vm1728 = vcmask 1046528
      %v1729 = vrot.slane %v1007, 1
      %v1730 = vrot.slane %v1008, 1
      %v1731 = vsel %vm1728, %v1729, %v1730
      %v1732 = vrot.slane %v1009, 1
      %v1733 = vsel %vm1728, %v1730, %v1732
      %v1734 = vrot.slane %v1010, 1
      %v1735 = vsel %vm1728, %v1732, %v1734
      %v1736 = vrot.slane %v1011, 1
      %v1737 = vsel %vm1728, %v1734, %v1736
      %v1738 = vrot.slane %v1012, 1
      %v1739 = vsel %vm1728, %v1736, %v1738
      %v1740 = vrot.slane %v1013, 1
      %v1741 = vsel %vm1728, %v1738, %v1740
      %v1742 = vrot.slane %v1014, 1
      %v1743 = vsel %vm1728, %v1740, %v1742
      %v1744 = vrot.slane %v1015, 1
      %v1745 = vsel %vm1728, %v1742, %v1744
      %v1746 = vrot.slane %v1016, 1
      %v1747 = vsel %vm1728, %v1744, %v1746
      %v1748 = vrot.slane %v1017, 1
      %v1749 = vsel %vm1728, %v1746, %v1748
      %v1750 = vrot.slane %v1018, 1
      %v1751 = vsel %vm1728, %v1748, %v1750
      %v1752 = vrot.slane %v1019, 1
      %v1753 = vsel %vm1728, %v1750, %v1752
      %v1754 = vrot.slane %v1020, 1
      %v1755 = vsel %vm1728, %v1752, %v1754
      %v1756 = vrot.slane %v1021, 1
      %v1757 = vsel %vm1728, %v1754, %v1756
      %v1758 = vrot.slane %v1022, 1
      %v1759 = vsel %vm1728, %v1756, %v1758
      %v1760 = vrot.slane %v1023, 1
      %v1761 = vsel %vm1728, %v1758, %v1760
      %v1762 = vrot.slane %v1024, 1
      %v1763 = vsel %vm1728, %v1760, %v1762
      %v1764 = vrot.slane %v1025, 1
      %v1765 = vsel %vm1728, %v1762, %v1764
      %v1766 = vrot.slane %v1026, 1
      %v1767 = vsel %vm1728, %v1764, %v1766
      %v1768 = vrot.slane %v1027, 1
      %v1769 = vsel %vm1728, %v1766, %v1768
      %v1770 = vrot.slane %v1028, 1
      %v1771 = vsel %vm1728, %v1768, %v1770
      %v1772 = vrot.slane %v1029, 1
      %v1773 = vsel %vm1728, %v1770, %v1772
      %v1774 = vrot.slane %v1030, 1
      %v1775 = vsel %vm1728, %v1772, %v1774
      %v1776 = vrot.slane %v1031, 1
      %v1777 = vsel %vm1728, %v1774, %v1776
      %v1778 = vrot.slane %v1032, 1
      %v1779 = vsel %vm1728, %v1776, %v1778
      %v1780 = vrot.slane %v1033, 1
      %v1781 = vsel %vm1728, %v1778, %v1780
      %v1782 = vrot.slane %v1034, 1
      %v1783 = vsel %vm1728, %v1780, %v1782
      %v1784 = vrot.slane %v1035, 1
      %v1785 = vsel %vm1728, %v1782, %v1784
      %v1786 = vrot.slane %v1036, 1
      %v1787 = vsel %vm1728, %v1784, %v1786
      %v1788 = vrot.slane %v1037, 1
      %v1789 = vsel %vm1728, %v1786, %v1788
      %v1790 = vrot.slane %v1038, 1
      %v1791 = vsel %vm1728, %v1788, %v1790
      %v1792 = vrot.slane %v1039, 1
      %v1793 = vsel %vm1728, %v1790, %v1792
      %v1794 = vrot.slane %v1040, 1
      %v1795 = vsel %vm1728, %v1792, %v1794
      %v1796 = vrot.slane %v1041, 1
      %v1797 = vsel %vm1728, %v1794, %v1796
      %v1798 = vrot.slane %v1042, 1
      %v1799 = vsel %vm1728, %v1796, %v1798
      %v1836 = vsel %vm1728, %v1798, %v1042
      %v1837 = vsel %vm1692, %v1731, 0.0
      %v1838 = vsel %vm1693, %v1733, 0.0
      %v1839 = vsel %vm1694, %v1735, 0.0
      %v1840 = vsel %vm1695, %v1737, 0.0
      %v1841 = vsel %vm1696, %v1739, 0.0
      %v1842 = vsel %vm1697, %v1741, 0.0
      %v1843 = vsel %vm1698, %v1743, 0.0
      %v1844 = vsel %vm1699, %v1745, 0.0
      %v1845 = vsel %vm1700, %v1747, 0.0
      %v1846 = vsel %vm1701, %v1749, 0.0
      %v1847 = vsel %vm1702, %v1751, 0.0
      %v1848 = vsel %vm1703, %v1753, 0.0
      %v1849 = vsel %vm1704, %v1755, 0.0
      %v1850 = vsel %vm1705, %v1757, 0.0
      %v1851 = vsel %vm1706, %v1759, 0.0
      %v1852 = vsel %vm1707, %v1761, 0.0
      %v1853 = vsel %vm1708, %v1763, 0.0
      %v1854 = vsel %vm1709, %v1765, 0.0
      %v1855 = vsel %vm1710, %v1767, 0.0
      %v1856 = vsel %vm1711, %v1769, 0.0
      %v1857 = vsel %vm1712, %v1771, 0.0
      %v1858 = vsel %vm1713, %v1773, 0.0
      %v1859 = vsel %vm1714, %v1775, 0.0
      %v1860 = vsel %vm1715, %v1777, 0.0
      %v1861 = vsel %vm1716, %v1779, 0.0
      %v1862 = vsel %vm1717, %v1781, 0.0
      %v1863 = vsel %vm1718, %v1783, 0.0
      %v1864 = vsel %vm1719, %v1785, 0.0
      %v1865 = vsel %vm1720, %v1787, 0.0
      %v1866 = vsel %vm1721, %v1789, 0.0
      %v1867 = vsel %vm1722, %v1791, 0.0
      %v1868 = vsel %vm1723, %v1793, 0.0
      %v1869 = vsel %vm1724, %v1795, 0.0
      %v1870 = vsel %vm1725, %v1797, 0.0
      %v1871 = vsel %vm1726, %v1799, 0.0
      %v1872 = vsel %vm1727, %v1836, 0.0
      %v1873 = vpack.c.bf16 %v1007, %v1007
      %v1874 = vpack.c.bf16 %v1008, %v1008
      %v1875 = vpack.c.bf16 %v1009, %v1009
      %v1876 = vpack.c.bf16 %v1010, %v1010
      %v1877 = vpack.c.bf16 %v1011, %v1011
      %v1878 = vpack.c.bf16 %v1012, %v1012
      %v1879 = vpack.c.bf16 %v1013, %v1013
      %v1880 = vpack.c.bf16 %v1014, %v1014
      %v1881 = vpack.c.bf16 %v1015, %v1015
      %v1882 = vpack.c.bf16 %v1016, %v1016
      %v1883 = vpack.c.bf16 %v1017, %v1017
      %v1884 = vpack.c.bf16 %v1018, %v1018
      %v1885 = vpack.c.bf16 %v1019, %v1019
      %v1886 = vpack.c.bf16 %v1020, %v1020
      %v1887 = vpack.c.bf16 %v1021, %v1021
      %v1888 = vpack.c.bf16 %v1022, %v1022
      %v1889 = vpack.c.bf16 %v1023, %v1023
      %v1890 = vpack.c.bf16 %v1024, %v1024
      %v1891 = vpack.c.bf16 %v1025, %v1025
      %v1892 = vpack.c.bf16 %v1026, %v1026
      %v1893 = vpack.c.bf16 %v1027, %v1027
      %v1894 = vpack.c.bf16 %v1028, %v1028
      %v1895 = vpack.c.bf16 %v1029, %v1029
      %v1896 = vpack.c.bf16 %v1030, %v1030
      %v1897 = vpack.c.bf16 %v1031, %v1031
      %v1898 = vpack.c.bf16 %v1032, %v1032
      %v1899 = vpack.c.bf16 %v1033, %v1033
      %v1900 = vpack.c.bf16 %v1034, %v1034
      %v1901 = vpack.c.bf16 %v1035, %v1035
      %v1902 = vpack.c.bf16 %v1036, %v1036
      %v1903 = vpack.c.bf16 %v1037, %v1037
      %v1904 = vpack.c.bf16 %v1038, %v1038
      %v1905 = vpack.c.bf16 %v1039, %v1039
      %v1906 = vpack.c.bf16 %v1040, %v1040
      %v1907 = vpack.c.bf16 %v1041, %v1041
      %v1908 = vpack.c.bf16 %v1042, %v1042
      %v1909 = vpack.c.bf16 %v1656, %v1656
      %v1910 = vpack.c.bf16 %v1657, %v1657
      %v1911 = vpack.c.bf16 %v1658, %v1658
      %v1912 = vpack.c.bf16 %v1659, %v1659
      %v1913 = vpack.c.bf16 %v1660, %v1660
      %v1914 = vpack.c.bf16 %v1661, %v1661
      %v1915 = vpack.c.bf16 %v1662, %v1662
      %v1916 = vpack.c.bf16 %v1663, %v1663
      %v1917 = vpack.c.bf16 %v1664, %v1664
      %v1918 = vpack.c.bf16 %v1665, %v1665
      %v1919 = vpack.c.bf16 %v1666, %v1666
      %v1920 = vpack.c.bf16 %v1667, %v1667
      %v1921 = vpack.c.bf16 %v1668, %v1668
      %v1922 = vpack.c.bf16 %v1669, %v1669
      %v1923 = vpack.c.bf16 %v1670, %v1670
      %v1924 = vpack.c.bf16 %v1671, %v1671
      %v1925 = vpack.c.bf16 %v1672, %v1672
      %v1926 = vpack.c.bf16 %v1673, %v1673
      %v1927 = vpack.c.bf16 %v1674, %v1674
      %v1928 = vpack.c.bf16 %v1675, %v1675
      %v1929 = vpack.c.bf16 %v1676, %v1676
      %v1930 = vpack.c.bf16 %v1677, %v1677
      %v1931 = vpack.c.bf16 %v1678, %v1678
      %v1932 = vpack.c.bf16 %v1679, %v1679
      %v1933 = vpack.c.bf16 %v1680, %v1680
      %v1934 = vpack.c.bf16 %v1681, %v1681
      %v1935 = vpack.c.bf16 %v1682, %v1682
      %v1936 = vpack.c.bf16 %v1683, %v1683
      %v1937 = vpack.c.bf16 %v1684, %v1684
      %v1938 = vpack.c.bf16 %v1685, %v1685
      %v1939 = vpack.c.bf16 %v1686, %v1686
      %v1940 = vpack.c.bf16 %v1687, %v1687
      %v1941 = vpack.c.bf16 %v1688, %v1688
      %v1942 = vpack.c.bf16 %v1689, %v1689
      %v1943 = vpack.c.bf16 %v1690, %v1690
      %v1944 = vpack.c.bf16 %v1691, %v1691
      %v1945 = vpack.c.bf16 %v1837, %v1837
      %v1946 = vpack.c.bf16 %v1838, %v1838
      %v1947 = vpack.c.bf16 %v1839, %v1839
      %v1948 = vpack.c.bf16 %v1840, %v1840
      %v1949 = vpack.c.bf16 %v1841, %v1841
      %v1950 = vpack.c.bf16 %v1842, %v1842
      %v1951 = vpack.c.bf16 %v1843, %v1843
      %v1952 = vpack.c.bf16 %v1844, %v1844
      %v1953 = vpack.c.bf16 %v1845, %v1845
      %v1954 = vpack.c.bf16 %v1846, %v1846
      %v1955 = vpack.c.bf16 %v1847, %v1847
      %v1956 = vpack.c.bf16 %v1848, %v1848
      %v1957 = vpack.c.bf16 %v1849, %v1849
      %v1958 = vpack.c.bf16 %v1850, %v1850
      %v1959 = vpack.c.bf16 %v1851, %v1851
      %v1960 = vpack.c.bf16 %v1852, %v1852
      %v1961 = vpack.c.bf16 %v1853, %v1853
      %v1962 = vpack.c.bf16 %v1854, %v1854
      %v1963 = vpack.c.bf16 %v1855, %v1855
      %v1964 = vpack.c.bf16 %v1856, %v1856
      %v1965 = vpack.c.bf16 %v1857, %v1857
      %v1966 = vpack.c.bf16 %v1858, %v1858
      %v1967 = vpack.c.bf16 %v1859, %v1859
      %v1968 = vpack.c.bf16 %v1860, %v1860
      %v1969 = vpack.c.bf16 %v1861, %v1861
      %v1970 = vpack.c.bf16 %v1862, %v1862
      %v1971 = vpack.c.bf16 %v1863, %v1863
      %v1972 = vpack.c.bf16 %v1864, %v1864
      %v1973 = vpack.c.bf16 %v1865, %v1865
      %v1974 = vpack.c.bf16 %v1866, %v1866
      %v1975 = vpack.c.bf16 %v1867, %v1867
      %v1976 = vpack.c.bf16 %v1868, %v1868
      %v1977 = vpack.c.bf16 %v1869, %v1869
      %v1978 = vpack.c.bf16 %v1870, %v1870
      %v1979 = vpack.c.bf16 %v1871, %v1871
      %v1980 = vpack.c.bf16 %v1872, %v1872
      %v1981 = vld [vmem:[%s5] sm:$0xf]
      %v1982 = vld [vmem:[%s5 + $0x4] sm:$0xf]
      %v1983 = vld [vmem:[%s5 + $0x8] sm:$0xf]
      %v1984 = vld [vmem:[%s5 + $0xc] sm:$0xf]
      %v1985 = vld [vmem:[%s5 + $0x10] sm:$0xf]
      %v1986 = vld [vmem:[%s5 + $0x14] sm:$0xf]
      %v1987 = vld [vmem:[%s5 + $0x18] sm:$0xf]
      %v1988 = vld [vmem:[%s5 + $0x1c] sm:$0xf]
      %v1989 = vld [vmem:[%s5 + $0x20] sm:$0xf]
      %v1990 = vld [vmem:[%s5 + $0x24] sm:$0xf]
      %v1991 = vld [vmem:[%s5 + $0x28] sm:$0xf]
      %v1992 = vld [vmem:[%s5 + $0x2c] sm:$0xf]
      %v1993 = vld [vmem:[%s5 + $0x30] sm:$0xf]
      %v1994 = vld [vmem:[%s5 + $0x34] sm:$0xf]
      %v1995 = vld [vmem:[%s5 + $0x38] sm:$0xf]
      %v1996 = vld [vmem:[%s5 + $0x3c] sm:$0xf]
      %s1997 = scalar_lea.vmem %s5, 64
      %v1998 = vld [vmem:[%s1997] sm:$0xf]
      %v1999 = vld [vmem:[%s1997 + $0x4] sm:$0xf]
      %v2000 = vld [vmem:[%s1997 + $0x8] sm:$0xf]
      %v2001 = vld [vmem:[%s1997 + $0xc] sm:$0xf]
      %v2002 = vld [vmem:[%s1997 + $0x10] sm:$0xf]
      %v2003 = vld [vmem:[%s1997 + $0x14] sm:$0xf]
      %v2004 = vld [vmem:[%s1997 + $0x18] sm:$0xf]
      %v2005 = vld [vmem:[%s1997 + $0x1c] sm:$0xf]
      %v2006 = vld [vmem:[%s1997 + $0x20] sm:$0xf]
      %v2007 = vld [vmem:[%s1997 + $0x24] sm:$0xf]
      %v2008 = vld [vmem:[%s1997 + $0x28] sm:$0xf]
      %v2009 = vld [vmem:[%s1997 + $0x2c] sm:$0xf]
      %v2010 = vld [vmem:[%s1997 + $0x30] sm:$0xf]
      %v2011 = vld [vmem:[%s1997 + $0x34] sm:$0xf]
      %v2012 = vld [vmem:[%s1997 + $0x38] sm:$0xf]
      %v2013 = vld [vmem:[%s1997 + $0x3c] sm:$0xf]
      %v2046 = vunpack.c.l.b16 %v1873
      %v2047 = vunpack.c.l.b16 %v1874
      %v2048 = vunpack.c.l.b16 %v1875
      %v2049 = vunpack.c.l.b16 %v1876
      %v2050 = vunpack.c.l.b16 %v1877
      %v2051 = vunpack.c.l.b16 %v1878
      %v2052 = vunpack.c.l.b16 %v1879
      %v2053 = vunpack.c.l.b16 %v1880
      %v2054 = vunpack.c.l.b16 %v1881
      %v2055 = vunpack.c.l.b16 %v1882
      %v2056 = vunpack.c.l.b16 %v1883
      %v2057 = vunpack.c.l.b16 %v1884
      %v2058 = vunpack.c.l.b16 %v1885
      %v2059 = vunpack.c.l.b16 %v1886
      %v2060 = vunpack.c.l.b16 %v1887
      %v2061 = vunpack.c.l.b16 %v1888
      %v2062 = vunpack.c.l.b16 %v1889
      %v2063 = vunpack.c.l.b16 %v1890
      %v2064 = vunpack.c.l.b16 %v1891
      %v2065 = vunpack.c.l.b16 %v1892
      %v2066 = vunpack.c.l.b16 %v1893
      %v2067 = vunpack.c.l.b16 %v1894
      %v2068 = vunpack.c.l.b16 %v1895
      %v2069 = vunpack.c.l.b16 %v1896
      %v2070 = vunpack.c.l.b16 %v1897
      %v2071 = vunpack.c.l.b16 %v1898
      %v2072 = vunpack.c.l.b16 %v1899
      %v2073 = vunpack.c.l.b16 %v1900
      %v2074 = vunpack.c.l.b16 %v1901
      %v2075 = vunpack.c.l.b16 %v1902
      %v2076 = vunpack.c.l.b16 %v1903
      %v2077 = vunpack.c.l.b16 %v1904
      %v2078 = vpack.c.b16 %v2047, %v2046
      %v2079 = vpack.c.b16 %v2049, %v2048
      %v2080 = vpack.c.b16 %v2051, %v2050
      %v2081 = vpack.c.b16 %v2053, %v2052
      %v2082 = vpack.c.b16 %v2055, %v2054
      %v2083 = vpack.c.b16 %v2057, %v2056
      %v2084 = vpack.c.b16 %v2059, %v2058
      %v2085 = vpack.c.b16 %v2061, %v2060
      %v2086 = vpack.c.b16 %v2063, %v2062
      %v2087 = vpack.c.b16 %v2065, %v2064
      %v2088 = vpack.c.b16 %v2067, %v2066
      %v2089 = vpack.c.b16 %v2069, %v2068
      %v2090 = vpack.c.b16 %v2071, %v2070
      %v2091 = vpack.c.b16 %v2073, %v2072
      %v2092 = vpack.c.b16 %v2075, %v2074
      %v2093 = vpack.c.b16 %v2077, %v2076
      %v2126 = vunpack.c.l.b16 %v1998
      %v2127 = vunpack.c.l.b16 %v1999
      %v2128 = vunpack.c.l.b16 %v2000
      %v2129 = vunpack.c.l.b16 %v2001
      %v2130 = vunpack.c.l.b16 %v2002
      %v2131 = vunpack.c.l.b16 %v2003
      %v2132 = vunpack.c.l.b16 %v2004
      %v2133 = vunpack.c.l.b16 %v2005
      %v2134 = vunpack.c.l.b16 %v2006
      %v2135 = vunpack.c.l.b16 %v2007
      %v2136 = vunpack.c.l.b16 %v2008
      %v2137 = vunpack.c.l.b16 %v2009
      %v2138 = vunpack.c.l.b16 %v2010
      %v2139 = vunpack.c.l.b16 %v2011
      %v2140 = vunpack.c.l.b16 %v2012
      %v2141 = vunpack.c.l.b16 %v2013
      %v2142 = vpack.c.b16 %v2127, %v2126
      %v2143 = vpack.c.b16 %v2129, %v2128
      %v2144 = vpack.c.b16 %v2131, %v2130
      %v2145 = vpack.c.b16 %v2133, %v2132
      %v2146 = vpack.c.b16 %v2135, %v2134
      %v2147 = vpack.c.b16 %v2137, %v2136
      %v2148 = vpack.c.b16 %v2139, %v2138
      %v2149 = vpack.c.b16 %v2141, %v2140
      %2158 = vmatpush.bf16.msra.mxu0 %v2149
      %2159 = vmatpush.bf16.msra.mxu0 %v2148
      %2160 = vmatpush.bf16.msra.mxu0 %v2147
      %2161 = vmatpush.bf16.msra.mxu0 %v2146
      %2162 = vmatpush.bf16.msra.mxu0 %v2145
      %2163 = vmatpush.bf16.msra.mxu0 %v2144
      %2164 = vmatpush.bf16.msra.mxu0 %v2143
      %2165 = vmatpush.bf16.msra.mxu0 %v2142
      %2166 = vmatmul.bf16.gmra.mxu0 %v2078
      %v2167 = vpop.f32.mrf.mxu0
      %v2168 = vadd.f32 0.0, %v2167
      %v2169 = vpop.f32.mrf.mxu0
      %v2170 = vadd.f32 0.0, %v2169
      %2171 = vmatmul.bf16.gmra.mxu0 %v2079
      %v2172 = vpop.f32.mrf.mxu0
      %v2173 = vadd.f32 0.0, %v2172
      %v2174 = vpop.f32.mrf.mxu0
      %v2175 = vadd.f32 0.0, %v2174
      %2176 = vmatmul.bf16.gmra.mxu0 %v2080
      %v2177 = vpop.f32.mrf.mxu0
      %v2178 = vadd.f32 0.0, %v2177
      %v2179 = vpop.f32.mrf.mxu0
      %v2180 = vadd.f32 0.0, %v2179
      %2181 = vmatmul.bf16.gmra.mxu0 %v2081
      %v2182 = vpop.f32.mrf.mxu0
      %v2183 = vadd.f32 0.0, %v2182
      %v2184 = vpop.f32.mrf.mxu0
      %v2185 = vadd.f32 0.0, %v2184
      %2186 = vmatmul.bf16.gmra.mxu0 %v2082
      %v2187 = vpop.f32.mrf.mxu0
      %v2188 = vadd.f32 0.0, %v2187
      %v2189 = vpop.f32.mrf.mxu0
      %v2190 = vadd.f32 0.0, %v2189
      %2191 = vmatmul.bf16.gmra.mxu0 %v2083
      %v2192 = vpop.f32.mrf.mxu0
      %v2193 = vadd.f32 0.0, %v2192
      %v2194 = vpop.f32.mrf.mxu0
      %v2195 = vadd.f32 0.0, %v2194
      %2196 = vmatmul.bf16.gmra.mxu0 %v2084
      %v2197 = vpop.f32.mrf.mxu0
      %v2198 = vadd.f32 0.0, %v2197
      %v2199 = vpop.f32.mrf.mxu0
      %v2200 = vadd.f32 0.0, %v2199
      %2201 = vmatmul.bf16.gmra.mxu0 %v2085
      %v2202 = vpop.f32.mrf.mxu0
      %v2203 = vadd.f32 0.0, %v2202
      %v2204 = vpop.f32.mrf.mxu0
      %v2205 = vadd.f32 0.0, %v2204
      %2206 = vmatmul.bf16.gmra.mxu0 %v2086
      %v2207 = vpop.f32.mrf.mxu0
      %v2208 = vadd.f32 0.0, %v2207
      %v2209 = vpop.f32.mrf.mxu0
      %v2210 = vadd.f32 0.0, %v2209
      %2211 = vmatmul.bf16.gmra.mxu0 %v2087
      %v2212 = vpop.f32.mrf.mxu0
      %v2213 = vadd.f32 0.0, %v2212
      %v2214 = vpop.f32.mrf.mxu0
      %v2215 = vadd.f32 0.0, %v2214
      %2216 = vmatmul.bf16.gmra.mxu0 %v2088
      %v2217 = vpop.f32.mrf.mxu0
      %v2218 = vadd.f32 0.0, %v2217
      %v2219 = vpop.f32.mrf.mxu0
      %v2220 = vadd.f32 0.0, %v2219
      %2221 = vmatmul.bf16.gmra.mxu0 %v2089
      %v2222 = vpop.f32.mrf.mxu0
      %v2223 = vadd.f32 0.0, %v2222
      %v2224 = vpop.f32.mrf.mxu0
      %v2225 = vadd.f32 0.0, %v2224
      %2226 = vmatmul.bf16.gmra.mxu0 %v2090
      %v2227 = vpop.f32.mrf.mxu0
      %v2228 = vadd.f32 0.0, %v2227
      %v2229 = vpop.f32.mrf.mxu0
      %v2230 = vadd.f32 0.0, %v2229
      %2231 = vmatmul.bf16.gmra.mxu0 %v2091
      %v2232 = vpop.f32.mrf.mxu0
      %v2233 = vadd.f32 0.0, %v2232
      %v2234 = vpop.f32.mrf.mxu0
      %v2235 = vadd.f32 0.0, %v2234
      %2236 = vmatmul.bf16.gmra.mxu0 %v2092
      %v2237 = vpop.f32.mrf.mxu0
      %v2238 = vadd.f32 0.0, %v2237
      %v2239 = vpop.f32.mrf.mxu0
      %v2240 = vadd.f32 0.0, %v2239
      %2241 = vmatmul.bf16.gmra.mxu0 %v2093
      %v2242 = vpop.f32.mrf.mxu0
      %v2243 = vadd.f32 0.0, %v2242
      %v2244 = vpop.f32.mrf.mxu0
      %v2245 = vadd.f32 0.0, %v2244
      %2246 = vdwg.mxu0
      %v2279 = vunpack.c.l.b16 %v1909
      %v2280 = vunpack.c.l.b16 %v1910
      %v2281 = vunpack.c.l.b16 %v1911
      %v2282 = vunpack.c.l.b16 %v1912
      %v2283 = vunpack.c.l.b16 %v1913
      %v2284 = vunpack.c.l.b16 %v1914
      %v2285 = vunpack.c.l.b16 %v1915
      %v2286 = vunpack.c.l.b16 %v1916
      %v2287 = vunpack.c.l.b16 %v1917
      %v2288 = vunpack.c.l.b16 %v1918
      %v2289 = vunpack.c.l.b16 %v1919
      %v2290 = vunpack.c.l.b16 %v1920
      %v2291 = vunpack.c.l.b16 %v1921
      %v2292 = vunpack.c.l.b16 %v1922
      %v2293 = vunpack.c.l.b16 %v1923
      %v2294 = vunpack.c.l.b16 %v1924
      %v2295 = vunpack.c.l.b16 %v1925
      %v2296 = vunpack.c.l.b16 %v1926
      %v2297 = vunpack.c.l.b16 %v1927
      %v2298 = vunpack.c.l.b16 %v1928
      %v2299 = vunpack.c.l.b16 %v1929
      %v2300 = vunpack.c.l.b16 %v1930
      %v2301 = vunpack.c.l.b16 %v1931
      %v2302 = vunpack.c.l.b16 %v1932
      %v2303 = vunpack.c.l.b16 %v1933
      %v2304 = vunpack.c.l.b16 %v1934
      %v2305 = vunpack.c.l.b16 %v1935
      %v2306 = vunpack.c.l.b16 %v1936
      %v2307 = vunpack.c.l.b16 %v1937
      %v2308 = vunpack.c.l.b16 %v1938
      %v2309 = vunpack.c.l.b16 %v1939
      %v2310 = vunpack.c.l.b16 %v1940
      %v2311 = vpack.c.b16 %v2280, %v2279
      %v2312 = vpack.c.b16 %v2282, %v2281
      %v2313 = vpack.c.b16 %v2284, %v2283
      %v2314 = vpack.c.b16 %v2286, %v2285
      %v2315 = vpack.c.b16 %v2288, %v2287
      %v2316 = vpack.c.b16 %v2290, %v2289
      %v2317 = vpack.c.b16 %v2292, %v2291
      %v2318 = vpack.c.b16 %v2294, %v2293
      %v2319 = vpack.c.b16 %v2296, %v2295
      %v2320 = vpack.c.b16 %v2298, %v2297
      %v2321 = vpack.c.b16 %v2300, %v2299
      %v2322 = vpack.c.b16 %v2302, %v2301
      %v2323 = vpack.c.b16 %v2304, %v2303
      %v2324 = vpack.c.b16 %v2306, %v2305
      %v2325 = vpack.c.b16 %v2308, %v2307
      %v2326 = vpack.c.b16 %v2310, %v2309
      %v2359 = vunpack.c.l.b16 %v1981
      %v2360 = vunpack.c.l.b16 %v1982
      %v2361 = vunpack.c.l.b16 %v1983
      %v2362 = vunpack.c.l.b16 %v1984
      %v2363 = vunpack.c.l.b16 %v1985
      %v2364 = vunpack.c.l.b16 %v1986
      %v2365 = vunpack.c.l.b16 %v1987
      %v2366 = vunpack.c.l.b16 %v1988
      %v2367 = vunpack.c.l.b16 %v1989
      %v2368 = vunpack.c.l.b16 %v1990
      %v2369 = vunpack.c.l.b16 %v1991
      %v2370 = vunpack.c.l.b16 %v1992
      %v2371 = vunpack.c.l.b16 %v1993
      %v2372 = vunpack.c.l.b16 %v1994
      %v2373 = vunpack.c.l.b16 %v1995
      %v2374 = vunpack.c.l.b16 %v1996
      %v2375 = vpack.c.b16 %v2360, %v2359
      %v2376 = vpack.c.b16 %v2362, %v2361
      %v2377 = vpack.c.b16 %v2364, %v2363
      %v2378 = vpack.c.b16 %v2366, %v2365
      %v2379 = vpack.c.b16 %v2368, %v2367
      %v2380 = vpack.c.b16 %v2370, %v2369
      %v2381 = vpack.c.b16 %v2372, %v2371
      %v2382 = vpack.c.b16 %v2374, %v2373
      %2391 = vmatpush.bf16.msra.mxu0 %v2382
      %2392 = vmatpush.bf16.msra.mxu0 %v2381
      %2393 = vmatpush.bf16.msra.mxu0 %v2380
      %2394 = vmatpush.bf16.msra.mxu0 %v2379
      %2395 = vmatpush.bf16.msra.mxu0 %v2378
      %2396 = vmatpush.bf16.msra.mxu0 %v2377
      %2397 = vmatpush.bf16.msra.mxu0 %v2376
      %2398 = vmatpush.bf16.msra.mxu0 %v2375
      %2399 = vmatmul.bf16.gmra.mxu0 %v2311
      %v2400 = vpop.f32.mrf.mxu0
      %v2401 = vadd.f32 %v2168, %v2400
      %v2402 = vpop.f32.mrf.mxu0
      %v2403 = vadd.f32 %v2170, %v2402
      %2404 = vmatmul.bf16.gmra.mxu0 %v2312
      %v2405 = vpop.f32.mrf.mxu0
      %v2406 = vadd.f32 %v2173, %v2405
      %v2407 = vpop.f32.mrf.mxu0
      %v2408 = vadd.f32 %v2175, %v2407
      %2409 = vmatmul.bf16.gmra.mxu0 %v2313
      %v2410 = vpop.f32.mrf.mxu0
      %v2411 = vadd.f32 %v2178, %v2410
      %v2412 = vpop.f32.mrf.mxu0
      %v2413 = vadd.f32 %v2180, %v2412
      %2414 = vmatmul.bf16.gmra.mxu0 %v2314
      %v2415 = vpop.f32.mrf.mxu0
      %v2416 = vadd.f32 %v2183, %v2415
      %v2417 = vpop.f32.mrf.mxu0
      %v2418 = vadd.f32 %v2185, %v2417
      %2419 = vmatmul.bf16.gmra.mxu0 %v2315
      %v2420 = vpop.f32.mrf.mxu0
      %v2421 = vadd.f32 %v2188, %v2420
      %v2422 = vpop.f32.mrf.mxu0
      %v2423 = vadd.f32 %v2190, %v2422
      %2424 = vmatmul.bf16.gmra.mxu0 %v2316
      %v2425 = vpop.f32.mrf.mxu0
      %v2426 = vadd.f32 %v2193, %v2425
      %v2427 = vpop.f32.mrf.mxu0
      %v2428 = vadd.f32 %v2195, %v2427
      %2429 = vmatmul.bf16.gmra.mxu0 %v2317
      %v2430 = vpop.f32.mrf.mxu0
      %v2431 = vadd.f32 %v2198, %v2430
      %v2432 = vpop.f32.mrf.mxu0
      %v2433 = vadd.f32 %v2200, %v2432
      %2434 = vmatmul.bf16.gmra.mxu0 %v2318
      %v2435 = vpop.f32.mrf.mxu0
      %v2436 = vadd.f32 %v2203, %v2435
      %v2437 = vpop.f32.mrf.mxu0
      %v2438 = vadd.f32 %v2205, %v2437
      %2439 = vmatmul.bf16.gmra.mxu0 %v2319
      %v2440 = vpop.f32.mrf.mxu0
      %v2441 = vadd.f32 %v2208, %v2440
      %v2442 = vpop.f32.mrf.mxu0
      %v2443 = vadd.f32 %v2210, %v2442
      %2444 = vmatmul.bf16.gmra.mxu0 %v2320
      %v2445 = vpop.f32.mrf.mxu0
      %v2446 = vadd.f32 %v2213, %v2445
      %v2447 = vpop.f32.mrf.mxu0
      %v2448 = vadd.f32 %v2215, %v2447
      %2449 = vmatmul.bf16.gmra.mxu0 %v2321
      %v2450 = vpop.f32.mrf.mxu0
      %v2451 = vadd.f32 %v2218, %v2450
      %v2452 = vpop.f32.mrf.mxu0
      %v2453 = vadd.f32 %v2220, %v2452
      %2454 = vmatmul.bf16.gmra.mxu0 %v2322
      %v2455 = vpop.f32.mrf.mxu0
      %v2456 = vadd.f32 %v2223, %v2455
      %v2457 = vpop.f32.mrf.mxu0
      %v2458 = vadd.f32 %v2225, %v2457
      %2459 = vmatmul.bf16.gmra.mxu0 %v2323
      %v2460 = vpop.f32.mrf.mxu0
      %v2461 = vadd.f32 %v2228, %v2460
      %v2462 = vpop.f32.mrf.mxu0
      %v2463 = vadd.f32 %v2230, %v2462
      %2464 = vmatmul.bf16.gmra.mxu0 %v2324
      %v2465 = vpop.f32.mrf.mxu0
      %v2466 = vadd.f32 %v2233, %v2465
      %v2467 = vpop.f32.mrf.mxu0
      %v2468 = vadd.f32 %v2235, %v2467
      %2469 = vmatmul.bf16.gmra.mxu0 %v2325
      %v2470 = vpop.f32.mrf.mxu0
      %v2471 = vadd.f32 %v2238, %v2470
      %v2472 = vpop.f32.mrf.mxu0
      %v2473 = vadd.f32 %v2240, %v2472
      %2474 = vmatmul.bf16.gmra.mxu0 %v2326
      %v2475 = vpop.f32.mrf.mxu0
      %v2476 = vadd.f32 %v2243, %v2475
      %v2477 = vpop.f32.mrf.mxu0
      %v2478 = vadd.f32 %v2245, %v2477
      %2479 = vdwg.mxu0
      %s2480 = scalar_lea.vmem %s5, 128
      %v2481 = vld [vmem:[%s2480] sm:$0xf]
      %v2482 = vld [vmem:[%s2480 + $0x4] sm:$0xf]
      %v2483 = vld [vmem:[%s2480 + $0x8] sm:$0xf]
      %v2484 = vld [vmem:[%s2480 + $0xc] sm:$0xf]
      %v2485 = vld [vmem:[%s2480 + $0x10] sm:$0xf]
      %v2486 = vld [vmem:[%s2480 + $0x14] sm:$0xf]
      %v2487 = vld [vmem:[%s2480 + $0x18] sm:$0xf]
      %v2488 = vld [vmem:[%s2480 + $0x1c] sm:$0xf]
      %v2489 = vld [vmem:[%s2480 + $0x20] sm:$0xf]
      %v2490 = vld [vmem:[%s2480 + $0x24] sm:$0xf]
      %v2491 = vld [vmem:[%s2480 + $0x28] sm:$0xf]
      %v2492 = vld [vmem:[%s2480 + $0x2c] sm:$0xf]
      %v2493 = vld [vmem:[%s2480 + $0x30] sm:$0xf]
      %v2494 = vld [vmem:[%s2480 + $0x34] sm:$0xf]
      %v2495 = vld [vmem:[%s2480 + $0x38] sm:$0xf]
      %v2496 = vld [vmem:[%s2480 + $0x3c] sm:$0xf]
      %v2529 = vunpack.c.l.b16 %v1945
      %v2530 = vunpack.c.l.b16 %v1946
      %v2531 = vunpack.c.l.b16 %v1947
      %v2532 = vunpack.c.l.b16 %v1948
      %v2533 = vunpack.c.l.b16 %v1949
      %v2534 = vunpack.c.l.b16 %v1950
      %v2535 = vunpack.c.l.b16 %v1951
      %v2536 = vunpack.c.l.b16 %v1952
      %v2537 = vunpack.c.l.b16 %v1953
      %v2538 = vunpack.c.l.b16 %v1954
      %v2539 = vunpack.c.l.b16 %v1955
      %v2540 = vunpack.c.l.b16 %v1956
      %v2541 = vunpack.c.l.b16 %v1957
      %v2542 = vunpack.c.l.b16 %v1958
      %v2543 = vunpack.c.l.b16 %v1959
      %v2544 = vunpack.c.l.b16 %v1960
      %v2545 = vunpack.c.l.b16 %v1961
      %v2546 = vunpack.c.l.b16 %v1962
      %v2547 = vunpack.c.l.b16 %v1963
      %v2548 = vunpack.c.l.b16 %v1964
      %v2549 = vunpack.c.l.b16 %v1965
      %v2550 = vunpack.c.l.b16 %v1966
      %v2551 = vunpack.c.l.b16 %v1967
      %v2552 = vunpack.c.l.b16 %v1968
      %v2553 = vunpack.c.l.b16 %v1969
      %v2554 = vunpack.c.l.b16 %v1970
      %v2555 = vunpack.c.l.b16 %v1971
      %v2556 = vunpack.c.l.b16 %v1972
      %v2557 = vunpack.c.l.b16 %v1973
      %v2558 = vunpack.c.l.b16 %v1974
      %v2559 = vunpack.c.l.b16 %v1975
      %v2560 = vunpack.c.l.b16 %v1976
      %v2561 = vpack.c.b16 %v2530, %v2529
      %v2562 = vpack.c.b16 %v2532, %v2531
      %v2563 = vpack.c.b16 %v2534, %v2533
      %v2564 = vpack.c.b16 %v2536, %v2535
      %v2565 = vpack.c.b16 %v2538, %v2537
      %v2566 = vpack.c.b16 %v2540, %v2539
      %v2567 = vpack.c.b16 %v2542, %v2541
      %v2568 = vpack.c.b16 %v2544, %v2543
      %v2569 = vpack.c.b16 %v2546, %v2545
      %v2570 = vpack.c.b16 %v2548, %v2547
      %v2571 = vpack.c.b16 %v2550, %v2549
      %v2572 = vpack.c.b16 %v2552, %v2551
      %v2573 = vpack.c.b16 %v2554, %v2553
      %v2574 = vpack.c.b16 %v2556, %v2555
      %v2575 = vpack.c.b16 %v2558, %v2557
      %v2576 = vpack.c.b16 %v2560, %v2559
      %v2609 = vunpack.c.l.b16 %v2481
      %v2610 = vunpack.c.l.b16 %v2482
      %v2611 = vunpack.c.l.b16 %v2483
      %v2612 = vunpack.c.l.b16 %v2484
      %v2613 = vunpack.c.l.b16 %v2485
      %v2614 = vunpack.c.l.b16 %v2486
      %v2615 = vunpack.c.l.b16 %v2487
      %v2616 = vunpack.c.l.b16 %v2488
      %v2617 = vunpack.c.l.b16 %v2489
      %v2618 = vunpack.c.l.b16 %v2490
      %v2619 = vunpack.c.l.b16 %v2491
      %v2620 = vunpack.c.l.b16 %v2492
      %v2621 = vunpack.c.l.b16 %v2493
      %v2622 = vunpack.c.l.b16 %v2494
      %v2623 = vunpack.c.l.b16 %v2495
      %v2624 = vunpack.c.l.b16 %v2496
      %v2625 = vpack.c.b16 %v2610, %v2609
      %v2626 = vpack.c.b16 %v2612, %v2611
      %v2627 = vpack.c.b16 %v2614, %v2613
      %v2628 = vpack.c.b16 %v2616, %v2615
      %v2629 = vpack.c.b16 %v2618, %v2617
      %v2630 = vpack.c.b16 %v2620, %v2619
      %v2631 = vpack.c.b16 %v2622, %v2621
      %v2632 = vpack.c.b16 %v2624, %v2623
      %2641 = vmatpush.bf16.msra.mxu0 %v2632
      %2642 = vmatpush.bf16.msra.mxu0 %v2631
      %2643 = vmatpush.bf16.msra.mxu0 %v2630
      %2644 = vmatpush.bf16.msra.mxu0 %v2629
      %2645 = vmatpush.bf16.msra.mxu0 %v2628
      %2646 = vmatpush.bf16.msra.mxu0 %v2627
      %2647 = vmatpush.bf16.msra.mxu0 %v2626
      %2648 = vmatpush.bf16.msra.mxu0 %v2625
      %2649 = vmatmul.bf16.gmra.mxu0 %v2561
      %v2650 = vpop.f32.mrf.mxu0
      %v2651 = vadd.f32 0.0, %v2650
      %v2652 = vpop.f32.mrf.mxu0
      %v2653 = vadd.f32 0.0, %v2652
      %2654 = vmatmul.bf16.gmra.mxu0 %v2562
      %v2655 = vpop.f32.mrf.mxu0
      %v2656 = vadd.f32 0.0, %v2655
      %v2657 = vpop.f32.mrf.mxu0
      %v2658 = vadd.f32 0.0, %v2657
      %2659 = vmatmul.bf16.gmra.mxu0 %v2563
      %v2660 = vpop.f32.mrf.mxu0
      %v2661 = vadd.f32 0.0, %v2660
      %v2662 = vpop.f32.mrf.mxu0
      %v2663 = vadd.f32 0.0, %v2662
      %2664 = vmatmul.bf16.gmra.mxu0 %v2564
      %v2665 = vpop.f32.mrf.mxu0
      %v2666 = vadd.f32 0.0, %v2665
      %v2667 = vpop.f32.mrf.mxu0
      %v2668 = vadd.f32 0.0, %v2667
      %2669 = vmatmul.bf16.gmra.mxu0 %v2565
      %v2670 = vpop.f32.mrf.mxu0
      %v2671 = vadd.f32 0.0, %v2670
      %v2672 = vpop.f32.mrf.mxu0
      %v2673 = vadd.f32 0.0, %v2672
      %2674 = vmatmul.bf16.gmra.mxu0 %v2566
      %v2675 = vpop.f32.mrf.mxu0
      %v2676 = vadd.f32 0.0, %v2675
      %v2677 = vpop.f32.mrf.mxu0
      %v2678 = vadd.f32 0.0, %v2677
      %2679 = vmatmul.bf16.gmra.mxu0 %v2567
      %v2680 = vpop.f32.mrf.mxu0
      %v2681 = vadd.f32 0.0, %v2680
      %v2682 = vpop.f32.mrf.mxu0
      %v2683 = vadd.f32 0.0, %v2682
      %2684 = vmatmul.bf16.gmra.mxu0 %v2568
      %v2685 = vpop.f32.mrf.mxu0
      %v2686 = vadd.f32 0.0, %v2685
      %v2687 = vpop.f32.mrf.mxu0
      %v2688 = vadd.f32 0.0, %v2687
      %2689 = vmatmul.bf16.gmra.mxu0 %v2569
      %v2690 = vpop.f32.mrf.mxu0
      %v2691 = vadd.f32 0.0, %v2690
      %v2692 = vpop.f32.mrf.mxu0
      %v2693 = vadd.f32 0.0, %v2692
      %2694 = vmatmul.bf16.gmra.mxu0 %v2570
      %v2695 = vpop.f32.mrf.mxu0
      %v2696 = vadd.f32 0.0, %v2695
      %v2697 = vpop.f32.mrf.mxu0
      %v2698 = vadd.f32 0.0, %v2697
      %2699 = vmatmul.bf16.gmra.mxu0 %v2571
      %v2700 = vpop.f32.mrf.mxu0
      %v2701 = vadd.f32 0.0, %v2700
      %v2702 = vpop.f32.mrf.mxu0
      %v2703 = vadd.f32 0.0, %v2702
      %2704 = vmatmul.bf16.gmra.mxu0 %v2572
      %v2705 = vpop.f32.mrf.mxu0
      %v2706 = vadd.f32 0.0, %v2705
      %v2707 = vpop.f32.mrf.mxu0
      %v2708 = vadd.f32 0.0, %v2707
      %2709 = vmatmul.bf16.gmra.mxu0 %v2573
      %v2710 = vpop.f32.mrf.mxu0
      %v2711 = vadd.f32 0.0, %v2710
      %v2712 = vpop.f32.mrf.mxu0
      %v2713 = vadd.f32 0.0, %v2712
      %2714 = vmatmul.bf16.gmra.mxu0 %v2574
      %v2715 = vpop.f32.mrf.mxu0
      %v2716 = vadd.f32 0.0, %v2715
      %v2717 = vpop.f32.mrf.mxu0
      %v2718 = vadd.f32 0.0, %v2717
      %2719 = vmatmul.bf16.gmra.mxu0 %v2575
      %v2720 = vpop.f32.mrf.mxu0
      %v2721 = vadd.f32 0.0, %v2720
      %v2722 = vpop.f32.mrf.mxu0
      %v2723 = vadd.f32 0.0, %v2722
      %2724 = vmatmul.bf16.gmra.mxu0 %v2576
      %v2725 = vpop.f32.mrf.mxu0
      %v2726 = vadd.f32 0.0, %v2725
      %v2727 = vpop.f32.mrf.mxu0
      %v2728 = vadd.f32 0.0, %v2727
      %2729 = vdwg.mxu0
      %v2730 = vadd.f32 %v2401, %v2651
      %v2731 = vadd.f32 %v2403, %v2653
      %v2732 = vadd.f32 %v2406, %v2656
      %v2733 = vadd.f32 %v2408, %v2658
      %v2734 = vadd.f32 %v2411, %v2661
      %v2735 = vadd.f32 %v2413, %v2663
      %v2736 = vadd.f32 %v2416, %v2666
      %v2737 = vadd.f32 %v2418, %v2668
      %v2738 = vadd.f32 %v2421, %v2671
      %v2739 = vadd.f32 %v2423, %v2673
      %v2740 = vadd.f32 %v2426, %v2676
      %v2741 = vadd.f32 %v2428, %v2678
      %v2742 = vadd.f32 %v2431, %v2681
      %v2743 = vadd.f32 %v2433, %v2683
      %v2744 = vadd.f32 %v2436, %v2686
      %v2745 = vadd.f32 %v2438, %v2688
      %v2746 = vadd.f32 %v2441, %v2691
      %v2747 = vadd.f32 %v2443, %v2693
      %v2748 = vadd.f32 %v2446, %v2696
      %v2749 = vadd.f32 %v2448, %v2698
      %v2750 = vadd.f32 %v2451, %v2701
      %v2751 = vadd.f32 %v2453, %v2703
      %v2752 = vadd.f32 %v2456, %v2706
      %v2753 = vadd.f32 %v2458, %v2708
      %v2754 = vadd.f32 %v2461, %v2711
      %v2755 = vadd.f32 %v2463, %v2713
      %v2756 = vadd.f32 %v2466, %v2716
      %v2757 = vadd.f32 %v2468, %v2718
      %v2758 = vadd.f32 %v2471, %v2721
      %v2759 = vadd.f32 %v2473, %v2723
      %v2760 = vadd.f32 %v2476, %v2726
      %v2761 = vadd.f32 %v2478, %v2728
      %s2762 = scalar_lea.vmem %s5, 192
      %v2763 = vld [vmem:[%s2762] sm:$0xf]
      %v2764 = vld [vmem:[%s2762 + $0x4] sm:$0xf]
      %v2765 = vld [vmem:[%s2762 + $0x8] sm:$0xf]
      %v2766 = vld [vmem:[%s2762 + $0xc] sm:$0xf]
      %v2767 = vld [vmem:[%s2762 + $0x10] sm:$0xf]
      %v2768 = vld [vmem:[%s2762 + $0x14] sm:$0xf]
      %v2769 = vld [vmem:[%s2762 + $0x18] sm:$0xf]
      %v2770 = vld [vmem:[%s2762 + $0x1c] sm:$0xf]
      %v2771 = vld [vmem:[%s2762 + $0x20] sm:$0xf]
      %v2772 = vld [vmem:[%s2762 + $0x24] sm:$0xf]
      %v2773 = vld [vmem:[%s2762 + $0x28] sm:$0xf]
      %v2774 = vld [vmem:[%s2762 + $0x2c] sm:$0xf]
      %v2775 = vld [vmem:[%s2762 + $0x30] sm:$0xf]
      %v2776 = vld [vmem:[%s2762 + $0x34] sm:$0xf]
      %v2777 = vld [vmem:[%s2762 + $0x38] sm:$0xf]
      %v2778 = vld [vmem:[%s2762 + $0x3c] sm:$0xf]
      %v2781 = vunpack.c.l.b16 %v1941
      %v2782 = vunpack.c.l.b16 %v1942
      %v2783 = vpack.c.b16 %v2782, %v2781
      %v2801 = vunpack.c.l.b16 %v2763
      %v2802 = vunpack.c.l.b16 %v2764
      %v2803 = vunpack.c.l.b16 %v2765
      %v2804 = vunpack.c.l.b16 %v2766
      %v2805 = vunpack.c.l.b16 %v2767
      %v2806 = vunpack.c.l.b16 %v2768
      %v2807 = vunpack.c.l.b16 %v2769
      %v2808 = vunpack.c.l.b16 %v2770
      %v2809 = vunpack.c.l.b16 %v2771
      %v2810 = vunpack.c.l.b16 %v2772
      %v2811 = vunpack.c.l.b16 %v2773
      %v2812 = vunpack.c.l.b16 %v2774
      %v2813 = vunpack.c.l.b16 %v2775
      %v2814 = vunpack.c.l.b16 %v2776
      %v2815 = vunpack.c.l.b16 %v2777
      %v2816 = vunpack.c.l.b16 %v2778
      %v2817 = vpack.c.b16 %v2802, %v2801
      %v2818 = vpack.c.b16 %v2804, %v2803
      %v2819 = vpack.c.b16 %v2806, %v2805
      %v2820 = vpack.c.b16 %v2808, %v2807
      %v2821 = vpack.c.b16 %v2810, %v2809
      %v2822 = vpack.c.b16 %v2812, %v2811
      %v2823 = vpack.c.b16 %v2814, %v2813
      %v2824 = vpack.c.b16 %v2816, %v2815
      %2833 = vmatpush.bf16.msra.mxu0 %v2824
      %2834 = vmatpush.bf16.msra.mxu0 %v2823
      %2835 = vmatpush.bf16.msra.mxu0 %v2822
      %2836 = vmatpush.bf16.msra.mxu0 %v2821
      %2837 = vmatpush.bf16.msra.mxu0 %v2820
      %2838 = vmatpush.bf16.msra.mxu0 %v2819
      %2839 = vmatpush.bf16.msra.mxu0 %v2818
      %2840 = vmatpush.bf16.msra.mxu0 %v2817
      %2841 = vmatmul.bf16.gmra.mxu0 %v2312
      %v2842 = vpop.f32.mrf.mxu0
      %v2843 = vadd.f32 0.0, %v2842
      %v2844 = vpop.f32.mrf.mxu0
      %v2845 = vadd.f32 0.0, %v2844
      %2846 = vmatmul.bf16.gmra.mxu0 %v2313
      %v2847 = vpop.f32.mrf.mxu0
      %v2848 = vadd.f32 0.0, %v2847
      %v2849 = vpop.f32.mrf.mxu0
      %v2850 = vadd.f32 0.0, %v2849
      %2851 = vmatmul.bf16.gmra.mxu0 %v2314
      %v2852 = vpop.f32.mrf.mxu0
      %v2853 = vadd.f32 0.0, %v2852
      %v2854 = vpop.f32.mrf.mxu0
      %v2855 = vadd.f32 0.0, %v2854
      %2856 = vmatmul.bf16.gmra.mxu0 %v2315
      %v2857 = vpop.f32.mrf.mxu0
      %v2858 = vadd.f32 0.0, %v2857
      %v2859 = vpop.f32.mrf.mxu0
      %v2860 = vadd.f32 0.0, %v2859
      %2861 = vmatmul.bf16.gmra.mxu0 %v2316
      %v2862 = vpop.f32.mrf.mxu0
      %v2863 = vadd.f32 0.0, %v2862
      %v2864 = vpop.f32.mrf.mxu0
      %v2865 = vadd.f32 0.0, %v2864
      %2866 = vmatmul.bf16.gmra.mxu0 %v2317
      %v2867 = vpop.f32.mrf.mxu0
      %v2868 = vadd.f32 0.0, %v2867
      %v2869 = vpop.f32.mrf.mxu0
      %v2870 = vadd.f32 0.0, %v2869
      %2871 = vmatmul.bf16.gmra.mxu0 %v2318
      %v2872 = vpop.f32.mrf.mxu0
      %v2873 = vadd.f32 0.0, %v2872
      %v2874 = vpop.f32.mrf.mxu0
      %v2875 = vadd.f32 0.0, %v2874
      %2876 = vmatmul.bf16.gmra.mxu0 %v2319
      %v2877 = vpop.f32.mrf.mxu0
      %v2878 = vadd.f32 0.0, %v2877
      %v2879 = vpop.f32.mrf.mxu0
      %v2880 = vadd.f32 0.0, %v2879
      %2881 = vmatmul.bf16.gmra.mxu0 %v2320
      %v2882 = vpop.f32.mrf.mxu0
      %v2883 = vadd.f32 0.0, %v2882
      %v2884 = vpop.f32.mrf.mxu0
      %v2885 = vadd.f32 0.0, %v2884
      %2886 = vmatmul.bf16.gmra.mxu0 %v2321
      %v2887 = vpop.f32.mrf.mxu0
      %v2888 = vadd.f32 0.0, %v2887
      %v2889 = vpop.f32.mrf.mxu0
      %v2890 = vadd.f32 0.0, %v2889
      %2891 = vmatmul.bf16.gmra.mxu0 %v2322
      %v2892 = vpop.f32.mrf.mxu0
      %v2893 = vadd.f32 0.0, %v2892
      %v2894 = vpop.f32.mrf.mxu0
      %v2895 = vadd.f32 0.0, %v2894
      %2896 = vmatmul.bf16.gmra.mxu0 %v2323
      %v2897 = vpop.f32.mrf.mxu0
      %v2898 = vadd.f32 0.0, %v2897
      %v2899 = vpop.f32.mrf.mxu0
      %v2900 = vadd.f32 0.0, %v2899
      %2901 = vmatmul.bf16.gmra.mxu0 %v2324
      %v2902 = vpop.f32.mrf.mxu0
      %v2903 = vadd.f32 0.0, %v2902
      %v2904 = vpop.f32.mrf.mxu0
      %v2905 = vadd.f32 0.0, %v2904
      %2906 = vmatmul.bf16.gmra.mxu0 %v2325
      %v2907 = vpop.f32.mrf.mxu0
      %v2908 = vadd.f32 0.0, %v2907
      %v2909 = vpop.f32.mrf.mxu0
      %v2910 = vadd.f32 0.0, %v2909
      %2911 = vmatmul.bf16.gmra.mxu0 %v2326
      %v2912 = vpop.f32.mrf.mxu0
      %v2913 = vadd.f32 0.0, %v2912
      %v2914 = vpop.f32.mrf.mxu0
      %v2915 = vadd.f32 0.0, %v2914
      %2916 = vmatmul.bf16.gmra.mxu0 %v2783
      %v2917 = vpop.f32.mrf.mxu0
      %v2918 = vadd.f32 0.0, %v2917
      %v2919 = vpop.f32.mrf.mxu0
      %v2920 = vadd.f32 0.0, %v2919
      %2921 = vdwg.mxu0
      %v2922 = vadd.f32 %v2730, %v2843
      %v2923 = vadd.f32 %v2731, %v2845
      %v2924 = vadd.f32 %v2732, %v2848
      %v2925 = vadd.f32 %v2733, %v2850
      %v2926 = vadd.f32 %v2734, %v2853
      %v2927 = vadd.f32 %v2735, %v2855
      %v2928 = vadd.f32 %v2736, %v2858
      %v2929 = vadd.f32 %v2737, %v2860
      %v2930 = vadd.f32 %v2738, %v2863
      %v2931 = vadd.f32 %v2739, %v2865
      %v2932 = vadd.f32 %v2740, %v2868
      %v2933 = vadd.f32 %v2741, %v2870
      %v2934 = vadd.f32 %v2742, %v2873
      %v2935 = vadd.f32 %v2743, %v2875
      %v2936 = vadd.f32 %v2744, %v2878
      %v2937 = vadd.f32 %v2745, %v2880
      %v2938 = vadd.f32 %v2746, %v2883
      %v2939 = vadd.f32 %v2747, %v2885
      %v2940 = vadd.f32 %v2748, %v2888
      %v2941 = vadd.f32 %v2749, %v2890
      %v2942 = vadd.f32 %v2750, %v2893
      %v2943 = vadd.f32 %v2751, %v2895
      %v2944 = vadd.f32 %v2752, %v2898
      %v2945 = vadd.f32 %v2753, %v2900
      %v2946 = vadd.f32 %v2754, %v2903
      %v2947 = vadd.f32 %v2755, %v2905
      %v2948 = vadd.f32 %v2756, %v2908
      %v2949 = vadd.f32 %v2757, %v2910
      %v2950 = vadd.f32 %v2758, %v2913
      %v2951 = vadd.f32 %v2759, %v2915
      %v2952 = vadd.f32 %v2760, %v2918
      %v2953 = vadd.f32 %v2761, %v2920
      %s2954 = scalar_lea.vmem %s5, 256
      %v2955 = vld [vmem:[%s2954] sm:$0xf]
      %v2956 = vld [vmem:[%s2954 + $0x4] sm:$0xf]
      %v2957 = vld [vmem:[%s2954 + $0x8] sm:$0xf]
      %v2958 = vld [vmem:[%s2954 + $0xc] sm:$0xf]
      %v2959 = vld [vmem:[%s2954 + $0x10] sm:$0xf]
      %v2960 = vld [vmem:[%s2954 + $0x14] sm:$0xf]
      %v2961 = vld [vmem:[%s2954 + $0x18] sm:$0xf]
      %v2962 = vld [vmem:[%s2954 + $0x1c] sm:$0xf]
      %v2963 = vld [vmem:[%s2954 + $0x20] sm:$0xf]
      %v2964 = vld [vmem:[%s2954 + $0x24] sm:$0xf]
      %v2965 = vld [vmem:[%s2954 + $0x28] sm:$0xf]
      %v2966 = vld [vmem:[%s2954 + $0x2c] sm:$0xf]
      %v2967 = vld [vmem:[%s2954 + $0x30] sm:$0xf]
      %v2968 = vld [vmem:[%s2954 + $0x34] sm:$0xf]
      %v2969 = vld [vmem:[%s2954 + $0x38] sm:$0xf]
      %v2970 = vld [vmem:[%s2954 + $0x3c] sm:$0xf]
      %v2973 = vunpack.c.l.b16 %v1905
      %v2974 = vunpack.c.l.b16 %v1906
      %v2975 = vpack.c.b16 %v2974, %v2973
      %v2993 = vunpack.c.l.b16 %v2955
      %v2994 = vunpack.c.l.b16 %v2956
      %v2995 = vunpack.c.l.b16 %v2957
      %v2996 = vunpack.c.l.b16 %v2958
      %v2997 = vunpack.c.l.b16 %v2959
      %v2998 = vunpack.c.l.b16 %v2960
      %v2999 = vunpack.c.l.b16 %v2961
      %v3000 = vunpack.c.l.b16 %v2962
      %v3001 = vunpack.c.l.b16 %v2963
      %v3002 = vunpack.c.l.b16 %v2964
      %v3003 = vunpack.c.l.b16 %v2965
      %v3004 = vunpack.c.l.b16 %v2966
      %v3005 = vunpack.c.l.b16 %v2967
      %v3006 = vunpack.c.l.b16 %v2968
      %v3007 = vunpack.c.l.b16 %v2969
      %v3008 = vunpack.c.l.b16 %v2970
      %v3009 = vpack.c.b16 %v2994, %v2993
      %v3010 = vpack.c.b16 %v2996, %v2995
      %v3011 = vpack.c.b16 %v2998, %v2997
      %v3012 = vpack.c.b16 %v3000, %v2999
      %v3013 = vpack.c.b16 %v3002, %v3001
      %v3014 = vpack.c.b16 %v3004, %v3003
      %v3015 = vpack.c.b16 %v3006, %v3005
      %v3016 = vpack.c.b16 %v3008, %v3007
      %3025 = vmatpush.bf16.msra.mxu0 %v3016
      %3026 = vmatpush.bf16.msra.mxu0 %v3015
      %3027 = vmatpush.bf16.msra.mxu0 %v3014
      %3028 = vmatpush.bf16.msra.mxu0 %v3013
      %3029 = vmatpush.bf16.msra.mxu0 %v3012
      %3030 = vmatpush.bf16.msra.mxu0 %v3011
      %3031 = vmatpush.bf16.msra.mxu0 %v3010
      %3032 = vmatpush.bf16.msra.mxu0 %v3009
      %3033 = vmatmul.bf16.gmra.mxu0 %v2079
      %v3034 = vpop.f32.mrf.mxu0
      %v3035 = vadd.f32 0.0, %v3034
      %v3036 = vpop.f32.mrf.mxu0
      %v3037 = vadd.f32 0.0, %v3036
      %3038 = vmatmul.bf16.gmra.mxu0 %v2080
      %v3039 = vpop.f32.mrf.mxu0
      %v3040 = vadd.f32 0.0, %v3039
      %v3041 = vpop.f32.mrf.mxu0
      %v3042 = vadd.f32 0.0, %v3041
      %3043 = vmatmul.bf16.gmra.mxu0 %v2081
      %v3044 = vpop.f32.mrf.mxu0
      %v3045 = vadd.f32 0.0, %v3044
      %v3046 = vpop.f32.mrf.mxu0
      %v3047 = vadd.f32 0.0, %v3046
      %3048 = vmatmul.bf16.gmra.mxu0 %v2082
      %v3049 = vpop.f32.mrf.mxu0
      %v3050 = vadd.f32 0.0, %v3049
      %v3051 = vpop.f32.mrf.mxu0
      %v3052 = vadd.f32 0.0, %v3051
      %3053 = vmatmul.bf16.gmra.mxu0 %v2083
      %v3054 = vpop.f32.mrf.mxu0
      %v3055 = vadd.f32 0.0, %v3054
      %v3056 = vpop.f32.mrf.mxu0
      %v3057 = vadd.f32 0.0, %v3056
      %3058 = vmatmul.bf16.gmra.mxu0 %v2084
      %v3059 = vpop.f32.mrf.mxu0
      %v3060 = vadd.f32 0.0, %v3059
      %v3061 = vpop.f32.mrf.mxu0
      %v3062 = vadd.f32 0.0, %v3061
      %3063 = vmatmul.bf16.gmra.mxu0 %v2085
      %v3064 = vpop.f32.mrf.mxu0
      %v3065 = vadd.f32 0.0, %v3064
      %v3066 = vpop.f32.mrf.mxu0
      %v3067 = vadd.f32 0.0, %v3066
      %3068 = vmatmul.bf16.gmra.mxu0 %v2086
      %v3069 = vpop.f32.mrf.mxu0
      %v3070 = vadd.f32 0.0, %v3069
      %v3071 = vpop.f32.mrf.mxu0
      %v3072 = vadd.f32 0.0, %v3071
      %3073 = vmatmul.bf16.gmra.mxu0 %v2087
      %v3074 = vpop.f32.mrf.mxu0
      %v3075 = vadd.f32 0.0, %v3074
      %v3076 = vpop.f32.mrf.mxu0
      %v3077 = vadd.f32 0.0, %v3076
      %3078 = vmatmul.bf16.gmra.mxu0 %v2088
      %v3079 = vpop.f32.mrf.mxu0
      %v3080 = vadd.f32 0.0, %v3079
      %v3081 = vpop.f32.mrf.mxu0
      %v3082 = vadd.f32 0.0, %v3081
      %3083 = vmatmul.bf16.gmra.mxu0 %v2089
      %v3084 = vpop.f32.mrf.mxu0
      %v3085 = vadd.f32 0.0, %v3084
      %v3086 = vpop.f32.mrf.mxu0
      %v3087 = vadd.f32 0.0, %v3086
      %3088 = vmatmul.bf16.gmra.mxu0 %v2090
      %v3089 = vpop.f32.mrf.mxu0
      %v3090 = vadd.f32 0.0, %v3089
      %v3091 = vpop.f32.mrf.mxu0
      %v3092 = vadd.f32 0.0, %v3091
      %3093 = vmatmul.bf16.gmra.mxu0 %v2091
      %v3094 = vpop.f32.mrf.mxu0
      %v3095 = vadd.f32 0.0, %v3094
      %v3096 = vpop.f32.mrf.mxu0
      %v3097 = vadd.f32 0.0, %v3096
      %3098 = vmatmul.bf16.gmra.mxu0 %v2092
      %v3099 = vpop.f32.mrf.mxu0
      %v3100 = vadd.f32 0.0, %v3099
      %v3101 = vpop.f32.mrf.mxu0
      %v3102 = vadd.f32 0.0, %v3101
      %3103 = vmatmul.bf16.gmra.mxu0 %v2093
      %v3104 = vpop.f32.mrf.mxu0
      %v3105 = vadd.f32 0.0, %v3104
      %v3106 = vpop.f32.mrf.mxu0
      %v3107 = vadd.f32 0.0, %v3106
      %3108 = vmatmul.bf16.gmra.mxu0 %v2975
      %v3109 = vpop.f32.mrf.mxu0
      %v3110 = vadd.f32 0.0, %v3109
      %v3111 = vpop.f32.mrf.mxu0
      %v3112 = vadd.f32 0.0, %v3111
      %3113 = vdwg.mxu0
      %v3114 = vadd.f32 %v2922, %v3035
      %v3115 = vadd.f32 %v2923, %v3037
      %v3116 = vadd.f32 %v2924, %v3040
      %v3117 = vadd.f32 %v2925, %v3042
      %v3118 = vadd.f32 %v2926, %v3045
      %v3119 = vadd.f32 %v2927, %v3047
      %v3120 = vadd.f32 %v2928, %v3050
      %v3121 = vadd.f32 %v2929, %v3052
      %v3122 = vadd.f32 %v2930, %v3055
      %v3123 = vadd.f32 %v2931, %v3057
      %v3124 = vadd.f32 %v2932, %v3060
      %v3125 = vadd.f32 %v2933, %v3062
      %v3126 = vadd.f32 %v2934, %v3065
      %v3127 = vadd.f32 %v2935, %v3067
      %v3128 = vadd.f32 %v2936, %v3070
      %v3129 = vadd.f32 %v2937, %v3072
      %v3130 = vadd.f32 %v2938, %v3075
      %v3131 = vadd.f32 %v2939, %v3077
      %v3132 = vadd.f32 %v2940, %v3080
      %v3133 = vadd.f32 %v2941, %v3082
      %v3134 = vadd.f32 %v2942, %v3085
      %v3135 = vadd.f32 %v2943, %v3087
      %v3136 = vadd.f32 %v2944, %v3090
      %v3137 = vadd.f32 %v2945, %v3092
      %v3138 = vadd.f32 %v2946, %v3095
      %v3139 = vadd.f32 %v2947, %v3097
      %v3140 = vadd.f32 %v2948, %v3100
      %v3141 = vadd.f32 %v2949, %v3102
      %v3142 = vadd.f32 %v2950, %v3105
      %v3143 = vadd.f32 %v2951, %v3107
      %v3144 = vadd.f32 %v2952, %v3110
      %v3145 = vadd.f32 %v2953, %v3112
      %s3146 = scalar_lea.vmem %s5, 320
      %v3147 = vld [vmem:[%s3146] sm:$0xf]
      %v3148 = vld [vmem:[%s3146 + $0x4] sm:$0xf]
      %v3149 = vld [vmem:[%s3146 + $0x8] sm:$0xf]
      %v3150 = vld [vmem:[%s3146 + $0xc] sm:$0xf]
      %v3151 = vld [vmem:[%s3146 + $0x10] sm:$0xf]
      %v3152 = vld [vmem:[%s3146 + $0x14] sm:$0xf]
      %v3153 = vld [vmem:[%s3146 + $0x18] sm:$0xf]
      %v3154 = vld [vmem:[%s3146 + $0x1c] sm:$0xf]
      %v3155 = vld [vmem:[%s3146 + $0x20] sm:$0xf]
      %v3156 = vld [vmem:[%s3146 + $0x24] sm:$0xf]
      %v3157 = vld [vmem:[%s3146 + $0x28] sm:$0xf]
      %v3158 = vld [vmem:[%s3146 + $0x2c] sm:$0xf]
      %v3159 = vld [vmem:[%s3146 + $0x30] sm:$0xf]
      %v3160 = vld [vmem:[%s3146 + $0x34] sm:$0xf]
      %v3161 = vld [vmem:[%s3146 + $0x38] sm:$0xf]
      %v3162 = vld [vmem:[%s3146 + $0x3c] sm:$0xf]
      %v3165 = vunpack.c.l.b16 %v1977
      %v3166 = vunpack.c.l.b16 %v1978
      %v3167 = vpack.c.b16 %v3166, %v3165
      %v3185 = vunpack.c.l.b16 %v3147
      %v3186 = vunpack.c.l.b16 %v3148
      %v3187 = vunpack.c.l.b16 %v3149
      %v3188 = vunpack.c.l.b16 %v3150
      %v3189 = vunpack.c.l.b16 %v3151
      %v3190 = vunpack.c.l.b16 %v3152
      %v3191 = vunpack.c.l.b16 %v3153
      %v3192 = vunpack.c.l.b16 %v3154
      %v3193 = vunpack.c.l.b16 %v3155
      %v3194 = vunpack.c.l.b16 %v3156
      %v3195 = vunpack.c.l.b16 %v3157
      %v3196 = vunpack.c.l.b16 %v3158
      %v3197 = vunpack.c.l.b16 %v3159
      %v3198 = vunpack.c.l.b16 %v3160
      %v3199 = vunpack.c.l.b16 %v3161
      %v3200 = vunpack.c.l.b16 %v3162
      %v3201 = vpack.c.b16 %v3186, %v3185
      %v3202 = vpack.c.b16 %v3188, %v3187
      %v3203 = vpack.c.b16 %v3190, %v3189
      %v3204 = vpack.c.b16 %v3192, %v3191
      %v3205 = vpack.c.b16 %v3194, %v3193
      %v3206 = vpack.c.b16 %v3196, %v3195
      %v3207 = vpack.c.b16 %v3198, %v3197
      %v3208 = vpack.c.b16 %v3200, %v3199
      %3217 = vmatpush.bf16.msra.mxu0 %v3208
      %3218 = vmatpush.bf16.msra.mxu0 %v3207
      %3219 = vmatpush.bf16.msra.mxu0 %v3206
      %3220 = vmatpush.bf16.msra.mxu0 %v3205
      %3221 = vmatpush.bf16.msra.mxu0 %v3204
      %3222 = vmatpush.bf16.msra.mxu0 %v3203
      %3223 = vmatpush.bf16.msra.mxu0 %v3202
      %3224 = vmatpush.bf16.msra.mxu0 %v3201
      %3225 = vmatmul.bf16.gmra.mxu0 %v2562
      %v3226 = vpop.f32.mrf.mxu0
      %v3227 = vadd.f32 0.0, %v3226
      %v3228 = vpop.f32.mrf.mxu0
      %v3229 = vadd.f32 0.0, %v3228
      %3230 = vmatmul.bf16.gmra.mxu0 %v2563
      %v3231 = vpop.f32.mrf.mxu0
      %v3232 = vadd.f32 0.0, %v3231
      %v3233 = vpop.f32.mrf.mxu0
      %v3234 = vadd.f32 0.0, %v3233
      %3235 = vmatmul.bf16.gmra.mxu0 %v2564
      %v3236 = vpop.f32.mrf.mxu0
      %v3237 = vadd.f32 0.0, %v3236
      %v3238 = vpop.f32.mrf.mxu0
      %v3239 = vadd.f32 0.0, %v3238
      %3240 = vmatmul.bf16.gmra.mxu0 %v2565
      %v3241 = vpop.f32.mrf.mxu0
      %v3242 = vadd.f32 0.0, %v3241
      %v3243 = vpop.f32.mrf.mxu0
      %v3244 = vadd.f32 0.0, %v3243
      %3245 = vmatmul.bf16.gmra.mxu0 %v2566
      %v3246 = vpop.f32.mrf.mxu0
      %v3247 = vadd.f32 0.0, %v3246
      %v3248 = vpop.f32.mrf.mxu0
      %v3249 = vadd.f32 0.0, %v3248
      %3250 = vmatmul.bf16.gmra.mxu0 %v2567
      %v3251 = vpop.f32.mrf.mxu0
      %v3252 = vadd.f32 0.0, %v3251
      %v3253 = vpop.f32.mrf.mxu0
      %v3254 = vadd.f32 0.0, %v3253
      %3255 = vmatmul.bf16.gmra.mxu0 %v2568
      %v3256 = vpop.f32.mrf.mxu0
      %v3257 = vadd.f32 0.0, %v3256
      %v3258 = vpop.f32.mrf.mxu0
      %v3259 = vadd.f32 0.0, %v3258
      %3260 = vmatmul.bf16.gmra.mxu0 %v2569
      %v3261 = vpop.f32.mrf.mxu0
      %v3262 = vadd.f32 0.0, %v3261
      %v3263 = vpop.f32.mrf.mxu0
      %v3264 = vadd.f32 0.0, %v3263
      %3265 = vmatmul.bf16.gmra.mxu0 %v2570
      %v3266 = vpop.f32.mrf.mxu0
      %v3267 = vadd.f32 0.0, %v3266
      %v3268 = vpop.f32.mrf.mxu0
      %v3269 = vadd.f32 0.0, %v3268
      %3270 = vmatmul.bf16.gmra.mxu0 %v2571
      %v3271 = vpop.f32.mrf.mxu0
      %v3272 = vadd.f32 0.0, %v3271
      %v3273 = vpop.f32.mrf.mxu0
      %v3274 = vadd.f32 0.0, %v3273
      %3275 = vmatmul.bf16.gmra.mxu0 %v2572
      %v3276 = vpop.f32.mrf.mxu0
      %v3277 = vadd.f32 0.0, %v3276
      %v3278 = vpop.f32.mrf.mxu0
      %v3279 = vadd.f32 0.0, %v3278
      %3280 = vmatmul.bf16.gmra.mxu0 %v2573
      %v3281 = vpop.f32.mrf.mxu0
      %v3282 = vadd.f32 0.0, %v3281
      %v3283 = vpop.f32.mrf.mxu0
      %v3284 = vadd.f32 0.0, %v3283
      %3285 = vmatmul.bf16.gmra.mxu0 %v2574
      %v3286 = vpop.f32.mrf.mxu0
      %v3287 = vadd.f32 0.0, %v3286
      %v3288 = vpop.f32.mrf.mxu0
      %v3289 = vadd.f32 0.0, %v3288
      %3290 = vmatmul.bf16.gmra.mxu0 %v2575
      %v3291 = vpop.f32.mrf.mxu0
      %v3292 = vadd.f32 0.0, %v3291
      %v3293 = vpop.f32.mrf.mxu0
      %v3294 = vadd.f32 0.0, %v3293
      %3295 = vmatmul.bf16.gmra.mxu0 %v2576
      %v3296 = vpop.f32.mrf.mxu0
      %v3297 = vadd.f32 0.0, %v3296
      %v3298 = vpop.f32.mrf.mxu0
      %v3299 = vadd.f32 0.0, %v3298
      %3300 = vmatmul.bf16.gmra.mxu0 %v3167
      %v3301 = vpop.f32.mrf.mxu0
      %v3302 = vadd.f32 0.0, %v3301
      %v3303 = vpop.f32.mrf.mxu0
      %v3304 = vadd.f32 0.0, %v3303
      %3305 = vdwg.mxu0
      %v3306 = vadd.f32 %v3114, %v3227
      %v3307 = vadd.f32 %v3115, %v3229
      %v3308 = vadd.f32 %v3116, %v3232
      %v3309 = vadd.f32 %v3117, %v3234
      %v3310 = vadd.f32 %v3118, %v3237
      %v3311 = vadd.f32 %v3119, %v3239
      %v3312 = vadd.f32 %v3120, %v3242
      %v3313 = vadd.f32 %v3121, %v3244
      %v3314 = vadd.f32 %v3122, %v3247
      %v3315 = vadd.f32 %v3123, %v3249
      %v3316 = vadd.f32 %v3124, %v3252
      %v3317 = vadd.f32 %v3125, %v3254
      %v3318 = vadd.f32 %v3126, %v3257
      %v3319 = vadd.f32 %v3127, %v3259
      %v3320 = vadd.f32 %v3128, %v3262
      %v3321 = vadd.f32 %v3129, %v3264
      %v3322 = vadd.f32 %v3130, %v3267
      %v3323 = vadd.f32 %v3131, %v3269
      %v3324 = vadd.f32 %v3132, %v3272
      %v3325 = vadd.f32 %v3133, %v3274
      %v3326 = vadd.f32 %v3134, %v3277
      %v3327 = vadd.f32 %v3135, %v3279
      %v3328 = vadd.f32 %v3136, %v3282
      %v3329 = vadd.f32 %v3137, %v3284
      %v3330 = vadd.f32 %v3138, %v3287
      %v3331 = vadd.f32 %v3139, %v3289
      %v3332 = vadd.f32 %v3140, %v3292
      %v3333 = vadd.f32 %v3141, %v3294
      %v3334 = vadd.f32 %v3142, %v3297
      %v3335 = vadd.f32 %v3143, %v3299
      %v3336 = vadd.f32 %v3144, %v3302
      %v3337 = vadd.f32 %v3145, %v3304
      %s3338 = scalar_lea.vmem %s5, 384
      %v3339 = vld [vmem:[%s3338] sm:$0xf]
      %v3340 = vld [vmem:[%s3338 + $0x4] sm:$0xf]
      %v3341 = vld [vmem:[%s3338 + $0x8] sm:$0xf]
      %v3342 = vld [vmem:[%s3338 + $0xc] sm:$0xf]
      %v3343 = vld [vmem:[%s3338 + $0x10] sm:$0xf]
      %v3344 = vld [vmem:[%s3338 + $0x14] sm:$0xf]
      %v3345 = vld [vmem:[%s3338 + $0x18] sm:$0xf]
      %v3346 = vld [vmem:[%s3338 + $0x1c] sm:$0xf]
      %v3347 = vld [vmem:[%s3338 + $0x20] sm:$0xf]
      %v3348 = vld [vmem:[%s3338 + $0x24] sm:$0xf]
      %v3349 = vld [vmem:[%s3338 + $0x28] sm:$0xf]
      %v3350 = vld [vmem:[%s3338 + $0x2c] sm:$0xf]
      %v3351 = vld [vmem:[%s3338 + $0x30] sm:$0xf]
      %v3352 = vld [vmem:[%s3338 + $0x34] sm:$0xf]
      %v3353 = vld [vmem:[%s3338 + $0x38] sm:$0xf]
      %v3354 = vld [vmem:[%s3338 + $0x3c] sm:$0xf]
      %v3357 = vunpack.c.l.b16 %v1943
      %v3358 = vunpack.c.l.b16 %v1944
      %v3359 = vpack.c.b16 %v3358, %v3357
      %v3377 = vunpack.c.l.b16 %v3339
      %v3378 = vunpack.c.l.b16 %v3340
      %v3379 = vunpack.c.l.b16 %v3341
      %v3380 = vunpack.c.l.b16 %v3342
      %v3381 = vunpack.c.l.b16 %v3343
      %v3382 = vunpack.c.l.b16 %v3344
      %v3383 = vunpack.c.l.b16 %v3345
      %v3384 = vunpack.c.l.b16 %v3346
      %v3385 = vunpack.c.l.b16 %v3347
      %v3386 = vunpack.c.l.b16 %v3348
      %v3387 = vunpack.c.l.b16 %v3349
      %v3388 = vunpack.c.l.b16 %v3350
      %v3389 = vunpack.c.l.b16 %v3351
      %v3390 = vunpack.c.l.b16 %v3352
      %v3391 = vunpack.c.l.b16 %v3353
      %v3392 = vunpack.c.l.b16 %v3354
      %v3393 = vpack.c.b16 %v3378, %v3377
      %v3394 = vpack.c.b16 %v3380, %v3379
      %v3395 = vpack.c.b16 %v3382, %v3381
      %v3396 = vpack.c.b16 %v3384, %v3383
      %v3397 = vpack.c.b16 %v3386, %v3385
      %v3398 = vpack.c.b16 %v3388, %v3387
      %v3399 = vpack.c.b16 %v3390, %v3389
      %v3400 = vpack.c.b16 %v3392, %v3391
      %3409 = vmatpush.bf16.msra.mxu0 %v3400
      %3410 = vmatpush.bf16.msra.mxu0 %v3399
      %3411 = vmatpush.bf16.msra.mxu0 %v3398
      %3412 = vmatpush.bf16.msra.mxu0 %v3397
      %3413 = vmatpush.bf16.msra.mxu0 %v3396
      %3414 = vmatpush.bf16.msra.mxu0 %v3395
      %3415 = vmatpush.bf16.msra.mxu0 %v3394
      %3416 = vmatpush.bf16.msra.mxu0 %v3393
      %3417 = vmatmul.bf16.gmra.mxu0 %v2313
      %v3418 = vpop.f32.mrf.mxu0
      %v3419 = vadd.f32 0.0, %v3418
      %v3420 = vpop.f32.mrf.mxu0
      %v3421 = vadd.f32 0.0, %v3420
      %3422 = vmatmul.bf16.gmra.mxu0 %v2314
      %v3423 = vpop.f32.mrf.mxu0
      %v3424 = vadd.f32 0.0, %v3423
      %v3425 = vpop.f32.mrf.mxu0
      %v3426 = vadd.f32 0.0, %v3425
      %3427 = vmatmul.bf16.gmra.mxu0 %v2315
      %v3428 = vpop.f32.mrf.mxu0
      %v3429 = vadd.f32 0.0, %v3428
      %v3430 = vpop.f32.mrf.mxu0
      %v3431 = vadd.f32 0.0, %v3430
      %3432 = vmatmul.bf16.gmra.mxu0 %v2316
      %v3433 = vpop.f32.mrf.mxu0
      %v3434 = vadd.f32 0.0, %v3433
      %v3435 = vpop.f32.mrf.mxu0
      %v3436 = vadd.f32 0.0, %v3435
      %3437 = vmatmul.bf16.gmra.mxu0 %v2317
      %v3438 = vpop.f32.mrf.mxu0
      %v3439 = vadd.f32 0.0, %v3438
      %v3440 = vpop.f32.mrf.mxu0
      %v3441 = vadd.f32 0.0, %v3440
      %3442 = vmatmul.bf16.gmra.mxu0 %v2318
      %v3443 = vpop.f32.mrf.mxu0
      %v3444 = vadd.f32 0.0, %v3443
      %v3445 = vpop.f32.mrf.mxu0
      %v3446 = vadd.f32 0.0, %v3445
      %3447 = vmatmul.bf16.gmra.mxu0 %v2319
      %v3448 = vpop.f32.mrf.mxu0
      %v3449 = vadd.f32 0.0, %v3448
      %v3450 = vpop.f32.mrf.mxu0
      %v3451 = vadd.f32 0.0, %v3450
      %3452 = vmatmul.bf16.gmra.mxu0 %v2320
      %v3453 = vpop.f32.mrf.mxu0
      %v3454 = vadd.f32 0.0, %v3453
      %v3455 = vpop.f32.mrf.mxu0
      %v3456 = vadd.f32 0.0, %v3455
      %3457 = vmatmul.bf16.gmra.mxu0 %v2321
      %v3458 = vpop.f32.mrf.mxu0
      %v3459 = vadd.f32 0.0, %v3458
      %v3460 = vpop.f32.mrf.mxu0
      %v3461 = vadd.f32 0.0, %v3460
      %3462 = vmatmul.bf16.gmra.mxu0 %v2322
      %v3463 = vpop.f32.mrf.mxu0
      %v3464 = vadd.f32 0.0, %v3463
      %v3465 = vpop.f32.mrf.mxu0
      %v3466 = vadd.f32 0.0, %v3465
      %3467 = vmatmul.bf16.gmra.mxu0 %v2323
      %v3468 = vpop.f32.mrf.mxu0
      %v3469 = vadd.f32 0.0, %v3468
      %v3470 = vpop.f32.mrf.mxu0
      %v3471 = vadd.f32 0.0, %v3470
      %3472 = vmatmul.bf16.gmra.mxu0 %v2324
      %v3473 = vpop.f32.mrf.mxu0
      %v3474 = vadd.f32 0.0, %v3473
      %v3475 = vpop.f32.mrf.mxu0
      %v3476 = vadd.f32 0.0, %v3475
      %3477 = vmatmul.bf16.gmra.mxu0 %v2325
      %v3478 = vpop.f32.mrf.mxu0
      %v3479 = vadd.f32 0.0, %v3478
      %v3480 = vpop.f32.mrf.mxu0
      %v3481 = vadd.f32 0.0, %v3480
      %3482 = vmatmul.bf16.gmra.mxu0 %v2326
      %v3483 = vpop.f32.mrf.mxu0
      %v3484 = vadd.f32 0.0, %v3483
      %v3485 = vpop.f32.mrf.mxu0
      %v3486 = vadd.f32 0.0, %v3485
      %3487 = vmatmul.bf16.gmra.mxu0 %v2783
      %v3488 = vpop.f32.mrf.mxu0
      %v3489 = vadd.f32 0.0, %v3488
      %v3490 = vpop.f32.mrf.mxu0
      %v3491 = vadd.f32 0.0, %v3490
      %3492 = vmatmul.bf16.gmra.mxu0 %v3359
      %v3493 = vpop.f32.mrf.mxu0
      %v3494 = vadd.f32 0.0, %v3493
      %v3495 = vpop.f32.mrf.mxu0
      %v3496 = vadd.f32 0.0, %v3495
      %3497 = vdwg.mxu0
      %v3498 = vadd.f32 %v3306, %v3419
      %v3499 = vadd.f32 %v3307, %v3421
      %v3500 = vadd.f32 %v3308, %v3424
      %v3501 = vadd.f32 %v3309, %v3426
      %v3502 = vadd.f32 %v3310, %v3429
      %v3503 = vadd.f32 %v3311, %v3431
      %v3504 = vadd.f32 %v3312, %v3434
      %v3505 = vadd.f32 %v3313, %v3436
      %v3506 = vadd.f32 %v3314, %v3439
      %v3507 = vadd.f32 %v3315, %v3441
      %v3508 = vadd.f32 %v3316, %v3444
      %v3509 = vadd.f32 %v3317, %v3446
      %v3510 = vadd.f32 %v3318, %v3449
      %v3511 = vadd.f32 %v3319, %v3451
      %v3512 = vadd.f32 %v3320, %v3454
      %v3513 = vadd.f32 %v3321, %v3456
      %v3514 = vadd.f32 %v3322, %v3459
      %v3515 = vadd.f32 %v3323, %v3461
      %v3516 = vadd.f32 %v3324, %v3464
      %v3517 = vadd.f32 %v3325, %v3466
      %v3518 = vadd.f32 %v3326, %v3469
      %v3519 = vadd.f32 %v3327, %v3471
      %v3520 = vadd.f32 %v3328, %v3474
      %v3521 = vadd.f32 %v3329, %v3476
      %v3522 = vadd.f32 %v3330, %v3479
      %v3523 = vadd.f32 %v3331, %v3481
      %v3524 = vadd.f32 %v3332, %v3484
      %v3525 = vadd.f32 %v3333, %v3486
      %v3526 = vadd.f32 %v3334, %v3489
      %v3527 = vadd.f32 %v3335, %v3491
      %v3528 = vadd.f32 %v3336, %v3494
      %v3529 = vadd.f32 %v3337, %v3496
      %s3530 = scalar_lea.vmem %s5, 448
      %v3531 = vld [vmem:[%s3530] sm:$0xf]
      %v3532 = vld [vmem:[%s3530 + $0x4] sm:$0xf]
      %v3533 = vld [vmem:[%s3530 + $0x8] sm:$0xf]
      %v3534 = vld [vmem:[%s3530 + $0xc] sm:$0xf]
      %v3535 = vld [vmem:[%s3530 + $0x10] sm:$0xf]
      %v3536 = vld [vmem:[%s3530 + $0x14] sm:$0xf]
      %v3537 = vld [vmem:[%s3530 + $0x18] sm:$0xf]
      %v3538 = vld [vmem:[%s3530 + $0x1c] sm:$0xf]
      %v3539 = vld [vmem:[%s3530 + $0x20] sm:$0xf]
      %v3540 = vld [vmem:[%s3530 + $0x24] sm:$0xf]
      %v3541 = vld [vmem:[%s3530 + $0x28] sm:$0xf]
      %v3542 = vld [vmem:[%s3530 + $0x2c] sm:$0xf]
      %v3543 = vld [vmem:[%s3530 + $0x30] sm:$0xf]
      %v3544 = vld [vmem:[%s3530 + $0x34] sm:$0xf]
      %v3545 = vld [vmem:[%s3530 + $0x38] sm:$0xf]
      %v3546 = vld [vmem:[%s3530 + $0x3c] sm:$0xf]
      %v3549 = vunpack.c.l.b16 %v1907
      %v3550 = vunpack.c.l.b16 %v1908
      %v3551 = vpack.c.b16 %v3550, %v3549
      %v3569 = vunpack.c.l.b16 %v3531
      %v3570 = vunpack.c.l.b16 %v3532
      %v3571 = vunpack.c.l.b16 %v3533
      %v3572 = vunpack.c.l.b16 %v3534
      %v3573 = vunpack.c.l.b16 %v3535
      %v3574 = vunpack.c.l.b16 %v3536
      %v3575 = vunpack.c.l.b16 %v3537
      %v3576 = vunpack.c.l.b16 %v3538
      %v3577 = vunpack.c.l.b16 %v3539
      %v3578 = vunpack.c.l.b16 %v3540
      %v3579 = vunpack.c.l.b16 %v3541
      %v3580 = vunpack.c.l.b16 %v3542
      %v3581 = vunpack.c.l.b16 %v3543
      %v3582 = vunpack.c.l.b16 %v3544
      %v3583 = vunpack.c.l.b16 %v3545
      %v3584 = vunpack.c.l.b16 %v3546
      %v3585 = vpack.c.b16 %v3570, %v3569
      %v3586 = vpack.c.b16 %v3572, %v3571
      %v3587 = vpack.c.b16 %v3574, %v3573
      %v3588 = vpack.c.b16 %v3576, %v3575
      %v3589 = vpack.c.b16 %v3578, %v3577
      %v3590 = vpack.c.b16 %v3580, %v3579
      %v3591 = vpack.c.b16 %v3582, %v3581
      %v3592 = vpack.c.b16 %v3584, %v3583
      %3601 = vmatpush.bf16.msra.mxu0 %v3592
      %3602 = vmatpush.bf16.msra.mxu0 %v3591
      %3603 = vmatpush.bf16.msra.mxu0 %v3590
      %3604 = vmatpush.bf16.msra.mxu0 %v3589
      %3605 = vmatpush.bf16.msra.mxu0 %v3588
      %3606 = vmatpush.bf16.msra.mxu0 %v3587
      %3607 = vmatpush.bf16.msra.mxu0 %v3586
      %3608 = vmatpush.bf16.msra.mxu0 %v3585
      %3609 = vmatmul.bf16.gmra.mxu0 %v2080
      %v3610 = vpop.f32.mrf.mxu0
      %v3611 = vadd.f32 0.0, %v3610
      %v3612 = vpop.f32.mrf.mxu0
      %v3613 = vadd.f32 0.0, %v3612
      %3614 = vmatmul.bf16.gmra.mxu0 %v2081
      %v3615 = vpop.f32.mrf.mxu0
      %v3616 = vadd.f32 0.0, %v3615
      %v3617 = vpop.f32.mrf.mxu0
      %v3618 = vadd.f32 0.0, %v3617
      %3619 = vmatmul.bf16.gmra.mxu0 %v2082
      %v3620 = vpop.f32.mrf.mxu0
      %v3621 = vadd.f32 0.0, %v3620
      %v3622 = vpop.f32.mrf.mxu0
      %v3623 = vadd.f32 0.0, %v3622
      %3624 = vmatmul.bf16.gmra.mxu0 %v2083
      %v3625 = vpop.f32.mrf.mxu0
      %v3626 = vadd.f32 0.0, %v3625
      %v3627 = vpop.f32.mrf.mxu0
      %v3628 = vadd.f32 0.0, %v3627
      %3629 = vmatmul.bf16.gmra.mxu0 %v2084
      %v3630 = vpop.f32.mrf.mxu0
      %v3631 = vadd.f32 0.0, %v3630
      %v3632 = vpop.f32.mrf.mxu0
      %v3633 = vadd.f32 0.0, %v3632
      %3634 = vmatmul.bf16.gmra.mxu0 %v2085
      %v3635 = vpop.f32.mrf.mxu0
      %v3636 = vadd.f32 0.0, %v3635
      %v3637 = vpop.f32.mrf.mxu0
      %v3638 = vadd.f32 0.0, %v3637
      %3639 = vmatmul.bf16.gmra.mxu0 %v2086
      %v3640 = vpop.f32.mrf.mxu0
      %v3641 = vadd.f32 0.0, %v3640
      %v3642 = vpop.f32.mrf.mxu0
      %v3643 = vadd.f32 0.0, %v3642
      %3644 = vmatmul.bf16.gmra.mxu0 %v2087
      %v3645 = vpop.f32.mrf.mxu0
      %v3646 = vadd.f32 0.0, %v3645
      %v3647 = vpop.f32.mrf.mxu0
      %v3648 = vadd.f32 0.0, %v3647
      %3649 = vmatmul.bf16.gmra.mxu0 %v2088
      %v3650 = vpop.f32.mrf.mxu0
      %v3651 = vadd.f32 0.0, %v3650
      %v3652 = vpop.f32.mrf.mxu0
      %v3653 = vadd.f32 0.0, %v3652
      %3654 = vmatmul.bf16.gmra.mxu0 %v2089
      %v3655 = vpop.f32.mrf.mxu0
      %v3656 = vadd.f32 0.0, %v3655
      %v3657 = vpop.f32.mrf.mxu0
      %v3658 = vadd.f32 0.0, %v3657
      %3659 = vmatmul.bf16.gmra.mxu0 %v2090
      %v3660 = vpop.f32.mrf.mxu0
      %v3661 = vadd.f32 0.0, %v3660
      %v3662 = vpop.f32.mrf.mxu0
      %v3663 = vadd.f32 0.0, %v3662
      %3664 = vmatmul.bf16.gmra.mxu0 %v2091
      %v3665 = vpop.f32.mrf.mxu0
      %v3666 = vadd.f32 0.0, %v3665
      %v3667 = vpop.f32.mrf.mxu0
      %v3668 = vadd.f32 0.0, %v3667
      %3669 = vmatmul.bf16.gmra.mxu0 %v2092
      %v3670 = vpop.f32.mrf.mxu0
      %v3671 = vadd.f32 0.0, %v3670
      %v3672 = vpop.f32.mrf.mxu0
      %v3673 = vadd.f32 0.0, %v3672
      %3674 = vmatmul.bf16.gmra.mxu0 %v2093
      %v3675 = vpop.f32.mrf.mxu0
      %v3676 = vadd.f32 0.0, %v3675
      %v3677 = vpop.f32.mrf.mxu0
      %v3678 = vadd.f32 0.0, %v3677
      %3679 = vmatmul.bf16.gmra.mxu0 %v2975
      %v3680 = vpop.f32.mrf.mxu0
      %v3681 = vadd.f32 0.0, %v3680
      %v3682 = vpop.f32.mrf.mxu0
      %v3683 = vadd.f32 0.0, %v3682
      %3684 = vmatmul.bf16.gmra.mxu0 %v3551
      %v3685 = vpop.f32.mrf.mxu0
      %v3686 = vadd.f32 0.0, %v3685
      %v3687 = vpop.f32.mrf.mxu0
      %v3688 = vadd.f32 0.0, %v3687
      %3689 = vdwg.mxu0
      %v3690 = vadd.f32 %v3498, %v3611
      %v3691 = vadd.f32 %v3499, %v3613
      %v3692 = vadd.f32 %v3500, %v3616
      %v3693 = vadd.f32 %v3501, %v3618
      %v3694 = vadd.f32 %v3502, %v3621
      %v3695 = vadd.f32 %v3503, %v3623
      %v3696 = vadd.f32 %v3504, %v3626
      %v3697 = vadd.f32 %v3505, %v3628
      %v3698 = vadd.f32 %v3506, %v3631
      %v3699 = vadd.f32 %v3507, %v3633
      %v3700 = vadd.f32 %v3508, %v3636
      %v3701 = vadd.f32 %v3509, %v3638
      %v3702 = vadd.f32 %v3510, %v3641
      %v3703 = vadd.f32 %v3511, %v3643
      %v3704 = vadd.f32 %v3512, %v3646
      %v3705 = vadd.f32 %v3513, %v3648
      %v3706 = vadd.f32 %v3514, %v3651
      %v3707 = vadd.f32 %v3515, %v3653
      %v3708 = vadd.f32 %v3516, %v3656
      %v3709 = vadd.f32 %v3517, %v3658
      %v3710 = vadd.f32 %v3518, %v3661
      %v3711 = vadd.f32 %v3519, %v3663
      %v3712 = vadd.f32 %v3520, %v3666
      %v3713 = vadd.f32 %v3521, %v3668
      %v3714 = vadd.f32 %v3522, %v3671
      %v3715 = vadd.f32 %v3523, %v3673
      %v3716 = vadd.f32 %v3524, %v3676
      %v3717 = vadd.f32 %v3525, %v3678
      %v3718 = vadd.f32 %v3526, %v3681
      %v3719 = vadd.f32 %v3527, %v3683
      %v3720 = vadd.f32 %v3528, %v3686
      %v3721 = vadd.f32 %v3529, %v3688
      %s3722 = scalar_lea.vmem %s5, 512
      %v3723 = vld [vmem:[%s3722] sm:$0xf]
      %v3724 = vld [vmem:[%s3722 + $0x4] sm:$0xf]
      %v3725 = vld [vmem:[%s3722 + $0x8] sm:$0xf]
      %v3726 = vld [vmem:[%s3722 + $0xc] sm:$0xf]
      %v3727 = vld [vmem:[%s3722 + $0x10] sm:$0xf]
      %v3728 = vld [vmem:[%s3722 + $0x14] sm:$0xf]
      %v3729 = vld [vmem:[%s3722 + $0x18] sm:$0xf]
      %v3730 = vld [vmem:[%s3722 + $0x1c] sm:$0xf]
      %v3731 = vld [vmem:[%s3722 + $0x20] sm:$0xf]
      %v3732 = vld [vmem:[%s3722 + $0x24] sm:$0xf]
      %v3733 = vld [vmem:[%s3722 + $0x28] sm:$0xf]
      %v3734 = vld [vmem:[%s3722 + $0x2c] sm:$0xf]
      %v3735 = vld [vmem:[%s3722 + $0x30] sm:$0xf]
      %v3736 = vld [vmem:[%s3722 + $0x34] sm:$0xf]
      %v3737 = vld [vmem:[%s3722 + $0x38] sm:$0xf]
      %v3738 = vld [vmem:[%s3722 + $0x3c] sm:$0xf]
      %v3741 = vunpack.c.l.b16 %v1979
      %v3742 = vunpack.c.l.b16 %v1980
      %v3743 = vpack.c.b16 %v3742, %v3741
      %v3761 = vunpack.c.l.b16 %v3723
      %v3762 = vunpack.c.l.b16 %v3724
      %v3763 = vunpack.c.l.b16 %v3725
      %v3764 = vunpack.c.l.b16 %v3726
      %v3765 = vunpack.c.l.b16 %v3727
      %v3766 = vunpack.c.l.b16 %v3728
      %v3767 = vunpack.c.l.b16 %v3729
      %v3768 = vunpack.c.l.b16 %v3730
      %v3769 = vunpack.c.l.b16 %v3731
      %v3770 = vunpack.c.l.b16 %v3732
      %v3771 = vunpack.c.l.b16 %v3733
      %v3772 = vunpack.c.l.b16 %v3734
      %v3773 = vunpack.c.l.b16 %v3735
      %v3774 = vunpack.c.l.b16 %v3736
      %v3775 = vunpack.c.l.b16 %v3737
      %v3776 = vunpack.c.l.b16 %v3738
      %v3777 = vpack.c.b16 %v3762, %v3761
      %v3778 = vpack.c.b16 %v3764, %v3763
      %v3779 = vpack.c.b16 %v3766, %v3765
      %v3780 = vpack.c.b16 %v3768, %v3767
      %v3781 = vpack.c.b16 %v3770, %v3769
      %v3782 = vpack.c.b16 %v3772, %v3771
      %v3783 = vpack.c.b16 %v3774, %v3773
      %v3784 = vpack.c.b16 %v3776, %v3775
      %3793 = vmatpush.bf16.msra.mxu0 %v3784
      %3794 = vmatpush.bf16.msra.mxu0 %v3783
      %3795 = vmatpush.bf16.msra.mxu0 %v3782
      %3796 = vmatpush.bf16.msra.mxu0 %v3781
      %3797 = vmatpush.bf16.msra.mxu0 %v3780
      %3798 = vmatpush.bf16.msra.mxu0 %v3779
      %3799 = vmatpush.bf16.msra.mxu0 %v3778
      %3800 = vmatpush.bf16.msra.mxu0 %v3777
      %3801 = vmatmul.bf16.gmra.mxu0 %v2563
      %v3802 = vpop.f32.mrf.mxu0
      %v3803 = vadd.f32 0.0, %v3802
      %v3804 = vpop.f32.mrf.mxu0
      %v3805 = vadd.f32 0.0, %v3804
      %3806 = vmatmul.bf16.gmra.mxu0 %v2564
      %v3807 = vpop.f32.mrf.mxu0
      %v3808 = vadd.f32 0.0, %v3807
      %v3809 = vpop.f32.mrf.mxu0
      %v3810 = vadd.f32 0.0, %v3809
      %3811 = vmatmul.bf16.gmra.mxu0 %v2565
      %v3812 = vpop.f32.mrf.mxu0
      %v3813 = vadd.f32 0.0, %v3812
      %v3814 = vpop.f32.mrf.mxu0
      %v3815 = vadd.f32 0.0, %v3814
      %3816 = vmatmul.bf16.gmra.mxu0 %v2566
      %v3817 = vpop.f32.mrf.mxu0
      %v3818 = vadd.f32 0.0, %v3817
      %v3819 = vpop.f32.mrf.mxu0
      %v3820 = vadd.f32 0.0, %v3819
      %3821 = vmatmul.bf16.gmra.mxu0 %v2567
      %v3822 = vpop.f32.mrf.mxu0
      %v3823 = vadd.f32 0.0, %v3822
      %v3824 = vpop.f32.mrf.mxu0
      %v3825 = vadd.f32 0.0, %v3824
      %3826 = vmatmul.bf16.gmra.mxu0 %v2568
      %v3827 = vpop.f32.mrf.mxu0
      %v3828 = vadd.f32 0.0, %v3827
      %v3829 = vpop.f32.mrf.mxu0
      %v3830 = vadd.f32 0.0, %v3829
      %3831 = vmatmul.bf16.gmra.mxu0 %v2569
      %v3832 = vpop.f32.mrf.mxu0
      %v3833 = vadd.f32 0.0, %v3832
      %v3834 = vpop.f32.mrf.mxu0
      %v3835 = vadd.f32 0.0, %v3834
      %3836 = vmatmul.bf16.gmra.mxu0 %v2570
      %v3837 = vpop.f32.mrf.mxu0
      %v3838 = vadd.f32 0.0, %v3837
      %v3839 = vpop.f32.mrf.mxu0
      %v3840 = vadd.f32 0.0, %v3839
      %3841 = vmatmul.bf16.gmra.mxu0 %v2571
      %v3842 = vpop.f32.mrf.mxu0
      %v3843 = vadd.f32 0.0, %v3842
      %v3844 = vpop.f32.mrf.mxu0
      %v3845 = vadd.f32 0.0, %v3844
      %3846 = vmatmul.bf16.gmra.mxu0 %v2572
      %v3847 = vpop.f32.mrf.mxu0
      %v3848 = vadd.f32 0.0, %v3847
      %v3849 = vpop.f32.mrf.mxu0
      %v3850 = vadd.f32 0.0, %v3849
      %3851 = vmatmul.bf16.gmra.mxu0 %v2573
      %v3852 = vpop.f32.mrf.mxu0
      %v3853 = vadd.f32 0.0, %v3852
      %v3854 = vpop.f32.mrf.mxu0
      %v3855 = vadd.f32 0.0, %v3854
      %3856 = vmatmul.bf16.gmra.mxu0 %v2574
      %v3857 = vpop.f32.mrf.mxu0
      %v3858 = vadd.f32 0.0, %v3857
      %v3859 = vpop.f32.mrf.mxu0
      %v3860 = vadd.f32 0.0, %v3859
      %3861 = vmatmul.bf16.gmra.mxu0 %v2575
      %v3862 = vpop.f32.mrf.mxu0
      %v3863 = vadd.f32 0.0, %v3862
      %v3864 = vpop.f32.mrf.mxu0
      %v3865 = vadd.f32 0.0, %v3864
      %3866 = vmatmul.bf16.gmra.mxu0 %v2576
      %v3867 = vpop.f32.mrf.mxu0
      %v3868 = vadd.f32 0.0, %v3867
      %v3869 = vpop.f32.mrf.mxu0
      %v3870 = vadd.f32 0.0, %v3869
      %3871 = vmatmul.bf16.gmra.mxu0 %v3167
      %v3872 = vpop.f32.mrf.mxu0
      %v3873 = vadd.f32 0.0, %v3872
      %v3874 = vpop.f32.mrf.mxu0
      %v3875 = vadd.f32 0.0, %v3874
      %3876 = vmatmul.bf16.gmra.mxu0 %v3743
      %v3877 = vpop.f32.mrf.mxu0
      %v3878 = vadd.f32 0.0, %v3877
      %v3879 = vpop.f32.mrf.mxu0
      %v3880 = vadd.f32 0.0, %v3879
      %3881 = vdwg.mxu0
      %v3882 = vadd.f32 %v3690, %v3803
      %v3883 = vadd.f32 %v3691, %v3805
      %v3884 = vadd.f32 %v3692, %v3808
      %v3885 = vadd.f32 %v3693, %v3810
      %v3886 = vadd.f32 %v3694, %v3813
      %v3887 = vadd.f32 %v3695, %v3815
      %v3888 = vadd.f32 %v3696, %v3818
      %v3889 = vadd.f32 %v3697, %v3820
      %v3890 = vadd.f32 %v3698, %v3823
      %v3891 = vadd.f32 %v3699, %v3825
      %v3892 = vadd.f32 %v3700, %v3828
      %v3893 = vadd.f32 %v3701, %v3830
      %v3894 = vadd.f32 %v3702, %v3833
      %v3895 = vadd.f32 %v3703, %v3835
      %v3896 = vadd.f32 %v3704, %v3838
      %v3897 = vadd.f32 %v3705, %v3840
      %v3898 = vadd.f32 %v3706, %v3843
      %v3899 = vadd.f32 %v3707, %v3845
      %v3900 = vadd.f32 %v3708, %v3848
      %v3901 = vadd.f32 %v3709, %v3850
      %v3902 = vadd.f32 %v3710, %v3853
      %v3903 = vadd.f32 %v3711, %v3855
      %v3904 = vadd.f32 %v3712, %v3858
      %v3905 = vadd.f32 %v3713, %v3860
      %v3906 = vadd.f32 %v3714, %v3863
      %v3907 = vadd.f32 %v3715, %v3865
      %v3908 = vadd.f32 %v3716, %v3868
      %v3909 = vadd.f32 %v3717, %v3870
      %v3910 = vadd.f32 %v3718, %v3873
      %v3911 = vadd.f32 %v3719, %v3875
      %v3912 = vadd.f32 %v3720, %v3878
      %v3913 = vadd.f32 %v3721, %v3880
      %v3914 = vld [vmem:[%s6] sm:$0x1]
      %v3916 = vperm.slane %v3914, 0
      %v3918 = vadd.f32 %v3882, %v3916
      %v3919 = vadd.f32 %v3883, %v3916
      %v3920 = vadd.f32 %v3884, %v3916
      %v3921 = vadd.f32 %v3885, %v3916
      %v3922 = vadd.f32 %v3886, %v3916
      %v3923 = vadd.f32 %v3887, %v3916
      %v3924 = vadd.f32 %v3888, %v3916
      %v3925 = vadd.f32 %v3889, %v3916
      %v3926 = vadd.f32 %v3890, %v3916
      %v3927 = vadd.f32 %v3891, %v3916
      %v3928 = vadd.f32 %v3892, %v3916
      %v3929 = vadd.f32 %v3893, %v3916
      %v3930 = vadd.f32 %v3894, %v3916
      %v3931 = vadd.f32 %v3895, %v3916
      %v3932 = vadd.f32 %v3896, %v3916
      %v3933 = vadd.f32 %v3897, %v3916
      %v3934 = vadd.f32 %v3898, %v3916
      %v3935 = vadd.f32 %v3899, %v3916
      %v3936 = vadd.f32 %v3900, %v3916
      %v3937 = vadd.f32 %v3901, %v3916
      %v3938 = vadd.f32 %v3902, %v3916
      %v3939 = vadd.f32 %v3903, %v3916
      %v3940 = vadd.f32 %v3904, %v3916
      %v3941 = vadd.f32 %v3905, %v3916
      %v3942 = vadd.f32 %v3906, %v3916
      %v3943 = vadd.f32 %v3907, %v3916
      %v3944 = vadd.f32 %v3908, %v3916
      %v3945 = vadd.f32 %v3909, %v3916
      %v3946 = vadd.f32 %v3910, %v3916
      %v3947 = vadd.f32 %v3911, %v3916
      %v3948 = vadd.f32 %v3912, %v3916
      %v3949 = vadd.f32 %v3913, %v3916
      %v3950 = vpack.c.bf16 %v3918, %v3918
      %v3951 = vpack.c.bf16 %v3919, %v3919
      %v3952 = vpack.c.bf16 %v3920, %v3920
      %v3953 = vpack.c.bf16 %v3921, %v3921
      %v3954 = vpack.c.bf16 %v3922, %v3922
      %v3955 = vpack.c.bf16 %v3923, %v3923
      %v3956 = vpack.c.bf16 %v3924, %v3924
      %v3957 = vpack.c.bf16 %v3925, %v3925
      %v3958 = vpack.c.bf16 %v3926, %v3926
      %v3959 = vpack.c.bf16 %v3927, %v3927
      %v3960 = vpack.c.bf16 %v3928, %v3928
      %v3961 = vpack.c.bf16 %v3929, %v3929
      %v3962 = vpack.c.bf16 %v3930, %v3930
      %v3963 = vpack.c.bf16 %v3931, %v3931
      %v3964 = vpack.c.bf16 %v3932, %v3932
      %v3965 = vpack.c.bf16 %v3933, %v3933
      %v3966 = vpack.c.bf16 %v3934, %v3934
      %v3967 = vpack.c.bf16 %v3935, %v3935
      %v3968 = vpack.c.bf16 %v3936, %v3936
      %v3969 = vpack.c.bf16 %v3937, %v3937
      %v3970 = vpack.c.bf16 %v3938, %v3938
      %v3971 = vpack.c.bf16 %v3939, %v3939
      %v3972 = vpack.c.bf16 %v3940, %v3940
      %v3973 = vpack.c.bf16 %v3941, %v3941
      %v3974 = vpack.c.bf16 %v3942, %v3942
      %v3975 = vpack.c.bf16 %v3943, %v3943
      %v3976 = vpack.c.bf16 %v3944, %v3944
      %v3977 = vpack.c.bf16 %v3945, %v3945
      %v3978 = vpack.c.bf16 %v3946, %v3946
      %v3979 = vpack.c.bf16 %v3947, %v3947
      %v3980 = vpack.c.bf16 %v3948, %v3948
      %v3981 = vpack.c.bf16 %v3949, %v3949
      %3982 = vst [vmem:[%s515] sm:$0xf] %v3950
      %3983 = vst [vmem:[%s515 + $0x4] sm:$0xf] %v3951
      %3984 = vst [vmem:[%s515 + $0x8] sm:$0xf] %v3952
      %3985 = vst [vmem:[%s515 + $0xc] sm:$0xf] %v3953
      %3986 = vst [vmem:[%s515 + $0x10] sm:$0xf] %v3954
      %3987 = vst [vmem:[%s515 + $0x14] sm:$0xf] %v3955
      %3988 = vst [vmem:[%s515 + $0x18] sm:$0xf] %v3956
      %3989 = vst [vmem:[%s515 + $0x1c] sm:$0xf] %v3957
      %3990 = vst [vmem:[%s515 + $0x20] sm:$0xf] %v3958
      %3991 = vst [vmem:[%s515 + $0x24] sm:$0xf] %v3959
      %3992 = vst [vmem:[%s515 + $0x28] sm:$0xf] %v3960
      %3993 = vst [vmem:[%s515 + $0x2c] sm:$0xf] %v3961
      %3994 = vst [vmem:[%s515 + $0x30] sm:$0xf] %v3962
      %3995 = vst [vmem:[%s515 + $0x34] sm:$0xf] %v3963
      %3996 = vst [vmem:[%s515 + $0x38] sm:$0xf] %v3964
      %3997 = vst [vmem:[%s515 + $0x3c] sm:$0xf] %v3965
      %3998 = vst [vmem:[%s515 + $0x40] sm:$0xf] %v3966
      %3999 = vst [vmem:[%s515 + $0x44] sm:$0xf] %v3967
      %4000 = vst [vmem:[%s515 + $0x48] sm:$0xf] %v3968
      %4001 = vst [vmem:[%s515 + $0x4c] sm:$0xf] %v3969
      %4002 = vst [vmem:[%s515 + $0x50] sm:$0xf] %v3970
      %4003 = vst [vmem:[%s515 + $0x54] sm:$0xf] %v3971
      %4004 = vst [vmem:[%s515 + $0x58] sm:$0xf] %v3972
      %4005 = vst [vmem:[%s515 + $0x5c] sm:$0xf] %v3973
      %4006 = vst [vmem:[%s515 + $0x60] sm:$0xf] %v3974
      %4007 = vst [vmem:[%s515 + $0x64] sm:$0xf] %v3975
      %4008 = vst [vmem:[%s515 + $0x68] sm:$0xf] %v3976
      %4009 = vst [vmem:[%s515 + $0x6c] sm:$0xf] %v3977
      %4010 = vst [vmem:[%s515 + $0x70] sm:$0xf] %v3978
      %4011 = vst [vmem:[%s515 + $0x74] sm:$0xf] %v3979
      %4012 = vst [vmem:[%s515 + $0x78] sm:$0xf] %v3980
      %4013 = vst [vmem:[%s515 + $0x7c] sm:$0xf] %v3981
      %v4014 = vadd.f32 %v3918, %v3919
      %v4015 = vadd.f32 %v4014, %v3920
      %v4016 = vadd.f32 %v4015, %v3921
      %v4017 = vadd.f32 %v4016, %v3922
      %v4018 = vadd.f32 %v4017, %v3923
      %v4019 = vadd.f32 %v4018, %v3924
      %v4020 = vadd.f32 %v4019, %v3925
      %v4021 = vadd.f32 %v4020, %v3926
      %v4022 = vadd.f32 %v4021, %v3927
      %v4023 = vadd.f32 %v4022, %v3928
      %v4024 = vadd.f32 %v4023, %v3929
      %v4025 = vadd.f32 %v4024, %v3930
      %v4026 = vadd.f32 %v4025, %v3931
      %v4027 = vadd.f32 %v4026, %v3932
      %v4028 = vadd.f32 %v4027, %v3933
      %v4029 = vadd.f32 %v4028, %v3934
      %v4030 = vadd.f32 %v4029, %v3935
      %v4031 = vadd.f32 %v4030, %v3936
      %v4032 = vadd.f32 %v4031, %v3937
      %v4033 = vadd.f32 %v4032, %v3938
      %v4034 = vadd.f32 %v4033, %v3939
      %v4035 = vadd.f32 %v4034, %v3940
      %v4036 = vadd.f32 %v4035, %v3941
      %v4037 = vadd.f32 %v4036, %v3942
      %v4038 = vadd.f32 %v4037, %v3943
      %v4039 = vadd.f32 %v4038, %v3944
      %v4040 = vadd.f32 %v4039, %v3945
      %v4041 = vadd.f32 %v4040, %v3946
      %v4042 = vadd.f32 %v4041, %v3947
      %v4043 = vadd.f32 %v4042, %v3948
      %v4044 = vadd.f32 %v4043, %v3949
      %v4045 = vrot.slane %v4044, 4
      %v4046 = vadd.f32 %v4044, %v4045
      %v4047 = vrot.slane %v4046, 2
      %v4048 = vadd.f32 %v4046, %v4047
      %v4049 = vrot.slane %v4048, 1
      %v4050 = vadd.f32 %v4048, %v4049
      %4051 = vst [vmem:[%s520] sm:$0x1] %v4050
      %v4052 = vmul.f32 %v3918, %v3918
      %v4053 = vmul.f32 %v3919, %v3919
      %v4054 = vmul.f32 %v3920, %v3920
      %v4055 = vmul.f32 %v3921, %v3921
      %v4056 = vmul.f32 %v3922, %v3922
      %v4057 = vmul.f32 %v3923, %v3923
      %v4058 = vmul.f32 %v3924, %v3924
      %v4059 = vmul.f32 %v3925, %v3925
      %v4060 = vmul.f32 %v3926, %v3926
      %v4061 = vmul.f32 %v3927, %v3927
      %v4062 = vmul.f32 %v3928, %v3928
      %v4063 = vmul.f32 %v3929, %v3929
      %v4064 = vmul.f32 %v3930, %v3930
      %v4065 = vmul.f32 %v3931, %v3931
      %v4066 = vmul.f32 %v3932, %v3932
      %v4067 = vmul.f32 %v3933, %v3933
      %v4068 = vmul.f32 %v3934, %v3934
      %v4069 = vmul.f32 %v3935, %v3935
      %v4070 = vmul.f32 %v3936, %v3936
      %v4071 = vmul.f32 %v3937, %v3937
      %v4072 = vmul.f32 %v3938, %v3938
      %v4073 = vmul.f32 %v3939, %v3939
      %v4074 = vmul.f32 %v3940, %v3940
      %v4075 = vmul.f32 %v3941, %v3941
      %v4076 = vmul.f32 %v3942, %v3942
      %v4077 = vmul.f32 %v3943, %v3943
      %v4078 = vmul.f32 %v3944, %v3944
      %v4079 = vmul.f32 %v3945, %v3945
      %v4080 = vmul.f32 %v3946, %v3946
      %v4081 = vmul.f32 %v3947, %v3947
      %v4082 = vmul.f32 %v3948, %v3948
      %v4083 = vmul.f32 %v3949, %v3949
      %v4084 = vadd.f32 %v4052, %v4053
      %v4085 = vadd.f32 %v4084, %v4054
      %v4086 = vadd.f32 %v4085, %v4055
      %v4087 = vadd.f32 %v4086, %v4056
      %v4088 = vadd.f32 %v4087, %v4057
      %v4089 = vadd.f32 %v4088, %v4058
      %v4090 = vadd.f32 %v4089, %v4059
      %v4091 = vadd.f32 %v4090, %v4060
      %v4092 = vadd.f32 %v4091, %v4061
      %v4093 = vadd.f32 %v4092, %v4062
      %v4094 = vadd.f32 %v4093, %v4063
      %v4095 = vadd.f32 %v4094, %v4064
      %v4096 = vadd.f32 %v4095, %v4065
      %v4097 = vadd.f32 %v4096, %v4066
      %v4098 = vadd.f32 %v4097, %v4067
      %v4099 = vadd.f32 %v4098, %v4068
      %v4100 = vadd.f32 %v4099, %v4069
      %v4101 = vadd.f32 %v4100, %v4070
      %v4102 = vadd.f32 %v4101, %v4071
      %v4103 = vadd.f32 %v4102, %v4072
      %v4104 = vadd.f32 %v4103, %v4073
      %v4105 = vadd.f32 %v4104, %v4074
      %v4106 = vadd.f32 %v4105, %v4075
      %v4107 = vadd.f32 %v4106, %v4076
      %v4108 = vadd.f32 %v4107, %v4077
      %v4109 = vadd.f32 %v4108, %v4078
      %v4110 = vadd.f32 %v4109, %v4079
      %v4111 = vadd.f32 %v4110, %v4080
      %v4112 = vadd.f32 %v4111, %v4081
      %v4113 = vadd.f32 %v4112, %v4082
      %v4114 = vadd.f32 %v4113, %v4083
      %v4115 = vrot.slane %v4114, 4
      %v4116 = vadd.f32 %v4114, %v4115
      %v4117 = vrot.slane %v4116, 2
      %v4118 = vadd.f32 %v4116, %v4117
      %v4119 = vrot.slane %v4118, 1
      %v4120 = vadd.f32 %v4118, %v4119
      %4121 = vst [vmem:[%s525] sm:$0x1] %v4120
      %s4122 = smul.u32 32, %s26
      %p4123 = scmp.lt.s32.totalorder %s25, 1
      %s4124 = scalar_select %p4123, %s25, 1
      %p4125 = scmp.lt.s32.totalorder %s4122, 31
      %s4126 = scalar_select %p4125, %s4122, 31
      %s4127 = smul.addr %s4124, 32
      %s4128 = sadd.s32 %s4126, %s4127
      %s4129 = smul.addr %s4128, 4
      %s4130 = scalar_lea.vmem %s7, %s4129
      %s4131 = sadd.s32 %s25, %s26
      %p4132 = scmp.lt.s32.totalorder %s4131, 1
      %s4133 = scalar_select %p4132, %s4131, 1
      %s4134 = scalar_lea.vmem %s8, %s4133
      %s4135 = sadd.s32 %s25, %s26
      %p4136 = scmp.lt.s32.totalorder %s4135, 1
      %s4137 = scalar_select %p4136, %s4135, 1
      %s4138 = scalar_lea.vmem %s9, %s4137
      // Predicated region
      $region49: #{conv_block_forward.4} parent=47 // pred_check
        %p4139 = pneg %p237
      $region50: #{conv_block_forward.4} parent=47 // pred_check_branch
        %4141 = sbr.rel (%p4139) target = $region52
      $region51: #{conv_block_forward.4} parent=47 // pred_region
        %s4142 = smul.u32 32, %s26
      $region52: #{conv_block_forward.4} parent=47 // pred_fallthru
        _
      // Predicated region
      $region53: #{conv_block_forward.4} parent=47 // pred_check
        %p4143 = pneg %p265
      $region54: #{conv_block_forward.4} parent=47 // pred_check_branch
        %4145 = sbr.rel (%p4143) target = $region56
      $region55: #{conv_block_forward.4} parent=47 // pred_region
        %s4146 = sadd.s32 %s25, %s26
      $region56: #{conv_block_forward.4} parent=47 // pred_fallthru
        _
      // Predicated region
      $region57: #{conv_block_forward.4} parent=47 // pred_check
        %p4147 = pneg %p293
      $region58: #{conv_block_forward.4} parent=47 // pred_check_branch
        %4149 = sbr.rel (%p4147) target = $region60
      $region59: #{conv_block_forward.4} parent=47 // pred_region
        %s4150 = sadd.s32 %s25, %s26
      $region60: #{conv_block_forward.4} parent=47 // pred_fallthru
        _
    $region48: #{conv_block_forward.4} parent=5 // pred_fallthru
      _
    %p4151 = scmp.le.s32.totalorder 2, %s16
    // Predicated region
    $region61: #{conv_block_forward.4} parent=5 // pred_check
      %p4152 = pneg %p4151
    $region62: #{conv_block_forward.4} parent=5 // pred_check_branch
      %4154 = sbr.rel (%p4152) target = $region64
    $region63: #{conv_block_forward.4} parent=5 // pred_region
      %s4155 = ssub.s32 %s16, 2
      // Predicated region
      $region65: #{conv_block_forward.4} parent=63 // pred_check
        %p4156 = pneg %p243
      $region66: #{conv_block_forward.4} parent=63 // pred_check_branch
        %4158 = sbr.rel (%p4156) target = $region68
      $region67: #{conv_block_forward.4} parent=63 // pred_region
        %s4159 = smul.u32 32, %s28
        %p4160 = scmp.lt.s32.totalorder %s27, 1
        %s4161 = scalar_select %p4160, %s27, 1
        %p4162 = scmp.lt.s32.totalorder %s4159, 31
        %s4163 = scalar_select %p4162, %s4159, 31
        %s4164 = smul.addr %s4161, 32
        %s4165 = sadd.s32 %s4163, %s4164
        %s4166 = smul.addr %s4165, 4
        %s4167 = scalar_lea.vmem %s7, %s4166
      $region68: #{conv_block_forward.4} parent=63 // pred_fallthru
        _
      // Predicated region
      $region69: #{conv_block_forward.4} parent=63 // pred_check
        %p4168 = pneg %p271
      $region70: #{conv_block_forward.4} parent=63 // pred_check_branch
        %4170 = sbr.rel (%p4168) target = $region72
      $region71: #{conv_block_forward.4} parent=63 // pred_region
        %s4171 = sadd.s32 %s27, %s28
        %p4172 = scmp.lt.s32.totalorder %s4171, 1
        %s4173 = scalar_select %p4172, %s4171, 1
        %s4174 = scalar_lea.vmem %s8, %s4173
      $region72: #{conv_block_forward.4} parent=63 // pred_fallthru
        _
      // Predicated region
      $region73: #{conv_block_forward.4} parent=63 // pred_check
        %p4175 = pneg %p299
      $region74: #{conv_block_forward.4} parent=63 // pred_check_branch
        %4177 = sbr.rel (%p4175) target = $region76
      $region75: #{conv_block_forward.4} parent=63 // pred_region
        %s4178 = sadd.s32 %s27, %s28
        %p4179 = scmp.lt.s32.totalorder %s4178, 1
        %s4180 = scalar_select %p4179, %s4178, 1
        %s4181 = scalar_lea.vmem %s9, %s4180
      $region76: #{conv_block_forward.4} parent=63 // pred_fallthru
        _
    $region64: #{conv_block_forward.4} parent=5 // pred_fallthru
      _
  $region6: #{conv_block_forward.4} parent=0 // loop_footer
    %s20 = sadd.s32 1, %s16
  $region7: #{conv_block_forward.4} parent=0 // loop_footer_branch
    %15 = sbr.rel target = $region3
  $region8: #{conv_block_forward.4} parent=0 // loop_exit
    _

</llo_original>
